<compile_context>
chip_gen: v5e
topology: v5e:2x2
jax: 0.10.0
libtpu: 0.0.40
codegen_flags: <defaults>
</compile_context>

<pallas_src>
import functools

import jax
import jax.numpy as jnp
from jax.experimental import pallas as pl
from jax.experimental.pallas import tpu as pltpu

NUM_CLASSES = 2
BN_EPS = 1e-5


# ----------------------------- common helpers ------------------------------

def _cparams():
    # Per-image working sets are a few MB; 32 MiB is safe on v5e/v6e (128 MiB)
    # and v7x (64 MiB).
    return pltpu.CompilerParams(
        dimension_semantics=("parallel",),
        vmem_limit_bytes=32 * 1024 * 1024,
    )


def _const_spec(shape):
    # Weight / constant input: whole-array block for every grid step.
    r = len(shape)
    return pl.BlockSpec(tuple(shape), lambda n, _r=r: (0,) * _r)


# ------------------------------ Pallas kernels ------------------------------

def _conv_pool_kernel(x_ref, w_ref, b_ref, o_ref, pad_ref, *, ho, wo):
    """Strided conv (im2col LHS, parity-major rows) + folded BN/CReLU + 3x3/s2/p1 pool.

    x_ref   : (1, 4*ho*wo, K) bf16 im2col patches; row ((py*2+px)*ho + i)*wo + j
              holds the patch of conv-output pixel (2i+py, 2j+px).
    w_ref   : (K, C)          bf16 weights (BN scale + CReLU fold applied).
    b_ref   : (1, C)          f32 folded bias.
    o_ref   : (1, ho, wo, C)  bf16 pooled output.
    pad_ref : (4, ho+1, wo+1, C) f32 scratch; zero row/col 0 emulates the pool's
              boundary (equivalent to -inf because the relu output is >= 0).
    """
    acc = jnp.dot(x_ref[0], w_ref[...], preferred_element_type=jnp.float32)
    a = jnp.maximum(acc + b_ref[...], 0.0)
    c = a.shape[-1]

    pad_ref[...] = jnp.zeros(pad_ref.shape, pad_ref.dtype)
    pad_ref[:, 1:, 1:, :] = a.reshape(4, ho, wo, c)

    def tap(p, y0, x0):
        return pad_ref[p, y0:y0 + ho, x0:x0 + wo, :]

    out = tap(0, 1, 1)
    for (p, y0, x0) in ((1, 1, 1), (1, 1, 0), (2, 1, 1), (2, 0, 1),
                        (3, 1, 1), (3, 1, 0), (3, 0, 1), (3, 0, 0)):
        out = jnp.maximum(out, tap(p, y0, x0))
    o_ref[0] = out.astype(o_ref.dtype)


def _tail_kernel(x_ref, w2_ref, b2_ref, w31_ref, b31_ref, w32_ref, b32_ref,
                 w41_ref, b41_ref, w42_ref, b42_ref,
                 wh1_ref, bh1_ref, wh2_ref, bh2_ref, wh3_ref, bh3_ref,
                 feat_ref, h1_ref, h2_ref, h3_ref,
                 cpad_ref, pada_ref, padb_ref, padc_ref):
    """conv2 + pool2 + entire post-pool2 tail (conv3/conv4 + loc/conf heads)."""
    f32 = jnp.float32
    bf16 = jnp.bfloat16

    # ---- conv2 (single K=1728 matmul) + folded BN/CReLU + fused maxpool2 ----
    acc = jnp.dot(x_ref[0], w2_ref[...], preferred_element_type=f32)      # (64, 128)
    a = jnp.maximum(acc + b2_ref[...], 0.0)
    cpad_ref[...] = jnp.zeros(cpad_ref.shape, cpad_ref.dtype)
    cpad_ref[:, 1:, 1:, :] = a.reshape(4, 4, 4, 128)

    def ptap(p, y0, x0):
        return cpad_ref[p, y0:y0 + 4, x0:x0 + 4, :]

    s1 = ptap(0, 1, 1)
    for (p, y0, x0) in ((1, 1, 1), (1, 1, 0), (2, 1, 1), (2, 0, 1),
                        (3, 1, 1), (3, 1, 0), (3, 0, 1), (3, 0, 0)):
        s1 = jnp.maximum(s1, ptap(p, y0, x0))         # (4, 4, 128) detection source 1

    pada_ref[...] = jnp.zeros(pada_ref.shape, pada_ref.dtype)
    pada_ref[1:5, 1:5, :] = s1
    s1b = s1.reshape(16, 128).astype(bf16)

    # ---- conv3_1 (1x1) + BN + relu ----
    t31 = jnp.maximum(jnp.dot(s1b, w31_ref[...], preferred_element_type=f32)
                      + b31_ref[...], 0.0)            # (16, 128)
    padb_ref[...] = jnp.zeros(padb_ref.shape, padb_ref.dtype)
    padb_ref[1:5, 1:5, :] = t31.reshape(4, 4, 128)

    # ---- head 1 (3x3/p1 on source 1): 9 weight matmuls on padded windows ----
    h1 = jnp.zeros((16, wh1_ref.shape[2]), f32)
    for dy in range(3):
        for dx in range(3):
            lhs = pada_ref[dy:dy + 4, dx:dx + 4, :].reshape(16, 128).astype(bf16)
            h1 = h1 + jnp.dot(lhs, wh1_ref[dy * 3 + dx], preferred_element_type=f32)
    h1_ref[0] = h1 + bh1_ref[...]

    # ---- conv3_2 (3x3/s2/p1, 4x4 -> 2x2): stride-1 conv, then row select ----
    t32 = jnp.zeros((16, 256), f32)
    for dy in range(3):
        for dx in range(3):
            lhs = padb_ref[dy:dy + 4, dx:dx + 4, :].reshape(16, 128).astype(bf16)
            t32 = t32 + jnp.dot(lhs, w32_ref[dy * 3 + dx], preferred_element_type=f32)
    t32 = t32 + b32_ref[...]
    s2 = jnp.maximum(jnp.concatenate(
        [t32[0:1], t32[2:3], t32[8:9], t32[10:11]], axis=0), 0.0)   # (4, 256) source 2
    s2b = s2.astype(bf16)

    padc_ref[...] = jnp.zeros(padc_ref.shape, padc_ref.dtype)
    padc_ref[1:3, 1:3, :] = s2.reshape(2, 2, 256)

    # ---- conv4_1 (1x1) + conv4_2 (3x3/s2/p1 on 2x2 -> 1x1, valid taps only) ----
    t41 = jnp.maximum(jnp.dot(s2b, w41_ref[...], preferred_element_type=f32)
                      + b41_ref[...], 0.0)                          # (4, 128)
    t41b = t41.astype(bf16)
    acc42 = jnp.zeros((1, 256), f32)
    for r in range(4):
        acc42 = acc42 + jnp.dot(t41b[r:r + 1, :], w42_ref[r],
                                preferred_element_type=f32)
    s3 = jnp.maximum(acc42 + b42_ref[...], 0.0)                     # (1, 256) source 3
    feat_ref[0] = s3                                                # conv4_2 out == mimic

    # ---- head 2 (3x3/p1 on source 2, 2x2) ----
    h2 = jnp.zeros((4, wh2_ref.shape[2]), f32)
    for dy in range(3):
        for dx in range(3):
            lhs = padc_ref[dy:dy + 2, dx:dx + 2, :].reshape(4, 256).astype(bf16)
            h2 = h2 + jnp.dot(lhs, wh2_ref[dy * 3 + dx], preferred_element_type=f32)
    h2_ref[0] = h2 + bh2_ref[...]

    # ---- head 3 (3x3/p1 on the 1x1 source 3): only the centre tap hits data ----
    h3_ref[0] = jnp.dot(s3.astype(bf16), wh3_ref[...],
                        preferred_element_type=f32) + bh3_ref[...]


# ------------------------------ pallas wrappers -----------------------------

def _conv_pool(patches, w, b, *, ho, wo):
    N = patches.shape[0]
    C = w.shape[1]
    kern = functools.partial(_conv_pool_kernel, ho=ho, wo=wo)
    return pl.pallas_call(
        kern,
        out_shape=jax.ShapeDtypeStruct((N, ho, wo, C), jnp.bfloat16),
        grid=(N,),
        in_specs=[
            pl.BlockSpec((1,) + patches.shape[1:], lambda n: (n, 0, 0)),
            _const_spec(w.shape),
            _const_spec(b.shape),
        ],
        out_specs=pl.BlockSpec((1, ho, wo, C), lambda n: (n, 0, 0, 0)),
        scratch_shapes=[pltpu.VMEM((4, ho + 1, wo + 1, C), jnp.float32)],
        compiler_params=_cparams(),
    )(patches, w, b)


def _conv2_tail(pat2, p):
    N = pat2.shape[0]
    ch1 = p["wh1"].shape[2]      # 128 (padded)
    ch2 = p["wh2"].shape[2]      # 6
    ch3 = p["wh3"].shape[1]      # 6

    consts = (p["w2"], p["b2"], p["w31"], p["b31"], p["w32"], p["b32"],
              p["w41"], p["b41"], p["w42"], p["b42"],
              p["wh1"], p["bh1"], p["wh2"], p["bh2"], p["wh3"], p["bh3"])
    in_specs = [pl.BlockSpec((1,) + pat2.shape[1:], lambda n: (n, 0, 0))]
    in_specs += [_const_spec(a.shape) for a in consts]

    out_shape = (
        jax.ShapeDtypeStruct((N, 1, 256), jnp.float32),     # feat / mimic (conv4_2)
        jax.ShapeDtypeStruct((N, 16, ch1), jnp.float32),    # head 1 (loc+conf, padded)
        jax.ShapeDtypeStruct((N, 4, ch2), jnp.float32),     # head 2 (loc+conf)
        jax.ShapeDtypeStruct((N, 1, ch3), jnp.float32),     # head 3 (loc+conf)
    )
    out_specs = (
        pl.BlockSpec((1, 1, 256), lambda n: (n, 0, 0)),
        pl.BlockSpec((1, 16, ch1), lambda n: (n, 0, 0)),
        pl.BlockSpec((1, 4, ch2), lambda n: (n, 0, 0)),
        pl.BlockSpec((1, 1, ch3), lambda n: (n, 0, 0)),
    )
    return pl.pallas_call(
        _tail_kernel, out_shape=out_shape, grid=(N,),
        in_specs=in_specs, out_specs=out_specs,
        scratch_shapes=[
            pltpu.VMEM((4, 5, 5, 128), jnp.float32),   # conv2 parity planes, padded
            pltpu.VMEM((6, 6, 128), jnp.float32),      # pool2 (source 1), padded
            pltpu.VMEM((6, 6, 128), jnp.float32),      # conv3_1 output, padded
            pltpu.VMEM((4, 4, 256), jnp.float32),      # conv3_2 output, padded
        ],
        compiler_params=_cparams(),
    )(pat2, *consts)


# -------------------------------- parameters --------------------------------

def init_params(key, num_classes=NUM_CLASSES):
    ks = jax.random.split(key, 9)

    def bn_fold(cout):
        gamma = jnp.ones((cout,), jnp.float32)
        beta = jnp.zeros((cout,), jnp.float32)
        mean = jnp.zeros((cout,), jnp.float32)
        var = jnp.ones((cout,), jnp.float32)
        scale = gamma / jnp.sqrt(var + BN_EPS)
        bias = beta - mean * scale
        return scale, bias

    # ---- conv1: CRelu(3, 24, k=7, s=4, p=3). Stride absorbed by s2d-by-4
    #      (7x7 kernel zero-padded to 8x8, Cin 3 -> 4): 4 super-taps of K=64,
    #      merged into one K=256 matrix; CReLU folded -> 48 output channels.
    w = jax.random.normal(ks[0], (24, 3, 7, 7), jnp.float32) * 0.01
    scale, bias = bn_fold(24)
    wt = jnp.transpose(w, (2, 3, 1, 0))                         # (ky, kx, ci, co)
    wt = jnp.pad(wt, ((0, 1), (0, 1), (0, 1), (0, 0)))          # (8, 8, 4, 24)
    wt = wt.reshape(2, 4, 2, 4, 4, 24).transpose(0, 2, 1, 3, 4, 5).reshape(256, 24)
    wt = wt * scale
    w1 = jnp.concatenate([wt, -wt], axis=1).astype(jnp.bfloat16)    # (256, 48)
    b1 = jnp.concatenate([bias, -bias]).reshape(1, 48)

    # ---- conv2: CRelu(48, 64, k=5, s=2, p=2). Stride absorbed by s2d-by-2
    #      (5x5 -> 6x6): 9 super-taps of K=192 merged into one K=1728 matrix;
    #      CReLU folded -> 128 output channels.
    w = jax.random.normal(ks[1], (64, 48, 5, 5), jnp.float32) * 0.01
    scale, bias = bn_fold(64)
    wt = jnp.transpose(w, (2, 3, 1, 0))                         # (5, 5, 48, 64)
    wt = jnp.pad(wt, ((0, 1), (0, 1), (0, 0), (0, 0)))          # (6, 6, 48, 64)
    wt = wt.reshape(3, 2, 3, 2, 48, 64).transpose(0, 2, 1, 3, 4, 5).reshape(1728, 64)
    wt = wt * scale
    w2 = jnp.concatenate([wt, -wt], axis=1).astype(jnp.bfloat16)    # (1728, 128)
    b2 = jnp.concatenate([bias, -bias]).reshape(1, 128)

    def basic1x1(k, cin, cout):
        w = jax.random.normal(k, (cout, cin, 1, 1), jnp.float32) * 0.01
        scale, bias = bn_fold(cout)
        return ((w[:, :, 0, 0].T * scale).astype(jnp.bfloat16),
                bias.reshape(1, cout))

    def basic3x3(k, cin, cout):
        w = jax.random.normal(k, (cout, cin, 3, 3), jnp.float32) * 0.01
        scale, bias = bn_fold(cout)
        taps = (jnp.transpose(w, (2, 3, 1, 0)) * scale).reshape(9, cin, cout)
        return taps.astype(jnp.bfloat16), bias.reshape(1, cout)

    w31, b31 = basic1x1(ks[2], 128, 128)
    w32, b32 = basic3x3(ks[3], 128, 256)
    w41, b41 = basic1x1(ks[4], 256, 128)
    w42_taps, b42 = basic3x3(ks[5], 128, 256)
    # conv4_2 acts on a 2x2 map -> 1x1: only taps (dy,dx) in {1,2}^2 touch data.
    w42 = jnp.stack([w42_taps[4], w42_taps[5], w42_taps[7], w42_taps[8]], axis=0)

    def head_taps(k, cin, cout_loc, cout_conf, pad_to=None):
        # Conv2d(cin, cout, 3, padding=1) with bias; train init: xavier + bias 0.02.
        kl, kc = jax.random.split(k)

        def xav(kk, co):
            std = (2.0 / ((cin + co) * 9.0)) ** 0.5
            return jax.random.normal(kk, (co, cin, 3, 3), jnp.float32) * std

        wl = jnp.transpose(xav(kl, cout_loc), (2, 3, 1, 0)).reshape(9, cin, cout_loc)
        wc = jnp.transpose(xav(kc, cout_conf), (2, 3, 1, 0)).reshape(9, cin, cout_conf)
        taps = jnp.concatenate([wl, wc], axis=-1)
        bias = jnp.full((1, cout_loc + cout_conf), 0.02, jnp.float32)
        if pad_to is not None and pad_to > taps.shape[-1]:
            extra = pad_to - taps.shape[-1]
            taps = jnp.pad(taps, ((0, 0), (0, 0), (0, extra)))
            bias = jnp.pad(bias, ((0, 0), (0, extra)))
        return taps.astype(jnp.bfloat16), bias

    # head 1 output padded 126 -> 128 lanes (unmasked stores); pad sliced off later.
    wh1, bh1 = head_taps(ks[6], 128, 21 * 4, 21 * num_classes, pad_to=128)
    wh2, bh2 = head_taps(ks[7], 256, 1 * 4, 1 * num_classes)
    wh3_t, bh3 = head_taps(ks[8], 256, 1 * 4, 1 * num_classes)
    wh3 = wh3_t[4]        # 1x1 source: only the centre tap ever touches real data

    return {
        "w1": w1, "b1": b1, "w2": w2, "b2": b2,
        "w31": w31, "b31": b31, "w32": w32, "b32": b32,
        "w41": w41, "b41": b41, "w42": w42, "b42": b42,
        "wh1": wh1, "bh1": bh1, "wh2": wh2, "bh2": bh2, "wh3": wh3, "bh3": bh3,
    }


# ---------------------------------- forward ---------------------------------

def faceboxes_s_forward(params, x_nchw, num_classes=NUM_CLASSES):
    # phase == 'train': conf returned WITHOUT softmax (matches the PyTorch module).
    N, _, H, W = x_nchw.shape
    x = jnp.transpose(x_nchw, (0, 2, 3, 1)).astype(jnp.float32)     # NCHW -> NHWC

    # ---- conv1 patches (k7 s4 p3 via s2d-by-4), bf16, parity-major rows ----
    ho1 = (H + 6 - 7) // 4 + 1
    wo1 = (W + 6 - 7) // 4 + 1
    assert ho1 % 2 == 0 and wo1 % 2 == 0
    hp, wp = 4 * (ho1 + 1), 4 * (wo1 + 1)
    xp = jnp.pad(x, ((0, 0), (3, hp - H - 3), (3, wp - W - 3), (0, 1)))  # Cin 3 -> 4
    xs = xp.reshape(N, hp // 4, 4, wp // 4, 4, 4)
    xs = xs.transpose(0, 1, 3, 2, 4, 5).reshape(N, hp // 4, wp // 4, 64)
    cols = [xs[:, sy:sy + ho1, sx:sx + wo1, :] for sy in range(2) for sx in range(2)]
    pat = jnp.concatenate(cols, axis=-1)                            # (N, 32, 32, 256)
    hq, wq = ho1 // 2, wo1 // 2
    pat = pat.reshape(N, hq, 2, wq, 2, 256).transpose(0, 2, 4, 1, 3, 5)
    pat = pat.reshape(N, ho1 * wo1, 256).astype(jnp.bfloat16)

    # kernel 1: conv1 + BN + CReLU + maxpool1 (one matmul + pooled epilogue)
    p1 = _conv_pool(pat, params["w1"], params["b1"], ho=hq, wo=wq)   # (N, 16, 16, 48)

    # ---- conv2 patches (k5 s2 p2 via s2d-by-2), bf16, parity-major rows ----
    hi, wi = p1.shape[1], p1.shape[2]
    ho2 = (hi + 4 - 5) // 2 + 1
    wo2 = (wi + 4 - 5) // 2 + 1
    assert ho2 == 8 and wo2 == 8, "tail kernel expects a 128x128 input image"
    qp = jnp.pad(p1, ((0, 0), (2, 2), (2, 2), (0, 0)))
    q = qp.reshape(N, (hi + 4) // 2, 2, (wi + 4) // 2, 2, 48)
    q = q.transpose(0, 1, 3, 2, 4, 5).reshape(N, (hi + 4) // 2, (wi + 4) // 2, 192)
    cols = [q[:, sy:sy + ho2, sx:sx + wo2, :] for sy in range(3) for sx in range(3)]
    pat2 = jnp.concatenate(cols, axis=-1)                           # (N, 8, 8, 1728)
    pat2 = pat2.reshape(N, 4, 2, 4, 2, 1728).transpose(0, 2, 4, 1, 3, 5)
    pat2 = pat2.reshape(N, ho2 * wo2, 1728)                         # bf16 already

    # kernel 2: conv2 + BN + CReLU + maxpool2 + whole tail + all heads
    feat, h1, h2, h3 = _conv2_tail(pat2, params)

    nl1, nc1 = 84, 21 * num_classes
    loc = jnp.concatenate([h1[..., :nl1].reshape(N, -1),
                           h2[..., :4].reshape(N, -1),
                           h3[..., :4].reshape(N, -1)], axis=1).reshape(N, -1, 4)
    conf = jnp.concatenate([h1[..., nl1:nl1 + nc1].reshape(N, -1),
                            h2[..., 4:4 + num_classes].reshape(N, -1),
                            h3[..., 4:4 + num_classes].reshape(N, -1)],
                           axis=1).reshape(N, -1, num_classes)

    x_out = feat.reshape(N, 256, 1, 1)                              # conv4_2 output (NCHW)
    mimic = feat.reshape(N, 256)                                    # avgpool(1) of a 1x1 map
    return x_out, mimic, (loc, conf)


# ------------------------------------ main -----------------------------------

if __name__ == "__main__":
    key = jax.random.PRNGKey(0)
    pkey, xkey = jax.random.split(key)
    params = init_params(pkey)

    # Smallest spatial size the whole net supports (overall stride 128): 128x128.
    x = jax.random.normal(xkey, (2, 3, 128, 128), jnp.float32)

    fwd = jax.jit(faceboxes_s_forward)
    feat, mimic, (loc, conf) = fwd(params, x)
    jax.block_until_ready((feat, mimic, loc, conf))

    assert feat.shape == (2, 256, 1, 1)
    assert mimic.shape == (2, 256)
    assert loc.shape == (2, 341, 4)
    assert conf.shape == (2, 341, NUM_CLASSES)
    assert bool(jnp.isfinite(loc).all()) and bool(jnp.isfinite(conf).all())
    assert bool(jnp.isfinite(feat).all())
    print("KERNEL_OK")
</pallas_src>

<mosaic_0001>
module attributes {stable_mosaic.version = 11 : i64} {
  func.func @_conv_pool_kernel(%arg0: i32, %arg1: memref<1x1024x256xbf16, #tpu.memory_space<vmem>>, %arg2: memref<256x48xbf16, #tpu.memory_space<vmem>>, %arg3: memref<1x48xf32, #tpu.memory_space<vmem>>, %arg4: memref<1x16x16x48xbf16, #tpu.memory_space<vmem>>, %arg5: memref<4x17x17x48xf32, #tpu.memory_space<vmem>>) attributes {dimension_semantics = [#tpu.dimension_semantics<parallel>], iteration_bounds = array<i64: 2>, scalar_prefetch = 0 : i64, scratch_operands = 1 : i64, tpu.core_type = #tpu.core_type<tc>, window_params = [{transform_indices = @transform_0, window_bounds = array<i64: 1, 1024, 256>}, {pipeline_mode = #tpu.pipeline_mode<synchronous>, transform_indices = @transform_1, window_bounds = array<i64: 256, 48>}, {pipeline_mode = #tpu.pipeline_mode<synchronous>, transform_indices = @transform_2, window_bounds = array<i64: 1, 48>}, {transform_indices = @transform_3, window_bounds = array<i64: 1, 16, 16, 48>}]} {
    %c0 = arith.constant 0 : index
    %c0_0 = arith.constant 0 : index
    %c0_1 = arith.constant 0 : index
    %0 = vector.load %arg1[%c0, %c0_0, %c0_1] : memref<1x1024x256xbf16, #tpu.memory_space<vmem>>, vector<1x1024x256xbf16>
    %1 = vector.shape_cast %0 : vector<1x1024x256xbf16> to vector<1024x256xbf16>
    %c0_2 = arith.constant 0 : index
    %c0_3 = arith.constant 0 : index
    %2 = vector.load %arg2[%c0_2, %c0_3] : memref<256x48xbf16, #tpu.memory_space<vmem>>, vector<256x48xbf16>
    %cst = arith.constant dense<0.000000e+00> : vector<1024x48xf32>
    %3 = tpu.matmul %1, %2, %cst {dimension_numbers = #tpu.dot_dimension_numbers<[1], [0], [0], [1], [0, 0, 1, 1], [], []>} : vector<1024x256xbf16>, vector<256x48xbf16>, vector<1024x48xf32> -> vector<1024x48xf32>
    %c0_4 = arith.constant 0 : index
    %c0_5 = arith.constant 0 : index
    %4 = vector.load %arg3[%c0_4, %c0_5] : memref<1x48xf32, #tpu.memory_space<vmem>>, vector<1x48xf32>
    %5 = vector.broadcast %4 : vector<1x48xf32> to vector<1024x48xf32>
    %6 = arith.addf %3, %5 : vector<1024x48xf32>
    %cst_6 = arith.constant 0.000000e+00 : f32
    %7 = vector.broadcast %cst_6 : f32 to vector<1024x48xf32>
    %8 = arith.maximumf %6, %7 : vector<1024x48xf32>
    %cst_7 = arith.constant 0.000000e+00 : f32
    %9 = vector.broadcast %cst_7 : f32 to vector<4x17x17x48xf32>
    %c0_8 = arith.constant 0 : index
    %c0_9 = arith.constant 0 : index
    %c0_10 = arith.constant 0 : index
    %c0_11 = arith.constant 0 : index
    %10 = vector.load %arg5[%c0_8, %c0_9, %c0_10, %c0_11] : memref<4x17x17x48xf32, #tpu.memory_space<vmem>>, vector<4x17x17x48xf32>
    tpu.vector_store %arg5[%c0_8, %c0_9, %c0_10, %c0_11], %9 {strides = array<i32>} : memref<4x17x17x48xf32, #tpu.memory_space<vmem>>, vector<4x17x17x48xf32>,
    %11 = vector.shape_cast %8 : vector<1024x48xf32> to vector<4x16x16x48xf32>
    %c0_12 = arith.constant 0 : index
    %c1 = arith.constant 1 : index
    %c1_13 = arith.constant 1 : index
    %c0_14 = arith.constant 0 : index
    %12 = vector.load %arg5[%c0_12, %c1, %c1_13, %c0_14] : memref<4x17x17x48xf32, #tpu.memory_space<vmem>>, vector<4x16x16x48xf32>
    tpu.vector_store %arg5[%c0_12, %c1, %c1_13, %c0_14], %11 {strides = array<i32>} : memref<4x17x17x48xf32, #tpu.memory_space<vmem>>, vector<4x16x16x48xf32>,
    %c0_15 = arith.constant 0 : index
    %c1_16 = arith.constant 1 : index
    %c1_17 = arith.constant 1 : index
    %c0_18 = arith.constant 0 : index
    %13 = vector.load %arg5[%c0_15, %c1_16, %c1_17, %c0_18] : memref<4x17x17x48xf32, #tpu.memory_space<vmem>>, vector<1x16x16x48xf32>
    %14 = vector.shape_cast %13 : vector<1x16x16x48xf32> to vector<16x16x48xf32>
    %c1_19 = arith.constant 1 : index
    %c1_20 = arith.constant 1 : index
    %c1_21 = arith.constant 1 : index
    %c0_22 = arith.constant 0 : index
    %15 = vector.load %arg5[%c1_19, %c1_20, %c1_21, %c0_22] : memref<4x17x17x48xf32, #tpu.memory_space<vmem>>, vector<1x16x16x48xf32>
    %16 = vector.shape_cast %15 : vector<1x16x16x48xf32> to vector<16x16x48xf32>
    %17 = arith.maximumf %14, %16 : vector<16x16x48xf32>
    %c1_23 = arith.constant 1 : index
    %c1_24 = arith.constant 1 : index
    %c0_25 = arith.constant 0 : index
    %c0_26 = arith.constant 0 : index
    %18 = vector.load %arg5[%c1_23, %c1_24, %c0_25, %c0_26] : memref<4x17x17x48xf32, #tpu.memory_space<vmem>>, vector<1x16x16x48xf32>
    %19 = vector.shape_cast %18 : vector<1x16x16x48xf32> to vector<16x16x48xf32>
    %20 = arith.maximumf %17, %19 : vector<16x16x48xf32>
    %c2 = arith.constant 2 : index
    %c1_27 = arith.constant 1 : index
    %c1_28 = arith.constant 1 : index
    %c0_29 = arith.constant 0 : index
    %21 = vector.load %arg5[%c2, %c1_27, %c1_28, %c0_29] : memref<4x17x17x48xf32, #tpu.memory_space<vmem>>, vector<1x16x16x48xf32>
    %22 = vector.shape_cast %21 : vector<1x16x16x48xf32> to vector<16x16x48xf32>
    %23 = arith.maximumf %20, %22 : vector<16x16x48xf32>
    %c2_30 = arith.constant 2 : index
    %c0_31 = arith.constant 0 : index
    %c1_32 = arith.constant 1 : index
    %c0_33 = arith.constant 0 : index
    %24 = vector.load %arg5[%c2_30, %c0_31, %c1_32, %c0_33] : memref<4x17x17x48xf32, #tpu.memory_space<vmem>>, vector<1x16x16x48xf32>
    %25 = vector.shape_cast %24 : vector<1x16x16x48xf32> to vector<16x16x48xf32>
    %26 = arith.maximumf %23, %25 : vector<16x16x48xf32>
    %c3 = arith.constant 3 : index
    %c1_34 = arith.constant 1 : index
    %c1_35 = arith.constant 1 : index
    %c0_36 = arith.constant 0 : index
    %27 = vector.load %arg5[%c3, %c1_34, %c1_35, %c0_36] : memref<4x17x17x48xf32, #tpu.memory_space<vmem>>, vector<1x16x16x48xf32>
    %28 = vector.shape_cast %27 : vector<1x16x16x48xf32> to vector<16x16x48xf32>
    %29 = arith.maximumf %26, %28 : vector<16x16x48xf32>
    %c3_37 = arith.constant 3 : index
    %c1_38 = arith.constant 1 : index
    %c0_39 = arith.constant 0 : index
    %c0_40 = arith.constant 0 : index
    %30 = vector.load %arg5[%c3_37, %c1_38, %c0_39, %c0_40] : memref<4x17x17x48xf32, #tpu.memory_space<vmem>>, vector<1x16x16x48xf32>
    %31 = vector.shape_cast %30 : vector<1x16x16x48xf32> to vector<16x16x48xf32>
    %32 = arith.maximumf %29, %31 : vector<16x16x48xf32>
    %c3_41 = arith.constant 3 : index
    %c0_42 = arith.constant 0 : index
    %c1_43 = arith.constant 1 : index
    %c0_44 = arith.constant 0 : index
    %33 = vector.load %arg5[%c3_41, %c0_42, %c1_43, %c0_44] : memref<4x17x17x48xf32, #tpu.memory_space<vmem>>, vector<1x16x16x48xf32>
    %34 = vector.shape_cast %33 : vector<1x16x16x48xf32> to vector<16x16x48xf32>
    %35 = arith.maximumf %32, %34 : vector<16x16x48xf32>
    %c3_45 = arith.constant 3 : index
    %c0_46 = arith.constant 0 : index
    %c0_47 = arith.constant 0 : index
    %c0_48 = arith.constant 0 : index
    %36 = vector.load %arg5[%c3_45, %c0_46, %c0_47, %c0_48] : memref<4x17x17x48xf32, #tpu.memory_space<vmem>>, vector<1x16x16x48xf32>
    %37 = vector.shape_cast %36 : vector<1x16x16x48xf32> to vector<16x16x48xf32>
    %38 = arith.maximumf %35, %37 : vector<16x16x48xf32>
    %39 = arith.truncf %38 : vector<16x16x48xf32> to vector<16x16x48xbf16>
    %c0_49 = arith.constant 0 : index
    %c0_50 = arith.constant 0 : index
    %c0_51 = arith.constant 0 : index
    %c0_52 = arith.constant 0 : index
    %40 = vector.load %arg4[%c0_49, %c0_50, %c0_51, %c0_52] : memref<1x16x16x48xbf16, #tpu.memory_space<vmem>>, vector<1x16x16x48xbf16>
    %41 = vector.shape_cast %40 : vector<1x16x16x48xbf16> to vector<16x16x48xbf16>
    %42 = vector.shape_cast %39 : vector<16x16x48xbf16> to vector<1x16x16x48xbf16>
    tpu.vector_store %arg4[%c0_49, %c0_50, %c0_51, %c0_52], %42 {strides = array<i32>} : memref<1x16x16x48xbf16, #tpu.memory_space<vmem>>, vector<1x16x16x48xbf16>,
    return
  }
  func.func @transform_0(%arg0: i32) -> (i32, i32, i32) {
    %c0_i32 = arith.constant 0 : i32
    %c0_i32_0 = arith.constant 0 : i32
    %c0_i32_1 = arith.constant 0 : i32
    return %arg0, %c0_i32, %c0_i32_0 : i32, i32, i32
  }
  func.func @transform_1(%arg0: i32) -> (i32, i32) {
    %c0_i32 = arith.constant 0 : i32
    %c0_i32_0 = arith.constant 0 : i32
    %c0_i32_1 = arith.constant 0 : i32
    return %c0_i32, %c0_i32_0 : i32, i32
  }
  func.func @transform_2(%arg0: i32) -> (i32, i32) {
    %c0_i32 = arith.constant 0 : i32
    %c0_i32_0 = arith.constant 0 : i32
    %c0_i32_1 = arith.constant 0 : i32
    return %c0_i32, %c0_i32_0 : i32, i32
  }
  func.func @transform_3(%arg0: i32) -> (i32, i32, i32, i32) {
    %c0_i32 = arith.constant 0 : i32
    %c0_i32_0 = arith.constant 0 : i32
    %c0_i32_1 = arith.constant 0 : i32
    %c0_i32_2 = arith.constant 0 : i32
    return %arg0, %c0_i32, %c0_i32_0, %c0_i32_1 : i32, i32, i32, i32
  }
}

module attributes {stable_mosaic.version = 11 : i64} {
  func.func @_tail_kernel(%arg0: i32, %arg1: memref<1x64x1728xbf16, #tpu.memory_space<vmem>>, %arg2: memref<1728x128xbf16, #tpu.memory_space<vmem>>, %arg3: memref<1x128xf32, #tpu.memory_space<vmem>>, %arg4: memref<128x128xbf16, #tpu.memory_space<vmem>>, %arg5: memref<1x128xf32, #tpu.memory_space<vmem>>, %arg6: memref<9x128x256xbf16, #tpu.memory_space<vmem>>, %arg7: memref<1x256xf32, #tpu.memory_space<vmem>>, %arg8: memref<256x128xbf16, #tpu.memory_space<vmem>>, %arg9: memref<1x128xf32, #tpu.memory_space<vmem>>, %arg10: memref<4x128x256xbf16, #tpu.memory_space<vmem>>, %arg11: memref<1x256xf32, #tpu.memory_space<vmem>>, %arg12: memref<9x128x128xbf16, #tpu.memory_space<vmem>>, %arg13: memref<1x128xf32, #tpu.memory_space<vmem>>, %arg14: memref<9x256x6xbf16, #tpu.memory_space<vmem>>, %arg15: memref<1x6xf32, #tpu.memory_space<vmem>>, %arg16: memref<256x6xbf16, #tpu.memory_space<vmem>>, %arg17: memref<1x6xf32, #tpu.memory_space<vmem>>, %arg18: memref<1x1x256xf32, #tpu.memory_space<vmem>>, %arg19: memref<1x16x128xf32, #tpu.memory_space<vmem>>, %arg20: memref<1x4x6xf32, #tpu.memory_space<vmem>>, %arg21: memref<1x1x6xf32, #tpu.memory_space<vmem>>, %arg22: memref<4x5x5x128xf32, #tpu.memory_space<vmem>>, %arg23: memref<6x6x128xf32, #tpu.memory_space<vmem>>, %arg24: memref<6x6x128xf32, #tpu.memory_space<vmem>>, %arg25: memref<4x4x256xf32, #tpu.memory_space<vmem>>) attributes {dimension_semantics = [#tpu.dimension_semantics<parallel>], iteration_bounds = array<i64: 2>, scalar_prefetch = 0 : i64, scratch_operands = 4 : i64, tpu.core_type = #tpu.core_type<tc>, window_params = [{transform_indices = @transform_0, window_bounds = array<i64: 1, 64, 1728>}, {pipeline_mode = #tpu.pipeline_mode<synchronous>, transform_indices = @transform_1, window_bounds = array<i64: 1728, 128>}, {pipeline_mode = #tpu.pipeline_mode<synchronous>, transform_indices = @transform_2, window_bounds = array<i64: 1, 128>}, {pipeline_mode = #tpu.pipeline_mode<synchronous>, transform_indices = @transform_3, window_bounds = array<i64: 128, 128>}, {pipeline_mode = #tpu.pipeline_mode<synchronous>, transform_indices = @transform_4, window_bounds = array<i64: 1, 128>}, {pipeline_mode = #tpu.pipeline_mode<synchronous>, transform_indices = @transform_5, window_bounds = array<i64: 9, 128, 256>}, {pipeline_mode = #tpu.pipeline_mode<synchronous>, transform_indices = @transform_6, window_bounds = array<i64: 1, 256>}, {pipeline_mode = #tpu.pipeline_mode<synchronous>, transform_indices = @transform_7, window_bounds = array<i64: 256, 128>}, {pipeline_mode = #tpu.pipeline_mode<synchronous>, transform_indices = @transform_8, window_bounds = array<i64: 1, 128>}, {pipeline_mode = #tpu.pipeline_mode<synchronous>, transform_indices = @transform_9, window_bounds = array<i64: 4, 128, 256>}, {pipeline_mode = #tpu.pipeline_mode<synchronous>, transform_indices = @transform_10, window_bounds = array<i64: 1, 256>}, {pipeline_mode = #tpu.pipeline_mode<synchronous>, transform_indices = @transform_11, window_bounds = array<i64: 9, 128, 128>}, {pipeline_mode = #tpu.pipeline_mode<synchronous>, transform_indices = @transform_12, window_bounds = array<i64: 1, 128>}, {pipeline_mode = #tpu.pipeline_mode<synchronous>, transform_indices = @transform_13, window_bounds = array<i64: 9, 256, 6>}, {pipeline_mode = #tpu.pipeline_mode<synchronous>, transform_indices = @transform_14, window_bounds = array<i64: 1, 6>}, {pipeline_mode = #tpu.pipeline_mode<synchronous>, transform_indices = @transform_15, window_bounds = array<i64: 256, 6>}, {pipeline_mode = #tpu.pipeline_mode<synchronous>, transform_indices = @transform_16, window_bounds = array<i64: 1, 6>}, {transform_indices = @transform_17, window_bounds = array<i64: 1, 1, 256>}, {transform_indices = @transform_18, window_bounds = array<i64: 1, 16, 128>}, {transform_indices = @transform_19, window_bounds = array<i64: 1, 4, 6>}, {transform_indices = @transform_20, window_bounds = array<i64: 1, 1, 6>}]} {
    %c0 = arith.constant 0 : index
    %c0_0 = arith.constant 0 : index
    %c0_1 = arith.constant 0 : index
    %0 = vector.load %arg1[%c0, %c0_0, %c0_1] : memref<1x64x1728xbf16, #tpu.memory_space<vmem>>, vector<1x64x1728xbf16>
    %1 = vector.shape_cast %0 : vector<1x64x1728xbf16> to vector<64x1728xbf16>
    %c0_2 = arith.constant 0 : index
    %c0_3 = arith.constant 0 : index
    %2 = vector.load %arg2[%c0_2, %c0_3] : memref<1728x128xbf16, #tpu.memory_space<vmem>>, vector<1728x128xbf16>
    %cst = arith.constant dense<0.000000e+00> : vector<64x128xf32>
    %3 = tpu.matmul %1, %2, %cst {dimension_numbers = #tpu.dot_dimension_numbers<[1], [0], [0], [1], [0, 0, 1, 1], [], []>} : vector<64x1728xbf16>, vector<1728x128xbf16>, vector<64x128xf32> -> vector<64x128xf32>
    %c0_4 = arith.constant 0 : index
    %c0_5 = arith.constant 0 : index
    %4 = vector.load %arg3[%c0_4, %c0_5] : memref<1x128xf32, #tpu.memory_space<vmem>>, vector<1x128xf32>
    %5 = vector.broadcast %4 : vector<1x128xf32> to vector<64x128xf32>
    %6 = arith.addf %3, %5 : vector<64x128xf32>
    %cst_6 = arith.constant 0.000000e+00 : f32
    %7 = vector.broadcast %cst_6 : f32 to vector<64x128xf32>
    %8 = arith.maximumf %6, %7 : vector<64x128xf32>
    %cst_7 = arith.constant 0.000000e+00 : f32
    %9 = vector.broadcast %cst_7 : f32 to vector<4x5x5x128xf32>
    %c0_8 = arith.constant 0 : index
    %c0_9 = arith.constant 0 : index
    %c0_10 = arith.constant 0 : index
    %c0_11 = arith.constant 0 : index
    %10 = vector.load %arg22[%c0_8, %c0_9, %c0_10, %c0_11] : memref<4x5x5x128xf32, #tpu.memory_space<vmem>>, vector<4x5x5x128xf32>
    tpu.vector_store %arg22[%c0_8, %c0_9, %c0_10, %c0_11], %9 {strides = array<i32>} : memref<4x5x5x128xf32, #tpu.memory_space<vmem>>, vector<4x5x5x128xf32>,
    %11 = vector.shape_cast %8 : vector<64x128xf32> to vector<4x4x4x128xf32>
    %c0_12 = arith.constant 0 : index
    %c1 = arith.constant 1 : index
    %c1_13 = arith.constant 1 : index
    %c0_14 = arith.constant 0 : index
    %12 = vector.load %arg22[%c0_12, %c1, %c1_13, %c0_14] : memref<4x5x5x128xf32, #tpu.memory_space<vmem>>, vector<4x4x4x128xf32>
    tpu.vector_store %arg22[%c0_12, %c1, %c1_13, %c0_14], %11 {strides = array<i32>} : memref<4x5x5x128xf32, #tpu.memory_space<vmem>>, vector<4x4x4x128xf32>,
    %c0_15 = arith.constant 0 : index
    %c1_16 = arith.constant 1 : index
    %c1_17 = arith.constant 1 : index
    %c0_18 = arith.constant 0 : index
    %13 = vector.load %arg22[%c0_15, %c1_16, %c1_17, %c0_18] : memref<4x5x5x128xf32, #tpu.memory_space<vmem>>, vector<1x4x4x128xf32>
    %14 = vector.shape_cast %13 : vector<1x4x4x128xf32> to vector<4x4x128xf32>
    %c1_19 = arith.constant 1 : index
    %c1_20 = arith.constant 1 : index
    %c1_21 = arith.constant 1 : index
    %c0_22 = arith.constant 0 : index
    %15 = vector.load %arg22[%c1_19, %c1_20, %c1_21, %c0_22] : memref<4x5x5x128xf32, #tpu.memory_space<vmem>>, vector<1x4x4x128xf32>
    %16 = vector.shape_cast %15 : vector<1x4x4x128xf32> to vector<4x4x128xf32>
    %17 = arith.maximumf %14, %16 : vector<4x4x128xf32>
    %c1_23 = arith.constant 1 : index
    %c1_24 = arith.constant 1 : index
    %c0_25 = arith.constant 0 : index
    %c0_26 = arith.constant 0 : index
    %18 = vector.load %arg22[%c1_23, %c1_24, %c0_25, %c0_26] : memref<4x5x5x128xf32, #tpu.memory_space<vmem>>, vector<1x4x4x128xf32>
    %19 = vector.shape_cast %18 : vector<1x4x4x128xf32> to vector<4x4x128xf32>
    %20 = arith.maximumf %17, %19 : vector<4x4x128xf32>
    %c2 = arith.constant 2 : index
    %c1_27 = arith.constant 1 : index
    %c1_28 = arith.constant 1 : index
    %c0_29 = arith.constant 0 : index
    %21 = vector.load %arg22[%c2, %c1_27, %c1_28, %c0_29] : memref<4x5x5x128xf32, #tpu.memory_space<vmem>>, vector<1x4x4x128xf32>
    %22 = vector.shape_cast %21 : vector<1x4x4x128xf32> to vector<4x4x128xf32>
    %23 = arith.maximumf %20, %22 : vector<4x4x128xf32>
    %c2_30 = arith.constant 2 : index
    %c0_31 = arith.constant 0 : index
    %c1_32 = arith.constant 1 : index
    %c0_33 = arith.constant 0 : index
    %24 = vector.load %arg22[%c2_30, %c0_31, %c1_32, %c0_33] : memref<4x5x5x128xf32, #tpu.memory_space<vmem>>, vector<1x4x4x128xf32>
    %25 = vector.shape_cast %24 : vector<1x4x4x128xf32> to vector<4x4x128xf32>
    %26 = arith.maximumf %23, %25 : vector<4x4x128xf32>
    %c3 = arith.constant 3 : index
    %c1_34 = arith.constant 1 : index
    %c1_35 = arith.constant 1 : index
    %c0_36 = arith.constant 0 : index
    %27 = vector.load %arg22[%c3, %c1_34, %c1_35, %c0_36] : memref<4x5x5x128xf32, #tpu.memory_space<vmem>>, vector<1x4x4x128xf32>
    %28 = vector.shape_cast %27 : vector<1x4x4x128xf32> to vector<4x4x128xf32>
    %29 = arith.maximumf %26, %28 : vector<4x4x128xf32>
    %c3_37 = arith.constant 3 : index
    %c1_38 = arith.constant 1 : index
    %c0_39 = arith.constant 0 : index
    %c0_40 = arith.constant 0 : index
    %30 = vector.load %arg22[%c3_37, %c1_38, %c0_39, %c0_40] : memref<4x5x5x128xf32, #tpu.memory_space<vmem>>, vector<1x4x4x128xf32>
    %31 = vector.shape_cast %30 : vector<1x4x4x128xf32> to vector<4x4x128xf32>
    %32 = arith.maximumf %29, %31 : vector<4x4x128xf32>
    %c3_41 = arith.constant 3 : index
    %c0_42 = arith.constant 0 : index
    %c1_43 = arith.constant 1 : index
    %c0_44 = arith.constant 0 : index
    %33 = vector.load %arg22[%c3_41, %c0_42, %c1_43, %c0_44] : memref<4x5x5x128xf32, #tpu.memory_space<vmem>>, vector<1x4x4x128xf32>
    %34 = vector.shape_cast %33 : vector<1x4x4x128xf32> to vector<4x4x128xf32>
    %35 = arith.maximumf %32, %34 : vector<4x4x128xf32>
    %c3_45 = arith.constant 3 : index
    %c0_46 = arith.constant 0 : index
    %c0_47 = arith.constant 0 : index
    %c0_48 = arith.constant 0 : index
    %36 = vector.load %arg22[%c3_45, %c0_46, %c0_47, %c0_48] : memref<4x5x5x128xf32, #tpu.memory_space<vmem>>, vector<1x4x4x128xf32>
    %37 = vector.shape_cast %36 : vector<1x4x4x128xf32> to vector<4x4x128xf32>
    %38 = arith.maximumf %35, %37 : vector<4x4x128xf32>
    %cst_49 = arith.constant 0.000000e+00 : f32
    %39 = vector.broadcast %cst_49 : f32 to vector<6x6x128xf32>
    %c0_50 = arith.constant 0 : index
    %c0_51 = arith.constant 0 : index
    %c0_52 = arith.constant 0 : index
    %40 = vector.load %arg23[%c0_50, %c0_51, %c0_52] : memref<6x6x128xf32, #tpu.memory_space<vmem>>, vector<6x6x128xf32>
    tpu.vector_store %arg23[%c0_50, %c0_51, %c0_52], %39 {strides = array<i32>} : memref<6x6x128xf32, #tpu.memory_space<vmem>>, vector<6x6x128xf32>,
    %c1_53 = arith.constant 1 : index
    %c1_54 = arith.constant 1 : index
    %c0_55 = arith.constant 0 : index
    %41 = vector.load %arg23[%c1_53, %c1_54, %c0_55] : memref<6x6x128xf32, #tpu.memory_space<vmem>>, vector<4x4x128xf32>
    tpu.vector_store %arg23[%c1_53, %c1_54, %c0_55], %38 {strides = array<i32>} : memref<6x6x128xf32, #tpu.memory_space<vmem>>, vector<4x4x128xf32>,
    %42 = vector.shape_cast %38 : vector<4x4x128xf32> to vector<16x128xf32>
    %43 = arith.truncf %42 : vector<16x128xf32> to vector<16x128xbf16>
    %c0_56 = arith.constant 0 : index
    %c0_57 = arith.constant 0 : index
    %44 = vector.load %arg4[%c0_56, %c0_57] : memref<128x128xbf16, #tpu.memory_space<vmem>>, vector<128x128xbf16>
    %cst_58 = arith.constant dense<0.000000e+00> : vector<16x128xf32>
    %45 = tpu.matmul %43, %44, %cst_58 {dimension_numbers = #tpu.dot_dimension_numbers<[1], [0], [0], [1], [0, 0, 1, 1], [], []>} : vector<16x128xbf16>, vector<128x128xbf16>, vector<16x128xf32> -> vector<16x128xf32>
    %c0_59 = arith.constant 0 : index
    %c0_60 = arith.constant 0 : index
    %46 = vector.load %arg5[%c0_59, %c0_60] : memref<1x128xf32, #tpu.memory_space<vmem>>, vector<1x128xf32>
    %47 = vector.broadcast %46 : vector<1x128xf32> to vector<16x128xf32>
    %48 = arith.addf %45, %47 : vector<16x128xf32>
    %cst_61 = arith.constant 0.000000e+00 : f32
    %49 = vector.broadcast %cst_61 : f32 to vector<16x128xf32>
    %50 = arith.maximumf %48, %49 : vector<16x128xf32>
    %cst_62 = arith.constant 0.000000e+00 : f32
    %51 = vector.broadcast %cst_62 : f32 to vector<6x6x128xf32>
    %c0_63 = arith.constant 0 : index
    %c0_64 = arith.constant 0 : index
    %c0_65 = arith.constant 0 : index
    %52 = vector.load %arg24[%c0_63, %c0_64, %c0_65] : memref<6x6x128xf32, #tpu.memory_space<vmem>>, vector<6x6x128xf32>
    tpu.vector_store %arg24[%c0_63, %c0_64, %c0_65], %51 {strides = array<i32>} : memref<6x6x128xf32, #tpu.memory_space<vmem>>, vector<6x6x128xf32>,
    %53 = vector.shape_cast %50 : vector<16x128xf32> to vector<4x4x128xf32>
    %c1_66 = arith.constant 1 : index
    %c1_67 = arith.constant 1 : index
    %c0_68 = arith.constant 0 : index
    %54 = vector.load %arg24[%c1_66, %c1_67, %c0_68] : memref<6x6x128xf32, #tpu.memory_space<vmem>>, vector<4x4x128xf32>
    tpu.vector_store %arg24[%c1_66, %c1_67, %c0_68], %53 {strides = array<i32>} : memref<6x6x128xf32, #tpu.memory_space<vmem>>, vector<4x4x128xf32>,
    %cst_69 = arith.constant 0.000000e+00 : f32
    %55 = vector.broadcast %cst_69 : f32 to vector<16x128xf32>
    %c0_70 = arith.constant 0 : index
    %c0_71 = arith.constant 0 : index
    %c0_72 = arith.constant 0 : index
    %56 = vector.load %arg23[%c0_70, %c0_71, %c0_72] : memref<6x6x128xf32, #tpu.memory_space<vmem>>, vector<4x4x128xf32>
    %57 = vector.shape_cast %56 : vector<4x4x128xf32> to vector<16x128xf32>
    %58 = arith.truncf %57 : vector<16x128xf32> to vector<16x128xbf16>
    %c0_73 = arith.constant 0 : index
    %c0_74 = arith.constant 0 : index
    %c0_75 = arith.constant 0 : index
    %59 = vector.load %arg12[%c0_73, %c0_74, %c0_75] : memref<9x128x128xbf16, #tpu.memory_space<vmem>>, vector<1x128x128xbf16>
    %60 = vector.shape_cast %59 : vector<1x128x128xbf16> to vector<128x128xbf16>
    %cst_76 = arith.constant dense<0.000000e+00> : vector<16x128xf32>
    %61 = tpu.matmul %58, %60, %cst_76 {dimension_numbers = #tpu.dot_dimension_numbers<[1], [0], [0], [1], [0, 0, 1, 1], [], []>} : vector<16x128xbf16>, vector<128x128xbf16>, vector<16x128xf32> -> vector<16x128xf32>
    %62 = arith.addf %55, %61 : vector<16x128xf32>
    %c0_77 = arith.constant 0 : index
    %c1_78 = arith.constant 1 : index
    %c0_79 = arith.constant 0 : index
    %63 = vector.load %arg23[%c0_77, %c1_78, %c0_79] : memref<6x6x128xf32, #tpu.memory_space<vmem>>, vector<4x4x128xf32>
    %64 = vector.shape_cast %63 : vector<4x4x128xf32> to vector<16x128xf32>
    %65 = arith.truncf %64 : vector<16x128xf32> to vector<16x128xbf16>
    %c1_80 = arith.constant 1 : index
    %c0_81 = arith.constant 0 : index
    %c0_82 = arith.constant 0 : index
    %66 = vector.load %arg12[%c1_80, %c0_81, %c0_82] : memref<9x128x128xbf16, #tpu.memory_space<vmem>>, vector<1x128x128xbf16>
    %67 = vector.shape_cast %66 : vector<1x128x128xbf16> to vector<128x128xbf16>
    %cst_83 = arith.constant dense<0.000000e+00> : vector<16x128xf32>
    %68 = tpu.matmul %65, %67, %cst_83 {dimension_numbers = #tpu.dot_dimension_numbers<[1], [0], [0], [1], [0, 0, 1, 1], [], []>} : vector<16x128xbf16>, vector<128x128xbf16>, vector<16x128xf32> -> vector<16x128xf32>
    %69 = arith.addf %62, %68 : vector<16x128xf32>
    %c0_84 = arith.constant 0 : index
    %c2_85 = arith.constant 2 : index
    %c0_86 = arith.constant 0 : index
    %70 = vector.load %arg23[%c0_84, %c2_85, %c0_86] : memref<6x6x128xf32, #tpu.memory_space<vmem>>, vector<4x4x128xf32>
    %71 = vector.shape_cast %70 : vector<4x4x128xf32> to vector<16x128xf32>
    %72 = arith.truncf %71 : vector<16x128xf32> to vector<16x128xbf16>
    %c2_87 = arith.constant 2 : index
    %c0_88 = arith.constant 0 : index
    %c0_89 = arith.constant 0 : index
    %73 = vector.load %arg12[%c2_87, %c0_88, %c0_89] : memref<9x128x128xbf16, #tpu.memory_space<vmem>>, vector<1x128x128xbf16>
    %74 = vector.shape_cast %73 : vector<1x128x128xbf16> to vector<128x128xbf16>
    %cst_90 = arith.constant dense<0.000000e+00> : vector<16x128xf32>
    %75 = tpu.matmul %72, %74, %cst_90 {dimension_numbers = #tpu.dot_dimension_numbers<[1], [0], [0], [1], [0, 0, 1, 1], [], []>} : vector<16x128xbf16>, vector<128x128xbf16>, vector<16x128xf32> -> vector<16x128xf32>
    %76 = arith.addf %69, %75 : vector<16x128xf32>
    %c1_91 = arith.constant 1 : index
    %c0_92 = arith.constant 0 : index
    %c0_93 = arith.constant 0 : index
    %77 = vector.load %arg23[%c1_91, %c0_92, %c0_93] : memref<6x6x128xf32, #tpu.memory_space<vmem>>, vector<4x4x128xf32>
    %78 = vector.shape_cast %77 : vector<4x4x128xf32> to vector<16x128xf32>
    %79 = arith.truncf %78 : vector<16x128xf32> to vector<16x128xbf16>
    %c3_94 = arith.constant 3 : index
    %c0_95 = arith.constant 0 : index
    %c0_96 = arith.constant 0 : index
    %80 = vector.load %arg12[%c3_94, %c0_95, %c0_96] : memref<9x128x128xbf16, #tpu.memory_space<vmem>>, vector<1x128x128xbf16>
    %81 = vector.shape_cast %80 : vector<1x128x128xbf16> to vector<128x128xbf16>
    %cst_97 = arith.constant dense<0.000000e+00> : vector<16x128xf32>
    %82 = tpu.matmul %79, %81, %cst_97 {dimension_numbers = #tpu.dot_dimension_numbers<[1], [0], [0], [1], [0, 0, 1, 1], [], []>} : vector<16x128xbf16>, vector<128x128xbf16>, vector<16x128xf32> -> vector<16x128xf32>
    %83 = arith.addf %76, %82 : vector<16x128xf32>
    %c1_98 = arith.constant 1 : index
    %c1_99 = arith.constant 1 : index
    %c0_100 = arith.constant 0 : index
    %84 = vector.load %arg23[%c1_98, %c1_99, %c0_100] : memref<6x6x128xf32, #tpu.memory_space<vmem>>, vector<4x4x128xf32>
    %85 = vector.shape_cast %84 : vector<4x4x128xf32> to vector<16x128xf32>
    %86 = arith.truncf %85 : vector<16x128xf32> to vector<16x128xbf16>
    %c4 = arith.constant 4 : index
    %c0_101 = arith.constant 0 : index
    %c0_102 = arith.constant 0 : index
    %87 = vector.load %arg12[%c4, %c0_101, %c0_102] : memref<9x128x128xbf16, #tpu.memory_space<vmem>>, vector<1x128x128xbf16>
    %88 = vector.shape_cast %87 : vector<1x128x128xbf16> to vector<128x128xbf16>
    %cst_103 = arith.constant dense<0.000000e+00> : vector<16x128xf32>
    %89 = tpu.matmul %86, %88, %cst_103 {dimension_numbers = #tpu.dot_dimension_numbers<[1], [0], [0], [1], [0, 0, 1, 1], [], []>} : vector<16x128xbf16>, vector<128x128xbf16>, vector<16x128xf32> -> vector<16x128xf32>
    %90 = arith.addf %83, %89 : vector<16x128xf32>
    %c1_104 = arith.constant 1 : index
    %c2_105 = arith.constant 2 : index
    %c0_106 = arith.constant 0 : index
    %91 = vector.load %arg23[%c1_104, %c2_105, %c0_106] : memref<6x6x128xf32, #tpu.memory_space<vmem>>, vector<4x4x128xf32>
    %92 = vector.shape_cast %91 : vector<4x4x128xf32> to vector<16x128xf32>
    %93 = arith.truncf %92 : vector<16x128xf32> to vector<16x128xbf16>
    %c5 = arith.constant 5 : index
    %c0_107 = arith.constant 0 : index
    %c0_108 = arith.constant 0 : index
    %94 = vector.load %arg12[%c5, %c0_107, %c0_108] : memref<9x128x128xbf16, #tpu.memory_space<vmem>>, vector<1x128x128xbf16>
    %95 = vector.shape_cast %94 : vector<1x128x128xbf16> to vector<128x128xbf16>
    %cst_109 = arith.constant dense<0.000000e+00> : vector<16x128xf32>
    %96 = tpu.matmul %93, %95, %cst_109 {dimension_numbers = #tpu.dot_dimension_numbers<[1], [0], [0], [1], [0, 0, 1, 1], [], []>} : vector<16x128xbf16>, vector<128x128xbf16>, vector<16x128xf32> -> vector<16x128xf32>
    %97 = arith.addf %90, %96 : vector<16x128xf32>
    %c2_110 = arith.constant 2 : index
    %c0_111 = arith.constant 0 : index
    %c0_112 = arith.constant 0 : index
    %98 = vector.load %arg23[%c2_110, %c0_111, %c0_112] : memref<6x6x128xf32, #tpu.memory_space<vmem>>, vector<4x4x128xf32>
    %99 = vector.shape_cast %98 : vector<4x4x128xf32> to vector<16x128xf32>
    %100 = arith.truncf %99 : vector<16x128xf32> to vector<16x128xbf16>
    %c6 = arith.constant 6 : index
    %c0_113 = arith.constant 0 : index
    %c0_114 = arith.constant 0 : index
    %101 = vector.load %arg12[%c6, %c0_113, %c0_114] : memref<9x128x128xbf16, #tpu.memory_space<vmem>>, vector<1x128x128xbf16>
    %102 = vector.shape_cast %101 : vector<1x128x128xbf16> to vector<128x128xbf16>
    %cst_115 = arith.constant dense<0.000000e+00> : vector<16x128xf32>
    %103 = tpu.matmul %100, %102, %cst_115 {dimension_numbers = #tpu.dot_dimension_numbers<[1], [0], [0], [1], [0, 0, 1, 1], [], []>} : vector<16x128xbf16>, vector<128x128xbf16>, vector<16x128xf32> -> vector<16x128xf32>
    %104 = arith.addf %97, %103 : vector<16x128xf32>
    %c2_116 = arith.constant 2 : index
    %c1_117 = arith.constant 1 : index
    %c0_118 = arith.constant 0 : index
    %105 = vector.load %arg23[%c2_116, %c1_117, %c0_118] : memref<6x6x128xf32, #tpu.memory_space<vmem>>, vector<4x4x128xf32>
    %106 = vector.shape_cast %105 : vector<4x4x128xf32> to vector<16x128xf32>
    %107 = arith.truncf %106 : vector<16x128xf32> to vector<16x128xbf16>
    %c7 = arith.constant 7 : index
    %c0_119 = arith.constant 0 : index
    %c0_120 = arith.constant 0 : index
    %108 = vector.load %arg12[%c7, %c0_119, %c0_120] : memref<9x128x128xbf16, #tpu.memory_space<vmem>>, vector<1x128x128xbf16>
    %109 = vector.shape_cast %108 : vector<1x128x128xbf16> to vector<128x128xbf16>
    %cst_121 = arith.constant dense<0.000000e+00> : vector<16x128xf32>
    %110 = tpu.matmul %107, %109, %cst_121 {dimension_numbers = #tpu.dot_dimension_numbers<[1], [0], [0], [1], [0, 0, 1, 1], [], []>} : vector<16x128xbf16>, vector<128x128xbf16>, vector<16x128xf32> -> vector<16x128xf32>
    %111 = arith.addf %104, %110 : vector<16x128xf32>
    %c2_122 = arith.constant 2 : index
    %c2_123 = arith.constant 2 : index
    %c0_124 = arith.constant 0 : index
    %112 = vector.load %arg23[%c2_122, %c2_123, %c0_124] : memref<6x6x128xf32, #tpu.memory_space<vmem>>, vector<4x4x128xf32>
    %113 = vector.shape_cast %112 : vector<4x4x128xf32> to vector<16x128xf32>
    %114 = arith.truncf %113 : vector<16x128xf32> to vector<16x128xbf16>
    %c8 = arith.constant 8 : index
    %c0_125 = arith.constant 0 : index
    %c0_126 = arith.constant 0 : index
    %115 = vector.load %arg12[%c8, %c0_125, %c0_126] : memref<9x128x128xbf16, #tpu.memory_space<vmem>>, vector<1x128x128xbf16>
    %116 = vector.shape_cast %115 : vector<1x128x128xbf16> to vector<128x128xbf16>
    %cst_127 = arith.constant dense<0.000000e+00> : vector<16x128xf32>
    %117 = tpu.matmul %114, %116, %cst_127 {dimension_numbers = #tpu.dot_dimension_numbers<[1], [0], [0], [1], [0, 0, 1, 1], [], []>} : vector<16x128xbf16>, vector<128x128xbf16>, vector<16x128xf32> -> vector<16x128xf32>
    %118 = arith.addf %111, %117 : vector<16x128xf32>
    %c0_128 = arith.constant 0 : index
    %c0_129 = arith.constant 0 : index
    %119 = vector.load %arg13[%c0_128, %c0_129] : memref<1x128xf32, #tpu.memory_space<vmem>>, vector<1x128xf32>
    %120 = vector.broadcast %119 : vector<1x128xf32> to vector<16x128xf32>
    %121 = arith.addf %118, %120 : vector<16x128xf32>
    %c0_130 = arith.constant 0 : index
    %c0_131 = arith.constant 0 : index
    %c0_132 = arith.constant 0 : index
    %122 = vector.load %arg19[%c0_130, %c0_131, %c0_132] : memref<1x16x128xf32, #tpu.memory_space<vmem>>, vector<1x16x128xf32>
    %123 = vector.shape_cast %122 : vector<1x16x128xf32> to vector<16x128xf32>
    %124 = vector.shape_cast %121 : vector<16x128xf32> to vector<1x16x128xf32>
    tpu.vector_store %arg19[%c0_130, %c0_131, %c0_132], %124 {strides = array<i32>} : memref<1x16x128xf32, #tpu.memory_space<vmem>>, vector<1x16x128xf32>,
    %cst_133 = arith.constant 0.000000e+00 : f32
    %125 = vector.broadcast %cst_133 : f32 to vector<16x256xf32>
    %c0_134 = arith.constant 0 : index
    %c0_135 = arith.constant 0 : index
    %c0_136 = arith.constant 0 : index
    %126 = vector.load %arg24[%c0_134, %c0_135, %c0_136] : memref<6x6x128xf32, #tpu.memory_space<vmem>>, vector<4x4x128xf32>
    %127 = vector.shape_cast %126 : vector<4x4x128xf32> to vector<16x128xf32>
    %128 = arith.truncf %127 : vector<16x128xf32> to vector<16x128xbf16>
    %c0_137 = arith.constant 0 : index
    %c0_138 = arith.constant 0 : index
    %c0_139 = arith.constant 0 : index
    %129 = vector.load %arg6[%c0_137, %c0_138, %c0_139] : memref<9x128x256xbf16, #tpu.memory_space<vmem>>, vector<1x128x256xbf16>
    %130 = vector.shape_cast %129 : vector<1x128x256xbf16> to vector<128x256xbf16>
    %cst_140 = arith.constant dense<0.000000e+00> : vector<16x256xf32>
    %131 = tpu.matmul %128, %130, %cst_140 {dimension_numbers = #tpu.dot_dimension_numbers<[1], [0], [0], [1], [0, 0, 1, 1], [], []>} : vector<16x128xbf16>, vector<128x256xbf16>, vector<16x256xf32> -> vector<16x256xf32>
    %132 = arith.addf %125, %131 : vector<16x256xf32>
    %c0_141 = arith.constant 0 : index
    %c1_142 = arith.constant 1 : index
    %c0_143 = arith.constant 0 : index
    %133 = vector.load %arg24[%c0_141, %c1_142, %c0_143] : memref<6x6x128xf32, #tpu.memory_space<vmem>>, vector<4x4x128xf32>
    %134 = vector.shape_cast %133 : vector<4x4x128xf32> to vector<16x128xf32>
    %135 = arith.truncf %134 : vector<16x128xf32> to vector<16x128xbf16>
    %c1_144 = arith.constant 1 : index
    %c0_145 = arith.constant 0 : index
    %c0_146 = arith.constant 0 : index
    %136 = vector.load %arg6[%c1_144, %c0_145, %c0_146] : memref<9x128x256xbf16, #tpu.memory_space<vmem>>, vector<1x128x256xbf16>
    %137 = vector.shape_cast %136 : vector<1x128x256xbf16> to vector<128x256xbf16>
    %cst_147 = arith.constant dense<0.000000e+00> : vector<16x256xf32>
    %138 = tpu.matmul %135, %137, %cst_147 {dimension_numbers = #tpu.dot_dimension_numbers<[1], [0], [0], [1], [0, 0, 1, 1], [], []>} : vector<16x128xbf16>, vector<128x256xbf16>, vector<16x256xf32> -> vector<16x256xf32>
    %139 = arith.addf %132, %138 : vector<16x256xf32>
    %c0_148 = arith.constant 0 : index
    %c2_149 = arith.constant 2 : index
    %c0_150 = arith.constant 0 : index
    %140 = vector.load %arg24[%c0_148, %c2_149, %c0_150] : memref<6x6x128xf32, #tpu.memory_space<vmem>>, vector<4x4x128xf32>
    %141 = vector.shape_cast %140 : vector<4x4x128xf32> to vector<16x128xf32>
    %142 = arith.truncf %141 : vector<16x128xf32> to vector<16x128xbf16>
    %c2_151 = arith.constant 2 : index
    %c0_152 = arith.constant 0 : index
    %c0_153 = arith.constant 0 : index
    %143 = vector.load %arg6[%c2_151, %c0_152, %c0_153] : memref<9x128x256xbf16, #tpu.memory_space<vmem>>, vector<1x128x256xbf16>
    %144 = vector.shape_cast %143 : vector<1x128x256xbf16> to vector<128x256xbf16>
    %cst_154 = arith.constant dense<0.000000e+00> : vector<16x256xf32>
    %145 = tpu.matmul %142, %144, %cst_154 {dimension_numbers = #tpu.dot_dimension_numbers<[1], [0], [0], [1], [0, 0, 1, 1], [], []>} : vector<16x128xbf16>, vector<128x256xbf16>, vector<16x256xf32> -> vector<16x256xf32>
    %146 = arith.addf %139, %145 : vector<16x256xf32>
    %c1_155 = arith.constant 1 : index
    %c0_156 = arith.constant 0 : index
    %c0_157 = arith.constant 0 : index
    %147 = vector.load %arg24[%c1_155, %c0_156, %c0_157] : memref<6x6x128xf32, #tpu.memory_space<vmem>>, vector<4x4x128xf32>
    %148 = vector.shape_cast %147 : vector<4x4x128xf32> to vector<16x128xf32>
    %149 = arith.truncf %148 : vector<16x128xf32> to vector<16x128xbf16>
    %c3_158 = arith.constant 3 : index
    %c0_159 = arith.constant 0 : index
    %c0_160 = arith.constant 0 : index
    %150 = vector.load %arg6[%c3_158, %c0_159, %c0_160] : memref<9x128x256xbf16, #tpu.memory_space<vmem>>, vector<1x128x256xbf16>
    %151 = vector.shape_cast %150 : vector<1x128x256xbf16> to vector<128x256xbf16>
    %cst_161 = arith.constant dense<0.000000e+00> : vector<16x256xf32>
    %152 = tpu.matmul %149, %151, %cst_161 {dimension_numbers = #tpu.dot_dimension_numbers<[1], [0], [0], [1], [0, 0, 1, 1], [], []>} : vector<16x128xbf16>, vector<128x256xbf16>, vector<16x256xf32> -> vector<16x256xf32>
    %153 = arith.addf %146, %152 : vector<16x256xf32>
    %c1_162 = arith.constant 1 : index
    %c1_163 = arith.constant 1 : index
    %c0_164 = arith.constant 0 : index
    %154 = vector.load %arg24[%c1_162, %c1_163, %c0_164] : memref<6x6x128xf32, #tpu.memory_space<vmem>>, vector<4x4x128xf32>
    %155 = vector.shape_cast %154 : vector<4x4x128xf32> to vector<16x128xf32>
    %156 = arith.truncf %155 : vector<16x128xf32> to vector<16x128xbf16>
    %c4_165 = arith.constant 4 : index
    %c0_166 = arith.constant 0 : index
    %c0_167 = arith.constant 0 : index
    %157 = vector.load %arg6[%c4_165, %c0_166, %c0_167] : memref<9x128x256xbf16, #tpu.memory_space<vmem>>, vector<1x128x256xbf16>
    %158 = vector.shape_cast %157 : vector<1x128x256xbf16> to vector<128x256xbf16>
    %cst_168 = arith.constant dense<0.000000e+00> : vector<16x256xf32>
    %159 = tpu.matmul %156, %158, %cst_168 {dimension_numbers = #tpu.dot_dimension_numbers<[1], [0], [0], [1], [0, 0, 1, 1], [], []>} : vector<16x128xbf16>, vector<128x256xbf16>, vector<16x256xf32> -> vector<16x256xf32>
    %160 = arith.addf %153, %159 : vector<16x256xf32>
    %c1_169 = arith.constant 1 : index
    %c2_170 = arith.constant 2 : index
    %c0_171 = arith.constant 0 : index
    %161 = vector.load %arg24[%c1_169, %c2_170, %c0_171] : memref<6x6x128xf32, #tpu.memory_space<vmem>>, vector<4x4x128xf32>
    %162 = vector.shape_cast %161 : vector<4x4x128xf32> to vector<16x128xf32>
    %163 = arith.truncf %162 : vector<16x128xf32> to vector<16x128xbf16>
    %c5_172 = arith.constant 5 : index
    %c0_173 = arith.constant 0 : index
    %c0_174 = arith.constant 0 : index
    %164 = vector.load %arg6[%c5_172, %c0_173, %c0_174] : memref<9x128x256xbf16, #tpu.memory_space<vmem>>, vector<1x128x256xbf16>
    %165 = vector.shape_cast %164 : vector<1x128x256xbf16> to vector<128x256xbf16>
    %cst_175 = arith.constant dense<0.000000e+00> : vector<16x256xf32>
    %166 = tpu.matmul %163, %165, %cst_175 {dimension_numbers = #tpu.dot_dimension_numbers<[1], [0], [0], [1], [0, 0, 1, 1], [], []>} : vector<16x128xbf16>, vector<128x256xbf16>, vector<16x256xf32> -> vector<16x256xf32>
    %167 = arith.addf %160, %166 : vector<16x256xf32>
    %c2_176 = arith.constant 2 : index
    %c0_177 = arith.constant 0 : index
    %c0_178 = arith.constant 0 : index
    %168 = vector.load %arg24[%c2_176, %c0_177, %c0_178] : memref<6x6x128xf32, #tpu.memory_space<vmem>>, vector<4x4x128xf32>
    %169 = vector.shape_cast %168 : vector<4x4x128xf32> to vector<16x128xf32>
    %170 = arith.truncf %169 : vector<16x128xf32> to vector<16x128xbf16>
    %c6_179 = arith.constant 6 : index
    %c0_180 = arith.constant 0 : index
    %c0_181 = arith.constant 0 : index
    %171 = vector.load %arg6[%c6_179, %c0_180, %c0_181] : memref<9x128x256xbf16, #tpu.memory_space<vmem>>, vector<1x128x256xbf16>
    %172 = vector.shape_cast %171 : vector<1x128x256xbf16> to vector<128x256xbf16>
    %cst_182 = arith.constant dense<0.000000e+00> : vector<16x256xf32>
    %173 = tpu.matmul %170, %172, %cst_182 {dimension_numbers = #tpu.dot_dimension_numbers<[1], [0], [0], [1], [0, 0, 1, 1], [], []>} : vector<16x128xbf16>, vector<128x256xbf16>, vector<16x256xf32> -> vector<16x256xf32>
    %174 = arith.addf %167, %173 : vector<16x256xf32>
    %c2_183 = arith.constant 2 : index
    %c1_184 = arith.constant 1 : index
    %c0_185 = arith.constant 0 : index
    %175 = vector.load %arg24[%c2_183, %c1_184, %c0_185] : memref<6x6x128xf32, #tpu.memory_space<vmem>>, vector<4x4x128xf32>
    %176 = vector.shape_cast %175 : vector<4x4x128xf32> to vector<16x128xf32>
    %177 = arith.truncf %176 : vector<16x128xf32> to vector<16x128xbf16>
    %c7_186 = arith.constant 7 : index
    %c0_187 = arith.constant 0 : index
    %c0_188 = arith.constant 0 : index
    %178 = vector.load %arg6[%c7_186, %c0_187, %c0_188] : memref<9x128x256xbf16, #tpu.memory_space<vmem>>, vector<1x128x256xbf16>
    %179 = vector.shape_cast %178 : vector<1x128x256xbf16> to vector<128x256xbf16>
    %cst_189 = arith.constant dense<0.000000e+00> : vector<16x256xf32>
    %180 = tpu.matmul %177, %179, %cst_189 {dimension_numbers = #tpu.dot_dimension_numbers<[1], [0], [0], [1], [0, 0, 1, 1], [], []>} : vector<16x128xbf16>, vector<128x256xbf16>, vector<16x256xf32> -> vector<16x256xf32>
    %181 = arith.addf %174, %180 : vector<16x256xf32>
    %c2_190 = arith.constant 2 : index
    %c2_191 = arith.constant 2 : index
    %c0_192 = arith.constant 0 : index
    %182 = vector.load %arg24[%c2_190, %c2_191, %c0_192] : memref<6x6x128xf32, #tpu.memory_space<vmem>>, vector<4x4x128xf32>
    %183 = vector.shape_cast %182 : vector<4x4x128xf32> to vector<16x128xf32>
    %184 = arith.truncf %183 : vector<16x128xf32> to vector<16x128xbf16>
    %c8_193 = arith.constant 8 : index
    %c0_194 = arith.constant 0 : index
    %c0_195 = arith.constant 0 : index
    %185 = vector.load %arg6[%c8_193, %c0_194, %c0_195] : memref<9x128x256xbf16, #tpu.memory_space<vmem>>, vector<1x128x256xbf16>
    %186 = vector.shape_cast %185 : vector<1x128x256xbf16> to vector<128x256xbf16>
    %cst_196 = arith.constant dense<0.000000e+00> : vector<16x256xf32>
    %187 = tpu.matmul %184, %186, %cst_196 {dimension_numbers = #tpu.dot_dimension_numbers<[1], [0], [0], [1], [0, 0, 1, 1], [], []>} : vector<16x128xbf16>, vector<128x256xbf16>, vector<16x256xf32> -> vector<16x256xf32>
    %188 = arith.addf %181, %187 : vector<16x256xf32>
    %c0_197 = arith.constant 0 : index
    %c0_198 = arith.constant 0 : index
    %189 = vector.load %arg7[%c0_197, %c0_198] : memref<1x256xf32, #tpu.memory_space<vmem>>, vector<1x256xf32>
    %190 = vector.broadcast %189 : vector<1x256xf32> to vector<16x256xf32>
    %191 = arith.addf %188, %190 : vector<16x256xf32>
    %192 = vector.extract_strided_slice %191 {offsets = [0, 0], sizes = [1, 256], strides = [1, 1]} : vector<16x256xf32> to vector<1x256xf32>
    %193 = vector.extract_strided_slice %191 {offsets = [2, 0], sizes = [1, 256], strides = [1, 1]} : vector<16x256xf32> to vector<1x256xf32>
    %194 = vector.extract_strided_slice %191 {offsets = [8, 0], sizes = [1, 256], strides = [1, 1]} : vector<16x256xf32> to vector<1x256xf32>
    %195 = vector.extract_strided_slice %191 {offsets = [10, 0], sizes = [1, 256], strides = [1, 1]} : vector<16x256xf32> to vector<1x256xf32>
    %196 = tpu.concatenate %192, %193, %194, %195 in 0 : vector<1x256xf32>, vector<1x256xf32>, vector<1x256xf32>, vector<1x256xf32> -> vector<4x256xf32>
    %cst_199 = arith.constant 0.000000e+00 : f32
    %197 = vector.broadcast %cst_199 : f32 to vector<4x256xf32>
    %198 = arith.maximumf %196, %197 : vector<4x256xf32>
    %199 = arith.truncf %198 : vector<4x256xf32> to vector<4x256xbf16>
    %cst_200 = arith.constant 0.000000e+00 : f32
    %200 = vector.broadcast %cst_200 : f32 to vector<4x4x256xf32>
    %c0_201 = arith.constant 0 : index
    %c0_202 = arith.constant 0 : index
    %c0_203 = arith.constant 0 : index
    %201 = vector.load %arg25[%c0_201, %c0_202, %c0_203] : memref<4x4x256xf32, #tpu.memory_space<vmem>>, vector<4x4x256xf32>
    tpu.vector_store %arg25[%c0_201, %c0_202, %c0_203], %200 {strides = array<i32>} : memref<4x4x256xf32, #tpu.memory_space<vmem>>, vector<4x4x256xf32>,
    %202 = vector.shape_cast %198 : vector<4x256xf32> to vector<2x2x256xf32>
    %c1_204 = arith.constant 1 : index
    %c1_205 = arith.constant 1 : index
    %c0_206 = arith.constant 0 : index
    %203 = vector.load %arg25[%c1_204, %c1_205, %c0_206] : memref<4x4x256xf32, #tpu.memory_space<vmem>>, vector<2x2x256xf32>
    tpu.vector_store %arg25[%c1_204, %c1_205, %c0_206], %202 {strides = array<i32>} : memref<4x4x256xf32, #tpu.memory_space<vmem>>, vector<2x2x256xf32>,
    %c0_207 = arith.constant 0 : index
    %c0_208 = arith.constant 0 : index
    %204 = vector.load %arg8[%c0_207, %c0_208] : memref<256x128xbf16, #tpu.memory_space<vmem>>, vector<256x128xbf16>
    %cst_209 = arith.constant dense<0.000000e+00> : vector<4x128xf32>
    %205 = tpu.matmul %199, %204, %cst_209 {dimension_numbers = #tpu.dot_dimension_numbers<[1], [0], [0], [1], [0, 0, 1, 1], [], []>} : vector<4x256xbf16>, vector<256x128xbf16>, vector<4x128xf32> -> vector<4x128xf32>
    %c0_210 = arith.constant 0 : index
    %c0_211 = arith.constant 0 : index
    %206 = vector.load %arg9[%c0_210, %c0_211] : memref<1x128xf32, #tpu.memory_space<vmem>>, vector<1x128xf32>
    %207 = vector.broadcast %206 : vector<1x128xf32> to vector<4x128xf32>
    %208 = arith.addf %205, %207 : vector<4x128xf32>
    %cst_212 = arith.constant 0.000000e+00 : f32
    %209 = vector.broadcast %cst_212 : f32 to vector<4x128xf32>
    %210 = arith.maximumf %208, %209 : vector<4x128xf32>
    %211 = arith.truncf %210 : vector<4x128xf32> to vector<4x128xbf16>
    %cst_213 = arith.constant 0.000000e+00 : f32
    %212 = vector.broadcast %cst_213 : f32 to vector<1x256xf32>
    %213 = vector.extract_strided_slice %211 {offsets = [0, 0], sizes = [1, 128], strides = [1, 1]} : vector<4x128xbf16> to vector<1x128xbf16>
    %c0_214 = arith.constant 0 : index
    %c0_215 = arith.constant 0 : index
    %c0_216 = arith.constant 0 : index
    %214 = vector.load %arg10[%c0_214, %c0_215, %c0_216] : memref<4x128x256xbf16, #tpu.memory_space<vmem>>, vector<1x128x256xbf16>
    %215 = vector.shape_cast %214 : vector<1x128x256xbf16> to vector<128x256xbf16>
    %cst_217 = arith.constant dense<0.000000e+00> : vector<1x256xf32>
    %216 = tpu.matmul %213, %215, %cst_217 {dimension_numbers = #tpu.dot_dimension_numbers<[1], [0], [0], [1], [0, 0, 1, 1], [], []>} : vector<1x128xbf16>, vector<128x256xbf16>, vector<1x256xf32> -> vector<1x256xf32>
    %217 = arith.addf %212, %216 : vector<1x256xf32>
    %218 = vector.extract_strided_slice %211 {offsets = [1, 0], sizes = [1, 128], strides = [1, 1]} : vector<4x128xbf16> to vector<1x128xbf16>
    %c1_218 = arith.constant 1 : index
    %c0_219 = arith.constant 0 : index
    %c0_220 = arith.constant 0 : index
    %219 = vector.load %arg10[%c1_218, %c0_219, %c0_220] : memref<4x128x256xbf16, #tpu.memory_space<vmem>>, vector<1x128x256xbf16>
    %220 = vector.shape_cast %219 : vector<1x128x256xbf16> to vector<128x256xbf16>
    %cst_221 = arith.constant dense<0.000000e+00> : vector<1x256xf32>
    %221 = tpu.matmul %218, %220, %cst_221 {dimension_numbers = #tpu.dot_dimension_numbers<[1], [0], [0], [1], [0, 0, 1, 1], [], []>} : vector<1x128xbf16>, vector<128x256xbf16>, vector<1x256xf32> -> vector<1x256xf32>
    %222 = arith.addf %217, %221 : vector<1x256xf32>
    %223 = vector.extract_strided_slice %211 {offsets = [2, 0], sizes = [1, 128], strides = [1, 1]} : vector<4x128xbf16> to vector<1x128xbf16>
    %c2_222 = arith.constant 2 : index
    %c0_223 = arith.constant 0 : index
    %c0_224 = arith.constant 0 : index
    %224 = vector.load %arg10[%c2_222, %c0_223, %c0_224] : memref<4x128x256xbf16, #tpu.memory_space<vmem>>, vector<1x128x256xbf16>
    %225 = vector.shape_cast %224 : vector<1x128x256xbf16> to vector<128x256xbf16>
    %cst_225 = arith.constant dense<0.000000e+00> : vector<1x256xf32>
    %226 = tpu.matmul %223, %225, %cst_225 {dimension_numbers = #tpu.dot_dimension_numbers<[1], [0], [0], [1], [0, 0, 1, 1], [], []>} : vector<1x128xbf16>, vector<128x256xbf16>, vector<1x256xf32> -> vector<1x256xf32>
    %227 = arith.addf %222, %226 : vector<1x256xf32>
    %228 = vector.extract_strided_slice %211 {offsets = [3, 0], sizes = [1, 128], strides = [1, 1]} : vector<4x128xbf16> to vector<1x128xbf16>
    %c3_226 = arith.constant 3 : index
    %c0_227 = arith.constant 0 : index
    %c0_228 = arith.constant 0 : index
    %229 = vector.load %arg10[%c3_226, %c0_227, %c0_228] : memref<4x128x256xbf16, #tpu.memory_space<vmem>>, vector<1x128x256xbf16>
    %230 = vector.shape_cast %229 : vector<1x128x256xbf16> to vector<128x256xbf16>
    %cst_229 = arith.constant dense<0.000000e+00> : vector<1x256xf32>
    %231 = tpu.matmul %228, %230, %cst_229 {dimension_numbers = #tpu.dot_dimension_numbers<[1], [0], [0], [1], [0, 0, 1, 1], [], []>} : vector<1x128xbf16>, vector<128x256xbf16>, vector<1x256xf32> -> vector<1x256xf32>
    %232 = arith.addf %227, %231 : vector<1x256xf32>
    %c0_230 = arith.constant 0 : index
    %c0_231 = arith.constant 0 : index
    %233 = vector.load %arg11[%c0_230, %c0_231] : memref<1x256xf32, #tpu.memory_space<vmem>>, vector<1x256xf32>
    %234 = arith.addf %232, %233 : vector<1x256xf32>
    %cst_232 = arith.constant 0.000000e+00 : f32
    %235 = vector.broadcast %cst_232 : f32 to vector<1x256xf32>
    %236 = arith.maximumf %234, %235 : vector<1x256xf32>
    %c0_233 = arith.constant 0 : index
    %c0_234 = arith.constant 0 : index
    %c0_235 = arith.constant 0 : index
    %237 = vector.load %arg18[%c0_233, %c0_234, %c0_235] : memref<1x1x256xf32, #tpu.memory_space<vmem>>, vector<1x1x256xf32>
    %238 = vector.shape_cast %237 : vector<1x1x256xf32> to vector<1x256xf32>
    %239 = vector.shape_cast %236 : vector<1x256xf32> to vector<1x1x256xf32>
    tpu.vector_store %arg18[%c0_233, %c0_234, %c0_235], %239 {strides = array<i32>} : memref<1x1x256xf32, #tpu.memory_space<vmem>>, vector<1x1x256xf32>,
    %cst_236 = arith.constant 0.000000e+00 : f32
    %240 = vector.broadcast %cst_236 : f32 to vector<4x6xf32>
    %c0_237 = arith.constant 0 : index
    %c0_238 = arith.constant 0 : index
    %c0_239 = arith.constant 0 : index
    %241 = vector.load %arg25[%c0_237, %c0_238, %c0_239] : memref<4x4x256xf32, #tpu.memory_space<vmem>>, vector<2x2x256xf32>
    %242 = vector.shape_cast %241 : vector<2x2x256xf32> to vector<4x256xf32>
    %243 = arith.truncf %242 : vector<4x256xf32> to vector<4x256xbf16>
    %c0_240 = arith.constant 0 : index
    %c0_241 = arith.constant 0 : index
    %c0_242 = arith.constant 0 : index
    %244 = vector.load %arg14[%c0_240, %c0_241, %c0_242] : memref<9x256x6xbf16, #tpu.memory_space<vmem>>, vector<1x256x6xbf16>
    %245 = vector.shape_cast %244 : vector<1x256x6xbf16> to vector<256x6xbf16>
    %cst_243 = arith.constant dense<0.000000e+00> : vector<4x6xf32>
    %246 = tpu.matmul %243, %245, %cst_243 {dimension_numbers = #tpu.dot_dimension_numbers<[1], [0], [0], [1], [0, 0, 1, 1], [], []>} : vector<4x256xbf16>, vector<256x6xbf16>, vector<4x6xf32> -> vector<4x6xf32>
    %247 = arith.addf %240, %246 : vector<4x6xf32>
    %c0_244 = arith.constant 0 : index
    %c1_245 = arith.constant 1 : index
    %c0_246 = arith.constant 0 : index
    %248 = vector.load %arg25[%c0_244, %c1_245, %c0_246] : memref<4x4x256xf32, #tpu.memory_space<vmem>>, vector<2x2x256xf32>
    %249 = vector.shape_cast %248 : vector<2x2x256xf32> to vector<4x256xf32>
    %250 = arith.truncf %249 : vector<4x256xf32> to vector<4x256xbf16>
    %c1_247 = arith.constant 1 : index
    %c0_248 = arith.constant 0 : index
    %c0_249 = arith.constant 0 : index
    %251 = vector.load %arg14[%c1_247, %c0_248, %c0_249] : memref<9x256x6xbf16, #tpu.memory_space<vmem>>, vector<1x256x6xbf16>
    %252 = vector.shape_cast %251 : vector<1x256x6xbf16> to vector<256x6xbf16>
    %cst_250 = arith.constant dense<0.000000e+00> : vector<4x6xf32>
    %253 = tpu.matmul %250, %252, %cst_250 {dimension_numbers = #tpu.dot_dimension_numbers<[1], [0], [0], [1], [0, 0, 1, 1], [], []>} : vector<4x256xbf16>, vector<256x6xbf16>, vector<4x6xf32> -> vector<4x6xf32>
    %254 = arith.addf %247, %253 : vector<4x6xf32>
    %c0_251 = arith.constant 0 : index
    %c2_252 = arith.constant 2 : index
    %c0_253 = arith.constant 0 : index
    %255 = vector.load %arg25[%c0_251, %c2_252, %c0_253] : memref<4x4x256xf32, #tpu.memory_space<vmem>>, vector<2x2x256xf32>
    %256 = vector.shape_cast %255 : vector<2x2x256xf32> to vector<4x256xf32>
    %257 = arith.truncf %256 : vector<4x256xf32> to vector<4x256xbf16>
    %c2_254 = arith.constant 2 : index
    %c0_255 = arith.constant 0 : index
    %c0_256 = arith.constant 0 : index
    %258 = vector.load %arg14[%c2_254, %c0_255, %c0_256] : memref<9x256x6xbf16, #tpu.memory_space<vmem>>, vector<1x256x6xbf16>
    %259 = vector.shape_cast %258 : vector<1x256x6xbf16> to vector<256x6xbf16>
    %cst_257 = arith.constant dense<0.000000e+00> : vector<4x6xf32>
    %260 = tpu.matmul %257, %259, %cst_257 {dimension_numbers = #tpu.dot_dimension_numbers<[1], [0], [0], [1], [0, 0, 1, 1], [], []>} : vector<4x256xbf16>, vector<256x6xbf16>, vector<4x6xf32> -> vector<4x6xf32>
    %261 = arith.addf %254, %260 : vector<4x6xf32>
    %c1_258 = arith.constant 1 : index
    %c0_259 = arith.constant 0 : index
    %c0_260 = arith.constant 0 : index
    %262 = vector.load %arg25[%c1_258, %c0_259, %c0_260] : memref<4x4x256xf32, #tpu.memory_space<vmem>>, vector<2x2x256xf32>
    %263 = vector.shape_cast %262 : vector<2x2x256xf32> to vector<4x256xf32>
    %264 = arith.truncf %263 : vector<4x256xf32> to vector<4x256xbf16>
    %c3_261 = arith.constant 3 : index
    %c0_262 = arith.constant 0 : index
    %c0_263 = arith.constant 0 : index
    %265 = vector.load %arg14[%c3_261, %c0_262, %c0_263] : memref<9x256x6xbf16, #tpu.memory_space<vmem>>, vector<1x256x6xbf16>
    %266 = vector.shape_cast %265 : vector<1x256x6xbf16> to vector<256x6xbf16>
    %cst_264 = arith.constant dense<0.000000e+00> : vector<4x6xf32>
    %267 = tpu.matmul %264, %266, %cst_264 {dimension_numbers = #tpu.dot_dimension_numbers<[1], [0], [0], [1], [0, 0, 1, 1], [], []>} : vector<4x256xbf16>, vector<256x6xbf16>, vector<4x6xf32> -> vector<4x6xf32>
    %268 = arith.addf %261, %267 : vector<4x6xf32>
    %c1_265 = arith.constant 1 : index
    %c1_266 = arith.constant 1 : index
    %c0_267 = arith.constant 0 : index
    %269 = vector.load %arg25[%c1_265, %c1_266, %c0_267] : memref<4x4x256xf32, #tpu.memory_space<vmem>>, vector<2x2x256xf32>
    %270 = vector.shape_cast %269 : vector<2x2x256xf32> to vector<4x256xf32>
    %271 = arith.truncf %270 : vector<4x256xf32> to vector<4x256xbf16>
    %c4_268 = arith.constant 4 : index
    %c0_269 = arith.constant 0 : index
    %c0_270 = arith.constant 0 : index
    %272 = vector.load %arg14[%c4_268, %c0_269, %c0_270] : memref<9x256x6xbf16, #tpu.memory_space<vmem>>, vector<1x256x6xbf16>
    %273 = vector.shape_cast %272 : vector<1x256x6xbf16> to vector<256x6xbf16>
    %cst_271 = arith.constant dense<0.000000e+00> : vector<4x6xf32>
    %274 = tpu.matmul %271, %273, %cst_271 {dimension_numbers = #tpu.dot_dimension_numbers<[1], [0], [0], [1], [0, 0, 1, 1], [], []>} : vector<4x256xbf16>, vector<256x6xbf16>, vector<4x6xf32> -> vector<4x6xf32>
    %275 = arith.addf %268, %274 : vector<4x6xf32>
    %c1_272 = arith.constant 1 : index
    %c2_273 = arith.constant 2 : index
    %c0_274 = arith.constant 0 : index
    %276 = vector.load %arg25[%c1_272, %c2_273, %c0_274] : memref<4x4x256xf32, #tpu.memory_space<vmem>>, vector<2x2x256xf32>
    %277 = vector.shape_cast %276 : vector<2x2x256xf32> to vector<4x256xf32>
    %278 = arith.truncf %277 : vector<4x256xf32> to vector<4x256xbf16>
    %c5_275 = arith.constant 5 : index
    %c0_276 = arith.constant 0 : index
    %c0_277 = arith.constant 0 : index
    %279 = vector.load %arg14[%c5_275, %c0_276, %c0_277] : memref<9x256x6xbf16, #tpu.memory_space<vmem>>, vector<1x256x6xbf16>
    %280 = vector.shape_cast %279 : vector<1x256x6xbf16> to vector<256x6xbf16>
    %cst_278 = arith.constant dense<0.000000e+00> : vector<4x6xf32>
    %281 = tpu.matmul %278, %280, %cst_278 {dimension_numbers = #tpu.dot_dimension_numbers<[1], [0], [0], [1], [0, 0, 1, 1], [], []>} : vector<4x256xbf16>, vector<256x6xbf16>, vector<4x6xf32> -> vector<4x6xf32>
    %282 = arith.addf %275, %281 : vector<4x6xf32>
    %c2_279 = arith.constant 2 : index
    %c0_280 = arith.constant 0 : index
    %c0_281 = arith.constant 0 : index
    %283 = vector.load %arg25[%c2_279, %c0_280, %c0_281] : memref<4x4x256xf32, #tpu.memory_space<vmem>>, vector<2x2x256xf32>
    %284 = vector.shape_cast %283 : vector<2x2x256xf32> to vector<4x256xf32>
    %285 = arith.truncf %284 : vector<4x256xf32> to vector<4x256xbf16>
    %c6_282 = arith.constant 6 : index
    %c0_283 = arith.constant 0 : index
    %c0_284 = arith.constant 0 : index
    %286 = vector.load %arg14[%c6_282, %c0_283, %c0_284] : memref<9x256x6xbf16, #tpu.memory_space<vmem>>, vector<1x256x6xbf16>
    %287 = vector.shape_cast %286 : vector<1x256x6xbf16> to vector<256x6xbf16>
    %cst_285 = arith.constant dense<0.000000e+00> : vector<4x6xf32>
    %288 = tpu.matmul %285, %287, %cst_285 {dimension_numbers = #tpu.dot_dimension_numbers<[1], [0], [0], [1], [0, 0, 1, 1], [], []>} : vector<4x256xbf16>, vector<256x6xbf16>, vector<4x6xf32> -> vector<4x6xf32>
    %289 = arith.addf %282, %288 : vector<4x6xf32>
    %c2_286 = arith.constant 2 : index
    %c1_287 = arith.constant 1 : index
    %c0_288 = arith.constant 0 : index
    %290 = vector.load %arg25[%c2_286, %c1_287, %c0_288] : memref<4x4x256xf32, #tpu.memory_space<vmem>>, vector<2x2x256xf32>
    %291 = vector.shape_cast %290 : vector<2x2x256xf32> to vector<4x256xf32>
    %292 = arith.truncf %291 : vector<4x256xf32> to vector<4x256xbf16>
    %c7_289 = arith.constant 7 : index
    %c0_290 = arith.constant 0 : index
    %c0_291 = arith.constant 0 : index
    %293 = vector.load %arg14[%c7_289, %c0_290, %c0_291] : memref<9x256x6xbf16, #tpu.memory_space<vmem>>, vector<1x256x6xbf16>
    %294 = vector.shape_cast %293 : vector<1x256x6xbf16> to vector<256x6xbf16>
    %cst_292 = arith.constant dense<0.000000e+00> : vector<4x6xf32>
    %295 = tpu.matmul %292, %294, %cst_292 {dimension_numbers = #tpu.dot_dimension_numbers<[1], [0], [0], [1], [0, 0, 1, 1], [], []>} : vector<4x256xbf16>, vector<256x6xbf16>, vector<4x6xf32> -> vector<4x6xf32>
    %296 = arith.addf %289, %295 : vector<4x6xf32>
    %c2_293 = arith.constant 2 : index
    %c2_294 = arith.constant 2 : index
    %c0_295 = arith.constant 0 : index
    %297 = vector.load %arg25[%c2_293, %c2_294, %c0_295] : memref<4x4x256xf32, #tpu.memory_space<vmem>>, vector<2x2x256xf32>
    %298 = vector.shape_cast %297 : vector<2x2x256xf32> to vector<4x256xf32>
    %299 = arith.truncf %298 : vector<4x256xf32> to vector<4x256xbf16>
    %c8_296 = arith.constant 8 : index
    %c0_297 = arith.constant 0 : index
    %c0_298 = arith.constant 0 : index
    %300 = vector.load %arg14[%c8_296, %c0_297, %c0_298] : memref<9x256x6xbf16, #tpu.memory_space<vmem>>, vector<1x256x6xbf16>
    %301 = vector.shape_cast %300 : vector<1x256x6xbf16> to vector<256x6xbf16>
    %cst_299 = arith.constant dense<0.000000e+00> : vector<4x6xf32>
    %302 = tpu.matmul %299, %301, %cst_299 {dimension_numbers = #tpu.dot_dimension_numbers<[1], [0], [0], [1], [0, 0, 1, 1], [], []>} : vector<4x256xbf16>, vector<256x6xbf16>, vector<4x6xf32> -> vector<4x6xf32>
    %303 = arith.addf %296, %302 : vector<4x6xf32>
    %c0_300 = arith.constant 0 : index
    %c0_301 = arith.constant 0 : index
    %304 = vector.load %arg15[%c0_300, %c0_301] : memref<1x6xf32, #tpu.memory_space<vmem>>, vector<1x6xf32>
    %305 = vector.broadcast %304 : vector<1x6xf32> to vector<4x6xf32>
    %306 = arith.addf %303, %305 : vector<4x6xf32>
    %c0_302 = arith.constant 0 : index
    %c0_303 = arith.constant 0 : index
    %c0_304 = arith.constant 0 : index
    %307 = vector.load %arg20[%c0_302, %c0_303, %c0_304] : memref<1x4x6xf32, #tpu.memory_space<vmem>>, vector<1x4x6xf32>
    %308 = vector.shape_cast %307 : vector<1x4x6xf32> to vector<4x6xf32>
    %309 = vector.shape_cast %306 : vector<4x6xf32> to vector<1x4x6xf32>
    tpu.vector_store %arg20[%c0_302, %c0_303, %c0_304], %309 {strides = array<i32>} : memref<1x4x6xf32, #tpu.memory_space<vmem>>, vector<1x4x6xf32>,
    %310 = arith.truncf %236 : vector<1x256xf32> to vector<1x256xbf16>
    %c0_305 = arith.constant 0 : index
    %c0_306 = arith.constant 0 : index
    %311 = vector.load %arg16[%c0_305, %c0_306] : memref<256x6xbf16, #tpu.memory_space<vmem>>, vector<256x6xbf16>
    %cst_307 = arith.constant dense<0.000000e+00> : vector<1x6xf32>
    %312 = tpu.matmul %310, %311, %cst_307 {dimension_numbers = #tpu.dot_dimension_numbers<[1], [0], [0], [1], [0, 0, 1, 1], [], []>} : vector<1x256xbf16>, vector<256x6xbf16>, vector<1x6xf32> -> vector<1x6xf32>
    %c0_308 = arith.constant 0 : index
    %c0_309 = arith.constant 0 : index
    %313 = vector.load %arg17[%c0_308, %c0_309] : memref<1x6xf32, #tpu.memory_space<vmem>>, vector<1x6xf32>
    %314 = arith.addf %312, %313 : vector<1x6xf32>
    %c0_310 = arith.constant 0 : index
    %c0_311 = arith.constant 0 : index
    %c0_312 = arith.constant 0 : index
    %315 = vector.load %arg21[%c0_310, %c0_311, %c0_312] : memref<1x1x6xf32, #tpu.memory_space<vmem>>, vector<1x1x6xf32>
    %316 = vector.shape_cast %315 : vector<1x1x6xf32> to vector<1x6xf32>
    %317 = vector.shape_cast %314 : vector<1x6xf32> to vector<1x1x6xf32>
    tpu.vector_store %arg21[%c0_310, %c0_311, %c0_312], %317 {strides = array<i32>} : memref<1x1x6xf32, #tpu.memory_space<vmem>>, vector<1x1x6xf32>,
    return
  }
  func.func @transform_0(%arg0: i32) -> (i32, i32, i32) {
    %c0_i32 = arith.constant 0 : i32
    %c0_i32_0 = arith.constant 0 : i32
    %c0_i32_1 = arith.constant 0 : i32
    return %arg0, %c0_i32, %c0_i32_0 : i32, i32, i32
  }
  func.func @transform_1(%arg0: i32) -> (i32, i32) {
    %c0_i32 = arith.constant 0 : i32
    %c0_i32_0 = arith.constant 0 : i32
    %c0_i32_1 = arith.constant 0 : i32
    return %c0_i32, %c0_i32_0 : i32, i32
  }
  func.func @transform_2(%arg0: i32) -> (i32, i32) {
    %c0_i32 = arith.constant 0 : i32
    %c0_i32_0 = arith.constant 0 : i32
    %c0_i32_1 = arith.constant 0 : i32
    return %c0_i32, %c0_i32_0 : i32, i32
  }
  func.func @transform_3(%arg0: i32) -> (i32, i32) {
    %c0_i32 = arith.constant 0 : i32
    %c0_i32_0 = arith.constant 0 : i32
    %c0_i32_1 = arith.constant 0 : i32
    return %c0_i32, %c0_i32_0 : i32, i32
  }
  func.func @transform_4(%arg0: i32) -> (i32, i32) {
    %c0_i32 = arith.constant 0 : i32
    %c0_i32_0 = arith.constant 0 : i32
    %c0_i32_1 = arith.constant 0 : i32
    return %c0_i32, %c0_i32_0 : i32, i32
  }
  func.func @transform_5(%arg0: i32) -> (i32, i32, i32) {
    %c0_i32 = arith.constant 0 : i32
    %c0_i32_0 = arith.constant 0 : i32
    %c0_i32_1 = arith.constant 0 : i32
    %c0_i32_2 = arith.constant 0 : i32
    return %c0_i32, %c0_i32_0, %c0_i32_1 : i32, i32, i32
  }
  func.func @transform_6(%arg0: i32) -> (i32, i32) {
    %c0_i32 = arith.constant 0 : i32
    %c0_i32_0 = arith.constant 0 : i32
    %c0_i32_1 = arith.constant 0 : i32
    return %c0_i32, %c0_i32_0 : i32, i32
  }
  func.func @transform_7(%arg0: i32) -> (i32, i32) {
    %c0_i32 = arith.constant 0 : i32
    %c0_i32_0 = arith.constant 0 : i32
    %c0_i32_1 = arith.constant 0 : i32
    return %c0_i32, %c0_i32_0 : i32, i32
  }
  func.func @transform_8(%arg0: i32) -> (i32, i32) {
    %c0_i32 = arith.constant 0 : i32
    %c0_i32_0 = arith.constant 0 : i32
    %c0_i32_1 = arith.constant 0 : i32
    return %c0_i32, %c0_i32_0 : i32, i32
  }
  func.func @transform_9(%arg0: i32) -> (i32, i32, i32) {
    %c0_i32 = arith.constant 0 : i32
    %c0_i32_0 = arith.constant 0 : i32
    %c0_i32_1 = arith.constant 0 : i32
    %c0_i32_2 = arith.constant 0 : i32
    return %c0_i32, %c0_i32_0, %c0_i32_1 : i32, i32, i32
  }
  func.func @transform_10(%arg0: i32) -> (i32, i32) {
    %c0_i32 = arith.constant 0 : i32
    %c0_i32_0 = arith.constant 0 : i32
    %c0_i32_1 = arith.constant 0 : i32
    return %c0_i32, %c0_i32_0 : i32, i32
  }
  func.func @transform_11(%arg0: i32) -> (i32, i32, i32) {
    %c0_i32 = arith.constant 0 : i32
    %c0_i32_0 = arith.constant 0 : i32
    %c0_i32_1 = arith.constant 0 : i32
    %c0_i32_2 = arith.constant 0 : i32
    return %c0_i32, %c0_i32_0, %c0_i32_1 : i32, i32, i32
  }
  func.func @transform_12(%arg0: i32) -> (i32, i32) {
    %c0_i32 = arith.constant 0 : i32
    %c0_i32_0 = arith.constant 0 : i32
    %c0_i32_1 = arith.constant 0 : i32
    return %c0_i32, %c0_i32_0 : i32, i32
  }
  func.func @transform_13(%arg0: i32) -> (i32, i32, i32) {
    %c0_i32 = arith.constant 0 : i32
    %c0_i32_0 = arith.constant 0 : i32
    %c0_i32_1 = arith.constant 0 : i32
    %c0_i32_2 = arith.constant 0 : i32
    return %c0_i32, %c0_i32_0, %c0_i32_1 : i32, i32, i32
  }
  func.func @transform_14(%arg0: i32) -> (i32, i32) {
    %c0_i32 = arith.constant 0 : i32
    %c0_i32_0 = arith.constant 0 : i32
    %c0_i32_1 = arith.constant 0 : i32
    return %c0_i32, %c0_i32_0 : i32, i32
  }
  func.func @transform_15(%arg0: i32) -> (i32, i32) {
    %c0_i32 = arith.constant 0 : i32
    %c0_i32_0 = arith.constant 0 : i32
    %c0_i32_1 = arith.constant 0 : i32
    return %c0_i32, %c0_i32_0 : i32, i32
  }
  func.func @transform_16(%arg0: i32) -> (i32, i32) {
    %c0_i32 = arith.constant 0 : i32
    %c0_i32_0 = arith.constant 0 : i32
    %c0_i32_1 = arith.constant 0 : i32
    return %c0_i32, %c0_i32_0 : i32, i32
  }
  func.func @transform_17(%arg0: i32) -> (i32, i32, i32) {
    %c0_i32 = arith.constant 0 : i32
    %c0_i32_0 = arith.constant 0 : i32
    %c0_i32_1 = arith.constant 0 : i32
    return %arg0, %c0_i32, %c0_i32_0 : i32, i32, i32
  }
  func.func @transform_18(%arg0: i32) -> (i32, i32, i32) {
    %c0_i32 = arith.constant 0 : i32
    %c0_i32_0 = arith.constant 0 : i32
    %c0_i32_1 = arith.constant 0 : i32
    return %arg0, %c0_i32, %c0_i32_0 : i32, i32, i32
  }
  func.func @transform_19(%arg0: i32) -> (i32, i32, i32) {
    %c0_i32 = arith.constant 0 : i32
    %c0_i32_0 = arith.constant 0 : i32
    %c0_i32_1 = arith.constant 0 : i32
    return %arg0, %c0_i32, %c0_i32_0 : i32, i32, i32
  }
  func.func @transform_20(%arg0: i32) -> (i32, i32, i32) {
    %c0_i32 = arith.constant 0 : i32
    %c0_i32_0 = arith.constant 0 : i32
    %c0_i32_1 = arith.constant 0 : i32
    return %arg0, %c0_i32, %c0_i32_0 : i32, i32, i32
  }
}

</mosaic_0001>

<llo_original>
// kernel: faceboxes_s_forward.2
$region0: #{faceboxes_s_forward.2}
  #allocation0 [shape = 'u32[]', space=smem, size = 0x4, offset = 0x4, fixed_abs, tag = 'smem constant byte address 0x4 - core index']
  #allocation1 [shape = 'u32[72,128]{1,0:T(1,128)}', space=vmem, size = 0x9000, scoped, tag = 'internal scratch']
  #allocation2 [shape = 'f32[4,17,17,48]{3,2,1,0:T(8,128)}', space=vmem, size = 0xcc000, scoped, tag = 'scratch operand']
  %s0 = inlined_call_operand.vmem [shape: bf16[2,1024,256], index: 0, kind: input, shape index: {}]
  %s1 = inlined_call_operand.vmem [shape: bf16[256,48], index: 1, kind: input, shape index: {}]
  %s2 = inlined_call_operand.vmem [shape: f32[1,48], index: 2, kind: input, shape index: {}]
  %s3 = inlined_call_operand.vmem [shape: bf16[2,16,16,48], index: 3, kind: output, shape index: {}]
  %s4 = sld [smem:[#allocation0]]
  $region45: #{faceboxes_s_forward.2} parent=0
    _
  %s6 = ssub.s32 1, %s4
  %s7 = scalar_select 0, %s6, %s4
  loop: start=0, step=1, limit=4
  $region2: #{faceboxes_s_forward.2} parent=0 // loop_pre_header
    _
  $region3: #{faceboxes_s_forward.2} parent=0 // loop_header
    %s9 = sphi 0, %s13
    %p10 = scmp.ge.s32.totalorder %s9, 4
    %s19 = sphi 0, %s21
    %s22 = sphi 0, %s19
    %s23 = sphi 0, %s22
    %s39 = sphi 0, %s23
    %s43 = sphi 0, %s43
    %s45 = sphi 0, %s43
    %s46 = sphi 0, %s45
    %s60 = sphi 0, %s46
    %s64 = sphi 0, %s64
    %s66 = sphi 0, %s64
    %s67 = sphi 0, %s66
    %s81 = sphi 0, %s67
    %s87 = sphi 0, %s89
    %s90 = sphi 0, %s87
    %s91 = sphi 0, %s90
    %s107 = sphi 0, %s91
  $region4: #{faceboxes_s_forward.2} parent=0 // loop_header_branch
    %12 = sbr.rel (%p10) target = $region8
  $region5: #{faceboxes_s_forward.2} parent=0 // loop_body
    %s14 = ssub.s32 %s9, 1
    %s15 = ssub.s32 %s9, 2
    %s16 = sadd.s32 %s9, 1
    %s17 = ssub.s32 %s9, %s16
    %p18 = scmp.eq.s32.totalorder %s17, 0
    %s20 = sadd.s32 %s19, 1
    %s21 = scalar_select %p18, %s19, %s20
    %p24 = pneg %p18
    %p25 = scmp.eq.s32.totalorder %s9, 1
    %p26 = por %p24, %p25
    %p27 = scmp.ne.s32.totalorder %s19, %s22
    %p28 = scmp.eq.s32.totalorder %s9, 0
    %p29 = por %p27, %p28
    %p30 = scmp.ne.s32.totalorder %s19, %s22
    %p31 = scmp.eq.s32.totalorder %s14, 1
    %p32 = por %p30, %p31
    %p33 = scmp.ne.s32.totalorder %s22, %s23
    %p34 = scmp.eq.s32.totalorder %s14, 0
    %p35 = por %p33, %p34
    %p36 = scmp.ne.s32.totalorder %s22, %s23
    %p37 = scmp.eq.s32.totalorder %s15, 1
    %p38 = por %p36, %p37
    %p40 = scmp.ne.s32.totalorder %s23, %s39
    %p41 = scmp.eq.s32.totalorder %s15, 0
    %p42 = por %p40, %p41
    %s44 = sadd.s32 %s43, 1
    %p47 = scmp.eq.s32.totalorder %s9, 1
    %p48 = scmp.ne.s32.totalorder %s43, %s45
    %p49 = scmp.eq.s32.totalorder %s9, 0
    %p50 = por %p48, %p49
    %p51 = scmp.ne.s32.totalorder %s43, %s45
    %p52 = scmp.eq.s32.totalorder %s14, 1
    %p53 = por %p51, %p52
    %p54 = scmp.ne.s32.totalorder %s45, %s46
    %p55 = scmp.eq.s32.totalorder %s14, 0
    %p56 = por %p54, %p55
    %p57 = scmp.ne.s32.totalorder %s45, %s46
    %p58 = scmp.eq.s32.totalorder %s15, 1
    %p59 = por %p57, %p58
    %p61 = scmp.ne.s32.totalorder %s46, %s60
    %p62 = scmp.eq.s32.totalorder %s15, 0
    %p63 = por %p61, %p62
    %s65 = sadd.s32 %s64, 1
    %p68 = scmp.eq.s32.totalorder %s9, 1
    %p69 = scmp.ne.s32.totalorder %s64, %s66
    %p70 = scmp.eq.s32.totalorder %s9, 0
    %p71 = por %p69, %p70
    %p72 = scmp.ne.s32.totalorder %s64, %s66
    %p73 = scmp.eq.s32.totalorder %s14, 1
    %p74 = por %p72, %p73
    %p75 = scmp.ne.s32.totalorder %s66, %s67
    %p76 = scmp.eq.s32.totalorder %s14, 0
    %p77 = por %p75, %p76
    %p78 = scmp.ne.s32.totalorder %s66, %s67
    %p79 = scmp.eq.s32.totalorder %s15, 1
    %p80 = por %p78, %p79
    %p82 = scmp.ne.s32.totalorder %s67, %s81
    %p83 = scmp.eq.s32.totalorder %s15, 0
    %p84 = por %p82, %p83
    %s85 = ssub.s32 %s9, %s16
    %p86 = scmp.eq.s32.totalorder %s85, 0
    %s88 = sadd.s32 %s87, 1
    %s89 = scalar_select %p86, %s87, %s88
    %p92 = pneg %p86
    %p93 = scmp.eq.s32.totalorder %s9, 1
    %p94 = por %p92, %p93
    %p95 = scmp.ne.s32.totalorder %s87, %s90
    %p96 = scmp.eq.s32.totalorder %s9, 0
    %p97 = por %p95, %p96
    %p98 = scmp.ne.s32.totalorder %s87, %s90
    %p99 = scmp.eq.s32.totalorder %s14, 1
    %p100 = por %p98, %p99
    %p101 = scmp.ne.s32.totalorder %s90, %s91
    %p102 = scmp.eq.s32.totalorder %s14, 0
    %p103 = por %p101, %p102
    %p104 = scmp.ne.s32.totalorder %s90, %s91
    %p105 = scmp.eq.s32.totalorder %s15, 1
    %p106 = por %p104, %p105
    %p108 = scmp.ne.s32.totalorder %s91, %s107
    %p109 = scmp.eq.s32.totalorder %s15, 0
    %p110 = por %p108, %p109
    %p111 = scmp.le.s32.totalorder 1, %s9
    %p112 = scmp.lt.s32.totalorder %s9, 3
    %p113 = pnand %p111, %p112
    %p114 = pneg %p113
    // Predicated region
    $region9: #{faceboxes_s_forward.2} parent=5 // pred_check
      _
    $region10: #{faceboxes_s_forward.2} parent=5 // pred_check_branch
      %116 = sbr.rel (%p113) target = $region12
    $region11: #{faceboxes_s_forward.2} parent=5 // pred_region
      %s117 = ssub.s32 %s9, 1
      // Predicated region
      $region13: #{faceboxes_s_forward.2} parent=11 // pred_check
        %p118 = pneg %p56
      $region14: #{faceboxes_s_forward.2} parent=11 // pred_check_branch
        %120 = sbr.rel (%p118) target = $region16
      $region15: #{faceboxes_s_forward.2} parent=11 // pred_region
        _
      $region16: #{faceboxes_s_forward.2} parent=11 // pred_fallthru
        _
      // Predicated region
      $region17: #{faceboxes_s_forward.2} parent=11 // pred_check
        %p121 = pneg %p77
      $region18: #{faceboxes_s_forward.2} parent=11 // pred_check_branch
        %123 = sbr.rel (%p121) target = $region20
      $region19: #{faceboxes_s_forward.2} parent=11 // pred_region
        _
      $region20: #{faceboxes_s_forward.2} parent=11 // pred_fallthru
        _
    $region12: #{faceboxes_s_forward.2} parent=5 // pred_fallthru
      _
    %p124 = scmp.lt.s32.totalorder %s9, 2
    // Predicated region
    $region21: #{faceboxes_s_forward.2} parent=5 // pred_check
      %p125 = pneg %p124
    $region22: #{faceboxes_s_forward.2} parent=5 // pred_check_branch
      %127 = sbr.rel (%p125) target = $region24
    $region23: #{faceboxes_s_forward.2} parent=5 // pred_region
      // Predicated region
      $region25: #{faceboxes_s_forward.2} parent=23 // pred_check
        %p128 = pneg %p29
      $region26: #{faceboxes_s_forward.2} parent=23 // pred_check_branch
        %130 = sbr.rel (%p128) target = $region28
      $region27: #{faceboxes_s_forward.2} parent=23 // pred_region
        %p131 = scmp.lt.s32.totalorder %s9, 1
        %s132 = scalar_select %p131, %s9, 1
        %s133 = smul.addr %s132, 256
        %s134 = smul.addr %s133, 4
        %s135 = scalar_lea.vmem %s0, %s134
      $region28: #{faceboxes_s_forward.2} parent=23 // pred_fallthru
        _
    $region24: #{faceboxes_s_forward.2} parent=5 // pred_fallthru
      _
    %p136 = scmp.le.s32.totalorder 1, %s9
    %p137 = scmp.lt.s32.totalorder %s9, 3
    %p138 = pnand %p136, %p137
    %p139 = pneg %p138
    // Predicated region
    $region29: #{faceboxes_s_forward.2} parent=5 // pred_check
      _
    $region30: #{faceboxes_s_forward.2} parent=5 // pred_check_branch
      %141 = sbr.rel (%p138) target = $region32
    $region31: #{faceboxes_s_forward.2} parent=5 // pred_region
      %s142 = ssub.s32 %s9, 1
      %p143 = scmp.lt.s32.totalorder %s14, 1
      %s144 = scalar_select %p143, %s14, 1
      %s145 = smul.addr %s144, 256
      %s146 = smul.addr %s145, 4
      %s147 = scalar_lea.vmem %s0, %s146
      %p148 = pneg %p35
      %p149 = pneg %p32
      %p150 = pneg %p56
      %p151 = pneg %p53
      %p152 = pneg %p77
      %p153 = pneg %p74
      %p154 = pneg %p103
      %p155 = pneg %p100
      %p156 = scmp.lt.s32.totalorder %s14, 1
      %s157 = scalar_select %p156, %s14, 1
      %s158 = smul.addr %s157, 32
      %s159 = smul.addr %s158, 4
      %s160 = scalar_lea.vmem %s3, %s159
      %p161 = scmp.lt.s32.totalorder %s14, 1
      %s162 = scalar_select %p161, %s14, 1
      %s163 = smul.addr %s162, 256
      %s164 = smul.addr %s163, 4
      %s165 = scalar_lea.vmem %s0, %s164
      %p166 = scmp.lt.s32.totalorder %s14, 1
      %s167 = scalar_select %p166, %s14, 1
      %s168 = smul.addr %s167, 32
      %s169 = smul.addr %s168, 4
      %s170 = scalar_lea.vmem %s3, %s169
      %v171 = vld [vmem:[%s165] sm:$0xff]
      %v172 = vld [vmem:[%s165 + $0x8] sm:$0xff]
      %v173 = vld [vmem:[%s165 + $0x10] sm:$0xff]
      %v174 = vld [vmem:[%s165 + $0x18] sm:$0xff]
      %v175 = vld [vmem:[%s165 + $0x20] sm:$0xff]
      %v176 = vld [vmem:[%s165 + $0x28] sm:$0xff]
      %v177 = vld [vmem:[%s165 + $0x30] sm:$0xff]
      %v178 = vld [vmem:[%s165 + $0x38] sm:$0xff]
      %v179 = vld [vmem:[%s165 + $0x40] sm:$0xff]
      %v180 = vld [vmem:[%s165 + $0x48] sm:$0xff]
      %v181 = vld [vmem:[%s165 + $0x50] sm:$0xff]
      %v182 = vld [vmem:[%s165 + $0x58] sm:$0xff]
      %v183 = vld [vmem:[%s165 + $0x60] sm:$0xff]
      %v184 = vld [vmem:[%s165 + $0x68] sm:$0xff]
      %v185 = vld [vmem:[%s165 + $0x70] sm:$0xff]
      %v186 = vld [vmem:[%s165 + $0x78] sm:$0xff]
      %v187 = vld [vmem:[%s165 + $0x80] sm:$0xff]
      %v188 = vld [vmem:[%s165 + $0x88] sm:$0xff]
      %v189 = vld [vmem:[%s165 + $0x90] sm:$0xff]
      %v190 = vld [vmem:[%s165 + $0x98] sm:$0xff]
      %v191 = vld [vmem:[%s165 + $0xa0] sm:$0xff]
      %v192 = vld [vmem:[%s165 + $0xa8] sm:$0xff]
      %v193 = vld [vmem:[%s165 + $0xb0] sm:$0xff]
      %v194 = vld [vmem:[%s165 + $0xb8] sm:$0xff]
      %v195 = vld [vmem:[%s165 + $0xc0] sm:$0xff]
      %v196 = vld [vmem:[%s165 + $0xc8] sm:$0xff]
      %v197 = vld [vmem:[%s165 + $0xd0] sm:$0xff]
      %v198 = vld [vmem:[%s165 + $0xd8] sm:$0xff]
      %v199 = vld [vmem:[%s165 + $0xe0] sm:$0xff]
      %v200 = vld [vmem:[%s165 + $0xe8] sm:$0xff]
      %v201 = vld [vmem:[%s165 + $0xf0] sm:$0xff]
      %v202 = vld [vmem:[%s165 + $0xf8] sm:$0xff]
      %v203 = vld [vmem:[%s165 + $0x100] sm:$0xff]
      %v204 = vld [vmem:[%s165 + $0x108] sm:$0xff]
      %v205 = vld [vmem:[%s165 + $0x110] sm:$0xff]
      %v206 = vld [vmem:[%s165 + $0x118] sm:$0xff]
      %v207 = vld [vmem:[%s165 + $0x120] sm:$0xff]
      %v208 = vld [vmem:[%s165 + $0x128] sm:$0xff]
      %v209 = vld [vmem:[%s165 + $0x130] sm:$0xff]
      %v210 = vld [vmem:[%s165 + $0x138] sm:$0xff]
      %v211 = vld [vmem:[%s165 + $0x140] sm:$0xff]
      %v212 = vld [vmem:[%s165 + $0x148] sm:$0xff]
      %v213 = vld [vmem:[%s165 + $0x150] sm:$0xff]
      %v214 = vld [vmem:[%s165 + $0x158] sm:$0xff]
      %v215 = vld [vmem:[%s165 + $0x160] sm:$0xff]
      %v216 = vld [vmem:[%s165 + $0x168] sm:$0xff]
      %v217 = vld [vmem:[%s165 + $0x170] sm:$0xff]
      %v218 = vld [vmem:[%s165 + $0x178] sm:$0xff]
      %v219 = vld [vmem:[%s165 + $0x180] sm:$0xff]
      %v220 = vld [vmem:[%s165 + $0x188] sm:$0xff]
      %v221 = vld [vmem:[%s165 + $0x190] sm:$0xff]
      %v222 = vld [vmem:[%s165 + $0x198] sm:$0xff]
      %v223 = vld [vmem:[%s165 + $0x1a0] sm:$0xff]
      %v224 = vld [vmem:[%s165 + $0x1a8] sm:$0xff]
      %v225 = vld [vmem:[%s165 + $0x1b0] sm:$0xff]
      %v226 = vld [vmem:[%s165 + $0x1b8] sm:$0xff]
      %v227 = vld [vmem:[%s165 + $0x1c0] sm:$0xff]
      %v228 = vld [vmem:[%s165 + $0x1c8] sm:$0xff]
      %v229 = vld [vmem:[%s165 + $0x1d0] sm:$0xff]
      %v230 = vld [vmem:[%s165 + $0x1d8] sm:$0xff]
      %v231 = vld [vmem:[%s165 + $0x1e0] sm:$0xff]
      %v232 = vld [vmem:[%s165 + $0x1e8] sm:$0xff]
      %v233 = vld [vmem:[%s165 + $0x1f0] sm:$0xff]
      %v234 = vld [vmem:[%s165 + $0x1f8] sm:$0xff]
      %v235 = vld [vmem:[%s165 + $0x200] sm:$0xff]
      %v236 = vld [vmem:[%s165 + $0x208] sm:$0xff]
      %v237 = vld [vmem:[%s165 + $0x210] sm:$0xff]
      %v238 = vld [vmem:[%s165 + $0x218] sm:$0xff]
      %v239 = vld [vmem:[%s165 + $0x220] sm:$0xff]
      %v240 = vld [vmem:[%s165 + $0x228] sm:$0xff]
      %v241 = vld [vmem:[%s165 + $0x230] sm:$0xff]
      %v242 = vld [vmem:[%s165 + $0x238] sm:$0xff]
      %v243 = vld [vmem:[%s165 + $0x240] sm:$0xff]
      %v244 = vld [vmem:[%s165 + $0x248] sm:$0xff]
      %v245 = vld [vmem:[%s165 + $0x250] sm:$0xff]
      %v246 = vld [vmem:[%s165 + $0x258] sm:$0xff]
      %v247 = vld [vmem:[%s165 + $0x260] sm:$0xff]
      %v248 = vld [vmem:[%s165 + $0x268] sm:$0xff]
      %v249 = vld [vmem:[%s165 + $0x270] sm:$0xff]
      %v250 = vld [vmem:[%s165 + $0x278] sm:$0xff]
      %v251 = vld [vmem:[%s165 + $0x280] sm:$0xff]
      %v252 = vld [vmem:[%s165 + $0x288] sm:$0xff]
      %v253 = vld [vmem:[%s165 + $0x290] sm:$0xff]
      %v254 = vld [vmem:[%s165 + $0x298] sm:$0xff]
      %v255 = vld [vmem:[%s165 + $0x2a0] sm:$0xff]
      %v256 = vld [vmem:[%s165 + $0x2a8] sm:$0xff]
      %v257 = vld [vmem:[%s165 + $0x2b0] sm:$0xff]
      %v258 = vld [vmem:[%s165 + $0x2b8] sm:$0xff]
      %v259 = vld [vmem:[%s165 + $0x2c0] sm:$0xff]
      %v260 = vld [vmem:[%s165 + $0x2c8] sm:$0xff]
      %v261 = vld [vmem:[%s165 + $0x2d0] sm:$0xff]
      %v262 = vld [vmem:[%s165 + $0x2d8] sm:$0xff]
      %v263 = vld [vmem:[%s165 + $0x2e0] sm:$0xff]
      %v264 = vld [vmem:[%s165 + $0x2e8] sm:$0xff]
      %v265 = vld [vmem:[%s165 + $0x2f0] sm:$0xff]
      %v266 = vld [vmem:[%s165 + $0x2f8] sm:$0xff]
      %v267 = vld [vmem:[%s165 + $0x300] sm:$0xff]
      %v268 = vld [vmem:[%s165 + $0x308] sm:$0xff]
      %v269 = vld [vmem:[%s165 + $0x310] sm:$0xff]
      %v270 = vld [vmem:[%s165 + $0x318] sm:$0xff]
      %v271 = vld [vmem:[%s165 + $0x320] sm:$0xff]
      %v272 = vld [vmem:[%s165 + $0x328] sm:$0xff]
      %v273 = vld [vmem:[%s165 + $0x330] sm:$0xff]
      %v274 = vld [vmem:[%s165 + $0x338] sm:$0xff]
      %v275 = vld [vmem:[%s165 + $0x340] sm:$0xff]
      %v276 = vld [vmem:[%s165 + $0x348] sm:$0xff]
      %v277 = vld [vmem:[%s165 + $0x350] sm:$0xff]
      %v278 = vld [vmem:[%s165 + $0x358] sm:$0xff]
      %v279 = vld [vmem:[%s165 + $0x360] sm:$0xff]
      %v280 = vld [vmem:[%s165 + $0x368] sm:$0xff]
      %v281 = vld [vmem:[%s165 + $0x370] sm:$0xff]
      %v282 = vld [vmem:[%s165 + $0x378] sm:$0xff]
      %v283 = vld [vmem:[%s165 + $0x380] sm:$0xff]
      %v284 = vld [vmem:[%s165 + $0x388] sm:$0xff]
      %v285 = vld [vmem:[%s165 + $0x390] sm:$0xff]
      %v286 = vld [vmem:[%s165 + $0x398] sm:$0xff]
      %v287 = vld [vmem:[%s165 + $0x3a0] sm:$0xff]
      %v288 = vld [vmem:[%s165 + $0x3a8] sm:$0xff]
      %v289 = vld [vmem:[%s165 + $0x3b0] sm:$0xff]
      %v290 = vld [vmem:[%s165 + $0x3b8] sm:$0xff]
      %v291 = vld [vmem:[%s165 + $0x3c0] sm:$0xff]
      %v292 = vld [vmem:[%s165 + $0x3c8] sm:$0xff]
      %v293 = vld [vmem:[%s165 + $0x3d0] sm:$0xff]
      %v294 = vld [vmem:[%s165 + $0x3d8] sm:$0xff]
      %v295 = vld [vmem:[%s165 + $0x3e0] sm:$0xff]
      %v296 = vld [vmem:[%s165 + $0x3e8] sm:$0xff]
      %v297 = vld [vmem:[%s165 + $0x3f0] sm:$0xff]
      %v298 = vld [vmem:[%s165 + $0x3f8] sm:$0xff]
      %v299 = vld [vmem:[%s1] sm:$0xf]
      %v300 = vld [vmem:[%s1 + $0x4] sm:$0xf]
      %v301 = vld [vmem:[%s1 + $0x8] sm:$0xf]
      %v302 = vld [vmem:[%s1 + $0xc] sm:$0xf]
      %v303 = vld [vmem:[%s1 + $0x10] sm:$0xf]
      %v304 = vld [vmem:[%s1 + $0x14] sm:$0xf]
      %v305 = vld [vmem:[%s1 + $0x18] sm:$0xf]
      %v306 = vld [vmem:[%s1 + $0x1c] sm:$0xf]
      %v307 = vld [vmem:[%s1 + $0x20] sm:$0xf]
      %v308 = vld [vmem:[%s1 + $0x24] sm:$0xf]
      %v309 = vld [vmem:[%s1 + $0x28] sm:$0xf]
      %v310 = vld [vmem:[%s1 + $0x2c] sm:$0xf]
      %v311 = vld [vmem:[%s1 + $0x30] sm:$0xf]
      %v312 = vld [vmem:[%s1 + $0x34] sm:$0xf]
      %v313 = vld [vmem:[%s1 + $0x38] sm:$0xf]
      %v314 = vld [vmem:[%s1 + $0x3c] sm:$0xf]
      %v315 = vld [vmem:[%s1 + $0x40] sm:$0xf]
      %v316 = vld [vmem:[%s1 + $0x44] sm:$0xf]
      %v317 = vld [vmem:[%s1 + $0x48] sm:$0xf]
      %v318 = vld [vmem:[%s1 + $0x4c] sm:$0xf]
      %v319 = vld [vmem:[%s1 + $0x50] sm:$0xf]
      %v320 = vld [vmem:[%s1 + $0x54] sm:$0xf]
      %v321 = vld [vmem:[%s1 + $0x58] sm:$0xf]
      %v322 = vld [vmem:[%s1 + $0x5c] sm:$0xf]
      %v323 = vld [vmem:[%s1 + $0x60] sm:$0xf]
      %v324 = vld [vmem:[%s1 + $0x64] sm:$0xf]
      %v325 = vld [vmem:[%s1 + $0x68] sm:$0xf]
      %v326 = vld [vmem:[%s1 + $0x6c] sm:$0xf]
      %v327 = vld [vmem:[%s1 + $0x70] sm:$0xf]
      %v328 = vld [vmem:[%s1 + $0x74] sm:$0xf]
      %v329 = vld [vmem:[%s1 + $0x78] sm:$0xf]
      %v330 = vld [vmem:[%s1 + $0x7c] sm:$0xf]
      %v331 = vld [vmem:[%s2] sm:$0x1]
      %v333 = vperm.slane %v331, 0
      %v463 = vunpack.c.l.b16 %v171
      %v464 = vunpack.c.h.b16 %v171
      %v465 = vunpack.c.l.b16 %v172
      %v466 = vunpack.c.h.b16 %v172
      %v467 = vunpack.c.l.b16 %v173
      %v468 = vunpack.c.h.b16 %v173
      %v469 = vunpack.c.l.b16 %v174
      %v470 = vunpack.c.h.b16 %v174
      %v471 = vunpack.c.l.b16 %v175
      %v472 = vunpack.c.h.b16 %v175
      %v473 = vunpack.c.l.b16 %v176
      %v474 = vunpack.c.h.b16 %v176
      %v475 = vunpack.c.l.b16 %v177
      %v476 = vunpack.c.h.b16 %v177
      %v477 = vunpack.c.l.b16 %v178
      %v478 = vunpack.c.h.b16 %v178
      %v479 = vunpack.c.l.b16 %v179
      %v480 = vunpack.c.h.b16 %v179
      %v481 = vunpack.c.l.b16 %v180
      %v482 = vunpack.c.h.b16 %v180
      %v483 = vunpack.c.l.b16 %v181
      %v484 = vunpack.c.h.b16 %v181
      %v485 = vunpack.c.l.b16 %v182
      %v486 = vunpack.c.h.b16 %v182
      %v487 = vunpack.c.l.b16 %v183
      %v488 = vunpack.c.h.b16 %v183
      %v489 = vunpack.c.l.b16 %v184
      %v490 = vunpack.c.h.b16 %v184
      %v491 = vunpack.c.l.b16 %v185
      %v492 = vunpack.c.h.b16 %v185
      %v493 = vunpack.c.l.b16 %v186
      %v494 = vunpack.c.h.b16 %v186
      %v495 = vunpack.c.l.b16 %v187
      %v496 = vunpack.c.h.b16 %v187
      %v497 = vunpack.c.l.b16 %v188
      %v498 = vunpack.c.h.b16 %v188
      %v499 = vunpack.c.l.b16 %v189
      %v500 = vunpack.c.h.b16 %v189
      %v501 = vunpack.c.l.b16 %v190
      %v502 = vunpack.c.h.b16 %v190
      %v503 = vunpack.c.l.b16 %v191
      %v504 = vunpack.c.h.b16 %v191
      %v505 = vunpack.c.l.b16 %v192
      %v506 = vunpack.c.h.b16 %v192
      %v507 = vunpack.c.l.b16 %v193
      %v508 = vunpack.c.h.b16 %v193
      %v509 = vunpack.c.l.b16 %v194
      %v510 = vunpack.c.h.b16 %v194
      %v511 = vunpack.c.l.b16 %v195
      %v512 = vunpack.c.h.b16 %v195
      %v513 = vunpack.c.l.b16 %v196
      %v514 = vunpack.c.h.b16 %v196
      %v515 = vunpack.c.l.b16 %v197
      %v516 = vunpack.c.h.b16 %v197
      %v517 = vunpack.c.l.b16 %v198
      %v518 = vunpack.c.h.b16 %v198
      %v519 = vunpack.c.l.b16 %v199
      %v520 = vunpack.c.h.b16 %v199
      %v521 = vunpack.c.l.b16 %v200
      %v522 = vunpack.c.h.b16 %v200
      %v523 = vunpack.c.l.b16 %v201
      %v524 = vunpack.c.h.b16 %v201
      %v525 = vunpack.c.l.b16 %v202
      %v526 = vunpack.c.h.b16 %v202
      %v527 = vunpack.c.l.b16 %v203
      %v528 = vunpack.c.h.b16 %v203
      %v529 = vunpack.c.l.b16 %v204
      %v530 = vunpack.c.h.b16 %v204
      %v531 = vunpack.c.l.b16 %v205
      %v532 = vunpack.c.h.b16 %v205
      %v533 = vunpack.c.l.b16 %v206
      %v534 = vunpack.c.h.b16 %v206
      %v535 = vunpack.c.l.b16 %v207
      %v536 = vunpack.c.h.b16 %v207
      %v537 = vunpack.c.l.b16 %v208
      %v538 = vunpack.c.h.b16 %v208
      %v539 = vunpack.c.l.b16 %v209
      %v540 = vunpack.c.h.b16 %v209
      %v541 = vunpack.c.l.b16 %v210
      %v542 = vunpack.c.h.b16 %v210
      %v543 = vunpack.c.l.b16 %v211
      %v544 = vunpack.c.h.b16 %v211
      %v545 = vunpack.c.l.b16 %v212
      %v546 = vunpack.c.h.b16 %v212
      %v547 = vunpack.c.l.b16 %v213
      %v548 = vunpack.c.h.b16 %v213
      %v549 = vunpack.c.l.b16 %v214
      %v550 = vunpack.c.h.b16 %v214
      %v551 = vunpack.c.l.b16 %v215
      %v552 = vunpack.c.h.b16 %v215
      %v553 = vunpack.c.l.b16 %v216
      %v554 = vunpack.c.h.b16 %v216
      %v555 = vunpack.c.l.b16 %v217
      %v556 = vunpack.c.h.b16 %v217
      %v557 = vunpack.c.l.b16 %v218
      %v558 = vunpack.c.h.b16 %v218
      %v559 = vunpack.c.l.b16 %v219
      %v560 = vunpack.c.h.b16 %v219
      %v561 = vunpack.c.l.b16 %v220
      %v562 = vunpack.c.h.b16 %v220
      %v563 = vunpack.c.l.b16 %v221
      %v564 = vunpack.c.h.b16 %v221
      %v565 = vunpack.c.l.b16 %v222
      %v566 = vunpack.c.h.b16 %v222
      %v567 = vunpack.c.l.b16 %v223
      %v568 = vunpack.c.h.b16 %v223
      %v569 = vunpack.c.l.b16 %v224
      %v570 = vunpack.c.h.b16 %v224
      %v571 = vunpack.c.l.b16 %v225
      %v572 = vunpack.c.h.b16 %v225
      %v573 = vunpack.c.l.b16 %v226
      %v574 = vunpack.c.h.b16 %v226
      %v575 = vunpack.c.l.b16 %v227
      %v576 = vunpack.c.h.b16 %v227
      %v577 = vunpack.c.l.b16 %v228
      %v578 = vunpack.c.h.b16 %v228
      %v579 = vunpack.c.l.b16 %v229
      %v580 = vunpack.c.h.b16 %v229
      %v581 = vunpack.c.l.b16 %v230
      %v582 = vunpack.c.h.b16 %v230
      %v583 = vunpack.c.l.b16 %v231
      %v584 = vunpack.c.h.b16 %v231
      %v585 = vunpack.c.l.b16 %v232
      %v586 = vunpack.c.h.b16 %v232
      %v587 = vunpack.c.l.b16 %v233
      %v588 = vunpack.c.h.b16 %v233
      %v589 = vunpack.c.l.b16 %v234
      %v590 = vunpack.c.h.b16 %v234
      %v591 = vunpack.c.l.b16 %v235
      %v592 = vunpack.c.h.b16 %v235
      %v593 = vunpack.c.l.b16 %v236
      %v594 = vunpack.c.h.b16 %v236
      %v595 = vunpack.c.l.b16 %v237
      %v596 = vunpack.c.h.b16 %v237
      %v597 = vunpack.c.l.b16 %v238
      %v598 = vunpack.c.h.b16 %v238
      %v599 = vunpack.c.l.b16 %v239
      %v600 = vunpack.c.h.b16 %v239
      %v601 = vunpack.c.l.b16 %v240
      %v602 = vunpack.c.h.b16 %v240
      %v603 = vunpack.c.l.b16 %v241
      %v604 = vunpack.c.h.b16 %v241
      %v605 = vunpack.c.l.b16 %v242
      %v606 = vunpack.c.h.b16 %v242
      %v607 = vunpack.c.l.b16 %v243
      %v608 = vunpack.c.h.b16 %v243
      %v609 = vunpack.c.l.b16 %v244
      %v610 = vunpack.c.h.b16 %v244
      %v611 = vunpack.c.l.b16 %v245
      %v612 = vunpack.c.h.b16 %v245
      %v613 = vunpack.c.l.b16 %v246
      %v614 = vunpack.c.h.b16 %v246
      %v615 = vunpack.c.l.b16 %v247
      %v616 = vunpack.c.h.b16 %v247
      %v617 = vunpack.c.l.b16 %v248
      %v618 = vunpack.c.h.b16 %v248
      %v619 = vunpack.c.l.b16 %v249
      %v620 = vunpack.c.h.b16 %v249
      %v621 = vunpack.c.l.b16 %v250
      %v622 = vunpack.c.h.b16 %v250
      %v623 = vunpack.c.l.b16 %v251
      %v624 = vunpack.c.h.b16 %v251
      %v625 = vunpack.c.l.b16 %v252
      %v626 = vunpack.c.h.b16 %v252
      %v627 = vunpack.c.l.b16 %v253
      %v628 = vunpack.c.h.b16 %v253
      %v629 = vunpack.c.l.b16 %v254
      %v630 = vunpack.c.h.b16 %v254
      %v631 = vunpack.c.l.b16 %v255
      %v632 = vunpack.c.h.b16 %v255
      %v633 = vunpack.c.l.b16 %v256
      %v634 = vunpack.c.h.b16 %v256
      %v635 = vunpack.c.l.b16 %v257
      %v636 = vunpack.c.h.b16 %v257
      %v637 = vunpack.c.l.b16 %v258
      %v638 = vunpack.c.h.b16 %v258
      %v639 = vunpack.c.l.b16 %v259
      %v640 = vunpack.c.h.b16 %v259
      %v641 = vunpack.c.l.b16 %v260
      %v642 = vunpack.c.h.b16 %v260
      %v643 = vunpack.c.l.b16 %v261
      %v644 = vunpack.c.h.b16 %v261
      %v645 = vunpack.c.l.b16 %v262
      %v646 = vunpack.c.h.b16 %v262
      %v647 = vunpack.c.l.b16 %v263
      %v648 = vunpack.c.h.b16 %v263
      %v649 = vunpack.c.l.b16 %v264
      %v650 = vunpack.c.h.b16 %v264
      %v651 = vunpack.c.l.b16 %v265
      %v652 = vunpack.c.h.b16 %v265
      %v653 = vunpack.c.l.b16 %v266
      %v654 = vunpack.c.h.b16 %v266
      %v655 = vunpack.c.l.b16 %v267
      %v656 = vunpack.c.h.b16 %v267
      %v657 = vunpack.c.l.b16 %v268
      %v658 = vunpack.c.h.b16 %v268
      %v659 = vunpack.c.l.b16 %v269
      %v660 = vunpack.c.h.b16 %v269
      %v661 = vunpack.c.l.b16 %v270
      %v662 = vunpack.c.h.b16 %v270
      %v663 = vunpack.c.l.b16 %v271
      %v664 = vunpack.c.h.b16 %v271
      %v665 = vunpack.c.l.b16 %v272
      %v666 = vunpack.c.h.b16 %v272
      %v667 = vunpack.c.l.b16 %v273
      %v668 = vunpack.c.h.b16 %v273
      %v669 = vunpack.c.l.b16 %v274
      %v670 = vunpack.c.h.b16 %v274
      %v671 = vunpack.c.l.b16 %v275
      %v672 = vunpack.c.h.b16 %v275
      %v673 = vunpack.c.l.b16 %v276
      %v674 = vunpack.c.h.b16 %v276
      %v675 = vunpack.c.l.b16 %v277
      %v676 = vunpack.c.h.b16 %v277
      %v677 = vunpack.c.l.b16 %v278
      %v678 = vunpack.c.h.b16 %v278
      %v679 = vunpack.c.l.b16 %v279
      %v680 = vunpack.c.h.b16 %v279
      %v681 = vunpack.c.l.b16 %v280
      %v682 = vunpack.c.h.b16 %v280
      %v683 = vunpack.c.l.b16 %v281
      %v684 = vunpack.c.h.b16 %v281
      %v685 = vunpack.c.l.b16 %v282
      %v686 = vunpack.c.h.b16 %v282
      %v687 = vunpack.c.l.b16 %v283
      %v688 = vunpack.c.h.b16 %v283
      %v689 = vunpack.c.l.b16 %v284
      %v690 = vunpack.c.h.b16 %v284
      %v691 = vunpack.c.l.b16 %v285
      %v692 = vunpack.c.h.b16 %v285
      %v693 = vunpack.c.l.b16 %v286
      %v694 = vunpack.c.h.b16 %v286
      %v695 = vunpack.c.l.b16 %v287
      %v696 = vunpack.c.h.b16 %v287
      %v697 = vunpack.c.l.b16 %v288
      %v698 = vunpack.c.h.b16 %v288
      %v699 = vunpack.c.l.b16 %v289
      %v700 = vunpack.c.h.b16 %v289
      %v701 = vunpack.c.l.b16 %v290
      %v702 = vunpack.c.h.b16 %v290
      %v703 = vunpack.c.l.b16 %v291
      %v704 = vunpack.c.h.b16 %v291
      %v705 = vunpack.c.l.b16 %v292
      %v706 = vunpack.c.h.b16 %v292
      %v707 = vunpack.c.l.b16 %v293
      %v708 = vunpack.c.h.b16 %v293
      %v709 = vunpack.c.l.b16 %v294
      %v710 = vunpack.c.h.b16 %v294
      %v711 = vunpack.c.l.b16 %v295
      %v712 = vunpack.c.h.b16 %v295
      %v713 = vunpack.c.l.b16 %v296
      %v714 = vunpack.c.h.b16 %v296
      %v715 = vunpack.c.l.b16 %v297
      %v716 = vunpack.c.h.b16 %v297
      %v717 = vunpack.c.l.b16 %v298
      %v718 = vunpack.c.h.b16 %v298
      %v719 = vpack.c.b16 %v465, %v463
      %v720 = vpack.c.b16 %v466, %v464
      %v721 = vpack.c.b16 %v469, %v467
      %v722 = vpack.c.b16 %v470, %v468
      %v723 = vpack.c.b16 %v473, %v471
      %v724 = vpack.c.b16 %v474, %v472
      %v725 = vpack.c.b16 %v477, %v475
      %v726 = vpack.c.b16 %v478, %v476
      %v727 = vpack.c.b16 %v481, %v479
      %v728 = vpack.c.b16 %v482, %v480
      %v729 = vpack.c.b16 %v485, %v483
      %v730 = vpack.c.b16 %v486, %v484
      %v731 = vpack.c.b16 %v489, %v487
      %v732 = vpack.c.b16 %v490, %v488
      %v733 = vpack.c.b16 %v493, %v491
      %v734 = vpack.c.b16 %v494, %v492
      %v735 = vpack.c.b16 %v497, %v495
      %v736 = vpack.c.b16 %v498, %v496
      %v737 = vpack.c.b16 %v501, %v499
      %v738 = vpack.c.b16 %v502, %v500
      %v739 = vpack.c.b16 %v505, %v503
      %v740 = vpack.c.b16 %v506, %v504
      %v741 = vpack.c.b16 %v509, %v507
      %v742 = vpack.c.b16 %v510, %v508
      %v743 = vpack.c.b16 %v513, %v511
      %v744 = vpack.c.b16 %v514, %v512
      %v745 = vpack.c.b16 %v517, %v515
      %v746 = vpack.c.b16 %v518, %v516
      %v747 = vpack.c.b16 %v521, %v519
      %v748 = vpack.c.b16 %v522, %v520
      %v749 = vpack.c.b16 %v525, %v523
      %v750 = vpack.c.b16 %v526, %v524
      %v751 = vpack.c.b16 %v529, %v527
      %v752 = vpack.c.b16 %v530, %v528
      %v753 = vpack.c.b16 %v533, %v531
      %v754 = vpack.c.b16 %v534, %v532
      %v755 = vpack.c.b16 %v537, %v535
      %v756 = vpack.c.b16 %v538, %v536
      %v757 = vpack.c.b16 %v541, %v539
      %v758 = vpack.c.b16 %v542, %v540
      %v759 = vpack.c.b16 %v545, %v543
      %v760 = vpack.c.b16 %v546, %v544
      %v761 = vpack.c.b16 %v549, %v547
      %v762 = vpack.c.b16 %v550, %v548
      %v763 = vpack.c.b16 %v553, %v551
      %v764 = vpack.c.b16 %v554, %v552
      %v765 = vpack.c.b16 %v557, %v555
      %v766 = vpack.c.b16 %v558, %v556
      %v767 = vpack.c.b16 %v561, %v559
      %v768 = vpack.c.b16 %v562, %v560
      %v769 = vpack.c.b16 %v565, %v563
      %v770 = vpack.c.b16 %v566, %v564
      %v771 = vpack.c.b16 %v569, %v567
      %v772 = vpack.c.b16 %v570, %v568
      %v773 = vpack.c.b16 %v573, %v571
      %v774 = vpack.c.b16 %v574, %v572
      %v775 = vpack.c.b16 %v577, %v575
      %v776 = vpack.c.b16 %v578, %v576
      %v777 = vpack.c.b16 %v581, %v579
      %v778 = vpack.c.b16 %v582, %v580
      %v779 = vpack.c.b16 %v585, %v583
      %v780 = vpack.c.b16 %v586, %v584
      %v781 = vpack.c.b16 %v589, %v587
      %v782 = vpack.c.b16 %v590, %v588
      %v783 = vpack.c.b16 %v593, %v591
      %v784 = vpack.c.b16 %v594, %v592
      %v785 = vpack.c.b16 %v597, %v595
      %v786 = vpack.c.b16 %v598, %v596
      %v787 = vpack.c.b16 %v601, %v599
      %v788 = vpack.c.b16 %v602, %v600
      %v789 = vpack.c.b16 %v605, %v603
      %v790 = vpack.c.b16 %v606, %v604
      %v791 = vpack.c.b16 %v609, %v607
      %v792 = vpack.c.b16 %v610, %v608
      %v793 = vpack.c.b16 %v613, %v611
      %v794 = vpack.c.b16 %v614, %v612
      %v795 = vpack.c.b16 %v617, %v615
      %v796 = vpack.c.b16 %v618, %v616
      %v797 = vpack.c.b16 %v621, %v619
      %v798 = vpack.c.b16 %v622, %v620
      %v799 = vpack.c.b16 %v625, %v623
      %v800 = vpack.c.b16 %v626, %v624
      %v801 = vpack.c.b16 %v629, %v627
      %v802 = vpack.c.b16 %v630, %v628
      %v803 = vpack.c.b16 %v633, %v631
      %v804 = vpack.c.b16 %v634, %v632
      %v805 = vpack.c.b16 %v637, %v635
      %v806 = vpack.c.b16 %v638, %v636
      %v807 = vpack.c.b16 %v641, %v639
      %v808 = vpack.c.b16 %v642, %v640
      %v809 = vpack.c.b16 %v645, %v643
      %v810 = vpack.c.b16 %v646, %v644
      %v811 = vpack.c.b16 %v649, %v647
      %v812 = vpack.c.b16 %v650, %v648
      %v813 = vpack.c.b16 %v653, %v651
      %v814 = vpack.c.b16 %v654, %v652
      %v815 = vpack.c.b16 %v657, %v655
      %v816 = vpack.c.b16 %v658, %v656
      %v817 = vpack.c.b16 %v661, %v659
      %v818 = vpack.c.b16 %v662, %v660
      %v819 = vpack.c.b16 %v665, %v663
      %v820 = vpack.c.b16 %v666, %v664
      %v821 = vpack.c.b16 %v669, %v667
      %v822 = vpack.c.b16 %v670, %v668
      %v823 = vpack.c.b16 %v673, %v671
      %v824 = vpack.c.b16 %v674, %v672
      %v825 = vpack.c.b16 %v677, %v675
      %v826 = vpack.c.b16 %v678, %v676
      %v827 = vpack.c.b16 %v681, %v679
      %v828 = vpack.c.b16 %v682, %v680
      %v829 = vpack.c.b16 %v685, %v683
      %v830 = vpack.c.b16 %v686, %v684
      %v831 = vpack.c.b16 %v689, %v687
      %v832 = vpack.c.b16 %v690, %v688
      %v833 = vpack.c.b16 %v693, %v691
      %v834 = vpack.c.b16 %v694, %v692
      %v835 = vpack.c.b16 %v697, %v695
      %v836 = vpack.c.b16 %v698, %v696
      %v837 = vpack.c.b16 %v701, %v699
      %v838 = vpack.c.b16 %v702, %v700
      %v839 = vpack.c.b16 %v705, %v703
      %v840 = vpack.c.b16 %v706, %v704
      %v841 = vpack.c.b16 %v709, %v707
      %v842 = vpack.c.b16 %v710, %v708
      %v843 = vpack.c.b16 %v713, %v711
      %v844 = vpack.c.b16 %v714, %v712
      %v845 = vpack.c.b16 %v717, %v715
      %v846 = vpack.c.b16 %v718, %v716
      %v1007 = vunpack.c.l.b16 %v299
      %v1008 = vunpack.c.l.b16 %v300
      %v1009 = vunpack.c.l.b16 %v301
      %v1010 = vunpack.c.l.b16 %v302
      %v1011 = vunpack.c.l.b16 %v303
      %v1012 = vunpack.c.l.b16 %v304
      %v1013 = vunpack.c.l.b16 %v305
      %v1014 = vunpack.c.l.b16 %v306
      %v1015 = vunpack.c.l.b16 %v307
      %v1016 = vunpack.c.l.b16 %v308
      %v1017 = vunpack.c.l.b16 %v309
      %v1018 = vunpack.c.l.b16 %v310
      %v1019 = vunpack.c.l.b16 %v311
      %v1020 = vunpack.c.l.b16 %v312
      %v1021 = vunpack.c.l.b16 %v313
      %v1022 = vunpack.c.l.b16 %v314
      %v1023 = vunpack.c.l.b16 %v315
      %v1024 = vunpack.c.l.b16 %v316
      %v1025 = vunpack.c.l.b16 %v317
      %v1026 = vunpack.c.l.b16 %v318
      %v1027 = vunpack.c.l.b16 %v319
      %v1028 = vunpack.c.l.b16 %v320
      %v1029 = vunpack.c.l.b16 %v321
      %v1030 = vunpack.c.l.b16 %v322
      %v1031 = vunpack.c.l.b16 %v323
      %v1032 = vunpack.c.l.b16 %v324
      %v1033 = vunpack.c.l.b16 %v325
      %v1034 = vunpack.c.l.b16 %v326
      %v1035 = vunpack.c.l.b16 %v327
      %v1036 = vunpack.c.l.b16 %v328
      %v1037 = vunpack.c.l.b16 %v329
      %v1038 = vunpack.c.l.b16 %v330
      %v1039 = vpack.c.b16 %v1008, %v1007
      %v1040 = vpack.c.b16 %v1010, %v1009
      %v1041 = vpack.c.b16 %v1012, %v1011
      %v1042 = vpack.c.b16 %v1014, %v1013
      %v1043 = vpack.c.b16 %v1016, %v1015
      %v1044 = vpack.c.b16 %v1018, %v1017
      %v1045 = vpack.c.b16 %v1020, %v1019
      %v1046 = vpack.c.b16 %v1022, %v1021
      %v1047 = vpack.c.b16 %v1024, %v1023
      %v1048 = vpack.c.b16 %v1026, %v1025
      %v1049 = vpack.c.b16 %v1028, %v1027
      %v1050 = vpack.c.b16 %v1030, %v1029
      %v1051 = vpack.c.b16 %v1032, %v1031
      %v1052 = vpack.c.b16 %v1034, %v1033
      %v1053 = vpack.c.b16 %v1036, %v1035
      %v1054 = vpack.c.b16 %v1038, %v1037
      %1071 = vmatpush.bf16.msra.mxu0 %v1046
      %1072 = vmatpush.bf16.msra.mxu0 %v1045
      %1073 = vmatpush.bf16.msra.mxu0 %v1044
      %1074 = vmatpush.bf16.msra.mxu0 %v1043
      %1075 = vmatpush.bf16.msra.mxu0 %v1042
      %1076 = vmatpush.bf16.msra.mxu0 %v1041
      %1077 = vmatpush.bf16.msra.mxu0 %v1040
      %1078 = vmatpush.bf16.msra.mxu0 %v1039
      %1079 = vmatmul.bf16.gmra.mxu0 %v719
      %v1080 = vpop.f32.mrf.mxu0
      %v1081 = vadd.f32 %v333, %v1080
      %v1082 = vpop.f32.mrf.mxu0
      %v1083 = vadd.f32 %v333, %v1082
      %1084 = vmatmul.bf16.gmra.mxu0 %v721
      %v1085 = vpop.f32.mrf.mxu0
      %v1086 = vadd.f32 %v333, %v1085
      %v1087 = vpop.f32.mrf.mxu0
      %v1088 = vadd.f32 %v333, %v1087
      %1089 = vmatmul.bf16.gmra.mxu0 %v723
      %v1090 = vpop.f32.mrf.mxu0
      %v1091 = vadd.f32 %v333, %v1090
      %v1092 = vpop.f32.mrf.mxu0
      %v1093 = vadd.f32 %v333, %v1092
      %1094 = vmatmul.bf16.gmra.mxu0 %v725
      %v1095 = vpop.f32.mrf.mxu0
      %v1096 = vadd.f32 %v333, %v1095
      %v1097 = vpop.f32.mrf.mxu0
      %v1098 = vadd.f32 %v333, %v1097
      %1099 = vmatmul.bf16.gmra.mxu0 %v727
      %v1100 = vpop.f32.mrf.mxu0
      %v1101 = vadd.f32 %v333, %v1100
      %v1102 = vpop.f32.mrf.mxu0
      %v1103 = vadd.f32 %v333, %v1102
      %1104 = vmatmul.bf16.gmra.mxu0 %v729
      %v1105 = vpop.f32.mrf.mxu0
      %v1106 = vadd.f32 %v333, %v1105
      %v1107 = vpop.f32.mrf.mxu0
      %v1108 = vadd.f32 %v333, %v1107
      %1109 = vmatmul.bf16.gmra.mxu0 %v731
      %v1110 = vpop.f32.mrf.mxu0
      %v1111 = vadd.f32 %v333, %v1110
      %v1112 = vpop.f32.mrf.mxu0
      %v1113 = vadd.f32 %v333, %v1112
      %1114 = vmatmul.bf16.gmra.mxu0 %v733
      %v1115 = vpop.f32.mrf.mxu0
      %v1116 = vadd.f32 %v333, %v1115
      %v1117 = vpop.f32.mrf.mxu0
      %v1118 = vadd.f32 %v333, %v1117
      %1119 = vmatmul.bf16.gmra.mxu0 %v735
      %v1120 = vpop.f32.mrf.mxu0
      %v1121 = vadd.f32 %v333, %v1120
      %v1122 = vpop.f32.mrf.mxu0
      %v1123 = vadd.f32 %v333, %v1122
      %1124 = vmatmul.bf16.gmra.mxu0 %v737
      %v1125 = vpop.f32.mrf.mxu0
      %v1126 = vadd.f32 %v333, %v1125
      %v1127 = vpop.f32.mrf.mxu0
      %v1128 = vadd.f32 %v333, %v1127
      %1129 = vmatmul.bf16.gmra.mxu0 %v739
      %v1130 = vpop.f32.mrf.mxu0
      %v1131 = vadd.f32 %v333, %v1130
      %v1132 = vpop.f32.mrf.mxu0
      %v1133 = vadd.f32 %v333, %v1132
      %1134 = vmatmul.bf16.gmra.mxu0 %v741
      %v1135 = vpop.f32.mrf.mxu0
      %v1136 = vadd.f32 %v333, %v1135
      %v1137 = vpop.f32.mrf.mxu0
      %v1138 = vadd.f32 %v333, %v1137
      %1139 = vmatmul.bf16.gmra.mxu0 %v743
      %v1140 = vpop.f32.mrf.mxu0
      %v1141 = vadd.f32 %v333, %v1140
      %v1142 = vpop.f32.mrf.mxu0
      %v1143 = vadd.f32 %v333, %v1142
      %1144 = vmatmul.bf16.gmra.mxu0 %v745
      %v1145 = vpop.f32.mrf.mxu0
      %v1146 = vadd.f32 %v333, %v1145
      %v1147 = vpop.f32.mrf.mxu0
      %v1148 = vadd.f32 %v333, %v1147
      %1149 = vmatmul.bf16.gmra.mxu0 %v747
      %v1150 = vpop.f32.mrf.mxu0
      %v1151 = vadd.f32 %v333, %v1150
      %v1152 = vpop.f32.mrf.mxu0
      %v1153 = vadd.f32 %v333, %v1152
      %1154 = vmatmul.bf16.gmra.mxu0 %v749
      %v1155 = vpop.f32.mrf.mxu0
      %v1156 = vadd.f32 %v333, %v1155
      %v1157 = vpop.f32.mrf.mxu0
      %v1158 = vadd.f32 %v333, %v1157
      %1159 = vmatmul.bf16.gmra.mxu0 %v751
      %v1160 = vpop.f32.mrf.mxu0
      %v1161 = vadd.f32 %v333, %v1160
      %v1162 = vpop.f32.mrf.mxu0
      %v1163 = vadd.f32 %v333, %v1162
      %1164 = vmatmul.bf16.gmra.mxu0 %v753
      %v1165 = vpop.f32.mrf.mxu0
      %v1166 = vadd.f32 %v333, %v1165
      %v1167 = vpop.f32.mrf.mxu0
      %v1168 = vadd.f32 %v333, %v1167
      %1169 = vmatmul.bf16.gmra.mxu0 %v755
      %v1170 = vpop.f32.mrf.mxu0
      %v1171 = vadd.f32 %v333, %v1170
      %v1172 = vpop.f32.mrf.mxu0
      %v1173 = vadd.f32 %v333, %v1172
      %1174 = vmatmul.bf16.gmra.mxu0 %v757
      %v1175 = vpop.f32.mrf.mxu0
      %v1176 = vadd.f32 %v333, %v1175
      %v1177 = vpop.f32.mrf.mxu0
      %v1178 = vadd.f32 %v333, %v1177
      %1179 = vmatmul.bf16.gmra.mxu0 %v759
      %v1180 = vpop.f32.mrf.mxu0
      %v1181 = vadd.f32 %v333, %v1180
      %v1182 = vpop.f32.mrf.mxu0
      %v1183 = vadd.f32 %v333, %v1182
      %1184 = vmatmul.bf16.gmra.mxu0 %v761
      %v1185 = vpop.f32.mrf.mxu0
      %v1186 = vadd.f32 %v333, %v1185
      %v1187 = vpop.f32.mrf.mxu0
      %v1188 = vadd.f32 %v333, %v1187
      %1189 = vmatmul.bf16.gmra.mxu0 %v763
      %v1190 = vpop.f32.mrf.mxu0
      %v1191 = vadd.f32 %v333, %v1190
      %v1192 = vpop.f32.mrf.mxu0
      %v1193 = vadd.f32 %v333, %v1192
      %1194 = vmatmul.bf16.gmra.mxu0 %v765
      %v1195 = vpop.f32.mrf.mxu0
      %v1196 = vadd.f32 %v333, %v1195
      %v1197 = vpop.f32.mrf.mxu0
      %v1198 = vadd.f32 %v333, %v1197
      %1199 = vmatmul.bf16.gmra.mxu0 %v767
      %v1200 = vpop.f32.mrf.mxu0
      %v1201 = vadd.f32 %v333, %v1200
      %v1202 = vpop.f32.mrf.mxu0
      %v1203 = vadd.f32 %v333, %v1202
      %1204 = vmatmul.bf16.gmra.mxu0 %v769
      %v1205 = vpop.f32.mrf.mxu0
      %v1206 = vadd.f32 %v333, %v1205
      %v1207 = vpop.f32.mrf.mxu0
      %v1208 = vadd.f32 %v333, %v1207
      %1209 = vmatmul.bf16.gmra.mxu0 %v771
      %v1210 = vpop.f32.mrf.mxu0
      %v1211 = vadd.f32 %v333, %v1210
      %v1212 = vpop.f32.mrf.mxu0
      %v1213 = vadd.f32 %v333, %v1212
      %1214 = vmatmul.bf16.gmra.mxu0 %v773
      %v1215 = vpop.f32.mrf.mxu0
      %v1216 = vadd.f32 %v333, %v1215
      %v1217 = vpop.f32.mrf.mxu0
      %v1218 = vadd.f32 %v333, %v1217
      %1219 = vmatmul.bf16.gmra.mxu0 %v775
      %v1220 = vpop.f32.mrf.mxu0
      %v1221 = vadd.f32 %v333, %v1220
      %v1222 = vpop.f32.mrf.mxu0
      %v1223 = vadd.f32 %v333, %v1222
      %1224 = vmatmul.bf16.gmra.mxu0 %v777
      %v1225 = vpop.f32.mrf.mxu0
      %v1226 = vadd.f32 %v333, %v1225
      %v1227 = vpop.f32.mrf.mxu0
      %v1228 = vadd.f32 %v333, %v1227
      %1229 = vmatmul.bf16.gmra.mxu0 %v779
      %v1230 = vpop.f32.mrf.mxu0
      %v1231 = vadd.f32 %v333, %v1230
      %v1232 = vpop.f32.mrf.mxu0
      %v1233 = vadd.f32 %v333, %v1232
      %1234 = vmatmul.bf16.gmra.mxu0 %v781
      %v1235 = vpop.f32.mrf.mxu0
      %v1236 = vadd.f32 %v333, %v1235
      %v1237 = vpop.f32.mrf.mxu0
      %v1238 = vadd.f32 %v333, %v1237
      %1239 = vmatmul.bf16.gmra.mxu0 %v783
      %v1240 = vpop.f32.mrf.mxu0
      %v1241 = vadd.f32 %v333, %v1240
      %v1242 = vpop.f32.mrf.mxu0
      %v1243 = vadd.f32 %v333, %v1242
      %1244 = vmatmul.bf16.gmra.mxu0 %v785
      %v1245 = vpop.f32.mrf.mxu0
      %v1246 = vadd.f32 %v333, %v1245
      %v1247 = vpop.f32.mrf.mxu0
      %v1248 = vadd.f32 %v333, %v1247
      %1249 = vmatmul.bf16.gmra.mxu0 %v787
      %v1250 = vpop.f32.mrf.mxu0
      %v1251 = vadd.f32 %v333, %v1250
      %v1252 = vpop.f32.mrf.mxu0
      %v1253 = vadd.f32 %v333, %v1252
      %1254 = vmatmul.bf16.gmra.mxu0 %v789
      %v1255 = vpop.f32.mrf.mxu0
      %v1256 = vadd.f32 %v333, %v1255
      %v1257 = vpop.f32.mrf.mxu0
      %v1258 = vadd.f32 %v333, %v1257
      %1259 = vmatmul.bf16.gmra.mxu0 %v791
      %v1260 = vpop.f32.mrf.mxu0
      %v1261 = vadd.f32 %v333, %v1260
      %v1262 = vpop.f32.mrf.mxu0
      %v1263 = vadd.f32 %v333, %v1262
      %1264 = vmatmul.bf16.gmra.mxu0 %v793
      %v1265 = vpop.f32.mrf.mxu0
      %v1266 = vadd.f32 %v333, %v1265
      %v1267 = vpop.f32.mrf.mxu0
      %v1268 = vadd.f32 %v333, %v1267
      %1269 = vmatmul.bf16.gmra.mxu0 %v795
      %v1270 = vpop.f32.mrf.mxu0
      %v1271 = vadd.f32 %v333, %v1270
      %v1272 = vpop.f32.mrf.mxu0
      %v1273 = vadd.f32 %v333, %v1272
      %1274 = vmatmul.bf16.gmra.mxu0 %v797
      %v1275 = vpop.f32.mrf.mxu0
      %v1276 = vadd.f32 %v333, %v1275
      %v1277 = vpop.f32.mrf.mxu0
      %v1278 = vadd.f32 %v333, %v1277
      %1279 = vmatmul.bf16.gmra.mxu0 %v799
      %v1280 = vpop.f32.mrf.mxu0
      %v1281 = vadd.f32 %v333, %v1280
      %v1282 = vpop.f32.mrf.mxu0
      %v1283 = vadd.f32 %v333, %v1282
      %1284 = vmatmul.bf16.gmra.mxu0 %v801
      %v1285 = vpop.f32.mrf.mxu0
      %v1286 = vadd.f32 %v333, %v1285
      %v1287 = vpop.f32.mrf.mxu0
      %v1288 = vadd.f32 %v333, %v1287
      %1289 = vmatmul.bf16.gmra.mxu0 %v803
      %v1290 = vpop.f32.mrf.mxu0
      %v1291 = vadd.f32 %v333, %v1290
      %v1292 = vpop.f32.mrf.mxu0
      %v1293 = vadd.f32 %v333, %v1292
      %1294 = vmatmul.bf16.gmra.mxu0 %v805
      %v1295 = vpop.f32.mrf.mxu0
      %v1296 = vadd.f32 %v333, %v1295
      %v1297 = vpop.f32.mrf.mxu0
      %v1298 = vadd.f32 %v333, %v1297
      %1299 = vmatmul.bf16.gmra.mxu0 %v807
      %v1300 = vpop.f32.mrf.mxu0
      %v1301 = vadd.f32 %v333, %v1300
      %v1302 = vpop.f32.mrf.mxu0
      %v1303 = vadd.f32 %v333, %v1302
      %1304 = vmatmul.bf16.gmra.mxu0 %v809
      %v1305 = vpop.f32.mrf.mxu0
      %v1306 = vadd.f32 %v333, %v1305
      %v1307 = vpop.f32.mrf.mxu0
      %v1308 = vadd.f32 %v333, %v1307
      %1309 = vmatmul.bf16.gmra.mxu0 %v811
      %v1310 = vpop.f32.mrf.mxu0
      %v1311 = vadd.f32 %v333, %v1310
      %v1312 = vpop.f32.mrf.mxu0
      %v1313 = vadd.f32 %v333, %v1312
      %1314 = vmatmul.bf16.gmra.mxu0 %v813
      %v1315 = vpop.f32.mrf.mxu0
      %v1316 = vadd.f32 %v333, %v1315
      %v1317 = vpop.f32.mrf.mxu0
      %v1318 = vadd.f32 %v333, %v1317
      %1319 = vmatmul.bf16.gmra.mxu0 %v815
      %v1320 = vpop.f32.mrf.mxu0
      %v1321 = vadd.f32 %v333, %v1320
      %v1322 = vpop.f32.mrf.mxu0
      %v1323 = vadd.f32 %v333, %v1322
      %1324 = vmatmul.bf16.gmra.mxu0 %v817
      %v1325 = vpop.f32.mrf.mxu0
      %v1326 = vadd.f32 %v333, %v1325
      %v1327 = vpop.f32.mrf.mxu0
      %v1328 = vadd.f32 %v333, %v1327
      %1329 = vmatmul.bf16.gmra.mxu0 %v819
      %v1330 = vpop.f32.mrf.mxu0
      %v1331 = vadd.f32 %v333, %v1330
      %v1332 = vpop.f32.mrf.mxu0
      %v1333 = vadd.f32 %v333, %v1332
      %1334 = vmatmul.bf16.gmra.mxu0 %v821
      %v1335 = vpop.f32.mrf.mxu0
      %v1336 = vadd.f32 %v333, %v1335
      %v1337 = vpop.f32.mrf.mxu0
      %v1338 = vadd.f32 %v333, %v1337
      %1339 = vmatmul.bf16.gmra.mxu0 %v823
      %v1340 = vpop.f32.mrf.mxu0
      %v1341 = vadd.f32 %v333, %v1340
      %v1342 = vpop.f32.mrf.mxu0
      %v1343 = vadd.f32 %v333, %v1342
      %1344 = vmatmul.bf16.gmra.mxu0 %v825
      %v1345 = vpop.f32.mrf.mxu0
      %v1346 = vadd.f32 %v333, %v1345
      %v1347 = vpop.f32.mrf.mxu0
      %v1348 = vadd.f32 %v333, %v1347
      %1349 = vmatmul.bf16.gmra.mxu0 %v827
      %v1350 = vpop.f32.mrf.mxu0
      %v1351 = vadd.f32 %v333, %v1350
      %v1352 = vpop.f32.mrf.mxu0
      %v1353 = vadd.f32 %v333, %v1352
      %1354 = vmatmul.bf16.gmra.mxu0 %v829
      %v1355 = vpop.f32.mrf.mxu0
      %v1356 = vadd.f32 %v333, %v1355
      %v1357 = vpop.f32.mrf.mxu0
      %v1358 = vadd.f32 %v333, %v1357
      %1359 = vmatmul.bf16.gmra.mxu0 %v831
      %v1360 = vpop.f32.mrf.mxu0
      %v1361 = vadd.f32 %v333, %v1360
      %v1362 = vpop.f32.mrf.mxu0
      %v1363 = vadd.f32 %v333, %v1362
      %1364 = vmatmul.bf16.gmra.mxu0 %v833
      %v1365 = vpop.f32.mrf.mxu0
      %v1366 = vadd.f32 %v333, %v1365
      %v1367 = vpop.f32.mrf.mxu0
      %v1368 = vadd.f32 %v333, %v1367
      %1369 = vmatmul.bf16.gmra.mxu0 %v835
      %v1370 = vpop.f32.mrf.mxu0
      %v1371 = vadd.f32 %v333, %v1370
      %v1372 = vpop.f32.mrf.mxu0
      %v1373 = vadd.f32 %v333, %v1372
      %1374 = vmatmul.bf16.gmra.mxu0 %v837
      %v1375 = vpop.f32.mrf.mxu0
      %v1376 = vadd.f32 %v333, %v1375
      %v1377 = vpop.f32.mrf.mxu0
      %v1378 = vadd.f32 %v333, %v1377
      %1379 = vmatmul.bf16.gmra.mxu0 %v839
      %v1380 = vpop.f32.mrf.mxu0
      %v1381 = vadd.f32 %v333, %v1380
      %v1382 = vpop.f32.mrf.mxu0
      %v1383 = vadd.f32 %v333, %v1382
      %1384 = vmatmul.bf16.gmra.mxu0 %v841
      %v1385 = vpop.f32.mrf.mxu0
      %v1386 = vadd.f32 %v333, %v1385
      %v1387 = vpop.f32.mrf.mxu0
      %v1388 = vadd.f32 %v333, %v1387
      %1389 = vmatmul.bf16.gmra.mxu0 %v843
      %v1390 = vpop.f32.mrf.mxu0
      %v1391 = vadd.f32 %v333, %v1390
      %v1392 = vpop.f32.mrf.mxu0
      %v1393 = vadd.f32 %v333, %v1392
      %1394 = vmatmul.bf16.gmra.mxu0 %v845
      %v1395 = vpop.f32.mrf.mxu0
      %v1396 = vadd.f32 %v333, %v1395
      %v1397 = vpop.f32.mrf.mxu0
      %v1398 = vadd.f32 %v333, %v1397
      %1399 = vdwg.mxu0
      %1400 = vmatpush.bf16.msra.mxu0 %v1054
      %1401 = vmatpush.bf16.msra.mxu0 %v1053
      %1402 = vmatpush.bf16.msra.mxu0 %v1052
      %1403 = vmatpush.bf16.msra.mxu0 %v1051
      %1404 = vmatpush.bf16.msra.mxu0 %v1050
      %1405 = vmatpush.bf16.msra.mxu0 %v1049
      %1406 = vmatpush.bf16.msra.mxu0 %v1048
      %1407 = vmatpush.bf16.msra.mxu0 %v1047
      %1408 = vmatmul.bf16.gmra.mxu0 %v720
      %v1409 = vpop.f32.mrf.mxu0
      %v1410 = vadd.f32 %v1081, %v1409
      %v1411 = vpop.f32.mrf.mxu0
      %v1412 = vadd.f32 %v1083, %v1411
      %1413 = vmatmul.bf16.gmra.mxu0 %v722
      %v1414 = vpop.f32.mrf.mxu0
      %v1415 = vadd.f32 %v1086, %v1414
      %v1416 = vpop.f32.mrf.mxu0
      %v1417 = vadd.f32 %v1088, %v1416
      %1418 = vmatmul.bf16.gmra.mxu0 %v724
      %v1419 = vpop.f32.mrf.mxu0
      %v1420 = vadd.f32 %v1091, %v1419
      %v1421 = vpop.f32.mrf.mxu0
      %v1422 = vadd.f32 %v1093, %v1421
      %1423 = vmatmul.bf16.gmra.mxu0 %v726
      %v1424 = vpop.f32.mrf.mxu0
      %v1425 = vadd.f32 %v1096, %v1424
      %v1426 = vpop.f32.mrf.mxu0
      %v1427 = vadd.f32 %v1098, %v1426
      %1428 = vmatmul.bf16.gmra.mxu0 %v728
      %v1429 = vpop.f32.mrf.mxu0
      %v1430 = vadd.f32 %v1101, %v1429
      %v1431 = vpop.f32.mrf.mxu0
      %v1432 = vadd.f32 %v1103, %v1431
      %1433 = vmatmul.bf16.gmra.mxu0 %v730
      %v1434 = vpop.f32.mrf.mxu0
      %v1435 = vadd.f32 %v1106, %v1434
      %v1436 = vpop.f32.mrf.mxu0
      %v1437 = vadd.f32 %v1108, %v1436
      %1438 = vmatmul.bf16.gmra.mxu0 %v732
      %v1439 = vpop.f32.mrf.mxu0
      %v1440 = vadd.f32 %v1111, %v1439
      %v1441 = vpop.f32.mrf.mxu0
      %v1442 = vadd.f32 %v1113, %v1441
      %1443 = vmatmul.bf16.gmra.mxu0 %v734
      %v1444 = vpop.f32.mrf.mxu0
      %v1445 = vadd.f32 %v1116, %v1444
      %v1446 = vpop.f32.mrf.mxu0
      %v1447 = vadd.f32 %v1118, %v1446
      %1448 = vmatmul.bf16.gmra.mxu0 %v736
      %v1449 = vpop.f32.mrf.mxu0
      %v1450 = vadd.f32 %v1121, %v1449
      %v1451 = vpop.f32.mrf.mxu0
      %v1452 = vadd.f32 %v1123, %v1451
      %1453 = vmatmul.bf16.gmra.mxu0 %v738
      %v1454 = vpop.f32.mrf.mxu0
      %v1455 = vadd.f32 %v1126, %v1454
      %v1456 = vpop.f32.mrf.mxu0
      %v1457 = vadd.f32 %v1128, %v1456
      %1458 = vmatmul.bf16.gmra.mxu0 %v740
      %v1459 = vpop.f32.mrf.mxu0
      %v1460 = vadd.f32 %v1131, %v1459
      %v1461 = vpop.f32.mrf.mxu0
      %v1462 = vadd.f32 %v1133, %v1461
      %1463 = vmatmul.bf16.gmra.mxu0 %v742
      %v1464 = vpop.f32.mrf.mxu0
      %v1465 = vadd.f32 %v1136, %v1464
      %v1466 = vpop.f32.mrf.mxu0
      %v1467 = vadd.f32 %v1138, %v1466
      %1468 = vmatmul.bf16.gmra.mxu0 %v744
      %v1469 = vpop.f32.mrf.mxu0
      %v1470 = vadd.f32 %v1141, %v1469
      %v1471 = vpop.f32.mrf.mxu0
      %v1472 = vadd.f32 %v1143, %v1471
      %1473 = vmatmul.bf16.gmra.mxu0 %v746
      %v1474 = vpop.f32.mrf.mxu0
      %v1475 = vadd.f32 %v1146, %v1474
      %v1476 = vpop.f32.mrf.mxu0
      %v1477 = vadd.f32 %v1148, %v1476
      %1478 = vmatmul.bf16.gmra.mxu0 %v748
      %v1479 = vpop.f32.mrf.mxu0
      %v1480 = vadd.f32 %v1151, %v1479
      %v1481 = vpop.f32.mrf.mxu0
      %v1482 = vadd.f32 %v1153, %v1481
      %1483 = vmatmul.bf16.gmra.mxu0 %v750
      %v1484 = vpop.f32.mrf.mxu0
      %v1485 = vadd.f32 %v1156, %v1484
      %v1486 = vpop.f32.mrf.mxu0
      %v1487 = vadd.f32 %v1158, %v1486
      %1488 = vmatmul.bf16.gmra.mxu0 %v752
      %v1489 = vpop.f32.mrf.mxu0
      %v1490 = vadd.f32 %v1161, %v1489
      %v1491 = vpop.f32.mrf.mxu0
      %v1492 = vadd.f32 %v1163, %v1491
      %1493 = vmatmul.bf16.gmra.mxu0 %v754
      %v1494 = vpop.f32.mrf.mxu0
      %v1495 = vadd.f32 %v1166, %v1494
      %v1496 = vpop.f32.mrf.mxu0
      %v1497 = vadd.f32 %v1168, %v1496
      %1498 = vmatmul.bf16.gmra.mxu0 %v756
      %v1499 = vpop.f32.mrf.mxu0
      %v1500 = vadd.f32 %v1171, %v1499
      %v1501 = vpop.f32.mrf.mxu0
      %v1502 = vadd.f32 %v1173, %v1501
      %1503 = vmatmul.bf16.gmra.mxu0 %v758
      %v1504 = vpop.f32.mrf.mxu0
      %v1505 = vadd.f32 %v1176, %v1504
      %v1506 = vpop.f32.mrf.mxu0
      %v1507 = vadd.f32 %v1178, %v1506
      %1508 = vmatmul.bf16.gmra.mxu0 %v760
      %v1509 = vpop.f32.mrf.mxu0
      %v1510 = vadd.f32 %v1181, %v1509
      %v1511 = vpop.f32.mrf.mxu0
      %v1512 = vadd.f32 %v1183, %v1511
      %1513 = vmatmul.bf16.gmra.mxu0 %v762
      %v1514 = vpop.f32.mrf.mxu0
      %v1515 = vadd.f32 %v1186, %v1514
      %v1516 = vpop.f32.mrf.mxu0
      %v1517 = vadd.f32 %v1188, %v1516
      %1518 = vmatmul.bf16.gmra.mxu0 %v764
      %v1519 = vpop.f32.mrf.mxu0
      %v1520 = vadd.f32 %v1191, %v1519
      %v1521 = vpop.f32.mrf.mxu0
      %v1522 = vadd.f32 %v1193, %v1521
      %1523 = vmatmul.bf16.gmra.mxu0 %v766
      %v1524 = vpop.f32.mrf.mxu0
      %v1525 = vadd.f32 %v1196, %v1524
      %v1526 = vpop.f32.mrf.mxu0
      %v1527 = vadd.f32 %v1198, %v1526
      %1528 = vmatmul.bf16.gmra.mxu0 %v768
      %v1529 = vpop.f32.mrf.mxu0
      %v1530 = vadd.f32 %v1201, %v1529
      %v1531 = vpop.f32.mrf.mxu0
      %v1532 = vadd.f32 %v1203, %v1531
      %1533 = vmatmul.bf16.gmra.mxu0 %v770
      %v1534 = vpop.f32.mrf.mxu0
      %v1535 = vadd.f32 %v1206, %v1534
      %v1536 = vpop.f32.mrf.mxu0
      %v1537 = vadd.f32 %v1208, %v1536
      %1538 = vmatmul.bf16.gmra.mxu0 %v772
      %v1539 = vpop.f32.mrf.mxu0
      %v1540 = vadd.f32 %v1211, %v1539
      %v1541 = vpop.f32.mrf.mxu0
      %v1542 = vadd.f32 %v1213, %v1541
      %1543 = vmatmul.bf16.gmra.mxu0 %v774
      %v1544 = vpop.f32.mrf.mxu0
      %v1545 = vadd.f32 %v1216, %v1544
      %v1546 = vpop.f32.mrf.mxu0
      %v1547 = vadd.f32 %v1218, %v1546
      %1548 = vmatmul.bf16.gmra.mxu0 %v776
      %v1549 = vpop.f32.mrf.mxu0
      %v1550 = vadd.f32 %v1221, %v1549
      %v1551 = vpop.f32.mrf.mxu0
      %v1552 = vadd.f32 %v1223, %v1551
      %1553 = vmatmul.bf16.gmra.mxu0 %v778
      %v1554 = vpop.f32.mrf.mxu0
      %v1555 = vadd.f32 %v1226, %v1554
      %v1556 = vpop.f32.mrf.mxu0
      %v1557 = vadd.f32 %v1228, %v1556
      %1558 = vmatmul.bf16.gmra.mxu0 %v780
      %v1559 = vpop.f32.mrf.mxu0
      %v1560 = vadd.f32 %v1231, %v1559
      %v1561 = vpop.f32.mrf.mxu0
      %v1562 = vadd.f32 %v1233, %v1561
      %1563 = vmatmul.bf16.gmra.mxu0 %v782
      %v1564 = vpop.f32.mrf.mxu0
      %v1565 = vadd.f32 %v1236, %v1564
      %v1566 = vpop.f32.mrf.mxu0
      %v1567 = vadd.f32 %v1238, %v1566
      %1568 = vmatmul.bf16.gmra.mxu0 %v784
      %v1569 = vpop.f32.mrf.mxu0
      %v1570 = vadd.f32 %v1241, %v1569
      %v1571 = vpop.f32.mrf.mxu0
      %v1572 = vadd.f32 %v1243, %v1571
      %1573 = vmatmul.bf16.gmra.mxu0 %v786
      %v1574 = vpop.f32.mrf.mxu0
      %v1575 = vadd.f32 %v1246, %v1574
      %v1576 = vpop.f32.mrf.mxu0
      %v1577 = vadd.f32 %v1248, %v1576
      %1578 = vmatmul.bf16.gmra.mxu0 %v788
      %v1579 = vpop.f32.mrf.mxu0
      %v1580 = vadd.f32 %v1251, %v1579
      %v1581 = vpop.f32.mrf.mxu0
      %v1582 = vadd.f32 %v1253, %v1581
      %1583 = vmatmul.bf16.gmra.mxu0 %v790
      %v1584 = vpop.f32.mrf.mxu0
      %v1585 = vadd.f32 %v1256, %v1584
      %v1586 = vpop.f32.mrf.mxu0
      %v1587 = vadd.f32 %v1258, %v1586
      %1588 = vmatmul.bf16.gmra.mxu0 %v792
      %v1589 = vpop.f32.mrf.mxu0
      %v1590 = vadd.f32 %v1261, %v1589
      %v1591 = vpop.f32.mrf.mxu0
      %v1592 = vadd.f32 %v1263, %v1591
      %1593 = vmatmul.bf16.gmra.mxu0 %v794
      %v1594 = vpop.f32.mrf.mxu0
      %v1595 = vadd.f32 %v1266, %v1594
      %v1596 = vpop.f32.mrf.mxu0
      %v1597 = vadd.f32 %v1268, %v1596
      %1598 = vmatmul.bf16.gmra.mxu0 %v796
      %v1599 = vpop.f32.mrf.mxu0
      %v1600 = vadd.f32 %v1271, %v1599
      %v1601 = vpop.f32.mrf.mxu0
      %v1602 = vadd.f32 %v1273, %v1601
      %1603 = vmatmul.bf16.gmra.mxu0 %v798
      %v1604 = vpop.f32.mrf.mxu0
      %v1605 = vadd.f32 %v1276, %v1604
      %v1606 = vpop.f32.mrf.mxu0
      %v1607 = vadd.f32 %v1278, %v1606
      %1608 = vmatmul.bf16.gmra.mxu0 %v800
      %v1609 = vpop.f32.mrf.mxu0
      %v1610 = vadd.f32 %v1281, %v1609
      %v1611 = vpop.f32.mrf.mxu0
      %v1612 = vadd.f32 %v1283, %v1611
      %1613 = vmatmul.bf16.gmra.mxu0 %v802
      %v1614 = vpop.f32.mrf.mxu0
      %v1615 = vadd.f32 %v1286, %v1614
      %v1616 = vpop.f32.mrf.mxu0
      %v1617 = vadd.f32 %v1288, %v1616
      %1618 = vmatmul.bf16.gmra.mxu0 %v804
      %v1619 = vpop.f32.mrf.mxu0
      %v1620 = vadd.f32 %v1291, %v1619
      %v1621 = vpop.f32.mrf.mxu0
      %v1622 = vadd.f32 %v1293, %v1621
      %1623 = vmatmul.bf16.gmra.mxu0 %v806
      %v1624 = vpop.f32.mrf.mxu0
      %v1625 = vadd.f32 %v1296, %v1624
      %v1626 = vpop.f32.mrf.mxu0
      %v1627 = vadd.f32 %v1298, %v1626
      %1628 = vmatmul.bf16.gmra.mxu0 %v808
      %v1629 = vpop.f32.mrf.mxu0
      %v1630 = vadd.f32 %v1301, %v1629
      %v1631 = vpop.f32.mrf.mxu0
      %v1632 = vadd.f32 %v1303, %v1631
      %1633 = vmatmul.bf16.gmra.mxu0 %v810
      %v1634 = vpop.f32.mrf.mxu0
      %v1635 = vadd.f32 %v1306, %v1634
      %v1636 = vpop.f32.mrf.mxu0
      %v1637 = vadd.f32 %v1308, %v1636
      %1638 = vmatmul.bf16.gmra.mxu0 %v812
      %v1639 = vpop.f32.mrf.mxu0
      %v1640 = vadd.f32 %v1311, %v1639
      %v1641 = vpop.f32.mrf.mxu0
      %v1642 = vadd.f32 %v1313, %v1641
      %1643 = vmatmul.bf16.gmra.mxu0 %v814
      %v1644 = vpop.f32.mrf.mxu0
      %v1645 = vadd.f32 %v1316, %v1644
      %v1646 = vpop.f32.mrf.mxu0
      %v1647 = vadd.f32 %v1318, %v1646
      %1648 = vmatmul.bf16.gmra.mxu0 %v816
      %v1649 = vpop.f32.mrf.mxu0
      %v1650 = vadd.f32 %v1321, %v1649
      %v1651 = vpop.f32.mrf.mxu0
      %v1652 = vadd.f32 %v1323, %v1651
      %1653 = vmatmul.bf16.gmra.mxu0 %v818
      %v1654 = vpop.f32.mrf.mxu0
      %v1655 = vadd.f32 %v1326, %v1654
      %v1656 = vpop.f32.mrf.mxu0
      %v1657 = vadd.f32 %v1328, %v1656
      %1658 = vmatmul.bf16.gmra.mxu0 %v820
      %v1659 = vpop.f32.mrf.mxu0
      %v1660 = vadd.f32 %v1331, %v1659
      %v1661 = vpop.f32.mrf.mxu0
      %v1662 = vadd.f32 %v1333, %v1661
      %1663 = vmatmul.bf16.gmra.mxu0 %v822
      %v1664 = vpop.f32.mrf.mxu0
      %v1665 = vadd.f32 %v1336, %v1664
      %v1666 = vpop.f32.mrf.mxu0
      %v1667 = vadd.f32 %v1338, %v1666
      %1668 = vmatmul.bf16.gmra.mxu0 %v824
      %v1669 = vpop.f32.mrf.mxu0
      %v1670 = vadd.f32 %v1341, %v1669
      %v1671 = vpop.f32.mrf.mxu0
      %v1672 = vadd.f32 %v1343, %v1671
      %1673 = vmatmul.bf16.gmra.mxu0 %v826
      %v1674 = vpop.f32.mrf.mxu0
      %v1675 = vadd.f32 %v1346, %v1674
      %v1676 = vpop.f32.mrf.mxu0
      %v1677 = vadd.f32 %v1348, %v1676
      %1678 = vmatmul.bf16.gmra.mxu0 %v828
      %v1679 = vpop.f32.mrf.mxu0
      %v1680 = vadd.f32 %v1351, %v1679
      %v1681 = vpop.f32.mrf.mxu0
      %v1682 = vadd.f32 %v1353, %v1681
      %1683 = vmatmul.bf16.gmra.mxu0 %v830
      %v1684 = vpop.f32.mrf.mxu0
      %v1685 = vadd.f32 %v1356, %v1684
      %v1686 = vpop.f32.mrf.mxu0
      %v1687 = vadd.f32 %v1358, %v1686
      %1688 = vmatmul.bf16.gmra.mxu0 %v832
      %v1689 = vpop.f32.mrf.mxu0
      %v1690 = vadd.f32 %v1361, %v1689
      %v1691 = vpop.f32.mrf.mxu0
      %v1692 = vadd.f32 %v1363, %v1691
      %1693 = vmatmul.bf16.gmra.mxu0 %v834
      %v1694 = vpop.f32.mrf.mxu0
      %v1695 = vadd.f32 %v1366, %v1694
      %v1696 = vpop.f32.mrf.mxu0
      %v1697 = vadd.f32 %v1368, %v1696
      %1698 = vmatmul.bf16.gmra.mxu0 %v836
      %v1699 = vpop.f32.mrf.mxu0
      %v1700 = vadd.f32 %v1371, %v1699
      %v1701 = vpop.f32.mrf.mxu0
      %v1702 = vadd.f32 %v1373, %v1701
      %1703 = vmatmul.bf16.gmra.mxu0 %v838
      %v1704 = vpop.f32.mrf.mxu0
      %v1705 = vadd.f32 %v1376, %v1704
      %v1706 = vpop.f32.mrf.mxu0
      %v1707 = vadd.f32 %v1378, %v1706
      %1708 = vmatmul.bf16.gmra.mxu0 %v840
      %v1709 = vpop.f32.mrf.mxu0
      %v1710 = vadd.f32 %v1381, %v1709
      %v1711 = vpop.f32.mrf.mxu0
      %v1712 = vadd.f32 %v1383, %v1711
      %1713 = vmatmul.bf16.gmra.mxu0 %v842
      %v1714 = vpop.f32.mrf.mxu0
      %v1715 = vadd.f32 %v1386, %v1714
      %v1716 = vpop.f32.mrf.mxu0
      %v1717 = vadd.f32 %v1388, %v1716
      %1718 = vmatmul.bf16.gmra.mxu0 %v844
      %v1719 = vpop.f32.mrf.mxu0
      %v1720 = vadd.f32 %v1391, %v1719
      %v1721 = vpop.f32.mrf.mxu0
      %v1722 = vadd.f32 %v1393, %v1721
      %1723 = vmatmul.bf16.gmra.mxu0 %v846
      %v1724 = vpop.f32.mrf.mxu0
      %v1725 = vadd.f32 %v1396, %v1724
      %v1726 = vpop.f32.mrf.mxu0
      %v1727 = vadd.f32 %v1398, %v1726
      %1728 = vdwg.mxu0
      %v1729 = vmax.f32 %v1410, 0.0
      %v1730 = vmax.f32 %v1412, 0.0
      %v1731 = vmax.f32 %v1415, 0.0
      %v1732 = vmax.f32 %v1417, 0.0
      %v1733 = vmax.f32 %v1420, 0.0
      %v1734 = vmax.f32 %v1422, 0.0
      %v1735 = vmax.f32 %v1425, 0.0
      %v1736 = vmax.f32 %v1427, 0.0
      %v1737 = vmax.f32 %v1430, 0.0
      %v1738 = vmax.f32 %v1432, 0.0
      %v1739 = vmax.f32 %v1435, 0.0
      %v1740 = vmax.f32 %v1437, 0.0
      %v1741 = vmax.f32 %v1440, 0.0
      %v1742 = vmax.f32 %v1442, 0.0
      %v1743 = vmax.f32 %v1445, 0.0
      %v1744 = vmax.f32 %v1447, 0.0
      %v1745 = vmax.f32 %v1450, 0.0
      %v1746 = vmax.f32 %v1452, 0.0
      %v1747 = vmax.f32 %v1455, 0.0
      %v1748 = vmax.f32 %v1457, 0.0
      %v1749 = vmax.f32 %v1460, 0.0
      %v1750 = vmax.f32 %v1462, 0.0
      %v1751 = vmax.f32 %v1465, 0.0
      %v1752 = vmax.f32 %v1467, 0.0
      %v1753 = vmax.f32 %v1470, 0.0
      %v1754 = vmax.f32 %v1472, 0.0
      %v1755 = vmax.f32 %v1475, 0.0
      %v1756 = vmax.f32 %v1477, 0.0
      %v1757 = vmax.f32 %v1480, 0.0
      %v1758 = vmax.f32 %v1482, 0.0
      %v1759 = vmax.f32 %v1485, 0.0
      %v1760 = vmax.f32 %v1487, 0.0
      %v1761 = vmax.f32 %v1490, 0.0
      %v1762 = vmax.f32 %v1492, 0.0
      %v1763 = vmax.f32 %v1495, 0.0
      %v1764 = vmax.f32 %v1497, 0.0
      %v1765 = vmax.f32 %v1500, 0.0
      %v1766 = vmax.f32 %v1502, 0.0
      %v1767 = vmax.f32 %v1505, 0.0
      %v1768 = vmax.f32 %v1507, 0.0
      %v1769 = vmax.f32 %v1510, 0.0
      %v1770 = vmax.f32 %v1512, 0.0
      %v1771 = vmax.f32 %v1515, 0.0
      %v1772 = vmax.f32 %v1517, 0.0
      %v1773 = vmax.f32 %v1520, 0.0
      %v1774 = vmax.f32 %v1522, 0.0
      %v1775 = vmax.f32 %v1525, 0.0
      %v1776 = vmax.f32 %v1527, 0.0
      %v1777 = vmax.f32 %v1530, 0.0
      %v1778 = vmax.f32 %v1532, 0.0
      %v1779 = vmax.f32 %v1535, 0.0
      %v1780 = vmax.f32 %v1537, 0.0
      %v1781 = vmax.f32 %v1540, 0.0
      %v1782 = vmax.f32 %v1542, 0.0
      %v1783 = vmax.f32 %v1545, 0.0
      %v1784 = vmax.f32 %v1547, 0.0
      %v1785 = vmax.f32 %v1550, 0.0
      %v1786 = vmax.f32 %v1552, 0.0
      %v1787 = vmax.f32 %v1555, 0.0
      %v1788 = vmax.f32 %v1557, 0.0
      %v1789 = vmax.f32 %v1560, 0.0
      %v1790 = vmax.f32 %v1562, 0.0
      %v1791 = vmax.f32 %v1565, 0.0
      %v1792 = vmax.f32 %v1567, 0.0
      %v1793 = vmax.f32 %v1570, 0.0
      %v1794 = vmax.f32 %v1572, 0.0
      %v1795 = vmax.f32 %v1575, 0.0
      %v1796 = vmax.f32 %v1577, 0.0
      %v1797 = vmax.f32 %v1580, 0.0
      %v1798 = vmax.f32 %v1582, 0.0
      %v1799 = vmax.f32 %v1585, 0.0
      %v1800 = vmax.f32 %v1587, 0.0
      %v1801 = vmax.f32 %v1590, 0.0
      %v1802 = vmax.f32 %v1592, 0.0
      %v1803 = vmax.f32 %v1595, 0.0
      %v1804 = vmax.f32 %v1597, 0.0
      %v1805 = vmax.f32 %v1600, 0.0
      %v1806 = vmax.f32 %v1602, 0.0
      %v1807 = vmax.f32 %v1605, 0.0
      %v1808 = vmax.f32 %v1607, 0.0
      %v1809 = vmax.f32 %v1610, 0.0
      %v1810 = vmax.f32 %v1612, 0.0
      %v1811 = vmax.f32 %v1615, 0.0
      %v1812 = vmax.f32 %v1617, 0.0
      %v1813 = vmax.f32 %v1620, 0.0
      %v1814 = vmax.f32 %v1622, 0.0
      %v1815 = vmax.f32 %v1625, 0.0
      %v1816 = vmax.f32 %v1627, 0.0
      %v1817 = vmax.f32 %v1630, 0.0
      %v1818 = vmax.f32 %v1632, 0.0
      %v1819 = vmax.f32 %v1635, 0.0
      %v1820 = vmax.f32 %v1637, 0.0
      %v1821 = vmax.f32 %v1640, 0.0
      %v1822 = vmax.f32 %v1642, 0.0
      %v1823 = vmax.f32 %v1645, 0.0
      %v1824 = vmax.f32 %v1647, 0.0
      %v1825 = vmax.f32 %v1650, 0.0
      %v1826 = vmax.f32 %v1652, 0.0
      %v1827 = vmax.f32 %v1655, 0.0
      %v1828 = vmax.f32 %v1657, 0.0
      %v1829 = vmax.f32 %v1660, 0.0
      %v1830 = vmax.f32 %v1662, 0.0
      %v1831 = vmax.f32 %v1665, 0.0
      %v1832 = vmax.f32 %v1667, 0.0
      %v1833 = vmax.f32 %v1670, 0.0
      %v1834 = vmax.f32 %v1672, 0.0
      %v1835 = vmax.f32 %v1675, 0.0
      %v1836 = vmax.f32 %v1677, 0.0
      %v1837 = vmax.f32 %v1680, 0.0
      %v1838 = vmax.f32 %v1682, 0.0
      %v1839 = vmax.f32 %v1685, 0.0
      %v1840 = vmax.f32 %v1687, 0.0
      %v1841 = vmax.f32 %v1690, 0.0
      %v1842 = vmax.f32 %v1692, 0.0
      %v1843 = vmax.f32 %v1695, 0.0
      %v1844 = vmax.f32 %v1697, 0.0
      %v1845 = vmax.f32 %v1700, 0.0
      %v1846 = vmax.f32 %v1702, 0.0
      %v1847 = vmax.f32 %v1705, 0.0
      %v1848 = vmax.f32 %v1707, 0.0
      %v1849 = vmax.f32 %v1710, 0.0
      %v1850 = vmax.f32 %v1712, 0.0
      %v1851 = vmax.f32 %v1715, 0.0
      %v1852 = vmax.f32 %v1717, 0.0
      %v1853 = vmax.f32 %v1720, 0.0
      %v1854 = vmax.f32 %v1722, 0.0
      %v1855 = vmax.f32 %v1725, 0.0
      %v1856 = vmax.f32 %v1727, 0.0
      %vm1857 = vcmask 392192
      %1858 = vst.msk [vmem:[#allocation2] sm:$0xff] %vm1857, 0.0
      %1859 = vst.msk [vmem:[#allocation2 + $0x8] sm:$0xff] %vm1857, 0.0
      %vm1860 = vcmask 385024
      %1861 = vst.msk [vmem:[#allocation2 + $0x10] sm:$0x1] %vm1860, 0.0
      %1862 = vst.msk [vmem:[#allocation2 + $0x18] sm:$0xff] %vm1857, 0.0
      %1863 = vst.msk [vmem:[#allocation2 + $0x20] sm:$0xff] %vm1857, 0.0
      %1864 = vst.msk [vmem:[#allocation2 + $0x28] sm:$0x1] %vm1860, 0.0
      %1865 = vst.msk [vmem:[#allocation2 + $0x30] sm:$0xff] %vm1857, 0.0
      %1866 = vst.msk [vmem:[#allocation2 + $0x38] sm:$0xff] %vm1857, 0.0
      %1867 = vst.msk [vmem:[#allocation2 + $0x40] sm:$0x1] %vm1860, 0.0
      %1868 = vst.msk [vmem:[#allocation2 + $0x48] sm:$0xff] %vm1857, 0.0
      %1869 = vst.msk [vmem:[#allocation2 + $0x50] sm:$0xff] %vm1857, 0.0
      %1870 = vst.msk [vmem:[#allocation2 + $0x58] sm:$0x1] %vm1860, 0.0
      %1871 = vst.msk [vmem:[#allocation2 + $0x60] sm:$0xff] %vm1857, 0.0
      %1872 = vst.msk [vmem:[#allocation2 + $0x68] sm:$0xff] %vm1857, 0.0
      %1873 = vst.msk [vmem:[#allocation2 + $0x70] sm:$0x1] %vm1860, 0.0
      %1874 = vst.msk [vmem:[#allocation2 + $0x78] sm:$0xff] %vm1857, 0.0
      %1875 = vst.msk [vmem:[#allocation2 + $0x80] sm:$0xff] %vm1857, 0.0
      %1876 = vst.msk [vmem:[#allocation2 + $0x88] sm:$0x1] %vm1860, 0.0
      %1877 = vst.msk [vmem:[#allocation2 + $0x90] sm:$0xff] %vm1857, 0.0
      %1878 = vst.msk [vmem:[#allocation2 + $0x98] sm:$0xff] %vm1857, 0.0
      %1879 = vst.msk [vmem:[#allocation2 + $0xa0] sm:$0x1] %vm1860, 0.0
      %1880 = vst.msk [vmem:[#allocation2 + $0xa8] sm:$0xff] %vm1857, 0.0
      %1881 = vst.msk [vmem:[#allocation2 + $0xb0] sm:$0xff] %vm1857, 0.0
      %1882 = vst.msk [vmem:[#allocation2 + $0xb8] sm:$0x1] %vm1860, 0.0
      %1883 = vst.msk [vmem:[#allocation2 + $0xc0] sm:$0xff] %vm1857, 0.0
      %1884 = vst.msk [vmem:[#allocation2 + $0xc8] sm:$0xff] %vm1857, 0.0
      %1885 = vst.msk [vmem:[#allocation2 + $0xd0] sm:$0x1] %vm1860, 0.0
      %1886 = vst.msk [vmem:[#allocation2 + $0xd8] sm:$0xff] %vm1857, 0.0
      %1887 = vst.msk [vmem:[#allocation2 + $0xe0] sm:$0xff] %vm1857, 0.0
      %1888 = vst.msk [vmem:[#allocation2 + $0xe8] sm:$0x1] %vm1860, 0.0
      %1889 = vst.msk [vmem:[#allocation2 + $0xf0] sm:$0xff] %vm1857, 0.0
      %1890 = vst.msk [vmem:[#allocation2 + $0xf8] sm:$0xff] %vm1857, 0.0
      %1891 = vst.msk [vmem:[#allocation2 + $0x100] sm:$0x1] %vm1860, 0.0
      %1892 = vst.msk [vmem:[#allocation2 + $0x108] sm:$0xff] %vm1857, 0.0
      %1893 = vst.msk [vmem:[#allocation2 + $0x110] sm:$0xff] %vm1857, 0.0
      %1894 = vst.msk [vmem:[#allocation2 + $0x118] sm:$0x1] %vm1860, 0.0
      %1895 = vst.msk [vmem:[#allocation2 + $0x120] sm:$0xff] %vm1857, 0.0
      %1896 = vst.msk [vmem:[#allocation2 + $0x128] sm:$0xff] %vm1857, 0.0
      %1897 = vst.msk [vmem:[#allocation2 + $0x130] sm:$0x1] %vm1860, 0.0
      %1898 = vst.msk [vmem:[#allocation2 + $0x138] sm:$0xff] %vm1857, 0.0
      %1899 = vst.msk [vmem:[#allocation2 + $0x140] sm:$0xff] %vm1857, 0.0
      %1900 = vst.msk [vmem:[#allocation2 + $0x148] sm:$0x1] %vm1860, 0.0
      %1901 = vst.msk [vmem:[#allocation2 + $0x150] sm:$0xff] %vm1857, 0.0
      %1902 = vst.msk [vmem:[#allocation2 + $0x158] sm:$0xff] %vm1857, 0.0
      %1903 = vst.msk [vmem:[#allocation2 + $0x160] sm:$0x1] %vm1860, 0.0
      %1904 = vst.msk [vmem:[#allocation2 + $0x168] sm:$0xff] %vm1857, 0.0
      %1905 = vst.msk [vmem:[#allocation2 + $0x170] sm:$0xff] %vm1857, 0.0
      %1906 = vst.msk [vmem:[#allocation2 + $0x178] sm:$0x1] %vm1860, 0.0
      %1907 = vst.msk [vmem:[#allocation2 + $0x180] sm:$0xff] %vm1857, 0.0
      %1908 = vst.msk [vmem:[#allocation2 + $0x188] sm:$0xff] %vm1857, 0.0
      %1909 = vst.msk [vmem:[#allocation2 + $0x190] sm:$0x1] %vm1860, 0.0
      %1910 = vst.msk [vmem:[#allocation2 + $0x198] sm:$0xff] %vm1857, 0.0
      %1911 = vst.msk [vmem:[#allocation2 + $0x1a0] sm:$0xff] %vm1857, 0.0
      %1912 = vst.msk [vmem:[#allocation2 + $0x1a8] sm:$0x1] %vm1860, 0.0
      %1913 = vst.msk [vmem:[#allocation2 + $0x1b0] sm:$0xff] %vm1857, 0.0
      %1914 = vst.msk [vmem:[#allocation2 + $0x1b8] sm:$0xff] %vm1857, 0.0
      %1915 = vst.msk [vmem:[#allocation2 + $0x1c0] sm:$0x1] %vm1860, 0.0
      %1916 = vst.msk [vmem:[#allocation2 + $0x1c8] sm:$0xff] %vm1857, 0.0
      %1917 = vst.msk [vmem:[#allocation2 + $0x1d0] sm:$0xff] %vm1857, 0.0
      %1918 = vst.msk [vmem:[#allocation2 + $0x1d8] sm:$0x1] %vm1860, 0.0
      %1919 = vst.msk [vmem:[#allocation2 + $0x1e0] sm:$0xff] %vm1857, 0.0
      %1920 = vst.msk [vmem:[#allocation2 + $0x1e8] sm:$0xff] %vm1857, 0.0
      %1921 = vst.msk [vmem:[#allocation2 + $0x1f0] sm:$0x1] %vm1860, 0.0
      %1922 = vst.msk [vmem:[#allocation2 + $0x1f8] sm:$0xff] %vm1857, 0.0
      %1923 = vst.msk [vmem:[#allocation2 + $0x200] sm:$0xff] %vm1857, 0.0
      %1924 = vst.msk [vmem:[#allocation2 + $0x208] sm:$0x1] %vm1860, 0.0
      %1925 = vst.msk [vmem:[#allocation2 + $0x210] sm:$0xff] %vm1857, 0.0
      %1926 = vst.msk [vmem:[#allocation2 + $0x218] sm:$0xff] %vm1857, 0.0
      %1927 = vst.msk [vmem:[#allocation2 + $0x220] sm:$0x1] %vm1860, 0.0
      %1928 = vst.msk [vmem:[#allocation2 + $0x228] sm:$0xff] %vm1857, 0.0
      %1929 = vst.msk [vmem:[#allocation2 + $0x230] sm:$0xff] %vm1857, 0.0
      %1930 = vst.msk [vmem:[#allocation2 + $0x238] sm:$0x1] %vm1860, 0.0
      %1931 = vst.msk [vmem:[#allocation2 + $0x240] sm:$0xff] %vm1857, 0.0
      %1932 = vst.msk [vmem:[#allocation2 + $0x248] sm:$0xff] %vm1857, 0.0
      %1933 = vst.msk [vmem:[#allocation2 + $0x250] sm:$0x1] %vm1860, 0.0
      %1934 = vst.msk [vmem:[#allocation2 + $0x258] sm:$0xff] %vm1857, 0.0
      %1935 = vst.msk [vmem:[#allocation2 + $0x260] sm:$0xff] %vm1857, 0.0
      %1936 = vst.msk [vmem:[#allocation2 + $0x268] sm:$0x1] %vm1860, 0.0
      %1937 = vst.msk [vmem:[#allocation2 + $0x270] sm:$0xff] %vm1857, 0.0
      %1938 = vst.msk [vmem:[#allocation2 + $0x278] sm:$0xff] %vm1857, 0.0
      %1939 = vst.msk [vmem:[#allocation2 + $0x280] sm:$0x1] %vm1860, 0.0
      %1940 = vst.msk [vmem:[#allocation2 + $0x288] sm:$0xff] %vm1857, 0.0
      %1941 = vst.msk [vmem:[#allocation2 + $0x290] sm:$0xff] %vm1857, 0.0
      %1942 = vst.msk [vmem:[#allocation2 + $0x298] sm:$0x1] %vm1860, 0.0
      %1943 = vst.msk [vmem:[#allocation2 + $0x2a0] sm:$0xff] %vm1857, 0.0
      %1944 = vst.msk [vmem:[#allocation2 + $0x2a8] sm:$0xff] %vm1857, 0.0
      %1945 = vst.msk [vmem:[#allocation2 + $0x2b0] sm:$0x1] %vm1860, 0.0
      %1946 = vst.msk [vmem:[#allocation2 + $0x2b8] sm:$0xff] %vm1857, 0.0
      %1947 = vst.msk [vmem:[#allocation2 + $0x2c0] sm:$0xff] %vm1857, 0.0
      %1948 = vst.msk [vmem:[#allocation2 + $0x2c8] sm:$0x1] %vm1860, 0.0
      %1949 = vst.msk [vmem:[#allocation2 + $0x2d0] sm:$0xff] %vm1857, 0.0
      %1950 = vst.msk [vmem:[#allocation2 + $0x2d8] sm:$0xff] %vm1857, 0.0
      %1951 = vst.msk [vmem:[#allocation2 + $0x2e0] sm:$0x1] %vm1860, 0.0
      %1952 = vst.msk [vmem:[#allocation2 + $0x2e8] sm:$0xff] %vm1857, 0.0
      %1953 = vst.msk [vmem:[#allocation2 + $0x2f0] sm:$0xff] %vm1857, 0.0
      %1954 = vst.msk [vmem:[#allocation2 + $0x2f8] sm:$0x1] %vm1860, 0.0
      %1955 = vst.msk [vmem:[#allocation2 + $0x300] sm:$0xff] %vm1857, 0.0
      %1956 = vst.msk [vmem:[#allocation2 + $0x308] sm:$0xff] %vm1857, 0.0
      %1957 = vst.msk [vmem:[#allocation2 + $0x310] sm:$0x1] %vm1860, 0.0
      %1958 = vst.msk [vmem:[#allocation2 + $0x318] sm:$0xff] %vm1857, 0.0
      %1959 = vst.msk [vmem:[#allocation2 + $0x320] sm:$0xff] %vm1857, 0.0
      %1960 = vst.msk [vmem:[#allocation2 + $0x328] sm:$0x1] %vm1860, 0.0
      %1961 = vst.msk [vmem:[#allocation2 + $0x330] sm:$0xff] %vm1857, 0.0
      %1962 = vst.msk [vmem:[#allocation2 + $0x338] sm:$0xff] %vm1857, 0.0
      %1963 = vst.msk [vmem:[#allocation2 + $0x340] sm:$0x1] %vm1860, 0.0
      %1964 = vst.msk [vmem:[#allocation2 + $0x348] sm:$0xff] %vm1857, 0.0
      %1965 = vst.msk [vmem:[#allocation2 + $0x350] sm:$0xff] %vm1857, 0.0
      %1966 = vst.msk [vmem:[#allocation2 + $0x358] sm:$0x1] %vm1860, 0.0
      %1967 = vst.msk [vmem:[#allocation2 + $0x360] sm:$0xff] %vm1857, 0.0
      %1968 = vst.msk [vmem:[#allocation2 + $0x368] sm:$0xff] %vm1857, 0.0
      %1969 = vst.msk [vmem:[#allocation2 + $0x370] sm:$0x1] %vm1860, 0.0
      %1970 = vst.msk [vmem:[#allocation2 + $0x378] sm:$0xff] %vm1857, 0.0
      %1971 = vst.msk [vmem:[#allocation2 + $0x380] sm:$0xff] %vm1857, 0.0
      %1972 = vst.msk [vmem:[#allocation2 + $0x388] sm:$0x1] %vm1860, 0.0
      %1973 = vst.msk [vmem:[#allocation2 + $0x390] sm:$0xff] %vm1857, 0.0
      %1974 = vst.msk [vmem:[#allocation2 + $0x398] sm:$0xff] %vm1857, 0.0
      %1975 = vst.msk [vmem:[#allocation2 + $0x3a0] sm:$0x1] %vm1860, 0.0
      %1976 = vst.msk [vmem:[#allocation2 + $0x3a8] sm:$0xff] %vm1857, 0.0
      %1977 = vst.msk [vmem:[#allocation2 + $0x3b0] sm:$0xff] %vm1857, 0.0
      %1978 = vst.msk [vmem:[#allocation2 + $0x3b8] sm:$0x1] %vm1860, 0.0
      %1979 = vst.msk [vmem:[#allocation2 + $0x3c0] sm:$0xff] %vm1857, 0.0
      %1980 = vst.msk [vmem:[#allocation2 + $0x3c8] sm:$0xff] %vm1857, 0.0
      %1981 = vst.msk [vmem:[#allocation2 + $0x3d0] sm:$0x1] %vm1860, 0.0
      %1982 = vst.msk [vmem:[#allocation2 + $0x3d8] sm:$0xff] %vm1857, 0.0
      %1983 = vst.msk [vmem:[#allocation2 + $0x3e0] sm:$0xff] %vm1857, 0.0
      %1984 = vst.msk [vmem:[#allocation2 + $0x3e8] sm:$0x1] %vm1860, 0.0
      %1985 = vst.msk [vmem:[#allocation2 + $0x3f0] sm:$0xff] %vm1857, 0.0
      %1986 = vst.msk [vmem:[#allocation2 + $0x3f8] sm:$0xff] %vm1857, 0.0
      %1987 = vst.msk [vmem:[#allocation2 + $0x400] sm:$0x1] %vm1860, 0.0
      %1988 = vst.msk [vmem:[#allocation2 + $0x408] sm:$0xff] %vm1857, 0.0
      %1989 = vst.msk [vmem:[#allocation2 + $0x410] sm:$0xff] %vm1857, 0.0
      %1990 = vst.msk [vmem:[#allocation2 + $0x418] sm:$0x1] %vm1860, 0.0
      %1991 = vst.msk [vmem:[#allocation2 + $0x420] sm:$0xff] %vm1857, 0.0
      %1992 = vst.msk [vmem:[#allocation2 + $0x428] sm:$0xff] %vm1857, 0.0
      %1993 = vst.msk [vmem:[#allocation2 + $0x430] sm:$0x1] %vm1860, 0.0
      %1994 = vst.msk [vmem:[#allocation2 + $0x438] sm:$0xff] %vm1857, 0.0
      %1995 = vst.msk [vmem:[#allocation2 + $0x440] sm:$0xff] %vm1857, 0.0
      %1996 = vst.msk [vmem:[#allocation2 + $0x448] sm:$0x1] %vm1860, 0.0
      %1997 = vst.msk [vmem:[#allocation2 + $0x450] sm:$0xff] %vm1857, 0.0
      %1998 = vst.msk [vmem:[#allocation2 + $0x458] sm:$0xff] %vm1857, 0.0
      %1999 = vst.msk [vmem:[#allocation2 + $0x460] sm:$0x1] %vm1860, 0.0
      %2000 = vst.msk [vmem:[#allocation2 + $0x468] sm:$0xff] %vm1857, 0.0
      %2001 = vst.msk [vmem:[#allocation2 + $0x470] sm:$0xff] %vm1857, 0.0
      %2002 = vst.msk [vmem:[#allocation2 + $0x478] sm:$0x1] %vm1860, 0.0
      %2003 = vst.msk [vmem:[#allocation2 + $0x480] sm:$0xff] %vm1857, 0.0
      %2004 = vst.msk [vmem:[#allocation2 + $0x488] sm:$0xff] %vm1857, 0.0
      %2005 = vst.msk [vmem:[#allocation2 + $0x490] sm:$0x1] %vm1860, 0.0
      %2006 = vst.msk [vmem:[#allocation2 + $0x498] sm:$0xff] %vm1857, 0.0
      %2007 = vst.msk [vmem:[#allocation2 + $0x4a0] sm:$0xff] %vm1857, 0.0
      %2008 = vst.msk [vmem:[#allocation2 + $0x4a8] sm:$0x1] %vm1860, 0.0
      %2009 = vst.msk [vmem:[#allocation2 + $0x4b0] sm:$0xff] %vm1857, 0.0
      %2010 = vst.msk [vmem:[#allocation2 + $0x4b8] sm:$0xff] %vm1857, 0.0
      %2011 = vst.msk [vmem:[#allocation2 + $0x4c0] sm:$0x1] %vm1860, 0.0
      %2012 = vst.msk [vmem:[#allocation2 + $0x4c8] sm:$0xff] %vm1857, 0.0
      %2013 = vst.msk [vmem:[#allocation2 + $0x4d0] sm:$0xff] %vm1857, 0.0
      %2014 = vst.msk [vmem:[#allocation2 + $0x4d8] sm:$0x1] %vm1860, 0.0
      %2015 = vst.msk [vmem:[#allocation2 + $0x4e0] sm:$0xff] %vm1857, 0.0
      %2016 = vst.msk [vmem:[#allocation2 + $0x4e8] sm:$0xff] %vm1857, 0.0
      %2017 = vst.msk [vmem:[#allocation2 + $0x4f0] sm:$0x1] %vm1860, 0.0
      %2018 = vst.msk [vmem:[#allocation2 + $0x4f8] sm:$0xff] %vm1857, 0.0
      %2019 = vst.msk [vmem:[#allocation2 + $0x500] sm:$0xff] %vm1857, 0.0
      %2020 = vst.msk [vmem:[#allocation2 + $0x508] sm:$0x1] %vm1860, 0.0
      %2021 = vst.msk [vmem:[#allocation2 + $0x510] sm:$0xff] %vm1857, 0.0
      %2022 = vst.msk [vmem:[#allocation2 + $0x518] sm:$0xff] %vm1857, 0.0
      %2023 = vst.msk [vmem:[#allocation2 + $0x520] sm:$0x1] %vm1860, 0.0
      %2024 = vst.msk [vmem:[#allocation2 + $0x528] sm:$0xff] %vm1857, 0.0
      %2025 = vst.msk [vmem:[#allocation2 + $0x530] sm:$0xff] %vm1857, 0.0
      %2026 = vst.msk [vmem:[#allocation2 + $0x538] sm:$0x1] %vm1860, 0.0
      %2027 = vst.msk [vmem:[#allocation2 + $0x540] sm:$0xff] %vm1857, 0.0
      %2028 = vst.msk [vmem:[#allocation2 + $0x548] sm:$0xff] %vm1857, 0.0
      %2029 = vst.msk [vmem:[#allocation2 + $0x550] sm:$0x1] %vm1860, 0.0
      %2030 = vst.msk [vmem:[#allocation2 + $0x558] sm:$0xff] %vm1857, 0.0
      %2031 = vst.msk [vmem:[#allocation2 + $0x560] sm:$0xff] %vm1857, 0.0
      %2032 = vst.msk [vmem:[#allocation2 + $0x568] sm:$0x1] %vm1860, 0.0
      %2033 = vst.msk [vmem:[#allocation2 + $0x570] sm:$0xff] %vm1857, 0.0
      %2034 = vst.msk [vmem:[#allocation2 + $0x578] sm:$0xff] %vm1857, 0.0
      %2035 = vst.msk [vmem:[#allocation2 + $0x580] sm:$0x1] %vm1860, 0.0
      %2036 = vst.msk [vmem:[#allocation2 + $0x588] sm:$0xff] %vm1857, 0.0
      %2037 = vst.msk [vmem:[#allocation2 + $0x590] sm:$0xff] %vm1857, 0.0
      %2038 = vst.msk [vmem:[#allocation2 + $0x598] sm:$0x1] %vm1860, 0.0
      %2039 = vst.msk [vmem:[#allocation2 + $0x5a0] sm:$0xff] %vm1857, 0.0
      %2040 = vst.msk [vmem:[#allocation2 + $0x5a8] sm:$0xff] %vm1857, 0.0
      %2041 = vst.msk [vmem:[#allocation2 + $0x5b0] sm:$0x1] %vm1860, 0.0
      %2042 = vst.msk [vmem:[#allocation2 + $0x5b8] sm:$0xff] %vm1857, 0.0
      %2043 = vst.msk [vmem:[#allocation2 + $0x5c0] sm:$0xff] %vm1857, 0.0
      %2044 = vst.msk [vmem:[#allocation2 + $0x5c8] sm:$0x1] %vm1860, 0.0
      %2045 = vst.msk [vmem:[#allocation2 + $0x5d0] sm:$0xff] %vm1857, 0.0
      %2046 = vst.msk [vmem:[#allocation2 + $0x5d8] sm:$0xff] %vm1857, 0.0
      %2047 = vst.msk [vmem:[#allocation2 + $0x5e0] sm:$0x1] %vm1860, 0.0
      %2048 = vst.msk [vmem:[#allocation2 + $0x5e8] sm:$0xff] %vm1857, 0.0
      %2049 = vst.msk [vmem:[#allocation2 + $0x5f0] sm:$0xff] %vm1857, 0.0
      %2050 = vst.msk [vmem:[#allocation2 + $0x5f8] sm:$0x1] %vm1860, 0.0
      %2051 = vst.msk [vmem:[#allocation2 + $0x600] sm:$0xff] %vm1857, 0.0
      %2052 = vst.msk [vmem:[#allocation2 + $0x608] sm:$0xff] %vm1857, 0.0
      %2053 = vst.msk [vmem:[#allocation2 + $0x610] sm:$0x1] %vm1860, 0.0
      %2054 = vst.msk [vmem:[#allocation2 + $0x618] sm:$0xff] %vm1857, 0.0
      %2055 = vst.msk [vmem:[#allocation2 + $0x620] sm:$0xff] %vm1857, 0.0
      %2056 = vst.msk [vmem:[#allocation2 + $0x628] sm:$0x1] %vm1860, 0.0
      %2057 = vst.msk [vmem:[#allocation2 + $0x630] sm:$0xff] %vm1857, 0.0
      %2058 = vst.msk [vmem:[#allocation2 + $0x638] sm:$0xff] %vm1857, 0.0
      %2059 = vst.msk [vmem:[#allocation2 + $0x640] sm:$0x1] %vm1860, 0.0
      %2060 = vst.msk [vmem:[#allocation2 + $0x648] sm:$0xff] %vm1857, 0.0
      %2061 = vst.msk [vmem:[#allocation2 + $0x650] sm:$0xff] %vm1857, 0.0
      %2062 = vst.msk [vmem:[#allocation2 + $0x658] sm:$0x1] %vm1860, 0.0
      %s2063 = scalar_lea.vmem [#allocation2], 24
      %2064 = vst.msk [vmem:[%s2063 + $0x1] sm:$0xff] %vm1857, %v1729
      %2065 = vst.msk [vmem:[%s2063 + $0x9] sm:$0xff] %vm1857, %v1730
      %2066 = vst.msk [vmem:[%s2063 + $0x19] sm:$0xff] %vm1857, %v1731
      %2067 = vst.msk [vmem:[%s2063 + $0x21] sm:$0xff] %vm1857, %v1732
      %2068 = vst.msk [vmem:[%s2063 + $0x31] sm:$0xff] %vm1857, %v1733
      %2069 = vst.msk [vmem:[%s2063 + $0x39] sm:$0xff] %vm1857, %v1734
      %2070 = vst.msk [vmem:[%s2063 + $0x49] sm:$0xff] %vm1857, %v1735
      %2071 = vst.msk [vmem:[%s2063 + $0x51] sm:$0xff] %vm1857, %v1736
      %2072 = vst.msk [vmem:[%s2063 + $0x61] sm:$0xff] %vm1857, %v1737
      %2073 = vst.msk [vmem:[%s2063 + $0x69] sm:$0xff] %vm1857, %v1738
      %2074 = vst.msk [vmem:[%s2063 + $0x79] sm:$0xff] %vm1857, %v1739
      %2075 = vst.msk [vmem:[%s2063 + $0x81] sm:$0xff] %vm1857, %v1740
      %2076 = vst.msk [vmem:[%s2063 + $0x91] sm:$0xff] %vm1857, %v1741
      %2077 = vst.msk [vmem:[%s2063 + $0x99] sm:$0xff] %vm1857, %v1742
      %2078 = vst.msk [vmem:[%s2063 + $0xa9] sm:$0xff] %vm1857, %v1743
      %2079 = vst.msk [vmem:[%s2063 + $0xb1] sm:$0xff] %vm1857, %v1744
      %2080 = vst.msk [vmem:[%s2063 + $0xc1] sm:$0xff] %vm1857, %v1745
      %2081 = vst.msk [vmem:[%s2063 + $0xc9] sm:$0xff] %vm1857, %v1746
      %2082 = vst.msk [vmem:[%s2063 + $0xd9] sm:$0xff] %vm1857, %v1747
      %2083 = vst.msk [vmem:[%s2063 + $0xe1] sm:$0xff] %vm1857, %v1748
      %2084 = vst.msk [vmem:[%s2063 + $0xf1] sm:$0xff] %vm1857, %v1749
      %2085 = vst.msk [vmem:[%s2063 + $0xf9] sm:$0xff] %vm1857, %v1750
      %2086 = vst.msk [vmem:[%s2063 + $0x109] sm:$0xff] %vm1857, %v1751
      %2087 = vst.msk [vmem:[%s2063 + $0x111] sm:$0xff] %vm1857, %v1752
      %2088 = vst.msk [vmem:[%s2063 + $0x121] sm:$0xff] %vm1857, %v1753
      %2089 = vst.msk [vmem:[%s2063 + $0x129] sm:$0xff] %vm1857, %v1754
      %2090 = vst.msk [vmem:[%s2063 + $0x139] sm:$0xff] %vm1857, %v1755
      %2091 = vst.msk [vmem:[%s2063 + $0x141] sm:$0xff] %vm1857, %v1756
      %2092 = vst.msk [vmem:[%s2063 + $0x151] sm:$0xff] %vm1857, %v1757
      %2093 = vst.msk [vmem:[%s2063 + $0x159] sm:$0xff] %vm1857, %v1758
      %2094 = vst.msk [vmem:[%s2063 + $0x169] sm:$0xff] %vm1857, %v1759
      %2095 = vst.msk [vmem:[%s2063 + $0x171] sm:$0xff] %vm1857, %v1760
      %2096 = vst.msk [vmem:[%s2063 + $0x199] sm:$0xff] %vm1857, %v1761
      %2097 = vst.msk [vmem:[%s2063 + $0x1a1] sm:$0xff] %vm1857, %v1762
      %2098 = vst.msk [vmem:[%s2063 + $0x1b1] sm:$0xff] %vm1857, %v1763
      %2099 = vst.msk [vmem:[%s2063 + $0x1b9] sm:$0xff] %vm1857, %v1764
      %2100 = vst.msk [vmem:[%s2063 + $0x1c9] sm:$0xff] %vm1857, %v1765
      %2101 = vst.msk [vmem:[%s2063 + $0x1d1] sm:$0xff] %vm1857, %v1766
      %2102 = vst.msk [vmem:[%s2063 + $0x1e1] sm:$0xff] %vm1857, %v1767
      %2103 = vst.msk [vmem:[%s2063 + $0x1e9] sm:$0xff] %vm1857, %v1768
      %2104 = vst.msk [vmem:[%s2063 + $0x1f9] sm:$0xff] %vm1857, %v1769
      %2105 = vst.msk [vmem:[%s2063 + $0x201] sm:$0xff] %vm1857, %v1770
      %2106 = vst.msk [vmem:[%s2063 + $0x211] sm:$0xff] %vm1857, %v1771
      %2107 = vst.msk [vmem:[%s2063 + $0x219] sm:$0xff] %vm1857, %v1772
      %2108 = vst.msk [vmem:[%s2063 + $0x229] sm:$0xff] %vm1857, %v1773
      %2109 = vst.msk [vmem:[%s2063 + $0x231] sm:$0xff] %vm1857, %v1774
      %2110 = vst.msk [vmem:[%s2063 + $0x241] sm:$0xff] %vm1857, %v1775
      %2111 = vst.msk [vmem:[%s2063 + $0x249] sm:$0xff] %vm1857, %v1776
      %2112 = vst.msk [vmem:[%s2063 + $0x259] sm:$0xff] %vm1857, %v1777
      %2113 = vst.msk [vmem:[%s2063 + $0x261] sm:$0xff] %vm1857, %v1778
      %2114 = vst.msk [vmem:[%s2063 + $0x271] sm:$0xff] %vm1857, %v1779
      %2115 = vst.msk [vmem:[%s2063 + $0x279] sm:$0xff] %vm1857, %v1780
      %2116 = vst.msk [vmem:[%s2063 + $0x289] sm:$0xff] %vm1857, %v1781
      %2117 = vst.msk [vmem:[%s2063 + $0x291] sm:$0xff] %vm1857, %v1782
      %2118 = vst.msk [vmem:[%s2063 + $0x2a1] sm:$0xff] %vm1857, %v1783
      %2119 = vst.msk [vmem:[%s2063 + $0x2a9] sm:$0xff] %vm1857, %v1784
      %2120 = vst.msk [vmem:[%s2063 + $0x2b9] sm:$0xff] %vm1857, %v1785
      %2121 = vst.msk [vmem:[%s2063 + $0x2c1] sm:$0xff] %vm1857, %v1786
      %2122 = vst.msk [vmem:[%s2063 + $0x2d1] sm:$0xff] %vm1857, %v1787
      %2123 = vst.msk [vmem:[%s2063 + $0x2d9] sm:$0xff] %vm1857, %v1788
      %2124 = vst.msk [vmem:[%s2063 + $0x2e9] sm:$0xff] %vm1857, %v1789
      %2125 = vst.msk [vmem:[%s2063 + $0x2f1] sm:$0xff] %vm1857, %v1790
      %2126 = vst.msk [vmem:[%s2063 + $0x301] sm:$0xff] %vm1857, %v1791
      %2127 = vst.msk [vmem:[%s2063 + $0x309] sm:$0xff] %vm1857, %v1792
      %2128 = vst.msk [vmem:[%s2063 + $0x331] sm:$0xff] %vm1857, %v1793
      %2129 = vst.msk [vmem:[%s2063 + $0x339] sm:$0xff] %vm1857, %v1794
      %2130 = vst.msk [vmem:[%s2063 + $0x349] sm:$0xff] %vm1857, %v1795
      %2131 = vst.msk [vmem:[%s2063 + $0x351] sm:$0xff] %vm1857, %v1796
      %2132 = vst.msk [vmem:[%s2063 + $0x361] sm:$0xff] %vm1857, %v1797
      %2133 = vst.msk [vmem:[%s2063 + $0x369] sm:$0xff] %vm1857, %v1798
      %2134 = vst.msk [vmem:[%s2063 + $0x379] sm:$0xff] %vm1857, %v1799
      %2135 = vst.msk [vmem:[%s2063 + $0x381] sm:$0xff] %vm1857, %v1800
      %2136 = vst.msk [vmem:[%s2063 + $0x391] sm:$0xff] %vm1857, %v1801
      %2137 = vst.msk [vmem:[%s2063 + $0x399] sm:$0xff] %vm1857, %v1802
      %2138 = vst.msk [vmem:[%s2063 + $0x3a9] sm:$0xff] %vm1857, %v1803
      %2139 = vst.msk [vmem:[%s2063 + $0x3b1] sm:$0xff] %vm1857, %v1804
      %2140 = vst.msk [vmem:[%s2063 + $0x3c1] sm:$0xff] %vm1857, %v1805
      %2141 = vst.msk [vmem:[%s2063 + $0x3c9] sm:$0xff] %vm1857, %v1806
      %2142 = vst.msk [vmem:[%s2063 + $0x3d9] sm:$0xff] %vm1857, %v1807
      %2143 = vst.msk [vmem:[%s2063 + $0x3e1] sm:$0xff] %vm1857, %v1808
      %2144 = vst.msk [vmem:[%s2063 + $0x3f1] sm:$0xff] %vm1857, %v1809
      %2145 = vst.msk [vmem:[%s2063 + $0x3f9] sm:$0xff] %vm1857, %v1810
      %2146 = vst.msk [vmem:[%s2063 + $0x409] sm:$0xff] %vm1857, %v1811
      %2147 = vst.msk [vmem:[%s2063 + $0x411] sm:$0xff] %vm1857, %v1812
      %2148 = vst.msk [vmem:[%s2063 + $0x421] sm:$0xff] %vm1857, %v1813
      %2149 = vst.msk [vmem:[%s2063 + $0x429] sm:$0xff] %vm1857, %v1814
      %2150 = vst.msk [vmem:[%s2063 + $0x439] sm:$0xff] %vm1857, %v1815
      %2151 = vst.msk [vmem:[%s2063 + $0x441] sm:$0xff] %vm1857, %v1816
      %2152 = vst.msk [vmem:[%s2063 + $0x451] sm:$0xff] %vm1857, %v1817
      %2153 = vst.msk [vmem:[%s2063 + $0x459] sm:$0xff] %vm1857, %v1818
      %2154 = vst.msk [vmem:[%s2063 + $0x469] sm:$0xff] %vm1857, %v1819
      %2155 = vst.msk [vmem:[%s2063 + $0x471] sm:$0xff] %vm1857, %v1820
      %2156 = vst.msk [vmem:[%s2063 + $0x481] sm:$0xff] %vm1857, %v1821
      %2157 = vst.msk [vmem:[%s2063 + $0x489] sm:$0xff] %vm1857, %v1822
      %2158 = vst.msk [vmem:[%s2063 + $0x499] sm:$0xff] %vm1857, %v1823
      %2159 = vst.msk [vmem:[%s2063 + $0x4a1] sm:$0xff] %vm1857, %v1824
      %2160 = vst.msk [vmem:[%s2063 + $0x4c9] sm:$0xff] %vm1857, %v1825
      %2161 = vst.msk [vmem:[%s2063 + $0x4d1] sm:$0xff] %vm1857, %v1826
      %2162 = vst.msk [vmem:[%s2063 + $0x4e1] sm:$0xff] %vm1857, %v1827
      %2163 = vst.msk [vmem:[%s2063 + $0x4e9] sm:$0xff] %vm1857, %v1828
      %2164 = vst.msk [vmem:[%s2063 + $0x4f9] sm:$0xff] %vm1857, %v1829
      %2165 = vst.msk [vmem:[%s2063 + $0x501] sm:$0xff] %vm1857, %v1830
      %2166 = vst.msk [vmem:[%s2063 + $0x511] sm:$0xff] %vm1857, %v1831
      %2167 = vst.msk [vmem:[%s2063 + $0x519] sm:$0xff] %vm1857, %v1832
      %2168 = vst.msk [vmem:[%s2063 + $0x529] sm:$0xff] %vm1857, %v1833
      %2169 = vst.msk [vmem:[%s2063 + $0x531] sm:$0xff] %vm1857, %v1834
      %2170 = vst.msk [vmem:[%s2063 + $0x541] sm:$0xff] %vm1857, %v1835
      %2171 = vst.msk [vmem:[%s2063 + $0x549] sm:$0xff] %vm1857, %v1836
      %2172 = vst.msk [vmem:[%s2063 + $0x559] sm:$0xff] %vm1857, %v1837
      %2173 = vst.msk [vmem:[%s2063 + $0x561] sm:$0xff] %vm1857, %v1838
      %2174 = vst.msk [vmem:[%s2063 + $0x571] sm:$0xff] %vm1857, %v1839
      %2175 = vst.msk [vmem:[%s2063 + $0x579] sm:$0xff] %vm1857, %v1840
      %2176 = vst.msk [vmem:[%s2063 + $0x589] sm:$0xff] %vm1857, %v1841
      %2177 = vst.msk [vmem:[%s2063 + $0x591] sm:$0xff] %vm1857, %v1842
      %2178 = vst.msk [vmem:[%s2063 + $0x5a1] sm:$0xff] %vm1857, %v1843
      %2179 = vst.msk [vmem:[%s2063 + $0x5a9] sm:$0xff] %vm1857, %v1844
      %2180 = vst.msk [vmem:[%s2063 + $0x5b9] sm:$0xff] %vm1857, %v1845
      %2181 = vst.msk [vmem:[%s2063 + $0x5c1] sm:$0xff] %vm1857, %v1846
      %2182 = vst.msk [vmem:[%s2063 + $0x5d1] sm:$0xff] %vm1857, %v1847
      %2183 = vst.msk [vmem:[%s2063 + $0x5d9] sm:$0xff] %vm1857, %v1848
      %2184 = vst.msk [vmem:[%s2063 + $0x5e9] sm:$0xff] %vm1857, %v1849
      %2185 = vst.msk [vmem:[%s2063 + $0x5f1] sm:$0xff] %vm1857, %v1850
      %2186 = vst.msk [vmem:[%s2063 + $0x601] sm:$0xff] %vm1857, %v1851
      %2187 = vst.msk [vmem:[%s2063 + $0x609] sm:$0xff] %vm1857, %v1852
      %2188 = vst.msk [vmem:[%s2063 + $0x619] sm:$0xff] %vm1857, %v1853
      %2189 = vst.msk [vmem:[%s2063 + $0x621] sm:$0xff] %vm1857, %v1854
      %2190 = vst.msk [vmem:[%s2063 + $0x631] sm:$0xff] %vm1857, %v1855
      %2191 = vst.msk [vmem:[%s2063 + $0x639] sm:$0xff] %vm1857, %v1856
      %v2192 = vld [vmem:[%s2063 + $0x1] sm:$0xff]
      %v2193 = vld [vmem:[%s2063 + $0x9] sm:$0xff]
      %v2194 = vld [vmem:[%s2063 + $0x19] sm:$0xff]
      %v2195 = vld [vmem:[%s2063 + $0x21] sm:$0xff]
      %v2196 = vld [vmem:[%s2063 + $0x31] sm:$0xff]
      %v2197 = vld [vmem:[%s2063 + $0x39] sm:$0xff]
      %v2198 = vld [vmem:[%s2063 + $0x49] sm:$0xff]
      %v2199 = vld [vmem:[%s2063 + $0x51] sm:$0xff]
      %v2200 = vld [vmem:[%s2063 + $0x61] sm:$0xff]
      %v2201 = vld [vmem:[%s2063 + $0x69] sm:$0xff]
      %v2202 = vld [vmem:[%s2063 + $0x79] sm:$0xff]
      %v2203 = vld [vmem:[%s2063 + $0x81] sm:$0xff]
      %v2204 = vld [vmem:[%s2063 + $0x91] sm:$0xff]
      %v2205 = vld [vmem:[%s2063 + $0x99] sm:$0xff]
      %v2206 = vld [vmem:[%s2063 + $0xa9] sm:$0xff]
      %v2207 = vld [vmem:[%s2063 + $0xb1] sm:$0xff]
      %v2208 = vld [vmem:[%s2063 + $0xc1] sm:$0xff]
      %v2209 = vld [vmem:[%s2063 + $0xc9] sm:$0xff]
      %v2210 = vld [vmem:[%s2063 + $0xd9] sm:$0xff]
      %v2211 = vld [vmem:[%s2063 + $0xe1] sm:$0xff]
      %v2212 = vld [vmem:[%s2063 + $0xf1] sm:$0xff]
      %v2213 = vld [vmem:[%s2063 + $0xf9] sm:$0xff]
      %v2214 = vld [vmem:[%s2063 + $0x109] sm:$0xff]
      %v2215 = vld [vmem:[%s2063 + $0x111] sm:$0xff]
      %v2216 = vld [vmem:[%s2063 + $0x121] sm:$0xff]
      %v2217 = vld [vmem:[%s2063 + $0x129] sm:$0xff]
      %v2218 = vld [vmem:[%s2063 + $0x139] sm:$0xff]
      %v2219 = vld [vmem:[%s2063 + $0x141] sm:$0xff]
      %v2220 = vld [vmem:[%s2063 + $0x151] sm:$0xff]
      %v2221 = vld [vmem:[%s2063 + $0x159] sm:$0xff]
      %v2222 = vld [vmem:[%s2063 + $0x169] sm:$0xff]
      %v2223 = vld [vmem:[%s2063 + $0x171] sm:$0xff]
      %s2224 = scalar_lea.vmem [#allocation2], 432
      %v2225 = vld [vmem:[%s2224 + $0x1] sm:$0xff]
      %v2226 = vld [vmem:[%s2224 + $0x9] sm:$0xff]
      %v2227 = vld [vmem:[%s2224 + $0x19] sm:$0xff]
      %v2228 = vld [vmem:[%s2224 + $0x21] sm:$0xff]
      %v2229 = vld [vmem:[%s2224 + $0x31] sm:$0xff]
      %v2230 = vld [vmem:[%s2224 + $0x39] sm:$0xff]
      %v2231 = vld [vmem:[%s2224 + $0x49] sm:$0xff]
      %v2232 = vld [vmem:[%s2224 + $0x51] sm:$0xff]
      %v2233 = vld [vmem:[%s2224 + $0x61] sm:$0xff]
      %v2234 = vld [vmem:[%s2224 + $0x69] sm:$0xff]
      %v2235 = vld [vmem:[%s2224 + $0x79] sm:$0xff]
      %v2236 = vld [vmem:[%s2224 + $0x81] sm:$0xff]
      %v2237 = vld [vmem:[%s2224 + $0x91] sm:$0xff]
      %v2238 = vld [vmem:[%s2224 + $0x99] sm:$0xff]
      %v2239 = vld [vmem:[%s2224 + $0xa9] sm:$0xff]
      %v2240 = vld [vmem:[%s2224 + $0xb1] sm:$0xff]
      %v2241 = vld [vmem:[%s2224 + $0xc1] sm:$0xff]
      %v2242 = vld [vmem:[%s2224 + $0xc9] sm:$0xff]
      %v2243 = vld [vmem:[%s2224 + $0xd9] sm:$0xff]
      %v2244 = vld [vmem:[%s2224 + $0xe1] sm:$0xff]
      %v2245 = vld [vmem:[%s2224 + $0xf1] sm:$0xff]
      %v2246 = vld [vmem:[%s2224 + $0xf9] sm:$0xff]
      %v2247 = vld [vmem:[%s2224 + $0x109] sm:$0xff]
      %v2248 = vld [vmem:[%s2224 + $0x111] sm:$0xff]
      %v2249 = vld [vmem:[%s2224 + $0x121] sm:$0xff]
      %v2250 = vld [vmem:[%s2224 + $0x129] sm:$0xff]
      %v2251 = vld [vmem:[%s2224 + $0x139] sm:$0xff]
      %v2252 = vld [vmem:[%s2224 + $0x141] sm:$0xff]
      %v2253 = vld [vmem:[%s2224 + $0x151] sm:$0xff]
      %v2254 = vld [vmem:[%s2224 + $0x159] sm:$0xff]
      %v2255 = vld [vmem:[%s2224 + $0x169] sm:$0xff]
      %v2256 = vld [vmem:[%s2224 + $0x171] sm:$0xff]
      %v2257 = vmax.f32 %v2192, %v2225
      %v2258 = vmax.f32 %v2193, %v2226
      %v2259 = vmax.f32 %v2194, %v2227
      %v2260 = vmax.f32 %v2195, %v2228
      %v2261 = vmax.f32 %v2196, %v2229
      %v2262 = vmax.f32 %v2197, %v2230
      %v2263 = vmax.f32 %v2198, %v2231
      %v2264 = vmax.f32 %v2199, %v2232
      %v2265 = vmax.f32 %v2200, %v2233
      %v2266 = vmax.f32 %v2201, %v2234
      %v2267 = vmax.f32 %v2202, %v2235
      %v2268 = vmax.f32 %v2203, %v2236
      %v2269 = vmax.f32 %v2204, %v2237
      %v2270 = vmax.f32 %v2205, %v2238
      %v2271 = vmax.f32 %v2206, %v2239
      %v2272 = vmax.f32 %v2207, %v2240
      %v2273 = vmax.f32 %v2208, %v2241
      %v2274 = vmax.f32 %v2209, %v2242
      %v2275 = vmax.f32 %v2210, %v2243
      %v2276 = vmax.f32 %v2211, %v2244
      %v2277 = vmax.f32 %v2212, %v2245
      %v2278 = vmax.f32 %v2213, %v2246
      %v2279 = vmax.f32 %v2214, %v2247
      %v2280 = vmax.f32 %v2215, %v2248
      %v2281 = vmax.f32 %v2216, %v2249
      %v2282 = vmax.f32 %v2217, %v2250
      %v2283 = vmax.f32 %v2218, %v2251
      %v2284 = vmax.f32 %v2219, %v2252
      %v2285 = vmax.f32 %v2220, %v2253
      %v2286 = vmax.f32 %v2221, %v2254
      %v2287 = vmax.f32 %v2222, %v2255
      %v2288 = vmax.f32 %v2223, %v2256
      %v2289 = vld [vmem:[%s2224] sm:$0xff]
      %v2290 = vld [vmem:[%s2224 + $0x8] sm:$0xff]
      %v2291 = vld [vmem:[%s2224 + $0x18] sm:$0xff]
      %v2292 = vld [vmem:[%s2224 + $0x20] sm:$0xff]
      %v2293 = vld [vmem:[%s2224 + $0x30] sm:$0xff]
      %v2294 = vld [vmem:[%s2224 + $0x38] sm:$0xff]
      %v2295 = vld [vmem:[%s2224 + $0x48] sm:$0xff]
      %v2296 = vld [vmem:[%s2224 + $0x50] sm:$0xff]
      %v2297 = vld [vmem:[%s2224 + $0x60] sm:$0xff]
      %v2298 = vld [vmem:[%s2224 + $0x68] sm:$0xff]
      %v2299 = vld [vmem:[%s2224 + $0x78] sm:$0xff]
      %v2300 = vld [vmem:[%s2224 + $0x80] sm:$0xff]
      %v2301 = vld [vmem:[%s2224 + $0x90] sm:$0xff]
      %v2302 = vld [vmem:[%s2224 + $0x98] sm:$0xff]
      %v2303 = vld [vmem:[%s2224 + $0xa8] sm:$0xff]
      %v2304 = vld [vmem:[%s2224 + $0xb0] sm:$0xff]
      %v2305 = vld [vmem:[%s2224 + $0xc0] sm:$0xff]
      %v2306 = vld [vmem:[%s2224 + $0xc8] sm:$0xff]
      %v2307 = vld [vmem:[%s2224 + $0xd8] sm:$0xff]
      %v2308 = vld [vmem:[%s2224 + $0xe0] sm:$0xff]
      %v2309 = vld [vmem:[%s2224 + $0xf0] sm:$0xff]
      %v2310 = vld [vmem:[%s2224 + $0xf8] sm:$0xff]
      %v2311 = vld [vmem:[%s2224 + $0x108] sm:$0xff]
      %v2312 = vld [vmem:[%s2224 + $0x110] sm:$0xff]
      %v2313 = vld [vmem:[%s2224 + $0x120] sm:$0xff]
      %v2314 = vld [vmem:[%s2224 + $0x128] sm:$0xff]
      %v2315 = vld [vmem:[%s2224 + $0x138] sm:$0xff]
      %v2316 = vld [vmem:[%s2224 + $0x140] sm:$0xff]
      %v2317 = vld [vmem:[%s2224 + $0x150] sm:$0xff]
      %v2318 = vld [vmem:[%s2224 + $0x158] sm:$0xff]
      %v2319 = vld [vmem:[%s2224 + $0x168] sm:$0xff]
      %v2320 = vld [vmem:[%s2224 + $0x170] sm:$0xff]
      %v2321 = vmax.f32 %v2257, %v2289
      %v2322 = vmax.f32 %v2258, %v2290
      %v2323 = vmax.f32 %v2259, %v2291
      %v2324 = vmax.f32 %v2260, %v2292
      %v2325 = vmax.f32 %v2261, %v2293
      %v2326 = vmax.f32 %v2262, %v2294
      %v2327 = vmax.f32 %v2263, %v2295
      %v2328 = vmax.f32 %v2264, %v2296
      %v2329 = vmax.f32 %v2265, %v2297
      %v2330 = vmax.f32 %v2266, %v2298
      %v2331 = vmax.f32 %v2267, %v2299
      %v2332 = vmax.f32 %v2268, %v2300
      %v2333 = vmax.f32 %v2269, %v2301
      %v2334 = vmax.f32 %v2270, %v2302
      %v2335 = vmax.f32 %v2271, %v2303
      %v2336 = vmax.f32 %v2272, %v2304
      %v2337 = vmax.f32 %v2273, %v2305
      %v2338 = vmax.f32 %v2274, %v2306
      %v2339 = vmax.f32 %v2275, %v2307
      %v2340 = vmax.f32 %v2276, %v2308
      %v2341 = vmax.f32 %v2277, %v2309
      %v2342 = vmax.f32 %v2278, %v2310
      %v2343 = vmax.f32 %v2279, %v2311
      %v2344 = vmax.f32 %v2280, %v2312
      %v2345 = vmax.f32 %v2281, %v2313
      %v2346 = vmax.f32 %v2282, %v2314
      %v2347 = vmax.f32 %v2283, %v2315
      %v2348 = vmax.f32 %v2284, %v2316
      %v2349 = vmax.f32 %v2285, %v2317
      %v2350 = vmax.f32 %v2286, %v2318
      %v2351 = vmax.f32 %v2287, %v2319
      %v2352 = vmax.f32 %v2288, %v2320
      %s2353 = scalar_lea.vmem [#allocation2], 840
      %v2354 = vld [vmem:[%s2353 + $0x1] sm:$0xff]
      %v2355 = vld [vmem:[%s2353 + $0x9] sm:$0xff]
      %v2356 = vld [vmem:[%s2353 + $0x19] sm:$0xff]
      %v2357 = vld [vmem:[%s2353 + $0x21] sm:$0xff]
      %v2358 = vld [vmem:[%s2353 + $0x31] sm:$0xff]
      %v2359 = vld [vmem:[%s2353 + $0x39] sm:$0xff]
      %v2360 = vld [vmem:[%s2353 + $0x49] sm:$0xff]
      %v2361 = vld [vmem:[%s2353 + $0x51] sm:$0xff]
      %v2362 = vld [vmem:[%s2353 + $0x61] sm:$0xff]
      %v2363 = vld [vmem:[%s2353 + $0x69] sm:$0xff]
      %v2364 = vld [vmem:[%s2353 + $0x79] sm:$0xff]
      %v2365 = vld [vmem:[%s2353 + $0x81] sm:$0xff]
      %v2366 = vld [vmem:[%s2353 + $0x91] sm:$0xff]
      %v2367 = vld [vmem:[%s2353 + $0x99] sm:$0xff]
      %v2368 = vld [vmem:[%s2353 + $0xa9] sm:$0xff]
      %v2369 = vld [vmem:[%s2353 + $0xb1] sm:$0xff]
      %v2370 = vld [vmem:[%s2353 + $0xc1] sm:$0xff]
      %v2371 = vld [vmem:[%s2353 + $0xc9] sm:$0xff]
      %v2372 = vld [vmem:[%s2353 + $0xd9] sm:$0xff]
      %v2373 = vld [vmem:[%s2353 + $0xe1] sm:$0xff]
      %v2374 = vld [vmem:[%s2353 + $0xf1] sm:$0xff]
      %v2375 = vld [vmem:[%s2353 + $0xf9] sm:$0xff]
      %v2376 = vld [vmem:[%s2353 + $0x109] sm:$0xff]
      %v2377 = vld [vmem:[%s2353 + $0x111] sm:$0xff]
      %v2378 = vld [vmem:[%s2353 + $0x121] sm:$0xff]
      %v2379 = vld [vmem:[%s2353 + $0x129] sm:$0xff]
      %v2380 = vld [vmem:[%s2353 + $0x139] sm:$0xff]
      %v2381 = vld [vmem:[%s2353 + $0x141] sm:$0xff]
      %v2382 = vld [vmem:[%s2353 + $0x151] sm:$0xff]
      %v2383 = vld [vmem:[%s2353 + $0x159] sm:$0xff]
      %v2384 = vld [vmem:[%s2353 + $0x169] sm:$0xff]
      %v2385 = vld [vmem:[%s2353 + $0x171] sm:$0xff]
      %v2386 = vmax.f32 %v2321, %v2354
      %v2387 = vmax.f32 %v2322, %v2355
      %v2388 = vmax.f32 %v2323, %v2356
      %v2389 = vmax.f32 %v2324, %v2357
      %v2390 = vmax.f32 %v2325, %v2358
      %v2391 = vmax.f32 %v2326, %v2359
      %v2392 = vmax.f32 %v2327, %v2360
      %v2393 = vmax.f32 %v2328, %v2361
      %v2394 = vmax.f32 %v2329, %v2362
      %v2395 = vmax.f32 %v2330, %v2363
      %v2396 = vmax.f32 %v2331, %v2364
      %v2397 = vmax.f32 %v2332, %v2365
      %v2398 = vmax.f32 %v2333, %v2366
      %v2399 = vmax.f32 %v2334, %v2367
      %v2400 = vmax.f32 %v2335, %v2368
      %v2401 = vmax.f32 %v2336, %v2369
      %v2402 = vmax.f32 %v2337, %v2370
      %v2403 = vmax.f32 %v2338, %v2371
      %v2404 = vmax.f32 %v2339, %v2372
      %v2405 = vmax.f32 %v2340, %v2373
      %v2406 = vmax.f32 %v2341, %v2374
      %v2407 = vmax.f32 %v2342, %v2375
      %v2408 = vmax.f32 %v2343, %v2376
      %v2409 = vmax.f32 %v2344, %v2377
      %v2410 = vmax.f32 %v2345, %v2378
      %v2411 = vmax.f32 %v2346, %v2379
      %v2412 = vmax.f32 %v2347, %v2380
      %v2413 = vmax.f32 %v2348, %v2381
      %v2414 = vmax.f32 %v2349, %v2382
      %v2415 = vmax.f32 %v2350, %v2383
      %v2416 = vmax.f32 %v2351, %v2384
      %v2417 = vmax.f32 %v2352, %v2385
      %s2418 = scalar_lea.vmem [#allocation2], 816
      %v2419 = vld [vmem:[%s2418 + $0x1] sm:$0xff]
      %v2420 = vld [vmem:[%s2418 + $0x9] sm:$0xff]
      %v2421 = vld [vmem:[%s2418 + $0x19] sm:$0xff]
      %v2422 = vld [vmem:[%s2418 + $0x21] sm:$0xff]
      %v2423 = vld [vmem:[%s2418 + $0x31] sm:$0xff]
      %v2424 = vld [vmem:[%s2418 + $0x39] sm:$0xff]
      %v2425 = vld [vmem:[%s2418 + $0x49] sm:$0xff]
      %v2426 = vld [vmem:[%s2418 + $0x51] sm:$0xff]
      %v2427 = vld [vmem:[%s2418 + $0x61] sm:$0xff]
      %v2428 = vld [vmem:[%s2418 + $0x69] sm:$0xff]
      %v2429 = vld [vmem:[%s2418 + $0x79] sm:$0xff]
      %v2430 = vld [vmem:[%s2418 + $0x81] sm:$0xff]
      %v2431 = vld [vmem:[%s2418 + $0x91] sm:$0xff]
      %v2432 = vld [vmem:[%s2418 + $0x99] sm:$0xff]
      %v2433 = vld [vmem:[%s2418 + $0xa9] sm:$0xff]
      %v2434 = vld [vmem:[%s2418 + $0xb1] sm:$0xff]
      %v2435 = vld [vmem:[%s2418 + $0xc1] sm:$0xff]
      %v2436 = vld [vmem:[%s2418 + $0xc9] sm:$0xff]
      %v2437 = vld [vmem:[%s2418 + $0xd9] sm:$0xff]
      %v2438 = vld [vmem:[%s2418 + $0xe1] sm:$0xff]
      %v2439 = vld [vmem:[%s2418 + $0xf1] sm:$0xff]
      %v2440 = vld [vmem:[%s2418 + $0xf9] sm:$0xff]
      %v2441 = vld [vmem:[%s2418 + $0x109] sm:$0xff]
      %v2442 = vld [vmem:[%s2418 + $0x111] sm:$0xff]
      %v2443 = vld [vmem:[%s2418 + $0x121] sm:$0xff]
      %v2444 = vld [vmem:[%s2418 + $0x129] sm:$0xff]
      %v2445 = vld [vmem:[%s2418 + $0x139] sm:$0xff]
      %v2446 = vld [vmem:[%s2418 + $0x141] sm:$0xff]
      %v2447 = vld [vmem:[%s2418 + $0x151] sm:$0xff]
      %v2448 = vld [vmem:[%s2418 + $0x159] sm:$0xff]
      %v2449 = vld [vmem:[%s2418 + $0x169] sm:$0xff]
      %v2450 = vld [vmem:[%s2418 + $0x171] sm:$0xff]
      %v2451 = vmax.f32 %v2386, %v2419
      %v2452 = vmax.f32 %v2387, %v2420
      %v2453 = vmax.f32 %v2388, %v2421
      %v2454 = vmax.f32 %v2389, %v2422
      %v2455 = vmax.f32 %v2390, %v2423
      %v2456 = vmax.f32 %v2391, %v2424
      %v2457 = vmax.f32 %v2392, %v2425
      %v2458 = vmax.f32 %v2393, %v2426
      %v2459 = vmax.f32 %v2394, %v2427
      %v2460 = vmax.f32 %v2395, %v2428
      %v2461 = vmax.f32 %v2396, %v2429
      %v2462 = vmax.f32 %v2397, %v2430
      %v2463 = vmax.f32 %v2398, %v2431
      %v2464 = vmax.f32 %v2399, %v2432
      %v2465 = vmax.f32 %v2400, %v2433
      %v2466 = vmax.f32 %v2401, %v2434
      %v2467 = vmax.f32 %v2402, %v2435
      %v2468 = vmax.f32 %v2403, %v2436
      %v2469 = vmax.f32 %v2404, %v2437
      %v2470 = vmax.f32 %v2405, %v2438
      %v2471 = vmax.f32 %v2406, %v2439
      %v2472 = vmax.f32 %v2407, %v2440
      %v2473 = vmax.f32 %v2408, %v2441
      %v2474 = vmax.f32 %v2409, %v2442
      %v2475 = vmax.f32 %v2410, %v2443
      %v2476 = vmax.f32 %v2411, %v2444
      %v2477 = vmax.f32 %v2412, %v2445
      %v2478 = vmax.f32 %v2413, %v2446
      %v2479 = vmax.f32 %v2414, %v2447
      %v2480 = vmax.f32 %v2415, %v2448
      %v2481 = vmax.f32 %v2416, %v2449
      %v2482 = vmax.f32 %v2417, %v2450
      %s2483 = scalar_lea.vmem [#allocation2], 1248
      %v2484 = vld [vmem:[%s2483 + $0x1] sm:$0xff]
      %v2485 = vld [vmem:[%s2483 + $0x9] sm:$0xff]
      %v2486 = vld [vmem:[%s2483 + $0x19] sm:$0xff]
      %v2487 = vld [vmem:[%s2483 + $0x21] sm:$0xff]
      %v2488 = vld [vmem:[%s2483 + $0x31] sm:$0xff]
      %v2489 = vld [vmem:[%s2483 + $0x39] sm:$0xff]
      %v2490 = vld [vmem:[%s2483 + $0x49] sm:$0xff]
      %v2491 = vld [vmem:[%s2483 + $0x51] sm:$0xff]
      %v2492 = vld [vmem:[%s2483 + $0x61] sm:$0xff]
      %v2493 = vld [vmem:[%s2483 + $0x69] sm:$0xff]
      %v2494 = vld [vmem:[%s2483 + $0x79] sm:$0xff]
      %v2495 = vld [vmem:[%s2483 + $0x81] sm:$0xff]
      %v2496 = vld [vmem:[%s2483 + $0x91] sm:$0xff]
      %v2497 = vld [vmem:[%s2483 + $0x99] sm:$0xff]
      %v2498 = vld [vmem:[%s2483 + $0xa9] sm:$0xff]
      %v2499 = vld [vmem:[%s2483 + $0xb1] sm:$0xff]
      %v2500 = vld [vmem:[%s2483 + $0xc1] sm:$0xff]
      %v2501 = vld [vmem:[%s2483 + $0xc9] sm:$0xff]
      %v2502 = vld [vmem:[%s2483 + $0xd9] sm:$0xff]
      %v2503 = vld [vmem:[%s2483 + $0xe1] sm:$0xff]
      %v2504 = vld [vmem:[%s2483 + $0xf1] sm:$0xff]
      %v2505 = vld [vmem:[%s2483 + $0xf9] sm:$0xff]
      %v2506 = vld [vmem:[%s2483 + $0x109] sm:$0xff]
      %v2507 = vld [vmem:[%s2483 + $0x111] sm:$0xff]
      %v2508 = vld [vmem:[%s2483 + $0x121] sm:$0xff]
      %v2509 = vld [vmem:[%s2483 + $0x129] sm:$0xff]
      %v2510 = vld [vmem:[%s2483 + $0x139] sm:$0xff]
      %v2511 = vld [vmem:[%s2483 + $0x141] sm:$0xff]
      %v2512 = vld [vmem:[%s2483 + $0x151] sm:$0xff]
      %v2513 = vld [vmem:[%s2483 + $0x159] sm:$0xff]
      %v2514 = vld [vmem:[%s2483 + $0x169] sm:$0xff]
      %v2515 = vld [vmem:[%s2483 + $0x171] sm:$0xff]
      %v2516 = vmax.f32 %v2451, %v2484
      %v2517 = vmax.f32 %v2452, %v2485
      %v2518 = vmax.f32 %v2453, %v2486
      %v2519 = vmax.f32 %v2454, %v2487
      %v2520 = vmax.f32 %v2455, %v2488
      %v2521 = vmax.f32 %v2456, %v2489
      %v2522 = vmax.f32 %v2457, %v2490
      %v2523 = vmax.f32 %v2458, %v2491
      %v2524 = vmax.f32 %v2459, %v2492
      %v2525 = vmax.f32 %v2460, %v2493
      %v2526 = vmax.f32 %v2461, %v2494
      %v2527 = vmax.f32 %v2462, %v2495
      %v2528 = vmax.f32 %v2463, %v2496
      %v2529 = vmax.f32 %v2464, %v2497
      %v2530 = vmax.f32 %v2465, %v2498
      %v2531 = vmax.f32 %v2466, %v2499
      %v2532 = vmax.f32 %v2467, %v2500
      %v2533 = vmax.f32 %v2468, %v2501
      %v2534 = vmax.f32 %v2469, %v2502
      %v2535 = vmax.f32 %v2470, %v2503
      %v2536 = vmax.f32 %v2471, %v2504
      %v2537 = vmax.f32 %v2472, %v2505
      %v2538 = vmax.f32 %v2473, %v2506
      %v2539 = vmax.f32 %v2474, %v2507
      %v2540 = vmax.f32 %v2475, %v2508
      %v2541 = vmax.f32 %v2476, %v2509
      %v2542 = vmax.f32 %v2477, %v2510
      %v2543 = vmax.f32 %v2478, %v2511
      %v2544 = vmax.f32 %v2479, %v2512
      %v2545 = vmax.f32 %v2480, %v2513
      %v2546 = vmax.f32 %v2481, %v2514
      %v2547 = vmax.f32 %v2482, %v2515
      %v2548 = vld [vmem:[%s2483] sm:$0xff]
      %v2549 = vld [vmem:[%s2483 + $0x8] sm:$0xff]
      %v2550 = vld [vmem:[%s2483 + $0x18] sm:$0xff]
      %v2551 = vld [vmem:[%s2483 + $0x20] sm:$0xff]
      %v2552 = vld [vmem:[%s2483 + $0x30] sm:$0xff]
      %v2553 = vld [vmem:[%s2483 + $0x38] sm:$0xff]
      %v2554 = vld [vmem:[%s2483 + $0x48] sm:$0xff]
      %v2555 = vld [vmem:[%s2483 + $0x50] sm:$0xff]
      %v2556 = vld [vmem:[%s2483 + $0x60] sm:$0xff]
      %v2557 = vld [vmem:[%s2483 + $0x68] sm:$0xff]
      %v2558 = vld [vmem:[%s2483 + $0x78] sm:$0xff]
      %v2559 = vld [vmem:[%s2483 + $0x80] sm:$0xff]
      %v2560 = vld [vmem:[%s2483 + $0x90] sm:$0xff]
      %v2561 = vld [vmem:[%s2483 + $0x98] sm:$0xff]
      %v2562 = vld [vmem:[%s2483 + $0xa8] sm:$0xff]
      %v2563 = vld [vmem:[%s2483 + $0xb0] sm:$0xff]
      %v2564 = vld [vmem:[%s2483 + $0xc0] sm:$0xff]
      %v2565 = vld [vmem:[%s2483 + $0xc8] sm:$0xff]
      %v2566 = vld [vmem:[%s2483 + $0xd8] sm:$0xff]
      %v2567 = vld [vmem:[%s2483 + $0xe0] sm:$0xff]
      %v2568 = vld [vmem:[%s2483 + $0xf0] sm:$0xff]
      %v2569 = vld [vmem:[%s2483 + $0xf8] sm:$0xff]
      %v2570 = vld [vmem:[%s2483 + $0x108] sm:$0xff]
      %v2571 = vld [vmem:[%s2483 + $0x110] sm:$0xff]
      %v2572 = vld [vmem:[%s2483 + $0x120] sm:$0xff]
      %v2573 = vld [vmem:[%s2483 + $0x128] sm:$0xff]
      %v2574 = vld [vmem:[%s2483 + $0x138] sm:$0xff]
      %v2575 = vld [vmem:[%s2483 + $0x140] sm:$0xff]
      %v2576 = vld [vmem:[%s2483 + $0x150] sm:$0xff]
      %v2577 = vld [vmem:[%s2483 + $0x158] sm:$0xff]
      %v2578 = vld [vmem:[%s2483 + $0x168] sm:$0xff]
      %v2579 = vld [vmem:[%s2483 + $0x170] sm:$0xff]
      %v2580 = vmax.f32 %v2516, %v2548
      %v2581 = vmax.f32 %v2517, %v2549
      %v2582 = vmax.f32 %v2518, %v2550
      %v2583 = vmax.f32 %v2519, %v2551
      %v2584 = vmax.f32 %v2520, %v2552
      %v2585 = vmax.f32 %v2521, %v2553
      %v2586 = vmax.f32 %v2522, %v2554
      %v2587 = vmax.f32 %v2523, %v2555
      %v2588 = vmax.f32 %v2524, %v2556
      %v2589 = vmax.f32 %v2525, %v2557
      %v2590 = vmax.f32 %v2526, %v2558
      %v2591 = vmax.f32 %v2527, %v2559
      %v2592 = vmax.f32 %v2528, %v2560
      %v2593 = vmax.f32 %v2529, %v2561
      %v2594 = vmax.f32 %v2530, %v2562
      %v2595 = vmax.f32 %v2531, %v2563
      %v2596 = vmax.f32 %v2532, %v2564
      %v2597 = vmax.f32 %v2533, %v2565
      %v2598 = vmax.f32 %v2534, %v2566
      %v2599 = vmax.f32 %v2535, %v2567
      %v2600 = vmax.f32 %v2536, %v2568
      %v2601 = vmax.f32 %v2537, %v2569
      %v2602 = vmax.f32 %v2538, %v2570
      %v2603 = vmax.f32 %v2539, %v2571
      %v2604 = vmax.f32 %v2540, %v2572
      %v2605 = vmax.f32 %v2541, %v2573
      %v2606 = vmax.f32 %v2542, %v2574
      %v2607 = vmax.f32 %v2543, %v2575
      %v2608 = vmax.f32 %v2544, %v2576
      %v2609 = vmax.f32 %v2545, %v2577
      %v2610 = vmax.f32 %v2546, %v2578
      %v2611 = vmax.f32 %v2547, %v2579
      %s2612 = scalar_lea.vmem [#allocation2], 1224
      %v2613 = vld [vmem:[%s2612 + $0x1] sm:$0xff]
      %v2614 = vld [vmem:[%s2612 + $0x9] sm:$0xff]
      %v2615 = vld [vmem:[%s2612 + $0x19] sm:$0xff]
      %v2616 = vld [vmem:[%s2612 + $0x21] sm:$0xff]
      %v2617 = vld [vmem:[%s2612 + $0x31] sm:$0xff]
      %v2618 = vld [vmem:[%s2612 + $0x39] sm:$0xff]
      %v2619 = vld [vmem:[%s2612 + $0x49] sm:$0xff]
      %v2620 = vld [vmem:[%s2612 + $0x51] sm:$0xff]
      %v2621 = vld [vmem:[%s2612 + $0x61] sm:$0xff]
      %v2622 = vld [vmem:[%s2612 + $0x69] sm:$0xff]
      %v2623 = vld [vmem:[%s2612 + $0x79] sm:$0xff]
      %v2624 = vld [vmem:[%s2612 + $0x81] sm:$0xff]
      %v2625 = vld [vmem:[%s2612 + $0x91] sm:$0xff]
      %v2626 = vld [vmem:[%s2612 + $0x99] sm:$0xff]
      %v2627 = vld [vmem:[%s2612 + $0xa9] sm:$0xff]
      %v2628 = vld [vmem:[%s2612 + $0xb1] sm:$0xff]
      %v2629 = vld [vmem:[%s2612 + $0xc1] sm:$0xff]
      %v2630 = vld [vmem:[%s2612 + $0xc9] sm:$0xff]
      %v2631 = vld [vmem:[%s2612 + $0xd9] sm:$0xff]
      %v2632 = vld [vmem:[%s2612 + $0xe1] sm:$0xff]
      %v2633 = vld [vmem:[%s2612 + $0xf1] sm:$0xff]
      %v2634 = vld [vmem:[%s2612 + $0xf9] sm:$0xff]
      %v2635 = vld [vmem:[%s2612 + $0x109] sm:$0xff]
      %v2636 = vld [vmem:[%s2612 + $0x111] sm:$0xff]
      %v2637 = vld [vmem:[%s2612 + $0x121] sm:$0xff]
      %v2638 = vld [vmem:[%s2612 + $0x129] sm:$0xff]
      %v2639 = vld [vmem:[%s2612 + $0x139] sm:$0xff]
      %v2640 = vld [vmem:[%s2612 + $0x141] sm:$0xff]
      %v2641 = vld [vmem:[%s2612 + $0x151] sm:$0xff]
      %v2642 = vld [vmem:[%s2612 + $0x159] sm:$0xff]
      %v2643 = vld [vmem:[%s2612 + $0x169] sm:$0xff]
      %v2644 = vld [vmem:[%s2612 + $0x171] sm:$0xff]
      %v2645 = vmax.f32 %v2580, %v2613
      %v2646 = vmax.f32 %v2581, %v2614
      %v2647 = vmax.f32 %v2582, %v2615
      %v2648 = vmax.f32 %v2583, %v2616
      %v2649 = vmax.f32 %v2584, %v2617
      %v2650 = vmax.f32 %v2585, %v2618
      %v2651 = vmax.f32 %v2586, %v2619
      %v2652 = vmax.f32 %v2587, %v2620
      %v2653 = vmax.f32 %v2588, %v2621
      %v2654 = vmax.f32 %v2589, %v2622
      %v2655 = vmax.f32 %v2590, %v2623
      %v2656 = vmax.f32 %v2591, %v2624
      %v2657 = vmax.f32 %v2592, %v2625
      %v2658 = vmax.f32 %v2593, %v2626
      %v2659 = vmax.f32 %v2594, %v2627
      %v2660 = vmax.f32 %v2595, %v2628
      %v2661 = vmax.f32 %v2596, %v2629
      %v2662 = vmax.f32 %v2597, %v2630
      %v2663 = vmax.f32 %v2598, %v2631
      %v2664 = vmax.f32 %v2599, %v2632
      %v2665 = vmax.f32 %v2600, %v2633
      %v2666 = vmax.f32 %v2601, %v2634
      %v2667 = vmax.f32 %v2602, %v2635
      %v2668 = vmax.f32 %v2603, %v2636
      %v2669 = vmax.f32 %v2604, %v2637
      %v2670 = vmax.f32 %v2605, %v2638
      %v2671 = vmax.f32 %v2606, %v2639
      %v2672 = vmax.f32 %v2607, %v2640
      %v2673 = vmax.f32 %v2608, %v2641
      %v2674 = vmax.f32 %v2609, %v2642
      %v2675 = vmax.f32 %v2610, %v2643
      %v2676 = vmax.f32 %v2611, %v2644
      %v2677 = vld [vmem:[%s2612] sm:$0xff]
      %v2678 = vld [vmem:[%s2612 + $0x8] sm:$0xff]
      %v2679 = vld [vmem:[%s2612 + $0x18] sm:$0xff]
      %v2680 = vld [vmem:[%s2612 + $0x20] sm:$0xff]
      %v2681 = vld [vmem:[%s2612 + $0x30] sm:$0xff]
      %v2682 = vld [vmem:[%s2612 + $0x38] sm:$0xff]
      %v2683 = vld [vmem:[%s2612 + $0x48] sm:$0xff]
      %v2684 = vld [vmem:[%s2612 + $0x50] sm:$0xff]
      %v2685 = vld [vmem:[%s2612 + $0x60] sm:$0xff]
      %v2686 = vld [vmem:[%s2612 + $0x68] sm:$0xff]
      %v2687 = vld [vmem:[%s2612 + $0x78] sm:$0xff]
      %v2688 = vld [vmem:[%s2612 + $0x80] sm:$0xff]
      %v2689 = vld [vmem:[%s2612 + $0x90] sm:$0xff]
      %v2690 = vld [vmem:[%s2612 + $0x98] sm:$0xff]
      %v2691 = vld [vmem:[%s2612 + $0xa8] sm:$0xff]
      %v2692 = vld [vmem:[%s2612 + $0xb0] sm:$0xff]
      %v2693 = vld [vmem:[%s2612 + $0xc0] sm:$0xff]
      %v2694 = vld [vmem:[%s2612 + $0xc8] sm:$0xff]
      %v2695 = vld [vmem:[%s2612 + $0xd8] sm:$0xff]
      %v2696 = vld [vmem:[%s2612 + $0xe0] sm:$0xff]
      %v2697 = vld [vmem:[%s2612 + $0xf0] sm:$0xff]
      %v2698 = vld [vmem:[%s2612 + $0xf8] sm:$0xff]
      %v2699 = vld [vmem:[%s2612 + $0x108] sm:$0xff]
      %v2700 = vld [vmem:[%s2612 + $0x110] sm:$0xff]
      %v2701 = vld [vmem:[%s2612 + $0x120] sm:$0xff]
      %v2702 = vld [vmem:[%s2612 + $0x128] sm:$0xff]
      %v2703 = vld [vmem:[%s2612 + $0x138] sm:$0xff]
      %v2704 = vld [vmem:[%s2612 + $0x140] sm:$0xff]
      %v2705 = vld [vmem:[%s2612 + $0x150] sm:$0xff]
      %v2706 = vld [vmem:[%s2612 + $0x158] sm:$0xff]
      %v2707 = vld [vmem:[%s2612 + $0x168] sm:$0xff]
      %v2708 = vld [vmem:[%s2612 + $0x170] sm:$0xff]
      %v2709 = vmax.f32 %v2645, %v2677
      %v2710 = vmax.f32 %v2646, %v2678
      %v2711 = vmax.f32 %v2647, %v2679
      %v2712 = vmax.f32 %v2648, %v2680
      %v2713 = vmax.f32 %v2649, %v2681
      %v2714 = vmax.f32 %v2650, %v2682
      %v2715 = vmax.f32 %v2651, %v2683
      %v2716 = vmax.f32 %v2652, %v2684
      %v2717 = vmax.f32 %v2653, %v2685
      %v2718 = vmax.f32 %v2654, %v2686
      %v2719 = vmax.f32 %v2655, %v2687
      %v2720 = vmax.f32 %v2656, %v2688
      %v2721 = vmax.f32 %v2657, %v2689
      %v2722 = vmax.f32 %v2658, %v2690
      %v2723 = vmax.f32 %v2659, %v2691
      %v2724 = vmax.f32 %v2660, %v2692
      %v2725 = vmax.f32 %v2661, %v2693
      %v2726 = vmax.f32 %v2662, %v2694
      %v2727 = vmax.f32 %v2663, %v2695
      %v2728 = vmax.f32 %v2664, %v2696
      %v2729 = vmax.f32 %v2665, %v2697
      %v2730 = vmax.f32 %v2666, %v2698
      %v2731 = vmax.f32 %v2667, %v2699
      %v2732 = vmax.f32 %v2668, %v2700
      %v2733 = vmax.f32 %v2669, %v2701
      %v2734 = vmax.f32 %v2670, %v2702
      %v2735 = vmax.f32 %v2671, %v2703
      %v2736 = vmax.f32 %v2672, %v2704
      %v2737 = vmax.f32 %v2673, %v2705
      %v2738 = vmax.f32 %v2674, %v2706
      %v2739 = vmax.f32 %v2675, %v2707
      %v2740 = vmax.f32 %v2676, %v2708
      %v2741 = vpack.c.bf16 %v2709, %v2709
      %v2742 = vpack.c.bf16 %v2710, %v2710
      %v2743 = vpack.c.bf16 %v2711, %v2711
      %v2744 = vpack.c.bf16 %v2712, %v2712
      %v2745 = vpack.c.bf16 %v2713, %v2713
      %v2746 = vpack.c.bf16 %v2714, %v2714
      %v2747 = vpack.c.bf16 %v2715, %v2715
      %v2748 = vpack.c.bf16 %v2716, %v2716
      %v2749 = vpack.c.bf16 %v2717, %v2717
      %v2750 = vpack.c.bf16 %v2718, %v2718
      %v2751 = vpack.c.bf16 %v2719, %v2719
      %v2752 = vpack.c.bf16 %v2720, %v2720
      %v2753 = vpack.c.bf16 %v2721, %v2721
      %v2754 = vpack.c.bf16 %v2722, %v2722
      %v2755 = vpack.c.bf16 %v2723, %v2723
      %v2756 = vpack.c.bf16 %v2724, %v2724
      %v2757 = vpack.c.bf16 %v2725, %v2725
      %v2758 = vpack.c.bf16 %v2726, %v2726
      %v2759 = vpack.c.bf16 %v2727, %v2727
      %v2760 = vpack.c.bf16 %v2728, %v2728
      %v2761 = vpack.c.bf16 %v2729, %v2729
      %v2762 = vpack.c.bf16 %v2730, %v2730
      %v2763 = vpack.c.bf16 %v2731, %v2731
      %v2764 = vpack.c.bf16 %v2732, %v2732
      %v2765 = vpack.c.bf16 %v2733, %v2733
      %v2766 = vpack.c.bf16 %v2734, %v2734
      %v2767 = vpack.c.bf16 %v2735, %v2735
      %v2768 = vpack.c.bf16 %v2736, %v2736
      %v2769 = vpack.c.bf16 %v2737, %v2737
      %v2770 = vpack.c.bf16 %v2738, %v2738
      %v2771 = vpack.c.bf16 %v2739, %v2739
      %v2772 = vpack.c.bf16 %v2740, %v2740
      %vm2773 = vcmask 388096
      %2774 = vst.msk [vmem:[%s170] sm:$0xf] %vm2773, %v2741
      %2775 = vst.msk [vmem:[%s170 + $0x4] sm:$0xf] %vm2773, %v2742
      %2776 = vst.msk [vmem:[%s170 + $0x8] sm:$0xf] %vm2773, %v2743
      %2777 = vst.msk [vmem:[%s170 + $0xc] sm:$0xf] %vm2773, %v2744
      %2778 = vst.msk [vmem:[%s170 + $0x10] sm:$0xf] %vm2773, %v2745
      %2779 = vst.msk [vmem:[%s170 + $0x14] sm:$0xf] %vm2773, %v2746
      %2780 = vst.msk [vmem:[%s170 + $0x18] sm:$0xf] %vm2773, %v2747
      %2781 = vst.msk [vmem:[%s170 + $0x1c] sm:$0xf] %vm2773, %v2748
      %2782 = vst.msk [vmem:[%s170 + $0x20] sm:$0xf] %vm2773, %v2749
      %2783 = vst.msk [vmem:[%s170 + $0x24] sm:$0xf] %vm2773, %v2750
      %2784 = vst.msk [vmem:[%s170 + $0x28] sm:$0xf] %vm2773, %v2751
      %2785 = vst.msk [vmem:[%s170 + $0x2c] sm:$0xf] %vm2773, %v2752
      %2786 = vst.msk [vmem:[%s170 + $0x30] sm:$0xf] %vm2773, %v2753
      %2787 = vst.msk [vmem:[%s170 + $0x34] sm:$0xf] %vm2773, %v2754
      %2788 = vst.msk [vmem:[%s170 + $0x38] sm:$0xf] %vm2773, %v2755
      %2789 = vst.msk [vmem:[%s170 + $0x3c] sm:$0xf] %vm2773, %v2756
      %2790 = vst.msk [vmem:[%s170 + $0x40] sm:$0xf] %vm2773, %v2757
      %2791 = vst.msk [vmem:[%s170 + $0x44] sm:$0xf] %vm2773, %v2758
      %2792 = vst.msk [vmem:[%s170 + $0x48] sm:$0xf] %vm2773, %v2759
      %2793 = vst.msk [vmem:[%s170 + $0x4c] sm:$0xf] %vm2773, %v2760
      %2794 = vst.msk [vmem:[%s170 + $0x50] sm:$0xf] %vm2773, %v2761
      %2795 = vst.msk [vmem:[%s170 + $0x54] sm:$0xf] %vm2773, %v2762
      %2796 = vst.msk [vmem:[%s170 + $0x58] sm:$0xf] %vm2773, %v2763
      %2797 = vst.msk [vmem:[%s170 + $0x5c] sm:$0xf] %vm2773, %v2764
      %2798 = vst.msk [vmem:[%s170 + $0x60] sm:$0xf] %vm2773, %v2765
      %2799 = vst.msk [vmem:[%s170 + $0x64] sm:$0xf] %vm2773, %v2766
      %2800 = vst.msk [vmem:[%s170 + $0x68] sm:$0xf] %vm2773, %v2767
      %2801 = vst.msk [vmem:[%s170 + $0x6c] sm:$0xf] %vm2773, %v2768
      %2802 = vst.msk [vmem:[%s170 + $0x70] sm:$0xf] %vm2773, %v2769
      %2803 = vst.msk [vmem:[%s170 + $0x74] sm:$0xf] %vm2773, %v2770
      %2804 = vst.msk [vmem:[%s170 + $0x78] sm:$0xf] %vm2773, %v2771
      %2805 = vst.msk [vmem:[%s170 + $0x7c] sm:$0xf] %vm2773, %v2772
      %p2806 = scmp.lt.s32.totalorder %s14, 1
      %s2807 = scalar_select %p2806, %s14, 1
      %s2808 = smul.addr %s2807, 32
      %s2809 = smul.addr %s2808, 4
      %s2810 = scalar_lea.vmem %s3, %s2809
      // Predicated region
      $region33: #{faceboxes_s_forward.2} parent=31 // pred_check
        %p2811 = pneg %p100
      $region34: #{faceboxes_s_forward.2} parent=31 // pred_check_branch
        %2813 = sbr.rel (%p2811) target = $region36
      $region35: #{faceboxes_s_forward.2} parent=31 // pred_region
        _
      $region36: #{faceboxes_s_forward.2} parent=31 // pred_fallthru
        _
    $region32: #{faceboxes_s_forward.2} parent=5 // pred_fallthru
      _
    %p2814 = scmp.le.s32.totalorder 2, %s9
    // Predicated region
    $region37: #{faceboxes_s_forward.2} parent=5 // pred_check
      %p2815 = pneg %p2814
    $region38: #{faceboxes_s_forward.2} parent=5 // pred_check_branch
      %2817 = sbr.rel (%p2815) target = $region40
    $region39: #{faceboxes_s_forward.2} parent=5 // pred_region
      %s2818 = ssub.s32 %s9, 2
      // Predicated region
      $region41: #{faceboxes_s_forward.2} parent=39 // pred_check
        %p2819 = pneg %p106
      $region42: #{faceboxes_s_forward.2} parent=39 // pred_check_branch
        %2821 = sbr.rel (%p2819) target = $region44
      $region43: #{faceboxes_s_forward.2} parent=39 // pred_region
        %p2822 = scmp.lt.s32.totalorder %s15, 1
        %s2823 = scalar_select %p2822, %s15, 1
        %s2824 = smul.addr %s2823, 32
        %s2825 = smul.addr %s2824, 4
        %s2826 = scalar_lea.vmem %s3, %s2825
      $region44: #{faceboxes_s_forward.2} parent=39 // pred_fallthru
        _
    $region40: #{faceboxes_s_forward.2} parent=5 // pred_fallthru
      _
  $region6: #{faceboxes_s_forward.2} parent=0 // loop_footer
    %s13 = sadd.s32 1, %s9
  $region7: #{faceboxes_s_forward.2} parent=0 // loop_footer_branch
    %8 = sbr.rel target = $region3
  $region8: #{faceboxes_s_forward.2} parent=0 // loop_exit
    _

// kernel: faceboxes_s_forward.3
$region0: #{faceboxes_s_forward.3}
  #allocation0 [shape = 'u32[]', space=smem, size = 0x4, offset = 0x4, fixed_abs, tag = 'smem constant byte address 0x4 - core index']
  #allocation1 [shape = 'u32[72,128]{1,0:T(1,128)}', space=vmem, size = 0x9000, scoped, tag = 'internal scratch']
  #allocation2 [shape = 'f32[4,5,5,128]{3,2,1,0:T(8,128)}', space=vmem, size = 0x14000, scoped, tag = 'scratch operand']
  #allocation3 [shape = 'f32[6,6,128]{2,1,0:T(8,128)}', space=vmem, size = 0x6000, scoped, tag = 'scratch operand']
  #allocation4 [shape = 'f32[6,6,128]{2,1,0:T(8,128)}', space=vmem, size = 0x6000, scoped, tag = 'scratch operand']
  #allocation5 [shape = 'f32[4,4,256]{2,1,0:T(4,128)}', space=vmem, size = 0x4000, scoped, tag = 'scratch operand']
  %s0 = inlined_call_operand.vmem [shape: bf16[2,64,1728], index: 0, kind: input, shape index: {}]
  %s1 = inlined_call_operand.vmem [shape: bf16[1728,128], index: 1, kind: input, shape index: {}]
  %s2 = inlined_call_operand.vmem [shape: f32[1,128], index: 2, kind: input, shape index: {}]
  %s3 = inlined_call_operand.vmem [shape: bf16[128,128], index: 3, kind: input, shape index: {}]
  %s4 = inlined_call_operand.vmem [shape: f32[1,128], index: 4, kind: input, shape index: {}]
  %s5 = inlined_call_operand.vmem [shape: bf16[9,128,256], index: 5, kind: input, shape index: {}]
  %s6 = inlined_call_operand.vmem [shape: f32[1,256], index: 6, kind: input, shape index: {}]
  %s7 = inlined_call_operand.vmem [shape: bf16[256,128], index: 7, kind: input, shape index: {}]
  %s8 = inlined_call_operand.vmem [shape: f32[1,128], index: 8, kind: input, shape index: {}]
  %s9 = inlined_call_operand.vmem [shape: bf16[4,128,256], index: 9, kind: input, shape index: {}]
  %s10 = inlined_call_operand.vmem [shape: f32[1,256], index: 10, kind: input, shape index: {}]
  %s11 = inlined_call_operand.vmem [shape: bf16[9,128,128], index: 11, kind: input, shape index: {}]
  %s12 = inlined_call_operand.vmem [shape: f32[1,128], index: 12, kind: input, shape index: {}]
  %s13 = inlined_call_operand.vmem [shape: bf16[9,256,6], index: 13, kind: input, shape index: {}]
  %s14 = inlined_call_operand.vmem [shape: f32[1,6], index: 14, kind: input, shape index: {}]
  %s15 = inlined_call_operand.vmem [shape: bf16[256,6], index: 15, kind: input, shape index: {}]
  %s16 = inlined_call_operand.vmem [shape: f32[1,6], index: 16, kind: input, shape index: {}]
  %s17 = inlined_call_operand.vmem [shape: f32[2,1,256], index: 17, kind: output, shape index: {0}]
  %s18 = inlined_call_operand.vmem [shape: f32[2,16,128], index: 18, kind: output, shape index: {1}]
  %s19 = inlined_call_operand.vmem [shape: f32[2,4,6], index: 19, kind: output, shape index: {2}]
  %s20 = inlined_call_operand.vmem [shape: f32[2,1,6], index: 20, kind: output, shape index: {3}]
  %21 = xla_tuple %s17, %s18, %s19, %s20
  %s22 = sld [smem:[#allocation0]]
  $region125: #{faceboxes_s_forward.3} parent=0
    _
  %s24 = ssub.s32 1, %s22
  %s25 = scalar_select 0, %s24, %s22
  loop: start=0, step=1, limit=4
  $region2: #{faceboxes_s_forward.3} parent=0 // loop_pre_header
    _
  $region3: #{faceboxes_s_forward.3} parent=0 // loop_header
    %s27 = sphi 0, %s31
    %p28 = scmp.ge.s32.totalorder %s27, 4
    %s37 = sphi 0, %s39
    %s40 = sphi 0, %s37
    %s41 = sphi 0, %s40
    %s57 = sphi 0, %s41
    %s61 = sphi 0, %s61
    %s63 = sphi 0, %s61
    %s64 = sphi 0, %s63
    %s78 = sphi 0, %s64
    %s82 = sphi 0, %s82
    %s84 = sphi 0, %s82
    %s85 = sphi 0, %s84
    %s99 = sphi 0, %s85
    %s103 = sphi 0, %s103
    %s105 = sphi 0, %s103
    %s106 = sphi 0, %s105
    %s120 = sphi 0, %s106
    %s124 = sphi 0, %s124
    %s126 = sphi 0, %s124
    %s127 = sphi 0, %s126
    %s141 = sphi 0, %s127
    %s145 = sphi 0, %s145
    %s147 = sphi 0, %s145
    %s148 = sphi 0, %s147
    %s162 = sphi 0, %s148
    %s166 = sphi 0, %s166
    %s168 = sphi 0, %s166
    %s169 = sphi 0, %s168
    %s183 = sphi 0, %s169
    %s187 = sphi 0, %s187
    %s189 = sphi 0, %s187
    %s190 = sphi 0, %s189
    %s204 = sphi 0, %s190
    %s208 = sphi 0, %s208
    %s210 = sphi 0, %s208
    %s211 = sphi 0, %s210
    %s225 = sphi 0, %s211
    %s229 = sphi 0, %s229
    %s231 = sphi 0, %s229
    %s232 = sphi 0, %s231
    %s246 = sphi 0, %s232
    %s250 = sphi 0, %s250
    %s252 = sphi 0, %s250
    %s253 = sphi 0, %s252
    %s267 = sphi 0, %s253
    %s271 = sphi 0, %s271
    %s273 = sphi 0, %s271
    %s274 = sphi 0, %s273
    %s288 = sphi 0, %s274
    %s292 = sphi 0, %s292
    %s294 = sphi 0, %s292
    %s295 = sphi 0, %s294
    %s309 = sphi 0, %s295
    %s313 = sphi 0, %s313
    %s315 = sphi 0, %s313
    %s316 = sphi 0, %s315
    %s330 = sphi 0, %s316
    %s334 = sphi 0, %s334
    %s336 = sphi 0, %s334
    %s337 = sphi 0, %s336
    %s351 = sphi 0, %s337
    %s355 = sphi 0, %s355
    %s357 = sphi 0, %s355
    %s358 = sphi 0, %s357
    %s372 = sphi 0, %s358
    %s376 = sphi 0, %s376
    %s378 = sphi 0, %s376
    %s379 = sphi 0, %s378
    %s393 = sphi 0, %s379
    %s399 = sphi 0, %s401
    %s402 = sphi 0, %s399
    %s403 = sphi 0, %s402
    %s419 = sphi 0, %s403
    %s425 = sphi 0, %s427
    %s428 = sphi 0, %s425
    %s429 = sphi 0, %s428
    %s445 = sphi 0, %s429
    %s451 = sphi 0, %s453
    %s454 = sphi 0, %s451
    %s455 = sphi 0, %s454
    %s471 = sphi 0, %s455
    %s477 = sphi 0, %s479
    %s480 = sphi 0, %s477
    %s481 = sphi 0, %s480
    %s497 = sphi 0, %s481
  $region4: #{faceboxes_s_forward.3} parent=0 // loop_header_branch
    %30 = sbr.rel (%p28) target = $region8
  $region5: #{faceboxes_s_forward.3} parent=0 // loop_body
    %s32 = ssub.s32 %s27, 1
    %s33 = ssub.s32 %s27, 2
    %s34 = sadd.s32 %s27, 1
    %s35 = ssub.s32 %s27, %s34
    %p36 = scmp.eq.s32.totalorder %s35, 0
    %s38 = sadd.s32 %s37, 1
    %s39 = scalar_select %p36, %s37, %s38
    %p42 = pneg %p36
    %p43 = scmp.eq.s32.totalorder %s27, 1
    %p44 = por %p42, %p43
    %p45 = scmp.ne.s32.totalorder %s37, %s40
    %p46 = scmp.eq.s32.totalorder %s27, 0
    %p47 = por %p45, %p46
    %p48 = scmp.ne.s32.totalorder %s37, %s40
    %p49 = scmp.eq.s32.totalorder %s32, 1
    %p50 = por %p48, %p49
    %p51 = scmp.ne.s32.totalorder %s40, %s41
    %p52 = scmp.eq.s32.totalorder %s32, 0
    %p53 = por %p51, %p52
    %p54 = scmp.ne.s32.totalorder %s40, %s41
    %p55 = scmp.eq.s32.totalorder %s33, 1
    %p56 = por %p54, %p55
    %p58 = scmp.ne.s32.totalorder %s41, %s57
    %p59 = scmp.eq.s32.totalorder %s33, 0
    %p60 = por %p58, %p59
    %s62 = sadd.s32 %s61, 1
    %p65 = scmp.eq.s32.totalorder %s27, 1
    %p66 = scmp.ne.s32.totalorder %s61, %s63
    %p67 = scmp.eq.s32.totalorder %s27, 0
    %p68 = por %p66, %p67
    %p69 = scmp.ne.s32.totalorder %s61, %s63
    %p70 = scmp.eq.s32.totalorder %s32, 1
    %p71 = por %p69, %p70
    %p72 = scmp.ne.s32.totalorder %s63, %s64
    %p73 = scmp.eq.s32.totalorder %s32, 0
    %p74 = por %p72, %p73
    %p75 = scmp.ne.s32.totalorder %s63, %s64
    %p76 = scmp.eq.s32.totalorder %s33, 1
    %p77 = por %p75, %p76
    %p79 = scmp.ne.s32.totalorder %s64, %s78
    %p80 = scmp.eq.s32.totalorder %s33, 0
    %p81 = por %p79, %p80
    %s83 = sadd.s32 %s82, 1
    %p86 = scmp.eq.s32.totalorder %s27, 1
    %p87 = scmp.ne.s32.totalorder %s82, %s84
    %p88 = scmp.eq.s32.totalorder %s27, 0
    %p89 = por %p87, %p88
    %p90 = scmp.ne.s32.totalorder %s82, %s84
    %p91 = scmp.eq.s32.totalorder %s32, 1
    %p92 = por %p90, %p91
    %p93 = scmp.ne.s32.totalorder %s84, %s85
    %p94 = scmp.eq.s32.totalorder %s32, 0
    %p95 = por %p93, %p94
    %p96 = scmp.ne.s32.totalorder %s84, %s85
    %p97 = scmp.eq.s32.totalorder %s33, 1
    %p98 = por %p96, %p97
    %p100 = scmp.ne.s32.totalorder %s85, %s99
    %p101 = scmp.eq.s32.totalorder %s33, 0
    %p102 = por %p100, %p101
    %s104 = sadd.s32 %s103, 1
    %p107 = scmp.eq.s32.totalorder %s27, 1
    %p108 = scmp.ne.s32.totalorder %s103, %s105
    %p109 = scmp.eq.s32.totalorder %s27, 0
    %p110 = por %p108, %p109
    %p111 = scmp.ne.s32.totalorder %s103, %s105
    %p112 = scmp.eq.s32.totalorder %s32, 1
    %p113 = por %p111, %p112
    %p114 = scmp.ne.s32.totalorder %s105, %s106
    %p115 = scmp.eq.s32.totalorder %s32, 0
    %p116 = por %p114, %p115
    %p117 = scmp.ne.s32.totalorder %s105, %s106
    %p118 = scmp.eq.s32.totalorder %s33, 1
    %p119 = por %p117, %p118
    %p121 = scmp.ne.s32.totalorder %s106, %s120
    %p122 = scmp.eq.s32.totalorder %s33, 0
    %p123 = por %p121, %p122
    %s125 = sadd.s32 %s124, 1
    %p128 = scmp.eq.s32.totalorder %s27, 1
    %p129 = scmp.ne.s32.totalorder %s124, %s126
    %p130 = scmp.eq.s32.totalorder %s27, 0
    %p131 = por %p129, %p130
    %p132 = scmp.ne.s32.totalorder %s124, %s126
    %p133 = scmp.eq.s32.totalorder %s32, 1
    %p134 = por %p132, %p133
    %p135 = scmp.ne.s32.totalorder %s126, %s127
    %p136 = scmp.eq.s32.totalorder %s32, 0
    %p137 = por %p135, %p136
    %p138 = scmp.ne.s32.totalorder %s126, %s127
    %p139 = scmp.eq.s32.totalorder %s33, 1
    %p140 = por %p138, %p139
    %p142 = scmp.ne.s32.totalorder %s127, %s141
    %p143 = scmp.eq.s32.totalorder %s33, 0
    %p144 = por %p142, %p143
    %s146 = sadd.s32 %s145, 1
    %p149 = scmp.eq.s32.totalorder %s27, 1
    %p150 = scmp.ne.s32.totalorder %s145, %s147
    %p151 = scmp.eq.s32.totalorder %s27, 0
    %p152 = por %p150, %p151
    %p153 = scmp.ne.s32.totalorder %s145, %s147
    %p154 = scmp.eq.s32.totalorder %s32, 1
    %p155 = por %p153, %p154
    %p156 = scmp.ne.s32.totalorder %s147, %s148
    %p157 = scmp.eq.s32.totalorder %s32, 0
    %p158 = por %p156, %p157
    %p159 = scmp.ne.s32.totalorder %s147, %s148
    %p160 = scmp.eq.s32.totalorder %s33, 1
    %p161 = por %p159, %p160
    %p163 = scmp.ne.s32.totalorder %s148, %s162
    %p164 = scmp.eq.s32.totalorder %s33, 0
    %p165 = por %p163, %p164
    %s167 = sadd.s32 %s166, 1
    %p170 = scmp.eq.s32.totalorder %s27, 1
    %p171 = scmp.ne.s32.totalorder %s166, %s168
    %p172 = scmp.eq.s32.totalorder %s27, 0
    %p173 = por %p171, %p172
    %p174 = scmp.ne.s32.totalorder %s166, %s168
    %p175 = scmp.eq.s32.totalorder %s32, 1
    %p176 = por %p174, %p175
    %p177 = scmp.ne.s32.totalorder %s168, %s169
    %p178 = scmp.eq.s32.totalorder %s32, 0
    %p179 = por %p177, %p178
    %p180 = scmp.ne.s32.totalorder %s168, %s169
    %p181 = scmp.eq.s32.totalorder %s33, 1
    %p182 = por %p180, %p181
    %p184 = scmp.ne.s32.totalorder %s169, %s183
    %p185 = scmp.eq.s32.totalorder %s33, 0
    %p186 = por %p184, %p185
    %s188 = sadd.s32 %s187, 1
    %p191 = scmp.eq.s32.totalorder %s27, 1
    %p192 = scmp.ne.s32.totalorder %s187, %s189
    %p193 = scmp.eq.s32.totalorder %s27, 0
    %p194 = por %p192, %p193
    %p195 = scmp.ne.s32.totalorder %s187, %s189
    %p196 = scmp.eq.s32.totalorder %s32, 1
    %p197 = por %p195, %p196
    %p198 = scmp.ne.s32.totalorder %s189, %s190
    %p199 = scmp.eq.s32.totalorder %s32, 0
    %p200 = por %p198, %p199
    %p201 = scmp.ne.s32.totalorder %s189, %s190
    %p202 = scmp.eq.s32.totalorder %s33, 1
    %p203 = por %p201, %p202
    %p205 = scmp.ne.s32.totalorder %s190, %s204
    %p206 = scmp.eq.s32.totalorder %s33, 0
    %p207 = por %p205, %p206
    %s209 = sadd.s32 %s208, 1
    %p212 = scmp.eq.s32.totalorder %s27, 1
    %p213 = scmp.ne.s32.totalorder %s208, %s210
    %p214 = scmp.eq.s32.totalorder %s27, 0
    %p215 = por %p213, %p214
    %p216 = scmp.ne.s32.totalorder %s208, %s210
    %p217 = scmp.eq.s32.totalorder %s32, 1
    %p218 = por %p216, %p217
    %p219 = scmp.ne.s32.totalorder %s210, %s211
    %p220 = scmp.eq.s32.totalorder %s32, 0
    %p221 = por %p219, %p220
    %p222 = scmp.ne.s32.totalorder %s210, %s211
    %p223 = scmp.eq.s32.totalorder %s33, 1
    %p224 = por %p222, %p223
    %p226 = scmp.ne.s32.totalorder %s211, %s225
    %p227 = scmp.eq.s32.totalorder %s33, 0
    %p228 = por %p226, %p227
    %s230 = sadd.s32 %s229, 1
    %p233 = scmp.eq.s32.totalorder %s27, 1
    %p234 = scmp.ne.s32.totalorder %s229, %s231
    %p235 = scmp.eq.s32.totalorder %s27, 0
    %p236 = por %p234, %p235
    %p237 = scmp.ne.s32.totalorder %s229, %s231
    %p238 = scmp.eq.s32.totalorder %s32, 1
    %p239 = por %p237, %p238
    %p240 = scmp.ne.s32.totalorder %s231, %s232
    %p241 = scmp.eq.s32.totalorder %s32, 0
    %p242 = por %p240, %p241
    %p243 = scmp.ne.s32.totalorder %s231, %s232
    %p244 = scmp.eq.s32.totalorder %s33, 1
    %p245 = por %p243, %p244
    %p247 = scmp.ne.s32.totalorder %s232, %s246
    %p248 = scmp.eq.s32.totalorder %s33, 0
    %p249 = por %p247, %p248
    %s251 = sadd.s32 %s250, 1
    %p254 = scmp.eq.s32.totalorder %s27, 1
    %p255 = scmp.ne.s32.totalorder %s250, %s252
    %p256 = scmp.eq.s32.totalorder %s27, 0
    %p257 = por %p255, %p256
    %p258 = scmp.ne.s32.totalorder %s250, %s252
    %p259 = scmp.eq.s32.totalorder %s32, 1
    %p260 = por %p258, %p259
    %p261 = scmp.ne.s32.totalorder %s252, %s253
    %p262 = scmp.eq.s32.totalorder %s32, 0
    %p263 = por %p261, %p262
    %p264 = scmp.ne.s32.totalorder %s252, %s253
    %p265 = scmp.eq.s32.totalorder %s33, 1
    %p266 = por %p264, %p265
    %p268 = scmp.ne.s32.totalorder %s253, %s267
    %p269 = scmp.eq.s32.totalorder %s33, 0
    %p270 = por %p268, %p269
    %s272 = sadd.s32 %s271, 1
    %p275 = scmp.eq.s32.totalorder %s27, 1
    %p276 = scmp.ne.s32.totalorder %s271, %s273
    %p277 = scmp.eq.s32.totalorder %s27, 0
    %p278 = por %p276, %p277
    %p279 = scmp.ne.s32.totalorder %s271, %s273
    %p280 = scmp.eq.s32.totalorder %s32, 1
    %p281 = por %p279, %p280
    %p282 = scmp.ne.s32.totalorder %s273, %s274
    %p283 = scmp.eq.s32.totalorder %s32, 0
    %p284 = por %p282, %p283
    %p285 = scmp.ne.s32.totalorder %s273, %s274
    %p286 = scmp.eq.s32.totalorder %s33, 1
    %p287 = por %p285, %p286
    %p289 = scmp.ne.s32.totalorder %s274, %s288
    %p290 = scmp.eq.s32.totalorder %s33, 0
    %p291 = por %p289, %p290
    %s293 = sadd.s32 %s292, 1
    %p296 = scmp.eq.s32.totalorder %s27, 1
    %p297 = scmp.ne.s32.totalorder %s292, %s294
    %p298 = scmp.eq.s32.totalorder %s27, 0
    %p299 = por %p297, %p298
    %p300 = scmp.ne.s32.totalorder %s292, %s294
    %p301 = scmp.eq.s32.totalorder %s32, 1
    %p302 = por %p300, %p301
    %p303 = scmp.ne.s32.totalorder %s294, %s295
    %p304 = scmp.eq.s32.totalorder %s32, 0
    %p305 = por %p303, %p304
    %p306 = scmp.ne.s32.totalorder %s294, %s295
    %p307 = scmp.eq.s32.totalorder %s33, 1
    %p308 = por %p306, %p307
    %p310 = scmp.ne.s32.totalorder %s295, %s309
    %p311 = scmp.eq.s32.totalorder %s33, 0
    %p312 = por %p310, %p311
    %s314 = sadd.s32 %s313, 1
    %p317 = scmp.eq.s32.totalorder %s27, 1
    %p318 = scmp.ne.s32.totalorder %s313, %s315
    %p319 = scmp.eq.s32.totalorder %s27, 0
    %p320 = por %p318, %p319
    %p321 = scmp.ne.s32.totalorder %s313, %s315
    %p322 = scmp.eq.s32.totalorder %s32, 1
    %p323 = por %p321, %p322
    %p324 = scmp.ne.s32.totalorder %s315, %s316
    %p325 = scmp.eq.s32.totalorder %s32, 0
    %p326 = por %p324, %p325
    %p327 = scmp.ne.s32.totalorder %s315, %s316
    %p328 = scmp.eq.s32.totalorder %s33, 1
    %p329 = por %p327, %p328
    %p331 = scmp.ne.s32.totalorder %s316, %s330
    %p332 = scmp.eq.s32.totalorder %s33, 0
    %p333 = por %p331, %p332
    %s335 = sadd.s32 %s334, 1
    %p338 = scmp.eq.s32.totalorder %s27, 1
    %p339 = scmp.ne.s32.totalorder %s334, %s336
    %p340 = scmp.eq.s32.totalorder %s27, 0
    %p341 = por %p339, %p340
    %p342 = scmp.ne.s32.totalorder %s334, %s336
    %p343 = scmp.eq.s32.totalorder %s32, 1
    %p344 = por %p342, %p343
    %p345 = scmp.ne.s32.totalorder %s336, %s337
    %p346 = scmp.eq.s32.totalorder %s32, 0
    %p347 = por %p345, %p346
    %p348 = scmp.ne.s32.totalorder %s336, %s337
    %p349 = scmp.eq.s32.totalorder %s33, 1
    %p350 = por %p348, %p349
    %p352 = scmp.ne.s32.totalorder %s337, %s351
    %p353 = scmp.eq.s32.totalorder %s33, 0
    %p354 = por %p352, %p353
    %s356 = sadd.s32 %s355, 1
    %p359 = scmp.eq.s32.totalorder %s27, 1
    %p360 = scmp.ne.s32.totalorder %s355, %s357
    %p361 = scmp.eq.s32.totalorder %s27, 0
    %p362 = por %p360, %p361
    %p363 = scmp.ne.s32.totalorder %s355, %s357
    %p364 = scmp.eq.s32.totalorder %s32, 1
    %p365 = por %p363, %p364
    %p366 = scmp.ne.s32.totalorder %s357, %s358
    %p367 = scmp.eq.s32.totalorder %s32, 0
    %p368 = por %p366, %p367
    %p369 = scmp.ne.s32.totalorder %s357, %s358
    %p370 = scmp.eq.s32.totalorder %s33, 1
    %p371 = por %p369, %p370
    %p373 = scmp.ne.s32.totalorder %s358, %s372
    %p374 = scmp.eq.s32.totalorder %s33, 0
    %p375 = por %p373, %p374
    %s377 = sadd.s32 %s376, 1
    %p380 = scmp.eq.s32.totalorder %s27, 1
    %p381 = scmp.ne.s32.totalorder %s376, %s378
    %p382 = scmp.eq.s32.totalorder %s27, 0
    %p383 = por %p381, %p382
    %p384 = scmp.ne.s32.totalorder %s376, %s378
    %p385 = scmp.eq.s32.totalorder %s32, 1
    %p386 = por %p384, %p385
    %p387 = scmp.ne.s32.totalorder %s378, %s379
    %p388 = scmp.eq.s32.totalorder %s32, 0
    %p389 = por %p387, %p388
    %p390 = scmp.ne.s32.totalorder %s378, %s379
    %p391 = scmp.eq.s32.totalorder %s33, 1
    %p392 = por %p390, %p391
    %p394 = scmp.ne.s32.totalorder %s379, %s393
    %p395 = scmp.eq.s32.totalorder %s33, 0
    %p396 = por %p394, %p395
    %s397 = ssub.s32 %s27, %s34
    %p398 = scmp.eq.s32.totalorder %s397, 0
    %s400 = sadd.s32 %s399, 1
    %s401 = scalar_select %p398, %s399, %s400
    %p404 = pneg %p398
    %p405 = scmp.eq.s32.totalorder %s27, 1
    %p406 = por %p404, %p405
    %p407 = scmp.ne.s32.totalorder %s399, %s402
    %p408 = scmp.eq.s32.totalorder %s27, 0
    %p409 = por %p407, %p408
    %p410 = scmp.ne.s32.totalorder %s399, %s402
    %p411 = scmp.eq.s32.totalorder %s32, 1
    %p412 = por %p410, %p411
    %p413 = scmp.ne.s32.totalorder %s402, %s403
    %p414 = scmp.eq.s32.totalorder %s32, 0
    %p415 = por %p413, %p414
    %p416 = scmp.ne.s32.totalorder %s402, %s403
    %p417 = scmp.eq.s32.totalorder %s33, 1
    %p418 = por %p416, %p417
    %p420 = scmp.ne.s32.totalorder %s403, %s419
    %p421 = scmp.eq.s32.totalorder %s33, 0
    %p422 = por %p420, %p421
    %s423 = ssub.s32 %s27, %s34
    %p424 = scmp.eq.s32.totalorder %s423, 0
    %s426 = sadd.s32 %s425, 1
    %s427 = scalar_select %p424, %s425, %s426
    %p430 = pneg %p424
    %p431 = scmp.eq.s32.totalorder %s27, 1
    %p432 = por %p430, %p431
    %p433 = scmp.ne.s32.totalorder %s425, %s428
    %p434 = scmp.eq.s32.totalorder %s27, 0
    %p435 = por %p433, %p434
    %p436 = scmp.ne.s32.totalorder %s425, %s428
    %p437 = scmp.eq.s32.totalorder %s32, 1
    %p438 = por %p436, %p437
    %p439 = scmp.ne.s32.totalorder %s428, %s429
    %p440 = scmp.eq.s32.totalorder %s32, 0
    %p441 = por %p439, %p440
    %p442 = scmp.ne.s32.totalorder %s428, %s429
    %p443 = scmp.eq.s32.totalorder %s33, 1
    %p444 = por %p442, %p443
    %p446 = scmp.ne.s32.totalorder %s429, %s445
    %p447 = scmp.eq.s32.totalorder %s33, 0
    %p448 = por %p446, %p447
    %s449 = ssub.s32 %s27, %s34
    %p450 = scmp.eq.s32.totalorder %s449, 0
    %s452 = sadd.s32 %s451, 1
    %s453 = scalar_select %p450, %s451, %s452
    %p456 = pneg %p450
    %p457 = scmp.eq.s32.totalorder %s27, 1
    %p458 = por %p456, %p457
    %p459 = scmp.ne.s32.totalorder %s451, %s454
    %p460 = scmp.eq.s32.totalorder %s27, 0
    %p461 = por %p459, %p460
    %p462 = scmp.ne.s32.totalorder %s451, %s454
    %p463 = scmp.eq.s32.totalorder %s32, 1
    %p464 = por %p462, %p463
    %p465 = scmp.ne.s32.totalorder %s454, %s455
    %p466 = scmp.eq.s32.totalorder %s32, 0
    %p467 = por %p465, %p466
    %p468 = scmp.ne.s32.totalorder %s454, %s455
    %p469 = scmp.eq.s32.totalorder %s33, 1
    %p470 = por %p468, %p469
    %p472 = scmp.ne.s32.totalorder %s455, %s471
    %p473 = scmp.eq.s32.totalorder %s33, 0
    %p474 = por %p472, %p473
    %s475 = ssub.s32 %s27, %s34
    %p476 = scmp.eq.s32.totalorder %s475, 0
    %s478 = sadd.s32 %s477, 1
    %s479 = scalar_select %p476, %s477, %s478
    %p482 = pneg %p476
    %p483 = scmp.eq.s32.totalorder %s27, 1
    %p484 = por %p482, %p483
    %p485 = scmp.ne.s32.totalorder %s477, %s480
    %p486 = scmp.eq.s32.totalorder %s27, 0
    %p487 = por %p485, %p486
    %p488 = scmp.ne.s32.totalorder %s477, %s480
    %p489 = scmp.eq.s32.totalorder %s32, 1
    %p490 = por %p488, %p489
    %p491 = scmp.ne.s32.totalorder %s480, %s481
    %p492 = scmp.eq.s32.totalorder %s32, 0
    %p493 = por %p491, %p492
    %p494 = scmp.ne.s32.totalorder %s480, %s481
    %p495 = scmp.eq.s32.totalorder %s33, 1
    %p496 = por %p494, %p495
    %p498 = scmp.ne.s32.totalorder %s481, %s497
    %p499 = scmp.eq.s32.totalorder %s33, 0
    %p500 = por %p498, %p499
    %p501 = scmp.le.s32.totalorder 1, %s27
    %p502 = scmp.lt.s32.totalorder %s27, 3
    %p503 = pnand %p501, %p502
    %p504 = pneg %p503
    // Predicated region
    $region9: #{faceboxes_s_forward.3} parent=5 // pred_check
      _
    $region10: #{faceboxes_s_forward.3} parent=5 // pred_check_branch
      %506 = sbr.rel (%p503) target = $region12
    $region11: #{faceboxes_s_forward.3} parent=5 // pred_region
      %s507 = ssub.s32 %s27, 1
      // Predicated region
      $region13: #{faceboxes_s_forward.3} parent=11 // pred_check
        %p508 = pneg %p74
      $region14: #{faceboxes_s_forward.3} parent=11 // pred_check_branch
        %510 = sbr.rel (%p508) target = $region16
      $region15: #{faceboxes_s_forward.3} parent=11 // pred_region
        _
      $region16: #{faceboxes_s_forward.3} parent=11 // pred_fallthru
        _
      // Predicated region
      $region17: #{faceboxes_s_forward.3} parent=11 // pred_check
        %p511 = pneg %p95
      $region18: #{faceboxes_s_forward.3} parent=11 // pred_check_branch
        %513 = sbr.rel (%p511) target = $region20
      $region19: #{faceboxes_s_forward.3} parent=11 // pred_region
        _
      $region20: #{faceboxes_s_forward.3} parent=11 // pred_fallthru
        _
      // Predicated region
      $region21: #{faceboxes_s_forward.3} parent=11 // pred_check
        %p514 = pneg %p116
      $region22: #{faceboxes_s_forward.3} parent=11 // pred_check_branch
        %516 = sbr.rel (%p514) target = $region24
      $region23: #{faceboxes_s_forward.3} parent=11 // pred_region
        _
      $region24: #{faceboxes_s_forward.3} parent=11 // pred_fallthru
        _
      // Predicated region
      $region25: #{faceboxes_s_forward.3} parent=11 // pred_check
        %p517 = pneg %p137
      $region26: #{faceboxes_s_forward.3} parent=11 // pred_check_branch
        %519 = sbr.rel (%p517) target = $region28
      $region27: #{faceboxes_s_forward.3} parent=11 // pred_region
        _
      $region28: #{faceboxes_s_forward.3} parent=11 // pred_fallthru
        _
      // Predicated region
      $region29: #{faceboxes_s_forward.3} parent=11 // pred_check
        %p520 = pneg %p158
      $region30: #{faceboxes_s_forward.3} parent=11 // pred_check_branch
        %522 = sbr.rel (%p520) target = $region32
      $region31: #{faceboxes_s_forward.3} parent=11 // pred_region
        _
      $region32: #{faceboxes_s_forward.3} parent=11 // pred_fallthru
        _
      // Predicated region
      $region33: #{faceboxes_s_forward.3} parent=11 // pred_check
        %p523 = pneg %p179
      $region34: #{faceboxes_s_forward.3} parent=11 // pred_check_branch
        %525 = sbr.rel (%p523) target = $region36
      $region35: #{faceboxes_s_forward.3} parent=11 // pred_region
        _
      $region36: #{faceboxes_s_forward.3} parent=11 // pred_fallthru
        _
      // Predicated region
      $region37: #{faceboxes_s_forward.3} parent=11 // pred_check
        %p526 = pneg %p200
      $region38: #{faceboxes_s_forward.3} parent=11 // pred_check_branch
        %528 = sbr.rel (%p526) target = $region40
      $region39: #{faceboxes_s_forward.3} parent=11 // pred_region
        _
      $region40: #{faceboxes_s_forward.3} parent=11 // pred_fallthru
        _
      // Predicated region
      $region41: #{faceboxes_s_forward.3} parent=11 // pred_check
        %p529 = pneg %p221
      $region42: #{faceboxes_s_forward.3} parent=11 // pred_check_branch
        %531 = sbr.rel (%p529) target = $region44
      $region43: #{faceboxes_s_forward.3} parent=11 // pred_region
        _
      $region44: #{faceboxes_s_forward.3} parent=11 // pred_fallthru
        _
      // Predicated region
      $region45: #{faceboxes_s_forward.3} parent=11 // pred_check
        %p532 = pneg %p242
      $region46: #{faceboxes_s_forward.3} parent=11 // pred_check_branch
        %534 = sbr.rel (%p532) target = $region48
      $region47: #{faceboxes_s_forward.3} parent=11 // pred_region
        _
      $region48: #{faceboxes_s_forward.3} parent=11 // pred_fallthru
        _
      // Predicated region
      $region49: #{faceboxes_s_forward.3} parent=11 // pred_check
        %p535 = pneg %p263
      $region50: #{faceboxes_s_forward.3} parent=11 // pred_check_branch
        %537 = sbr.rel (%p535) target = $region52
      $region51: #{faceboxes_s_forward.3} parent=11 // pred_region
        _
      $region52: #{faceboxes_s_forward.3} parent=11 // pred_fallthru
        _
      // Predicated region
      $region53: #{faceboxes_s_forward.3} parent=11 // pred_check
        %p538 = pneg %p284
      $region54: #{faceboxes_s_forward.3} parent=11 // pred_check_branch
        %540 = sbr.rel (%p538) target = $region56
      $region55: #{faceboxes_s_forward.3} parent=11 // pred_region
        _
      $region56: #{faceboxes_s_forward.3} parent=11 // pred_fallthru
        _
      // Predicated region
      $region57: #{faceboxes_s_forward.3} parent=11 // pred_check
        %p541 = pneg %p305
      $region58: #{faceboxes_s_forward.3} parent=11 // pred_check_branch
        %543 = sbr.rel (%p541) target = $region60
      $region59: #{faceboxes_s_forward.3} parent=11 // pred_region
        _
      $region60: #{faceboxes_s_forward.3} parent=11 // pred_fallthru
        _
      // Predicated region
      $region61: #{faceboxes_s_forward.3} parent=11 // pred_check
        %p544 = pneg %p326
      $region62: #{faceboxes_s_forward.3} parent=11 // pred_check_branch
        %546 = sbr.rel (%p544) target = $region64
      $region63: #{faceboxes_s_forward.3} parent=11 // pred_region
        _
      $region64: #{faceboxes_s_forward.3} parent=11 // pred_fallthru
        _
      // Predicated region
      $region65: #{faceboxes_s_forward.3} parent=11 // pred_check
        %p547 = pneg %p347
      $region66: #{faceboxes_s_forward.3} parent=11 // pred_check_branch
        %549 = sbr.rel (%p547) target = $region68
      $region67: #{faceboxes_s_forward.3} parent=11 // pred_region
        _
      $region68: #{faceboxes_s_forward.3} parent=11 // pred_fallthru
        _
      // Predicated region
      $region69: #{faceboxes_s_forward.3} parent=11 // pred_check
        %p550 = pneg %p368
      $region70: #{faceboxes_s_forward.3} parent=11 // pred_check_branch
        %552 = sbr.rel (%p550) target = $region72
      $region71: #{faceboxes_s_forward.3} parent=11 // pred_region
        _
      $region72: #{faceboxes_s_forward.3} parent=11 // pred_fallthru
        _
      // Predicated region
      $region73: #{faceboxes_s_forward.3} parent=11 // pred_check
        %p553 = pneg %p389
      $region74: #{faceboxes_s_forward.3} parent=11 // pred_check_branch
        %555 = sbr.rel (%p553) target = $region76
      $region75: #{faceboxes_s_forward.3} parent=11 // pred_region
        _
      $region76: #{faceboxes_s_forward.3} parent=11 // pred_fallthru
        _
    $region12: #{faceboxes_s_forward.3} parent=5 // pred_fallthru
      _
    %p556 = scmp.lt.s32.totalorder %s27, 2
    // Predicated region
    $region77: #{faceboxes_s_forward.3} parent=5 // pred_check
      %p557 = pneg %p556
    $region78: #{faceboxes_s_forward.3} parent=5 // pred_check_branch
      %559 = sbr.rel (%p557) target = $region80
    $region79: #{faceboxes_s_forward.3} parent=5 // pred_region
      // Predicated region
      $region81: #{faceboxes_s_forward.3} parent=79 // pred_check
        %p560 = pneg %p47
      $region82: #{faceboxes_s_forward.3} parent=79 // pred_check_branch
        %562 = sbr.rel (%p560) target = $region84
      $region83: #{faceboxes_s_forward.3} parent=79 // pred_region
        %p563 = scmp.lt.s32.totalorder %s27, 1
        %s564 = scalar_select %p563, %s27, 1
        %s565 = smul.addr %s564, 112
        %s566 = smul.addr %s565, 4
        %s567 = scalar_lea.vmem %s0, %s566
      $region84: #{faceboxes_s_forward.3} parent=79 // pred_fallthru
        _
    $region80: #{faceboxes_s_forward.3} parent=5 // pred_fallthru
      _
    %p568 = scmp.le.s32.totalorder 1, %s27
    %p569 = scmp.lt.s32.totalorder %s27, 3
    %p570 = pnand %p568, %p569
    %p571 = pneg %p570
    // Predicated region
    $region85: #{faceboxes_s_forward.3} parent=5 // pred_check
      _
    $region86: #{faceboxes_s_forward.3} parent=5 // pred_check_branch
      %573 = sbr.rel (%p570) target = $region88
    $region87: #{faceboxes_s_forward.3} parent=5 // pred_region
      %s574 = ssub.s32 %s27, 1
      %p575 = scmp.lt.s32.totalorder %s32, 1
      %s576 = scalar_select %p575, %s32, 1
      %s577 = smul.addr %s576, 112
      %s578 = smul.addr %s577, 4
      %s579 = scalar_lea.vmem %s0, %s578
      %p580 = pneg %p53
      %p581 = pneg %p50
      %p582 = pneg %p74
      %p583 = pneg %p71
      %p584 = pneg %p95
      %p585 = pneg %p92
      %p586 = pneg %p116
      %p587 = pneg %p113
      %p588 = pneg %p137
      %p589 = pneg %p134
      %p590 = pneg %p158
      %p591 = pneg %p155
      %p592 = pneg %p179
      %p593 = pneg %p176
      %p594 = pneg %p200
      %p595 = pneg %p197
      %p596 = pneg %p221
      %p597 = pneg %p218
      %p598 = pneg %p242
      %p599 = pneg %p239
      %p600 = pneg %p263
      %p601 = pneg %p260
      %p602 = pneg %p284
      %p603 = pneg %p281
      %p604 = pneg %p305
      %p605 = pneg %p302
      %p606 = pneg %p326
      %p607 = pneg %p323
      %p608 = pneg %p347
      %p609 = pneg %p344
      %p610 = pneg %p368
      %p611 = pneg %p365
      %p612 = pneg %p389
      %p613 = pneg %p386
      %p614 = pneg %p415
      %p615 = pneg %p412
      %p616 = scmp.lt.s32.totalorder %s32, 1
      %s617 = scalar_select %p616, %s32, 1
      %s618 = smul.addr %s617, 2
      %s619 = scalar_lea.vmem %s17, %s618
      %p620 = pneg %p441
      %p621 = pneg %p438
      %p622 = scmp.lt.s32.totalorder %s32, 1
      %s623 = scalar_select %p622, %s32, 1
      %s624 = smul.addr %s623, 2
      %s625 = smul.addr %s624, 8
      %s626 = scalar_lea.vmem %s18, %s625
      %p627 = pneg %p467
      %p628 = pneg %p464
      %p629 = scmp.lt.s32.totalorder %s32, 1
      %s630 = scalar_select %p629, %s32, 1
      %s631 = smul.addr %s630, 4
      %s632 = scalar_lea.vmem %s19, %s631
      %p633 = pneg %p493
      %p634 = pneg %p490
      %p635 = scmp.lt.s32.totalorder %s32, 1
      %s636 = scalar_select %p635, %s32, 1
      %s637 = scalar_lea.vmem %s20, %s636
      %p638 = scmp.lt.s32.totalorder %s32, 1
      %s639 = scalar_select %p638, %s32, 1
      %s640 = smul.addr %s639, 112
      %s641 = smul.addr %s640, 4
      %s642 = scalar_lea.vmem %s0, %s641
      %p643 = scmp.lt.s32.totalorder %s32, 1
      %s644 = scalar_select %p643, %s32, 1
      %s645 = smul.addr %s644, 2
      %s646 = scalar_lea.vmem %s17, %s645
      %p647 = scmp.lt.s32.totalorder %s32, 1
      %s648 = scalar_select %p647, %s32, 1
      %s649 = smul.addr %s648, 2
      %s650 = smul.addr %s649, 8
      %s651 = scalar_lea.vmem %s18, %s650
      %p652 = scmp.lt.s32.totalorder %s32, 1
      %s653 = scalar_select %p652, %s32, 1
      %s654 = smul.addr %s653, 4
      %s655 = scalar_lea.vmem %s19, %s654
      %p656 = scmp.lt.s32.totalorder %s32, 1
      %s657 = scalar_select %p656, %s32, 1
      %s658 = scalar_lea.vmem %s20, %s657
      %v660 = vld [vmem:[%s642] sm:$0xff]
      %v661 = vld [vmem:[%s642 + $0x8] sm:$0xff]
      %v662 = vld [vmem:[%s642 + $0x10] sm:$0xff]
      %v663 = vld [vmem:[%s642 + $0x18] sm:$0xff]
      %v664 = vld [vmem:[%s642 + $0x20] sm:$0xff]
      %v665 = vld [vmem:[%s642 + $0x28] sm:$0xff]
      %v666 = vld [vmem:[%s642 + $0x30] sm:$0xff]
      %v667 = vld [vmem:[%s642 + $0x38] sm:$0xff]
      %v668 = vld [vmem:[%s642 + $0x40] sm:$0xff]
      %v669 = vld [vmem:[%s642 + $0x48] sm:$0xff]
      %v670 = vld [vmem:[%s642 + $0x50] sm:$0xff]
      %v671 = vld [vmem:[%s642 + $0x58] sm:$0xff]
      %v672 = vld [vmem:[%s642 + $0x60] sm:$0xff]
      %v673 = vld [vmem:[%s642 + $0x68] sm:$0xff]
      %v674 = vld [vmem:[%s642 + $0x70] sm:$0xff]
      %v675 = vld [vmem:[%s642 + $0x78] sm:$0xff]
      %v676 = vld [vmem:[%s642 + $0x80] sm:$0xff]
      %v677 = vld [vmem:[%s642 + $0x88] sm:$0xff]
      %v678 = vld [vmem:[%s642 + $0x90] sm:$0xff]
      %v679 = vld [vmem:[%s642 + $0x98] sm:$0xff]
      %v680 = vld [vmem:[%s642 + $0xa0] sm:$0xff]
      %v681 = vld [vmem:[%s642 + $0xa8] sm:$0xff]
      %v682 = vld [vmem:[%s642 + $0xb0] sm:$0xff]
      %v683 = vld [vmem:[%s642 + $0xb8] sm:$0xff]
      %v684 = vld [vmem:[%s642 + $0xc0] sm:$0xff]
      %v685 = vld [vmem:[%s642 + $0xc8] sm:$0xff]
      %v686 = vld [vmem:[%s642 + $0xd0] sm:$0xff]
      %v687 = vld [vmem:[%s642 + $0xd8] sm:$0xff]
      %v688 = vld [vmem:[%s642 + $0xe0] sm:$0xff]
      %v689 = vld [vmem:[%s642 + $0xe8] sm:$0xff]
      %v690 = vld [vmem:[%s642 + $0xf0] sm:$0xff]
      %v691 = vld [vmem:[%s642 + $0xf8] sm:$0xff]
      %v692 = vld [vmem:[%s642 + $0x100] sm:$0xff]
      %v693 = vld [vmem:[%s642 + $0x108] sm:$0xff]
      %v694 = vld [vmem:[%s642 + $0x110] sm:$0xff]
      %v695 = vld [vmem:[%s642 + $0x118] sm:$0xff]
      %v696 = vld [vmem:[%s642 + $0x120] sm:$0xff]
      %v697 = vld [vmem:[%s642 + $0x128] sm:$0xff]
      %v698 = vld [vmem:[%s642 + $0x130] sm:$0xff]
      %v699 = vld [vmem:[%s642 + $0x138] sm:$0xff]
      %v700 = vld [vmem:[%s642 + $0x140] sm:$0xff]
      %v701 = vld [vmem:[%s642 + $0x148] sm:$0xff]
      %v702 = vld [vmem:[%s642 + $0x150] sm:$0xff]
      %v703 = vld [vmem:[%s642 + $0x158] sm:$0xff]
      %v704 = vld [vmem:[%s642 + $0x160] sm:$0xff]
      %v705 = vld [vmem:[%s642 + $0x168] sm:$0xff]
      %v706 = vld [vmem:[%s642 + $0x170] sm:$0xff]
      %v707 = vld [vmem:[%s642 + $0x178] sm:$0xff]
      %v708 = vld [vmem:[%s642 + $0x180] sm:$0xff]
      %v709 = vld [vmem:[%s642 + $0x188] sm:$0xff]
      %v710 = vld [vmem:[%s642 + $0x190] sm:$0xff]
      %v711 = vld [vmem:[%s642 + $0x198] sm:$0xff]
      %v712 = vld [vmem:[%s642 + $0x1a0] sm:$0xff]
      %v713 = vld [vmem:[%s642 + $0x1a8] sm:$0xff]
      %v714 = vld [vmem:[%s642 + $0x1b0] sm:$0xff]
      %v715 = vld [vmem:[%s642 + $0x1b8] sm:$0xff]
      %v716 = vld [vmem:[%s1] sm:$0xf]
      %v717 = vld [vmem:[%s1 + $0x4] sm:$0xf]
      %v718 = vld [vmem:[%s1 + $0x8] sm:$0xf]
      %v719 = vld [vmem:[%s1 + $0xc] sm:$0xf]
      %v720 = vld [vmem:[%s1 + $0x10] sm:$0xf]
      %v721 = vld [vmem:[%s1 + $0x14] sm:$0xf]
      %v722 = vld [vmem:[%s1 + $0x18] sm:$0xf]
      %v723 = vld [vmem:[%s1 + $0x1c] sm:$0xf]
      %v724 = vld [vmem:[%s1 + $0x20] sm:$0xf]
      %v725 = vld [vmem:[%s1 + $0x24] sm:$0xf]
      %v726 = vld [vmem:[%s1 + $0x28] sm:$0xf]
      %v727 = vld [vmem:[%s1 + $0x2c] sm:$0xf]
      %v728 = vld [vmem:[%s1 + $0x30] sm:$0xf]
      %v729 = vld [vmem:[%s1 + $0x34] sm:$0xf]
      %v730 = vld [vmem:[%s1 + $0x38] sm:$0xf]
      %v731 = vld [vmem:[%s1 + $0x3c] sm:$0xf]
      %v732 = vld [vmem:[%s1 + $0x40] sm:$0xf]
      %v733 = vld [vmem:[%s1 + $0x44] sm:$0xf]
      %v734 = vld [vmem:[%s1 + $0x48] sm:$0xf]
      %v735 = vld [vmem:[%s1 + $0x4c] sm:$0xf]
      %v736 = vld [vmem:[%s1 + $0x50] sm:$0xf]
      %v737 = vld [vmem:[%s1 + $0x54] sm:$0xf]
      %v738 = vld [vmem:[%s1 + $0x58] sm:$0xf]
      %v739 = vld [vmem:[%s1 + $0x5c] sm:$0xf]
      %v740 = vld [vmem:[%s1 + $0x60] sm:$0xf]
      %v741 = vld [vmem:[%s1 + $0x64] sm:$0xf]
      %v742 = vld [vmem:[%s1 + $0x68] sm:$0xf]
      %v743 = vld [vmem:[%s1 + $0x6c] sm:$0xf]
      %v744 = vld [vmem:[%s1 + $0x70] sm:$0xf]
      %v745 = vld [vmem:[%s1 + $0x74] sm:$0xf]
      %v746 = vld [vmem:[%s1 + $0x78] sm:$0xf]
      %v747 = vld [vmem:[%s1 + $0x7c] sm:$0xf]
      %v748 = vld [vmem:[%s1 + $0x80] sm:$0xf]
      %v749 = vld [vmem:[%s1 + $0x84] sm:$0xf]
      %v750 = vld [vmem:[%s1 + $0x88] sm:$0xf]
      %v751 = vld [vmem:[%s1 + $0x8c] sm:$0xf]
      %v752 = vld [vmem:[%s1 + $0x90] sm:$0xf]
      %v753 = vld [vmem:[%s1 + $0x94] sm:$0xf]
      %v754 = vld [vmem:[%s1 + $0x98] sm:$0xf]
      %v755 = vld [vmem:[%s1 + $0x9c] sm:$0xf]
      %v756 = vld [vmem:[%s1 + $0xa0] sm:$0xf]
      %v757 = vld [vmem:[%s1 + $0xa4] sm:$0xf]
      %v758 = vld [vmem:[%s1 + $0xa8] sm:$0xf]
      %v759 = vld [vmem:[%s1 + $0xac] sm:$0xf]
      %v760 = vld [vmem:[%s1 + $0xb0] sm:$0xf]
      %v761 = vld [vmem:[%s1 + $0xb4] sm:$0xf]
      %v762 = vld [vmem:[%s1 + $0xb8] sm:$0xf]
      %v763 = vld [vmem:[%s1 + $0xbc] sm:$0xf]
      %v764 = vld [vmem:[%s1 + $0xc0] sm:$0xf]
      %v765 = vld [vmem:[%s1 + $0xc4] sm:$0xf]
      %v766 = vld [vmem:[%s1 + $0xc8] sm:$0xf]
      %v767 = vld [vmem:[%s1 + $0xcc] sm:$0xf]
      %v768 = vld [vmem:[%s1 + $0xd0] sm:$0xf]
      %v769 = vld [vmem:[%s1 + $0xd4] sm:$0xf]
      %v770 = vld [vmem:[%s1 + $0xd8] sm:$0xf]
      %v771 = vld [vmem:[%s1 + $0xdc] sm:$0xf]
      %v772 = vld [vmem:[%s1 + $0xe0] sm:$0xf]
      %v773 = vld [vmem:[%s1 + $0xe4] sm:$0xf]
      %v774 = vld [vmem:[%s1 + $0xe8] sm:$0xf]
      %v775 = vld [vmem:[%s1 + $0xec] sm:$0xf]
      %v776 = vld [vmem:[%s1 + $0xf0] sm:$0xf]
      %v777 = vld [vmem:[%s1 + $0xf4] sm:$0xf]
      %v778 = vld [vmem:[%s1 + $0xf8] sm:$0xf]
      %v779 = vld [vmem:[%s1 + $0xfc] sm:$0xf]
      %v780 = vld [vmem:[%s1 + $0x100] sm:$0xf]
      %v781 = vld [vmem:[%s1 + $0x104] sm:$0xf]
      %v782 = vld [vmem:[%s1 + $0x108] sm:$0xf]
      %v783 = vld [vmem:[%s1 + $0x10c] sm:$0xf]
      %v784 = vld [vmem:[%s1 + $0x110] sm:$0xf]
      %v785 = vld [vmem:[%s1 + $0x114] sm:$0xf]
      %v786 = vld [vmem:[%s1 + $0x118] sm:$0xf]
      %v787 = vld [vmem:[%s1 + $0x11c] sm:$0xf]
      %v788 = vld [vmem:[%s1 + $0x120] sm:$0xf]
      %v789 = vld [vmem:[%s1 + $0x124] sm:$0xf]
      %v790 = vld [vmem:[%s1 + $0x128] sm:$0xf]
      %v791 = vld [vmem:[%s1 + $0x12c] sm:$0xf]
      %v792 = vld [vmem:[%s1 + $0x130] sm:$0xf]
      %v793 = vld [vmem:[%s1 + $0x134] sm:$0xf]
      %v794 = vld [vmem:[%s1 + $0x138] sm:$0xf]
      %v795 = vld [vmem:[%s1 + $0x13c] sm:$0xf]
      %v796 = vld [vmem:[%s1 + $0x140] sm:$0xf]
      %v797 = vld [vmem:[%s1 + $0x144] sm:$0xf]
      %v798 = vld [vmem:[%s1 + $0x148] sm:$0xf]
      %v799 = vld [vmem:[%s1 + $0x14c] sm:$0xf]
      %v800 = vld [vmem:[%s1 + $0x150] sm:$0xf]
      %v801 = vld [vmem:[%s1 + $0x154] sm:$0xf]
      %v802 = vld [vmem:[%s1 + $0x158] sm:$0xf]
      %v803 = vld [vmem:[%s1 + $0x15c] sm:$0xf]
      %v804 = vld [vmem:[%s1 + $0x160] sm:$0xf]
      %v805 = vld [vmem:[%s1 + $0x164] sm:$0xf]
      %v806 = vld [vmem:[%s1 + $0x168] sm:$0xf]
      %v807 = vld [vmem:[%s1 + $0x16c] sm:$0xf]
      %v808 = vld [vmem:[%s1 + $0x170] sm:$0xf]
      %v809 = vld [vmem:[%s1 + $0x174] sm:$0xf]
      %v810 = vld [vmem:[%s1 + $0x178] sm:$0xf]
      %v811 = vld [vmem:[%s1 + $0x17c] sm:$0xf]
      %v812 = vld [vmem:[%s1 + $0x180] sm:$0xf]
      %v813 = vld [vmem:[%s1 + $0x184] sm:$0xf]
      %v814 = vld [vmem:[%s1 + $0x188] sm:$0xf]
      %v815 = vld [vmem:[%s1 + $0x18c] sm:$0xf]
      %v816 = vld [vmem:[%s1 + $0x190] sm:$0xf]
      %v817 = vld [vmem:[%s1 + $0x194] sm:$0xf]
      %v818 = vld [vmem:[%s1 + $0x198] sm:$0xf]
      %v819 = vld [vmem:[%s1 + $0x19c] sm:$0xf]
      %v820 = vld [vmem:[%s1 + $0x1a0] sm:$0xf]
      %v821 = vld [vmem:[%s1 + $0x1a4] sm:$0xf]
      %v822 = vld [vmem:[%s1 + $0x1a8] sm:$0xf]
      %v823 = vld [vmem:[%s1 + $0x1ac] sm:$0xf]
      %v824 = vld [vmem:[%s1 + $0x1b0] sm:$0xf]
      %v825 = vld [vmem:[%s1 + $0x1b4] sm:$0xf]
      %v826 = vld [vmem:[%s1 + $0x1b8] sm:$0xf]
      %v827 = vld [vmem:[%s1 + $0x1bc] sm:$0xf]
      %v828 = vld [vmem:[%s1 + $0x1c0] sm:$0xf]
      %v829 = vld [vmem:[%s1 + $0x1c4] sm:$0xf]
      %v830 = vld [vmem:[%s1 + $0x1c8] sm:$0xf]
      %v831 = vld [vmem:[%s1 + $0x1cc] sm:$0xf]
      %v832 = vld [vmem:[%s1 + $0x1d0] sm:$0xf]
      %v833 = vld [vmem:[%s1 + $0x1d4] sm:$0xf]
      %v834 = vld [vmem:[%s1 + $0x1d8] sm:$0xf]
      %v835 = vld [vmem:[%s1 + $0x1dc] sm:$0xf]
      %v836 = vld [vmem:[%s1 + $0x1e0] sm:$0xf]
      %v837 = vld [vmem:[%s1 + $0x1e4] sm:$0xf]
      %v838 = vld [vmem:[%s1 + $0x1e8] sm:$0xf]
      %v839 = vld [vmem:[%s1 + $0x1ec] sm:$0xf]
      %v840 = vld [vmem:[%s1 + $0x1f0] sm:$0xf]
      %v841 = vld [vmem:[%s1 + $0x1f4] sm:$0xf]
      %v842 = vld [vmem:[%s1 + $0x1f8] sm:$0xf]
      %v843 = vld [vmem:[%s1 + $0x1fc] sm:$0xf]
      %v844 = vld [vmem:[%s1 + $0x200] sm:$0xf]
      %v845 = vld [vmem:[%s1 + $0x204] sm:$0xf]
      %v846 = vld [vmem:[%s1 + $0x208] sm:$0xf]
      %v847 = vld [vmem:[%s1 + $0x20c] sm:$0xf]
      %v848 = vld [vmem:[%s1 + $0x210] sm:$0xf]
      %v849 = vld [vmem:[%s1 + $0x214] sm:$0xf]
      %v850 = vld [vmem:[%s1 + $0x218] sm:$0xf]
      %v851 = vld [vmem:[%s1 + $0x21c] sm:$0xf]
      %v852 = vld [vmem:[%s1 + $0x220] sm:$0xf]
      %v853 = vld [vmem:[%s1 + $0x224] sm:$0xf]
      %v854 = vld [vmem:[%s1 + $0x228] sm:$0xf]
      %v855 = vld [vmem:[%s1 + $0x22c] sm:$0xf]
      %v856 = vld [vmem:[%s1 + $0x230] sm:$0xf]
      %v857 = vld [vmem:[%s1 + $0x234] sm:$0xf]
      %v858 = vld [vmem:[%s1 + $0x238] sm:$0xf]
      %v859 = vld [vmem:[%s1 + $0x23c] sm:$0xf]
      %v860 = vld [vmem:[%s1 + $0x240] sm:$0xf]
      %v861 = vld [vmem:[%s1 + $0x244] sm:$0xf]
      %v862 = vld [vmem:[%s1 + $0x248] sm:$0xf]
      %v863 = vld [vmem:[%s1 + $0x24c] sm:$0xf]
      %v864 = vld [vmem:[%s1 + $0x250] sm:$0xf]
      %v865 = vld [vmem:[%s1 + $0x254] sm:$0xf]
      %v866 = vld [vmem:[%s1 + $0x258] sm:$0xf]
      %v867 = vld [vmem:[%s1 + $0x25c] sm:$0xf]
      %v868 = vld [vmem:[%s1 + $0x260] sm:$0xf]
      %v869 = vld [vmem:[%s1 + $0x264] sm:$0xf]
      %v870 = vld [vmem:[%s1 + $0x268] sm:$0xf]
      %v871 = vld [vmem:[%s1 + $0x26c] sm:$0xf]
      %v872 = vld [vmem:[%s1 + $0x270] sm:$0xf]
      %v873 = vld [vmem:[%s1 + $0x274] sm:$0xf]
      %v874 = vld [vmem:[%s1 + $0x278] sm:$0xf]
      %v875 = vld [vmem:[%s1 + $0x27c] sm:$0xf]
      %v876 = vld [vmem:[%s1 + $0x280] sm:$0xf]
      %v877 = vld [vmem:[%s1 + $0x284] sm:$0xf]
      %v878 = vld [vmem:[%s1 + $0x288] sm:$0xf]
      %v879 = vld [vmem:[%s1 + $0x28c] sm:$0xf]
      %v880 = vld [vmem:[%s1 + $0x290] sm:$0xf]
      %v881 = vld [vmem:[%s1 + $0x294] sm:$0xf]
      %v882 = vld [vmem:[%s1 + $0x298] sm:$0xf]
      %v883 = vld [vmem:[%s1 + $0x29c] sm:$0xf]
      %v884 = vld [vmem:[%s1 + $0x2a0] sm:$0xf]
      %v885 = vld [vmem:[%s1 + $0x2a4] sm:$0xf]
      %v886 = vld [vmem:[%s1 + $0x2a8] sm:$0xf]
      %v887 = vld [vmem:[%s1 + $0x2ac] sm:$0xf]
      %v888 = vld [vmem:[%s1 + $0x2b0] sm:$0xf]
      %v889 = vld [vmem:[%s1 + $0x2b4] sm:$0xf]
      %v890 = vld [vmem:[%s1 + $0x2b8] sm:$0xf]
      %v891 = vld [vmem:[%s1 + $0x2bc] sm:$0xf]
      %v892 = vld [vmem:[%s1 + $0x2c0] sm:$0xf]
      %v893 = vld [vmem:[%s1 + $0x2c4] sm:$0xf]
      %v894 = vld [vmem:[%s1 + $0x2c8] sm:$0xf]
      %v895 = vld [vmem:[%s1 + $0x2cc] sm:$0xf]
      %v896 = vld [vmem:[%s1 + $0x2d0] sm:$0xf]
      %v897 = vld [vmem:[%s1 + $0x2d4] sm:$0xf]
      %v898 = vld [vmem:[%s1 + $0x2d8] sm:$0xf]
      %v899 = vld [vmem:[%s1 + $0x2dc] sm:$0xf]
      %v900 = vld [vmem:[%s1 + $0x2e0] sm:$0xf]
      %v901 = vld [vmem:[%s1 + $0x2e4] sm:$0xf]
      %v902 = vld [vmem:[%s1 + $0x2e8] sm:$0xf]
      %v903 = vld [vmem:[%s1 + $0x2ec] sm:$0xf]
      %v904 = vld [vmem:[%s1 + $0x2f0] sm:$0xf]
      %v905 = vld [vmem:[%s1 + $0x2f4] sm:$0xf]
      %v906 = vld [vmem:[%s1 + $0x2f8] sm:$0xf]
      %v907 = vld [vmem:[%s1 + $0x2fc] sm:$0xf]
      %v908 = vld [vmem:[%s1 + $0x300] sm:$0xf]
      %v909 = vld [vmem:[%s1 + $0x304] sm:$0xf]
      %v910 = vld [vmem:[%s1 + $0x308] sm:$0xf]
      %v911 = vld [vmem:[%s1 + $0x30c] sm:$0xf]
      %v912 = vld [vmem:[%s1 + $0x310] sm:$0xf]
      %v913 = vld [vmem:[%s1 + $0x314] sm:$0xf]
      %v914 = vld [vmem:[%s1 + $0x318] sm:$0xf]
      %v915 = vld [vmem:[%s1 + $0x31c] sm:$0xf]
      %v916 = vld [vmem:[%s1 + $0x320] sm:$0xf]
      %v917 = vld [vmem:[%s1 + $0x324] sm:$0xf]
      %v918 = vld [vmem:[%s1 + $0x328] sm:$0xf]
      %v919 = vld [vmem:[%s1 + $0x32c] sm:$0xf]
      %v920 = vld [vmem:[%s1 + $0x330] sm:$0xf]
      %v921 = vld [vmem:[%s1 + $0x334] sm:$0xf]
      %v922 = vld [vmem:[%s1 + $0x338] sm:$0xf]
      %v923 = vld [vmem:[%s1 + $0x33c] sm:$0xf]
      %v924 = vld [vmem:[%s1 + $0x340] sm:$0xf]
      %v925 = vld [vmem:[%s1 + $0x344] sm:$0xf]
      %v926 = vld [vmem:[%s1 + $0x348] sm:$0xf]
      %v927 = vld [vmem:[%s1 + $0x34c] sm:$0xf]
      %v928 = vld [vmem:[%s1 + $0x350] sm:$0xf]
      %v929 = vld [vmem:[%s1 + $0x354] sm:$0xf]
      %v930 = vld [vmem:[%s1 + $0x358] sm:$0xf]
      %v931 = vld [vmem:[%s1 + $0x35c] sm:$0xf]
      %v932 = vld [vmem:[%s2] sm:$0x1]
      %v934 = vperm.slane %v932, 0
      %v992 = vunpack.c.l.b16 %v660
      %v993 = vunpack.c.h.b16 %v660
      %v994 = vunpack.c.l.b16 %v661
      %v995 = vunpack.c.h.b16 %v661
      %v996 = vunpack.c.l.b16 %v662
      %v997 = vunpack.c.h.b16 %v662
      %v998 = vunpack.c.l.b16 %v663
      %v999 = vunpack.c.h.b16 %v663
      %v1000 = vunpack.c.l.b16 %v664
      %v1001 = vunpack.c.h.b16 %v664
      %v1002 = vunpack.c.l.b16 %v665
      %v1003 = vunpack.c.h.b16 %v665
      %v1004 = vunpack.c.l.b16 %v666
      %v1005 = vunpack.c.h.b16 %v666
      %v1006 = vunpack.c.l.b16 %v667
      %v1007 = vunpack.c.h.b16 %v667
      %v1008 = vunpack.c.l.b16 %v668
      %v1009 = vunpack.c.h.b16 %v668
      %v1010 = vunpack.c.l.b16 %v669
      %v1011 = vunpack.c.h.b16 %v669
      %v1012 = vunpack.c.l.b16 %v670
      %v1013 = vunpack.c.h.b16 %v670
      %v1014 = vunpack.c.l.b16 %v671
      %v1015 = vunpack.c.h.b16 %v671
      %v1016 = vunpack.c.l.b16 %v672
      %v1017 = vunpack.c.h.b16 %v672
      %v1018 = vunpack.c.l.b16 %v673
      %v1019 = vunpack.c.h.b16 %v673
      %v1020 = vunpack.c.l.b16 %v674
      %v1021 = vunpack.c.h.b16 %v674
      %v1022 = vunpack.c.l.b16 %v675
      %v1023 = vunpack.c.h.b16 %v675
      %v1024 = vunpack.c.l.b16 %v676
      %v1025 = vunpack.c.h.b16 %v676
      %v1026 = vunpack.c.l.b16 %v677
      %v1027 = vunpack.c.h.b16 %v677
      %v1028 = vunpack.c.l.b16 %v678
      %v1029 = vunpack.c.h.b16 %v678
      %v1030 = vunpack.c.l.b16 %v679
      %v1031 = vunpack.c.h.b16 %v679
      %v1032 = vunpack.c.l.b16 %v680
      %v1033 = vunpack.c.h.b16 %v680
      %v1034 = vunpack.c.l.b16 %v681
      %v1035 = vunpack.c.h.b16 %v681
      %v1036 = vunpack.c.l.b16 %v682
      %v1037 = vunpack.c.h.b16 %v682
      %v1038 = vunpack.c.l.b16 %v683
      %v1039 = vunpack.c.h.b16 %v683
      %v1040 = vunpack.c.l.b16 %v684
      %v1041 = vunpack.c.h.b16 %v684
      %v1042 = vunpack.c.l.b16 %v685
      %v1043 = vunpack.c.h.b16 %v685
      %v1044 = vunpack.c.l.b16 %v686
      %v1045 = vunpack.c.h.b16 %v686
      %v1046 = vunpack.c.l.b16 %v687
      %v1047 = vunpack.c.h.b16 %v687
      %v1048 = vunpack.c.l.b16 %v688
      %v1049 = vunpack.c.h.b16 %v688
      %v1050 = vunpack.c.l.b16 %v689
      %v1051 = vunpack.c.h.b16 %v689
      %v1052 = vunpack.c.l.b16 %v690
      %v1053 = vunpack.c.h.b16 %v690
      %v1054 = vunpack.c.l.b16 %v691
      %v1055 = vunpack.c.h.b16 %v691
      %v1056 = vunpack.c.l.b16 %v692
      %v1057 = vunpack.c.h.b16 %v692
      %v1058 = vunpack.c.l.b16 %v693
      %v1059 = vunpack.c.h.b16 %v693
      %v1060 = vunpack.c.l.b16 %v694
      %v1061 = vunpack.c.h.b16 %v694
      %v1062 = vunpack.c.l.b16 %v695
      %v1063 = vunpack.c.h.b16 %v695
      %v1064 = vunpack.c.l.b16 %v696
      %v1065 = vunpack.c.h.b16 %v696
      %v1066 = vunpack.c.l.b16 %v697
      %v1067 = vunpack.c.h.b16 %v697
      %v1068 = vunpack.c.l.b16 %v698
      %v1069 = vunpack.c.h.b16 %v698
      %v1070 = vunpack.c.l.b16 %v699
      %v1071 = vunpack.c.h.b16 %v699
      %v1072 = vunpack.c.l.b16 %v700
      %v1073 = vunpack.c.h.b16 %v700
      %v1074 = vunpack.c.l.b16 %v701
      %v1075 = vunpack.c.h.b16 %v701
      %v1076 = vunpack.c.l.b16 %v702
      %v1077 = vunpack.c.h.b16 %v702
      %v1078 = vunpack.c.l.b16 %v703
      %v1079 = vunpack.c.h.b16 %v703
      %v1080 = vunpack.c.l.b16 %v704
      %v1081 = vunpack.c.h.b16 %v704
      %v1082 = vunpack.c.l.b16 %v705
      %v1083 = vunpack.c.h.b16 %v705
      %v1084 = vunpack.c.l.b16 %v706
      %v1085 = vunpack.c.h.b16 %v706
      %v1086 = vunpack.c.l.b16 %v707
      %v1087 = vunpack.c.h.b16 %v707
      %v1088 = vunpack.c.l.b16 %v708
      %v1089 = vunpack.c.h.b16 %v708
      %v1090 = vunpack.c.l.b16 %v709
      %v1091 = vunpack.c.h.b16 %v709
      %v1092 = vunpack.c.l.b16 %v710
      %v1093 = vunpack.c.h.b16 %v710
      %v1094 = vunpack.c.l.b16 %v711
      %v1095 = vunpack.c.h.b16 %v711
      %v1096 = vunpack.c.l.b16 %v712
      %v1097 = vunpack.c.h.b16 %v712
      %v1098 = vunpack.c.l.b16 %v713
      %v1099 = vunpack.c.h.b16 %v713
      %v1100 = vunpack.c.l.b16 %v714
      %v1101 = vunpack.c.h.b16 %v714
      %v1102 = vunpack.c.l.b16 %v715
      %v1103 = vunpack.c.h.b16 %v715
      %v1104 = vpack.c.b16 %v1006, %v992
      %v1105 = vpack.c.b16 %v1007, %v993
      %v1106 = vpack.c.b16 %v1008, %v994
      %v1107 = vpack.c.b16 %v1009, %v995
      %v1108 = vpack.c.b16 %v1010, %v996
      %v1109 = vpack.c.b16 %v1011, %v997
      %v1110 = vpack.c.b16 %v1012, %v998
      %v1111 = vpack.c.b16 %v1013, %v999
      %v1112 = vpack.c.b16 %v1014, %v1000
      %v1113 = vpack.c.b16 %v1015, %v1001
      %v1114 = vpack.c.b16 %v1016, %v1002
      %v1115 = vpack.c.b16 %v1017, %v1003
      %v1116 = vpack.c.b16 %v1018, %v1004
      %v1117 = vpack.c.b16 %v1019, %v1005
      %v1118 = vpack.c.b16 %v1034, %v1020
      %v1119 = vpack.c.b16 %v1035, %v1021
      %v1120 = vpack.c.b16 %v1036, %v1022
      %v1121 = vpack.c.b16 %v1037, %v1023
      %v1122 = vpack.c.b16 %v1038, %v1024
      %v1123 = vpack.c.b16 %v1039, %v1025
      %v1124 = vpack.c.b16 %v1040, %v1026
      %v1125 = vpack.c.b16 %v1041, %v1027
      %v1126 = vpack.c.b16 %v1042, %v1028
      %v1127 = vpack.c.b16 %v1043, %v1029
      %v1128 = vpack.c.b16 %v1044, %v1030
      %v1129 = vpack.c.b16 %v1045, %v1031
      %v1130 = vpack.c.b16 %v1046, %v1032
      %v1131 = vpack.c.b16 %v1047, %v1033
      %v1132 = vpack.c.b16 %v1062, %v1048
      %v1133 = vpack.c.b16 %v1063, %v1049
      %v1134 = vpack.c.b16 %v1064, %v1050
      %v1135 = vpack.c.b16 %v1065, %v1051
      %v1136 = vpack.c.b16 %v1066, %v1052
      %v1137 = vpack.c.b16 %v1067, %v1053
      %v1138 = vpack.c.b16 %v1068, %v1054
      %v1139 = vpack.c.b16 %v1069, %v1055
      %v1140 = vpack.c.b16 %v1070, %v1056
      %v1141 = vpack.c.b16 %v1071, %v1057
      %v1142 = vpack.c.b16 %v1072, %v1058
      %v1143 = vpack.c.b16 %v1073, %v1059
      %v1144 = vpack.c.b16 %v1074, %v1060
      %v1145 = vpack.c.b16 %v1075, %v1061
      %v1146 = vpack.c.b16 %v1090, %v1076
      %v1147 = vpack.c.b16 %v1091, %v1077
      %v1148 = vpack.c.b16 %v1092, %v1078
      %v1149 = vpack.c.b16 %v1093, %v1079
      %v1150 = vpack.c.b16 %v1094, %v1080
      %v1151 = vpack.c.b16 %v1095, %v1081
      %v1152 = vpack.c.b16 %v1096, %v1082
      %v1153 = vpack.c.b16 %v1097, %v1083
      %v1154 = vpack.c.b16 %v1098, %v1084
      %v1155 = vpack.c.b16 %v1099, %v1085
      %v1156 = vpack.c.b16 %v1100, %v1086
      %v1157 = vpack.c.b16 %v1101, %v1087
      %v1158 = vpack.c.b16 %v1102, %v1088
      %v1159 = vpack.c.b16 %v1103, %v1089
      %v1428 = vunpack.c.l.b16 %v716
      %v1429 = vunpack.c.l.b16 %v717
      %v1430 = vunpack.c.l.b16 %v718
      %v1431 = vunpack.c.l.b16 %v719
      %v1432 = vunpack.c.l.b16 %v720
      %v1433 = vunpack.c.l.b16 %v721
      %v1434 = vunpack.c.l.b16 %v722
      %v1435 = vunpack.c.l.b16 %v723
      %v1436 = vunpack.c.l.b16 %v724
      %v1437 = vunpack.c.l.b16 %v725
      %v1438 = vunpack.c.l.b16 %v726
      %v1439 = vunpack.c.l.b16 %v727
      %v1440 = vunpack.c.l.b16 %v728
      %v1441 = vunpack.c.l.b16 %v729
      %v1442 = vunpack.c.l.b16 %v730
      %v1443 = vunpack.c.l.b16 %v731
      %v1444 = vunpack.c.l.b16 %v732
      %v1445 = vunpack.c.l.b16 %v733
      %v1446 = vunpack.c.l.b16 %v734
      %v1447 = vunpack.c.l.b16 %v735
      %v1448 = vunpack.c.l.b16 %v736
      %v1449 = vunpack.c.l.b16 %v737
      %v1450 = vunpack.c.l.b16 %v738
      %v1451 = vunpack.c.l.b16 %v739
      %v1452 = vunpack.c.l.b16 %v740
      %v1453 = vunpack.c.l.b16 %v741
      %v1454 = vunpack.c.l.b16 %v742
      %v1455 = vunpack.c.l.b16 %v743
      %v1456 = vunpack.c.l.b16 %v744
      %v1457 = vunpack.c.l.b16 %v745
      %v1458 = vunpack.c.l.b16 %v746
      %v1459 = vunpack.c.l.b16 %v747
      %v1460 = vunpack.c.l.b16 %v748
      %v1461 = vunpack.c.l.b16 %v749
      %v1462 = vunpack.c.l.b16 %v750
      %v1463 = vunpack.c.l.b16 %v751
      %v1464 = vunpack.c.l.b16 %v752
      %v1465 = vunpack.c.l.b16 %v753
      %v1466 = vunpack.c.l.b16 %v754
      %v1467 = vunpack.c.l.b16 %v755
      %v1468 = vunpack.c.l.b16 %v756
      %v1469 = vunpack.c.l.b16 %v757
      %v1470 = vunpack.c.l.b16 %v758
      %v1471 = vunpack.c.l.b16 %v759
      %v1472 = vunpack.c.l.b16 %v760
      %v1473 = vunpack.c.l.b16 %v761
      %v1474 = vunpack.c.l.b16 %v762
      %v1475 = vunpack.c.l.b16 %v763
      %v1476 = vunpack.c.l.b16 %v764
      %v1477 = vunpack.c.l.b16 %v765
      %v1478 = vunpack.c.l.b16 %v766
      %v1479 = vunpack.c.l.b16 %v767
      %v1480 = vunpack.c.l.b16 %v768
      %v1481 = vunpack.c.l.b16 %v769
      %v1482 = vunpack.c.l.b16 %v770
      %v1483 = vunpack.c.l.b16 %v771
      %v1484 = vunpack.c.l.b16 %v772
      %v1485 = vunpack.c.l.b16 %v773
      %v1486 = vunpack.c.l.b16 %v774
      %v1487 = vunpack.c.l.b16 %v775
      %v1488 = vunpack.c.l.b16 %v776
      %v1489 = vunpack.c.l.b16 %v777
      %v1490 = vunpack.c.l.b16 %v778
      %v1491 = vunpack.c.l.b16 %v779
      %v1492 = vunpack.c.l.b16 %v780
      %v1493 = vunpack.c.l.b16 %v781
      %v1494 = vunpack.c.l.b16 %v782
      %v1495 = vunpack.c.l.b16 %v783
      %v1496 = vunpack.c.l.b16 %v784
      %v1497 = vunpack.c.l.b16 %v785
      %v1498 = vunpack.c.l.b16 %v786
      %v1499 = vunpack.c.l.b16 %v787
      %v1500 = vunpack.c.l.b16 %v788
      %v1501 = vunpack.c.l.b16 %v789
      %v1502 = vunpack.c.l.b16 %v790
      %v1503 = vunpack.c.l.b16 %v791
      %v1504 = vunpack.c.l.b16 %v792
      %v1505 = vunpack.c.l.b16 %v793
      %v1506 = vunpack.c.l.b16 %v794
      %v1507 = vunpack.c.l.b16 %v795
      %v1508 = vunpack.c.l.b16 %v796
      %v1509 = vunpack.c.l.b16 %v797
      %v1510 = vunpack.c.l.b16 %v798
      %v1511 = vunpack.c.l.b16 %v799
      %v1512 = vunpack.c.l.b16 %v800
      %v1513 = vunpack.c.l.b16 %v801
      %v1514 = vunpack.c.l.b16 %v802
      %v1515 = vunpack.c.l.b16 %v803
      %v1516 = vunpack.c.l.b16 %v804
      %v1517 = vunpack.c.l.b16 %v805
      %v1518 = vunpack.c.l.b16 %v806
      %v1519 = vunpack.c.l.b16 %v807
      %v1520 = vunpack.c.l.b16 %v808
      %v1521 = vunpack.c.l.b16 %v809
      %v1522 = vunpack.c.l.b16 %v810
      %v1523 = vunpack.c.l.b16 %v811
      %v1524 = vunpack.c.l.b16 %v812
      %v1525 = vunpack.c.l.b16 %v813
      %v1526 = vunpack.c.l.b16 %v814
      %v1527 = vunpack.c.l.b16 %v815
      %v1528 = vunpack.c.l.b16 %v816
      %v1529 = vunpack.c.l.b16 %v817
      %v1530 = vunpack.c.l.b16 %v818
      %v1531 = vunpack.c.l.b16 %v819
      %v1532 = vunpack.c.l.b16 %v820
      %v1533 = vunpack.c.l.b16 %v821
      %v1534 = vunpack.c.l.b16 %v822
      %v1535 = vunpack.c.l.b16 %v823
      %v1536 = vunpack.c.l.b16 %v824
      %v1537 = vunpack.c.l.b16 %v825
      %v1538 = vunpack.c.l.b16 %v826
      %v1539 = vunpack.c.l.b16 %v827
      %v1540 = vunpack.c.l.b16 %v828
      %v1541 = vunpack.c.l.b16 %v829
      %v1542 = vunpack.c.l.b16 %v830
      %v1543 = vunpack.c.l.b16 %v831
      %v1544 = vunpack.c.l.b16 %v832
      %v1545 = vunpack.c.l.b16 %v833
      %v1546 = vunpack.c.l.b16 %v834
      %v1547 = vunpack.c.l.b16 %v835
      %v1548 = vunpack.c.l.b16 %v836
      %v1549 = vunpack.c.l.b16 %v837
      %v1550 = vunpack.c.l.b16 %v838
      %v1551 = vunpack.c.l.b16 %v839
      %v1552 = vunpack.c.l.b16 %v840
      %v1553 = vunpack.c.l.b16 %v841
      %v1554 = vunpack.c.l.b16 %v842
      %v1555 = vunpack.c.l.b16 %v843
      %v1556 = vunpack.c.l.b16 %v844
      %v1557 = vunpack.c.l.b16 %v845
      %v1558 = vunpack.c.l.b16 %v846
      %v1559 = vunpack.c.l.b16 %v847
      %v1560 = vunpack.c.l.b16 %v848
      %v1561 = vunpack.c.l.b16 %v849
      %v1562 = vunpack.c.l.b16 %v850
      %v1563 = vunpack.c.l.b16 %v851
      %v1564 = vunpack.c.l.b16 %v852
      %v1565 = vunpack.c.l.b16 %v853
      %v1566 = vunpack.c.l.b16 %v854
      %v1567 = vunpack.c.l.b16 %v855
      %v1568 = vunpack.c.l.b16 %v856
      %v1569 = vunpack.c.l.b16 %v857
      %v1570 = vunpack.c.l.b16 %v858
      %v1571 = vunpack.c.l.b16 %v859
      %v1572 = vunpack.c.l.b16 %v860
      %v1573 = vunpack.c.l.b16 %v861
      %v1574 = vunpack.c.l.b16 %v862
      %v1575 = vunpack.c.l.b16 %v863
      %v1576 = vunpack.c.l.b16 %v864
      %v1577 = vunpack.c.l.b16 %v865
      %v1578 = vunpack.c.l.b16 %v866
      %v1579 = vunpack.c.l.b16 %v867
      %v1580 = vunpack.c.l.b16 %v868
      %v1581 = vunpack.c.l.b16 %v869
      %v1582 = vunpack.c.l.b16 %v870
      %v1583 = vunpack.c.l.b16 %v871
      %v1584 = vunpack.c.l.b16 %v872
      %v1585 = vunpack.c.l.b16 %v873
      %v1586 = vunpack.c.l.b16 %v874
      %v1587 = vunpack.c.l.b16 %v875
      %v1588 = vunpack.c.l.b16 %v876
      %v1589 = vunpack.c.l.b16 %v877
      %v1590 = vunpack.c.l.b16 %v878
      %v1591 = vunpack.c.l.b16 %v879
      %v1592 = vunpack.c.l.b16 %v880
      %v1593 = vunpack.c.l.b16 %v881
      %v1594 = vunpack.c.l.b16 %v882
      %v1595 = vunpack.c.l.b16 %v883
      %v1596 = vunpack.c.l.b16 %v884
      %v1597 = vunpack.c.l.b16 %v885
      %v1598 = vunpack.c.l.b16 %v886
      %v1599 = vunpack.c.l.b16 %v887
      %v1600 = vunpack.c.l.b16 %v888
      %v1601 = vunpack.c.l.b16 %v889
      %v1602 = vunpack.c.l.b16 %v890
      %v1603 = vunpack.c.l.b16 %v891
      %v1604 = vunpack.c.l.b16 %v892
      %v1605 = vunpack.c.l.b16 %v893
      %v1606 = vunpack.c.l.b16 %v894
      %v1607 = vunpack.c.l.b16 %v895
      %v1608 = vunpack.c.l.b16 %v896
      %v1609 = vunpack.c.l.b16 %v897
      %v1610 = vunpack.c.l.b16 %v898
      %v1611 = vunpack.c.l.b16 %v899
      %v1612 = vunpack.c.l.b16 %v900
      %v1613 = vunpack.c.l.b16 %v901
      %v1614 = vunpack.c.l.b16 %v902
      %v1615 = vunpack.c.l.b16 %v903
      %v1616 = vunpack.c.l.b16 %v904
      %v1617 = vunpack.c.l.b16 %v905
      %v1618 = vunpack.c.l.b16 %v906
      %v1619 = vunpack.c.l.b16 %v907
      %v1620 = vunpack.c.l.b16 %v908
      %v1621 = vunpack.c.l.b16 %v909
      %v1622 = vunpack.c.l.b16 %v910
      %v1623 = vunpack.c.l.b16 %v911
      %v1624 = vunpack.c.l.b16 %v912
      %v1625 = vunpack.c.l.b16 %v913
      %v1626 = vunpack.c.l.b16 %v914
      %v1627 = vunpack.c.l.b16 %v915
      %v1628 = vunpack.c.l.b16 %v916
      %v1629 = vunpack.c.l.b16 %v917
      %v1630 = vunpack.c.l.b16 %v918
      %v1631 = vunpack.c.l.b16 %v919
      %v1632 = vunpack.c.l.b16 %v920
      %v1633 = vunpack.c.l.b16 %v921
      %v1634 = vunpack.c.l.b16 %v922
      %v1635 = vunpack.c.l.b16 %v923
      %v1636 = vunpack.c.l.b16 %v924
      %v1637 = vunpack.c.l.b16 %v925
      %v1638 = vunpack.c.l.b16 %v926
      %v1639 = vunpack.c.l.b16 %v927
      %v1640 = vunpack.c.l.b16 %v928
      %v1641 = vunpack.c.l.b16 %v929
      %v1642 = vunpack.c.l.b16 %v930
      %v1643 = vunpack.c.l.b16 %v931
      %v1644 = vpack.c.b16 %v1429, %v1428
      %v1645 = vpack.c.b16 %v1431, %v1430
      %v1646 = vpack.c.b16 %v1433, %v1432
      %v1647 = vpack.c.b16 %v1435, %v1434
      %v1648 = vpack.c.b16 %v1437, %v1436
      %v1649 = vpack.c.b16 %v1439, %v1438
      %v1650 = vpack.c.b16 %v1441, %v1440
      %v1651 = vpack.c.b16 %v1443, %v1442
      %v1652 = vpack.c.b16 %v1445, %v1444
      %v1653 = vpack.c.b16 %v1447, %v1446
      %v1654 = vpack.c.b16 %v1449, %v1448
      %v1655 = vpack.c.b16 %v1451, %v1450
      %v1656 = vpack.c.b16 %v1453, %v1452
      %v1657 = vpack.c.b16 %v1455, %v1454
      %v1658 = vpack.c.b16 %v1457, %v1456
      %v1659 = vpack.c.b16 %v1459, %v1458
      %v1660 = vpack.c.b16 %v1461, %v1460
      %v1661 = vpack.c.b16 %v1463, %v1462
      %v1662 = vpack.c.b16 %v1465, %v1464
      %v1663 = vpack.c.b16 %v1467, %v1466
      %v1664 = vpack.c.b16 %v1469, %v1468
      %v1665 = vpack.c.b16 %v1471, %v1470
      %v1666 = vpack.c.b16 %v1473, %v1472
      %v1667 = vpack.c.b16 %v1475, %v1474
      %v1668 = vpack.c.b16 %v1477, %v1476
      %v1669 = vpack.c.b16 %v1479, %v1478
      %v1670 = vpack.c.b16 %v1481, %v1480
      %v1671 = vpack.c.b16 %v1483, %v1482
      %v1672 = vpack.c.b16 %v1485, %v1484
      %v1673 = vpack.c.b16 %v1487, %v1486
      %v1674 = vpack.c.b16 %v1489, %v1488
      %v1675 = vpack.c.b16 %v1491, %v1490
      %v1676 = vpack.c.b16 %v1493, %v1492
      %v1677 = vpack.c.b16 %v1495, %v1494
      %v1678 = vpack.c.b16 %v1497, %v1496
      %v1679 = vpack.c.b16 %v1499, %v1498
      %v1680 = vpack.c.b16 %v1501, %v1500
      %v1681 = vpack.c.b16 %v1503, %v1502
      %v1682 = vpack.c.b16 %v1505, %v1504
      %v1683 = vpack.c.b16 %v1507, %v1506
      %v1684 = vpack.c.b16 %v1509, %v1508
      %v1685 = vpack.c.b16 %v1511, %v1510
      %v1686 = vpack.c.b16 %v1513, %v1512
      %v1687 = vpack.c.b16 %v1515, %v1514
      %v1688 = vpack.c.b16 %v1517, %v1516
      %v1689 = vpack.c.b16 %v1519, %v1518
      %v1690 = vpack.c.b16 %v1521, %v1520
      %v1691 = vpack.c.b16 %v1523, %v1522
      %v1692 = vpack.c.b16 %v1525, %v1524
      %v1693 = vpack.c.b16 %v1527, %v1526
      %v1694 = vpack.c.b16 %v1529, %v1528
      %v1695 = vpack.c.b16 %v1531, %v1530
      %v1696 = vpack.c.b16 %v1533, %v1532
      %v1697 = vpack.c.b16 %v1535, %v1534
      %v1698 = vpack.c.b16 %v1537, %v1536
      %v1699 = vpack.c.b16 %v1539, %v1538
      %v1700 = vpack.c.b16 %v1541, %v1540
      %v1701 = vpack.c.b16 %v1543, %v1542
      %v1702 = vpack.c.b16 %v1545, %v1544
      %v1703 = vpack.c.b16 %v1547, %v1546
      %v1704 = vpack.c.b16 %v1549, %v1548
      %v1705 = vpack.c.b16 %v1551, %v1550
      %v1706 = vpack.c.b16 %v1553, %v1552
      %v1707 = vpack.c.b16 %v1555, %v1554
      %v1708 = vpack.c.b16 %v1557, %v1556
      %v1709 = vpack.c.b16 %v1559, %v1558
      %v1710 = vpack.c.b16 %v1561, %v1560
      %v1711 = vpack.c.b16 %v1563, %v1562
      %v1712 = vpack.c.b16 %v1565, %v1564
      %v1713 = vpack.c.b16 %v1567, %v1566
      %v1714 = vpack.c.b16 %v1569, %v1568
      %v1715 = vpack.c.b16 %v1571, %v1570
      %v1716 = vpack.c.b16 %v1573, %v1572
      %v1717 = vpack.c.b16 %v1575, %v1574
      %v1718 = vpack.c.b16 %v1577, %v1576
      %v1719 = vpack.c.b16 %v1579, %v1578
      %v1720 = vpack.c.b16 %v1581, %v1580
      %v1721 = vpack.c.b16 %v1583, %v1582
      %v1722 = vpack.c.b16 %v1585, %v1584
      %v1723 = vpack.c.b16 %v1587, %v1586
      %v1724 = vpack.c.b16 %v1589, %v1588
      %v1725 = vpack.c.b16 %v1591, %v1590
      %v1726 = vpack.c.b16 %v1593, %v1592
      %v1727 = vpack.c.b16 %v1595, %v1594
      %v1728 = vpack.c.b16 %v1597, %v1596
      %v1729 = vpack.c.b16 %v1599, %v1598
      %v1730 = vpack.c.b16 %v1601, %v1600
      %v1731 = vpack.c.b16 %v1603, %v1602
      %v1732 = vpack.c.b16 %v1605, %v1604
      %v1733 = vpack.c.b16 %v1607, %v1606
      %v1734 = vpack.c.b16 %v1609, %v1608
      %v1735 = vpack.c.b16 %v1611, %v1610
      %v1736 = vpack.c.b16 %v1613, %v1612
      %v1737 = vpack.c.b16 %v1615, %v1614
      %v1738 = vpack.c.b16 %v1617, %v1616
      %v1739 = vpack.c.b16 %v1619, %v1618
      %v1740 = vpack.c.b16 %v1621, %v1620
      %v1741 = vpack.c.b16 %v1623, %v1622
      %v1742 = vpack.c.b16 %v1625, %v1624
      %v1743 = vpack.c.b16 %v1627, %v1626
      %v1744 = vpack.c.b16 %v1629, %v1628
      %v1745 = vpack.c.b16 %v1631, %v1630
      %v1746 = vpack.c.b16 %v1633, %v1632
      %v1747 = vpack.c.b16 %v1635, %v1634
      %v1748 = vpack.c.b16 %v1637, %v1636
      %v1749 = vpack.c.b16 %v1639, %v1638
      %v1750 = vpack.c.b16 %v1641, %v1640
      %v1751 = vpack.c.b16 %v1643, %v1642
      %vm1860 = vcmask 523264
      %v1862 = vsel %vm1860, %v1117, 0
      %v1865 = vsel %vm1860, %v1131, 0
      %v1868 = vsel %vm1860, %v1145, 0
      %v1871 = vsel %vm1860, %v1159, 0
      %1873 = vmatpush.bf16.msra.mxu0 %v1651
      %1874 = vmatpush.bf16.msra.mxu0 %v1650
      %1875 = vmatpush.bf16.msra.mxu0 %v1649
      %1876 = vmatpush.bf16.msra.mxu0 %v1648
      %1877 = vmatpush.bf16.msra.mxu0 %v1647
      %1878 = vmatpush.bf16.msra.mxu0 %v1646
      %1879 = vmatpush.bf16.msra.mxu0 %v1645
      %1880 = vmatpush.bf16.msra.mxu0 %v1644
      %1881 = vmatmul.bf16.gmra.mxu0 %v1104
      %v1882 = vpop.f32.mrf.mxu0
      %v1883 = vadd.f32 %v934, %v1882
      %v1884 = vpop.f32.mrf.mxu0
      %v1885 = vadd.f32 %v934, %v1884
      %1886 = vmatmul.bf16.gmra.mxu0 %v1118
      %v1887 = vpop.f32.mrf.mxu0
      %v1888 = vadd.f32 %v934, %v1887
      %v1889 = vpop.f32.mrf.mxu0
      %v1890 = vadd.f32 %v934, %v1889
      %1891 = vmatmul.bf16.gmra.mxu0 %v1132
      %v1892 = vpop.f32.mrf.mxu0
      %v1893 = vadd.f32 %v934, %v1892
      %v1894 = vpop.f32.mrf.mxu0
      %v1895 = vadd.f32 %v934, %v1894
      %1896 = vmatmul.bf16.gmra.mxu0 %v1146
      %v1897 = vpop.f32.mrf.mxu0
      %v1898 = vadd.f32 %v934, %v1897
      %v1899 = vpop.f32.mrf.mxu0
      %v1900 = vadd.f32 %v934, %v1899
      %1901 = vdwg.mxu0
      %1902 = vmatpush.bf16.msra.mxu0 %v1659
      %1903 = vmatpush.bf16.msra.mxu0 %v1658
      %1904 = vmatpush.bf16.msra.mxu0 %v1657
      %1905 = vmatpush.bf16.msra.mxu0 %v1656
      %1906 = vmatpush.bf16.msra.mxu0 %v1655
      %1907 = vmatpush.bf16.msra.mxu0 %v1654
      %1908 = vmatpush.bf16.msra.mxu0 %v1653
      %1909 = vmatpush.bf16.msra.mxu0 %v1652
      %1910 = vmatmul.bf16.gmra.mxu0 %v1105
      %v1911 = vpop.f32.mrf.mxu0
      %v1912 = vadd.f32 %v1883, %v1911
      %v1913 = vpop.f32.mrf.mxu0
      %v1914 = vadd.f32 %v1885, %v1913
      %1915 = vmatmul.bf16.gmra.mxu0 %v1119
      %v1916 = vpop.f32.mrf.mxu0
      %v1917 = vadd.f32 %v1888, %v1916
      %v1918 = vpop.f32.mrf.mxu0
      %v1919 = vadd.f32 %v1890, %v1918
      %1920 = vmatmul.bf16.gmra.mxu0 %v1133
      %v1921 = vpop.f32.mrf.mxu0
      %v1922 = vadd.f32 %v1893, %v1921
      %v1923 = vpop.f32.mrf.mxu0
      %v1924 = vadd.f32 %v1895, %v1923
      %1925 = vmatmul.bf16.gmra.mxu0 %v1147
      %v1926 = vpop.f32.mrf.mxu0
      %v1927 = vadd.f32 %v1898, %v1926
      %v1928 = vpop.f32.mrf.mxu0
      %v1929 = vadd.f32 %v1900, %v1928
      %1930 = vdwg.mxu0
      %1931 = vmatpush.bf16.msra.mxu0 %v1667
      %1932 = vmatpush.bf16.msra.mxu0 %v1666
      %1933 = vmatpush.bf16.msra.mxu0 %v1665
      %1934 = vmatpush.bf16.msra.mxu0 %v1664
      %1935 = vmatpush.bf16.msra.mxu0 %v1663
      %1936 = vmatpush.bf16.msra.mxu0 %v1662
      %1937 = vmatpush.bf16.msra.mxu0 %v1661
      %1938 = vmatpush.bf16.msra.mxu0 %v1660
      %1939 = vmatmul.bf16.gmra.mxu0 %v1106
      %v1940 = vpop.f32.mrf.mxu0
      %v1941 = vadd.f32 %v1912, %v1940
      %v1942 = vpop.f32.mrf.mxu0
      %v1943 = vadd.f32 %v1914, %v1942
      %1944 = vmatmul.bf16.gmra.mxu0 %v1120
      %v1945 = vpop.f32.mrf.mxu0
      %v1946 = vadd.f32 %v1917, %v1945
      %v1947 = vpop.f32.mrf.mxu0
      %v1948 = vadd.f32 %v1919, %v1947
      %1949 = vmatmul.bf16.gmra.mxu0 %v1134
      %v1950 = vpop.f32.mrf.mxu0
      %v1951 = vadd.f32 %v1922, %v1950
      %v1952 = vpop.f32.mrf.mxu0
      %v1953 = vadd.f32 %v1924, %v1952
      %1954 = vmatmul.bf16.gmra.mxu0 %v1148
      %v1955 = vpop.f32.mrf.mxu0
      %v1956 = vadd.f32 %v1927, %v1955
      %v1957 = vpop.f32.mrf.mxu0
      %v1958 = vadd.f32 %v1929, %v1957
      %1959 = vdwg.mxu0
      %1960 = vmatpush.bf16.msra.mxu0 %v1675
      %1961 = vmatpush.bf16.msra.mxu0 %v1674
      %1962 = vmatpush.bf16.msra.mxu0 %v1673
      %1963 = vmatpush.bf16.msra.mxu0 %v1672
      %1964 = vmatpush.bf16.msra.mxu0 %v1671
      %1965 = vmatpush.bf16.msra.mxu0 %v1670
      %1966 = vmatpush.bf16.msra.mxu0 %v1669
      %1967 = vmatpush.bf16.msra.mxu0 %v1668
      %1968 = vmatmul.bf16.gmra.mxu0 %v1107
      %v1969 = vpop.f32.mrf.mxu0
      %v1970 = vadd.f32 %v1941, %v1969
      %v1971 = vpop.f32.mrf.mxu0
      %v1972 = vadd.f32 %v1943, %v1971
      %1973 = vmatmul.bf16.gmra.mxu0 %v1121
      %v1974 = vpop.f32.mrf.mxu0
      %v1975 = vadd.f32 %v1946, %v1974
      %v1976 = vpop.f32.mrf.mxu0
      %v1977 = vadd.f32 %v1948, %v1976
      %1978 = vmatmul.bf16.gmra.mxu0 %v1135
      %v1979 = vpop.f32.mrf.mxu0
      %v1980 = vadd.f32 %v1951, %v1979
      %v1981 = vpop.f32.mrf.mxu0
      %v1982 = vadd.f32 %v1953, %v1981
      %1983 = vmatmul.bf16.gmra.mxu0 %v1149
      %v1984 = vpop.f32.mrf.mxu0
      %v1985 = vadd.f32 %v1956, %v1984
      %v1986 = vpop.f32.mrf.mxu0
      %v1987 = vadd.f32 %v1958, %v1986
      %1988 = vdwg.mxu0
      %1989 = vmatpush.bf16.msra.mxu0 %v1683
      %1990 = vmatpush.bf16.msra.mxu0 %v1682
      %1991 = vmatpush.bf16.msra.mxu0 %v1681
      %1992 = vmatpush.bf16.msra.mxu0 %v1680
      %1993 = vmatpush.bf16.msra.mxu0 %v1679
      %1994 = vmatpush.bf16.msra.mxu0 %v1678
      %1995 = vmatpush.bf16.msra.mxu0 %v1677
      %1996 = vmatpush.bf16.msra.mxu0 %v1676
      %1997 = vmatmul.bf16.gmra.mxu0 %v1108
      %v1998 = vpop.f32.mrf.mxu0
      %v1999 = vadd.f32 %v1970, %v1998
      %v2000 = vpop.f32.mrf.mxu0
      %v2001 = vadd.f32 %v1972, %v2000
      %2002 = vmatmul.bf16.gmra.mxu0 %v1122
      %v2003 = vpop.f32.mrf.mxu0
      %v2004 = vadd.f32 %v1975, %v2003
      %v2005 = vpop.f32.mrf.mxu0
      %v2006 = vadd.f32 %v1977, %v2005
      %2007 = vmatmul.bf16.gmra.mxu0 %v1136
      %v2008 = vpop.f32.mrf.mxu0
      %v2009 = vadd.f32 %v1980, %v2008
      %v2010 = vpop.f32.mrf.mxu0
      %v2011 = vadd.f32 %v1982, %v2010
      %2012 = vmatmul.bf16.gmra.mxu0 %v1150
      %v2013 = vpop.f32.mrf.mxu0
      %v2014 = vadd.f32 %v1985, %v2013
      %v2015 = vpop.f32.mrf.mxu0
      %v2016 = vadd.f32 %v1987, %v2015
      %2017 = vdwg.mxu0
      %2018 = vmatpush.bf16.msra.mxu0 %v1691
      %2019 = vmatpush.bf16.msra.mxu0 %v1690
      %2020 = vmatpush.bf16.msra.mxu0 %v1689
      %2021 = vmatpush.bf16.msra.mxu0 %v1688
      %2022 = vmatpush.bf16.msra.mxu0 %v1687
      %2023 = vmatpush.bf16.msra.mxu0 %v1686
      %2024 = vmatpush.bf16.msra.mxu0 %v1685
      %2025 = vmatpush.bf16.msra.mxu0 %v1684
      %2026 = vmatmul.bf16.gmra.mxu0 %v1109
      %v2027 = vpop.f32.mrf.mxu0
      %v2028 = vadd.f32 %v1999, %v2027
      %v2029 = vpop.f32.mrf.mxu0
      %v2030 = vadd.f32 %v2001, %v2029
      %2031 = vmatmul.bf16.gmra.mxu0 %v1123
      %v2032 = vpop.f32.mrf.mxu0
      %v2033 = vadd.f32 %v2004, %v2032
      %v2034 = vpop.f32.mrf.mxu0
      %v2035 = vadd.f32 %v2006, %v2034
      %2036 = vmatmul.bf16.gmra.mxu0 %v1137
      %v2037 = vpop.f32.mrf.mxu0
      %v2038 = vadd.f32 %v2009, %v2037
      %v2039 = vpop.f32.mrf.mxu0
      %v2040 = vadd.f32 %v2011, %v2039
      %2041 = vmatmul.bf16.gmra.mxu0 %v1151
      %v2042 = vpop.f32.mrf.mxu0
      %v2043 = vadd.f32 %v2014, %v2042
      %v2044 = vpop.f32.mrf.mxu0
      %v2045 = vadd.f32 %v2016, %v2044
      %2046 = vdwg.mxu0
      %2047 = vmatpush.bf16.msra.mxu0 %v1699
      %2048 = vmatpush.bf16.msra.mxu0 %v1698
      %2049 = vmatpush.bf16.msra.mxu0 %v1697
      %2050 = vmatpush.bf16.msra.mxu0 %v1696
      %2051 = vmatpush.bf16.msra.mxu0 %v1695
      %2052 = vmatpush.bf16.msra.mxu0 %v1694
      %2053 = vmatpush.bf16.msra.mxu0 %v1693
      %2054 = vmatpush.bf16.msra.mxu0 %v1692
      %2055 = vmatmul.bf16.gmra.mxu0 %v1110
      %v2056 = vpop.f32.mrf.mxu0
      %v2057 = vadd.f32 %v2028, %v2056
      %v2058 = vpop.f32.mrf.mxu0
      %v2059 = vadd.f32 %v2030, %v2058
      %2060 = vmatmul.bf16.gmra.mxu0 %v1124
      %v2061 = vpop.f32.mrf.mxu0
      %v2062 = vadd.f32 %v2033, %v2061
      %v2063 = vpop.f32.mrf.mxu0
      %v2064 = vadd.f32 %v2035, %v2063
      %2065 = vmatmul.bf16.gmra.mxu0 %v1138
      %v2066 = vpop.f32.mrf.mxu0
      %v2067 = vadd.f32 %v2038, %v2066
      %v2068 = vpop.f32.mrf.mxu0
      %v2069 = vadd.f32 %v2040, %v2068
      %2070 = vmatmul.bf16.gmra.mxu0 %v1152
      %v2071 = vpop.f32.mrf.mxu0
      %v2072 = vadd.f32 %v2043, %v2071
      %v2073 = vpop.f32.mrf.mxu0
      %v2074 = vadd.f32 %v2045, %v2073
      %2075 = vdwg.mxu0
      %2076 = vmatpush.bf16.msra.mxu0 %v1707
      %2077 = vmatpush.bf16.msra.mxu0 %v1706
      %2078 = vmatpush.bf16.msra.mxu0 %v1705
      %2079 = vmatpush.bf16.msra.mxu0 %v1704
      %2080 = vmatpush.bf16.msra.mxu0 %v1703
      %2081 = vmatpush.bf16.msra.mxu0 %v1702
      %2082 = vmatpush.bf16.msra.mxu0 %v1701
      %2083 = vmatpush.bf16.msra.mxu0 %v1700
      %2084 = vmatmul.bf16.gmra.mxu0 %v1111
      %v2085 = vpop.f32.mrf.mxu0
      %v2086 = vadd.f32 %v2057, %v2085
      %v2087 = vpop.f32.mrf.mxu0
      %v2088 = vadd.f32 %v2059, %v2087
      %2089 = vmatmul.bf16.gmra.mxu0 %v1125
      %v2090 = vpop.f32.mrf.mxu0
      %v2091 = vadd.f32 %v2062, %v2090
      %v2092 = vpop.f32.mrf.mxu0
      %v2093 = vadd.f32 %v2064, %v2092
      %2094 = vmatmul.bf16.gmra.mxu0 %v1139
      %v2095 = vpop.f32.mrf.mxu0
      %v2096 = vadd.f32 %v2067, %v2095
      %v2097 = vpop.f32.mrf.mxu0
      %v2098 = vadd.f32 %v2069, %v2097
      %2099 = vmatmul.bf16.gmra.mxu0 %v1153
      %v2100 = vpop.f32.mrf.mxu0
      %v2101 = vadd.f32 %v2072, %v2100
      %v2102 = vpop.f32.mrf.mxu0
      %v2103 = vadd.f32 %v2074, %v2102
      %2104 = vdwg.mxu0
      %2105 = vmatpush.bf16.msra.mxu0 %v1715
      %2106 = vmatpush.bf16.msra.mxu0 %v1714
      %2107 = vmatpush.bf16.msra.mxu0 %v1713
      %2108 = vmatpush.bf16.msra.mxu0 %v1712
      %2109 = vmatpush.bf16.msra.mxu0 %v1711
      %2110 = vmatpush.bf16.msra.mxu0 %v1710
      %2111 = vmatpush.bf16.msra.mxu0 %v1709
      %2112 = vmatpush.bf16.msra.mxu0 %v1708
      %2113 = vmatmul.bf16.gmra.mxu0 %v1112
      %v2114 = vpop.f32.mrf.mxu0
      %v2115 = vadd.f32 %v2086, %v2114
      %v2116 = vpop.f32.mrf.mxu0
      %v2117 = vadd.f32 %v2088, %v2116
      %2118 = vmatmul.bf16.gmra.mxu0 %v1126
      %v2119 = vpop.f32.mrf.mxu0
      %v2120 = vadd.f32 %v2091, %v2119
      %v2121 = vpop.f32.mrf.mxu0
      %v2122 = vadd.f32 %v2093, %v2121
      %2123 = vmatmul.bf16.gmra.mxu0 %v1140
      %v2124 = vpop.f32.mrf.mxu0
      %v2125 = vadd.f32 %v2096, %v2124
      %v2126 = vpop.f32.mrf.mxu0
      %v2127 = vadd.f32 %v2098, %v2126
      %2128 = vmatmul.bf16.gmra.mxu0 %v1154
      %v2129 = vpop.f32.mrf.mxu0
      %v2130 = vadd.f32 %v2101, %v2129
      %v2131 = vpop.f32.mrf.mxu0
      %v2132 = vadd.f32 %v2103, %v2131
      %2133 = vdwg.mxu0
      %2134 = vmatpush.bf16.msra.mxu0 %v1723
      %2135 = vmatpush.bf16.msra.mxu0 %v1722
      %2136 = vmatpush.bf16.msra.mxu0 %v1721
      %2137 = vmatpush.bf16.msra.mxu0 %v1720
      %2138 = vmatpush.bf16.msra.mxu0 %v1719
      %2139 = vmatpush.bf16.msra.mxu0 %v1718
      %2140 = vmatpush.bf16.msra.mxu0 %v1717
      %2141 = vmatpush.bf16.msra.mxu0 %v1716
      %2142 = vmatmul.bf16.gmra.mxu0 %v1113
      %v2143 = vpop.f32.mrf.mxu0
      %v2144 = vadd.f32 %v2115, %v2143
      %v2145 = vpop.f32.mrf.mxu0
      %v2146 = vadd.f32 %v2117, %v2145
      %2147 = vmatmul.bf16.gmra.mxu0 %v1127
      %v2148 = vpop.f32.mrf.mxu0
      %v2149 = vadd.f32 %v2120, %v2148
      %v2150 = vpop.f32.mrf.mxu0
      %v2151 = vadd.f32 %v2122, %v2150
      %2152 = vmatmul.bf16.gmra.mxu0 %v1141
      %v2153 = vpop.f32.mrf.mxu0
      %v2154 = vadd.f32 %v2125, %v2153
      %v2155 = vpop.f32.mrf.mxu0
      %v2156 = vadd.f32 %v2127, %v2155
      %2157 = vmatmul.bf16.gmra.mxu0 %v1155
      %v2158 = vpop.f32.mrf.mxu0
      %v2159 = vadd.f32 %v2130, %v2158
      %v2160 = vpop.f32.mrf.mxu0
      %v2161 = vadd.f32 %v2132, %v2160
      %2162 = vdwg.mxu0
      %2163 = vmatpush.bf16.msra.mxu0 %v1731
      %2164 = vmatpush.bf16.msra.mxu0 %v1730
      %2165 = vmatpush.bf16.msra.mxu0 %v1729
      %2166 = vmatpush.bf16.msra.mxu0 %v1728
      %2167 = vmatpush.bf16.msra.mxu0 %v1727
      %2168 = vmatpush.bf16.msra.mxu0 %v1726
      %2169 = vmatpush.bf16.msra.mxu0 %v1725
      %2170 = vmatpush.bf16.msra.mxu0 %v1724
      %2171 = vmatmul.bf16.gmra.mxu0 %v1114
      %v2172 = vpop.f32.mrf.mxu0
      %v2173 = vadd.f32 %v2144, %v2172
      %v2174 = vpop.f32.mrf.mxu0
      %v2175 = vadd.f32 %v2146, %v2174
      %2176 = vmatmul.bf16.gmra.mxu0 %v1128
      %v2177 = vpop.f32.mrf.mxu0
      %v2178 = vadd.f32 %v2149, %v2177
      %v2179 = vpop.f32.mrf.mxu0
      %v2180 = vadd.f32 %v2151, %v2179
      %2181 = vmatmul.bf16.gmra.mxu0 %v1142
      %v2182 = vpop.f32.mrf.mxu0
      %v2183 = vadd.f32 %v2154, %v2182
      %v2184 = vpop.f32.mrf.mxu0
      %v2185 = vadd.f32 %v2156, %v2184
      %2186 = vmatmul.bf16.gmra.mxu0 %v1156
      %v2187 = vpop.f32.mrf.mxu0
      %v2188 = vadd.f32 %v2159, %v2187
      %v2189 = vpop.f32.mrf.mxu0
      %v2190 = vadd.f32 %v2161, %v2189
      %2191 = vdwg.mxu0
      %2192 = vmatpush.bf16.msra.mxu0 %v1739
      %2193 = vmatpush.bf16.msra.mxu0 %v1738
      %2194 = vmatpush.bf16.msra.mxu0 %v1737
      %2195 = vmatpush.bf16.msra.mxu0 %v1736
      %2196 = vmatpush.bf16.msra.mxu0 %v1735
      %2197 = vmatpush.bf16.msra.mxu0 %v1734
      %2198 = vmatpush.bf16.msra.mxu0 %v1733
      %2199 = vmatpush.bf16.msra.mxu0 %v1732
      %2200 = vmatmul.bf16.gmra.mxu0 %v1115
      %v2201 = vpop.f32.mrf.mxu0
      %v2202 = vadd.f32 %v2173, %v2201
      %v2203 = vpop.f32.mrf.mxu0
      %v2204 = vadd.f32 %v2175, %v2203
      %2205 = vmatmul.bf16.gmra.mxu0 %v1129
      %v2206 = vpop.f32.mrf.mxu0
      %v2207 = vadd.f32 %v2178, %v2206
      %v2208 = vpop.f32.mrf.mxu0
      %v2209 = vadd.f32 %v2180, %v2208
      %2210 = vmatmul.bf16.gmra.mxu0 %v1143
      %v2211 = vpop.f32.mrf.mxu0
      %v2212 = vadd.f32 %v2183, %v2211
      %v2213 = vpop.f32.mrf.mxu0
      %v2214 = vadd.f32 %v2185, %v2213
      %2215 = vmatmul.bf16.gmra.mxu0 %v1157
      %v2216 = vpop.f32.mrf.mxu0
      %v2217 = vadd.f32 %v2188, %v2216
      %v2218 = vpop.f32.mrf.mxu0
      %v2219 = vadd.f32 %v2190, %v2218
      %2220 = vdwg.mxu0
      %2221 = vmatpush.bf16.msra.mxu0 %v1747
      %2222 = vmatpush.bf16.msra.mxu0 %v1746
      %2223 = vmatpush.bf16.msra.mxu0 %v1745
      %2224 = vmatpush.bf16.msra.mxu0 %v1744
      %2225 = vmatpush.bf16.msra.mxu0 %v1743
      %2226 = vmatpush.bf16.msra.mxu0 %v1742
      %2227 = vmatpush.bf16.msra.mxu0 %v1741
      %2228 = vmatpush.bf16.msra.mxu0 %v1740
      %2229 = vmatmul.bf16.gmra.mxu0 %v1116
      %v2230 = vpop.f32.mrf.mxu0
      %v2231 = vadd.f32 %v2202, %v2230
      %v2232 = vpop.f32.mrf.mxu0
      %v2233 = vadd.f32 %v2204, %v2232
      %2234 = vmatmul.bf16.gmra.mxu0 %v1130
      %v2235 = vpop.f32.mrf.mxu0
      %v2236 = vadd.f32 %v2207, %v2235
      %v2237 = vpop.f32.mrf.mxu0
      %v2238 = vadd.f32 %v2209, %v2237
      %2239 = vmatmul.bf16.gmra.mxu0 %v1144
      %v2240 = vpop.f32.mrf.mxu0
      %v2241 = vadd.f32 %v2212, %v2240
      %v2242 = vpop.f32.mrf.mxu0
      %v2243 = vadd.f32 %v2214, %v2242
      %2244 = vmatmul.bf16.gmra.mxu0 %v1158
      %v2245 = vpop.f32.mrf.mxu0
      %v2246 = vadd.f32 %v2217, %v2245
      %v2247 = vpop.f32.mrf.mxu0
      %v2248 = vadd.f32 %v2219, %v2247
      %2249 = vdwg.mxu0
      %2250 = vmatpush.bf16.msra.mxu0 0
      %2251 = vmatpush.bf16.msra.mxu0 0
      %2252 = vmatpush.bf16.msra.mxu0 0
      %2253 = vmatpush.bf16.msra.mxu0 0
      %2254 = vmatpush.bf16.msra.mxu0 %v1751
      %2255 = vmatpush.bf16.msra.mxu0 %v1750
      %2256 = vmatpush.bf16.msra.mxu0 %v1749
      %2257 = vmatpush.bf16.msra.mxu0 %v1748
      %2258 = vmatmul.bf16.gmra.mxu0 %v1862
      %v2259 = vpop.f32.mrf.mxu0
      %v2260 = vadd.f32 %v2231, %v2259
      %v2261 = vpop.f32.mrf.mxu0
      %v2262 = vadd.f32 %v2233, %v2261
      %2263 = vmatmul.bf16.gmra.mxu0 %v1865
      %v2264 = vpop.f32.mrf.mxu0
      %v2265 = vadd.f32 %v2236, %v2264
      %v2266 = vpop.f32.mrf.mxu0
      %v2267 = vadd.f32 %v2238, %v2266
      %2268 = vmatmul.bf16.gmra.mxu0 %v1868
      %v2269 = vpop.f32.mrf.mxu0
      %v2270 = vadd.f32 %v2241, %v2269
      %v2271 = vpop.f32.mrf.mxu0
      %v2272 = vadd.f32 %v2243, %v2271
      %2273 = vmatmul.bf16.gmra.mxu0 %v1871
      %v2274 = vpop.f32.mrf.mxu0
      %v2275 = vadd.f32 %v2246, %v2274
      %v2276 = vpop.f32.mrf.mxu0
      %v2277 = vadd.f32 %v2248, %v2276
      %2278 = vdwg.mxu0
      %v2279 = vmax.f32 %v2260, 0.0
      %v2280 = vmax.f32 %v2262, 0.0
      %v2281 = vmax.f32 %v2265, 0.0
      %v2282 = vmax.f32 %v2267, 0.0
      %v2283 = vmax.f32 %v2270, 0.0
      %v2284 = vmax.f32 %v2272, 0.0
      %v2285 = vmax.f32 %v2275, 0.0
      %v2286 = vmax.f32 %v2277, 0.0
      %2287 = vst [vmem:[#allocation2] sm:$0x1f] 0.0
      %2288 = vst [vmem:[#allocation2 + $0x8] sm:$0x1f] 0.0
      %2289 = vst [vmem:[#allocation2 + $0x10] sm:$0x1f] 0.0
      %2290 = vst [vmem:[#allocation2 + $0x18] sm:$0x1f] 0.0
      %2291 = vst [vmem:[#allocation2 + $0x20] sm:$0x1f] 0.0
      %2292 = vst [vmem:[#allocation2 + $0x28] sm:$0x1f] 0.0
      %2293 = vst [vmem:[#allocation2 + $0x30] sm:$0x1f] 0.0
      %2294 = vst [vmem:[#allocation2 + $0x38] sm:$0x1f] 0.0
      %2295 = vst [vmem:[#allocation2 + $0x40] sm:$0x1f] 0.0
      %2296 = vst [vmem:[#allocation2 + $0x48] sm:$0x1f] 0.0
      %2297 = vst [vmem:[#allocation2 + $0x50] sm:$0x1f] 0.0
      %2298 = vst [vmem:[#allocation2 + $0x58] sm:$0x1f] 0.0
      %2299 = vst [vmem:[#allocation2 + $0x60] sm:$0x1f] 0.0
      %2300 = vst [vmem:[#allocation2 + $0x68] sm:$0x1f] 0.0
      %2301 = vst [vmem:[#allocation2 + $0x70] sm:$0x1f] 0.0
      %2302 = vst [vmem:[#allocation2 + $0x78] sm:$0x1f] 0.0
      %2303 = vst [vmem:[#allocation2 + $0x80] sm:$0x1f] 0.0
      %2304 = vst [vmem:[#allocation2 + $0x88] sm:$0x1f] 0.0
      %2305 = vst [vmem:[#allocation2 + $0x90] sm:$0x1f] 0.0
      %2306 = vst [vmem:[#allocation2 + $0x98] sm:$0x1f] 0.0
      %v2315 = vrot.slane %v2279, 4
      %v2316 = vrot.slane %v2280, 4
      %v2317 = vrot.slane %v2281, 4
      %v2318 = vrot.slane %v2282, 4
      %v2319 = vrot.slane %v2283, 4
      %v2320 = vrot.slane %v2284, 4
      %v2321 = vrot.slane %v2285, 4
      %v2322 = vrot.slane %v2286, 4
      %s2331 = scalar_lea.vmem [#allocation2], 8
      %2332 = vst [vmem:[%s2331 + $0x1] sm:$0xf] %v2279
      %2333 = vst [vmem:[%s2331 + $0x9] sm:$0xf] %v2315
      %2334 = vst [vmem:[%s2331 + $0x11] sm:$0xf] %v2280
      %2335 = vst [vmem:[%s2331 + $0x19] sm:$0xf] %v2316
      %2336 = vst [vmem:[%s2331 + $0x29] sm:$0xf] %v2281
      %2337 = vst [vmem:[%s2331 + $0x31] sm:$0xf] %v2317
      %2338 = vst [vmem:[%s2331 + $0x39] sm:$0xf] %v2282
      %2339 = vst [vmem:[%s2331 + $0x41] sm:$0xf] %v2318
      %2340 = vst [vmem:[%s2331 + $0x51] sm:$0xf] %v2283
      %2341 = vst [vmem:[%s2331 + $0x59] sm:$0xf] %v2319
      %2342 = vst [vmem:[%s2331 + $0x61] sm:$0xf] %v2284
      %2343 = vst [vmem:[%s2331 + $0x69] sm:$0xf] %v2320
      %2344 = vst [vmem:[%s2331 + $0x79] sm:$0xf] %v2285
      %2345 = vst [vmem:[%s2331 + $0x81] sm:$0xf] %v2321
      %2346 = vst [vmem:[%s2331 + $0x89] sm:$0xf] %v2286
      %2347 = vst [vmem:[%s2331 + $0x91] sm:$0xf] %v2322
      %v2348 = vld [vmem:[%s2331 + $0x1] sm:$0xf]
      %v2349 = vld [vmem:[%s2331 + $0x9] sm:$0xf]
      %v2350 = vld [vmem:[%s2331 + $0x11] sm:$0xf]
      %v2351 = vld [vmem:[%s2331 + $0x19] sm:$0xf]
      %s2352 = scalar_lea.vmem [#allocation2], 48
      %v2353 = vld [vmem:[%s2352 + $0x1] sm:$0xf]
      %v2354 = vld [vmem:[%s2352 + $0x9] sm:$0xf]
      %v2355 = vld [vmem:[%s2352 + $0x11] sm:$0xf]
      %v2356 = vld [vmem:[%s2352 + $0x19] sm:$0xf]
      %v2357 = vmax.f32 %v2348, %v2353
      %v2358 = vmax.f32 %v2349, %v2354
      %v2359 = vmax.f32 %v2350, %v2355
      %v2360 = vmax.f32 %v2351, %v2356
      %v2361 = vld [vmem:[%s2352] sm:$0xf]
      %v2362 = vld [vmem:[%s2352 + $0x8] sm:$0xf]
      %v2363 = vld [vmem:[%s2352 + $0x10] sm:$0xf]
      %v2364 = vld [vmem:[%s2352 + $0x18] sm:$0xf]
      %v2365 = vmax.f32 %v2357, %v2361
      %v2366 = vmax.f32 %v2358, %v2362
      %v2367 = vmax.f32 %v2359, %v2363
      %v2368 = vmax.f32 %v2360, %v2364
      %s2369 = scalar_lea.vmem [#allocation2], 88
      %v2370 = vld [vmem:[%s2369 + $0x1] sm:$0xf]
      %v2371 = vld [vmem:[%s2369 + $0x9] sm:$0xf]
      %v2372 = vld [vmem:[%s2369 + $0x11] sm:$0xf]
      %v2373 = vld [vmem:[%s2369 + $0x19] sm:$0xf]
      %v2374 = vmax.f32 %v2365, %v2370
      %v2375 = vmax.f32 %v2366, %v2371
      %v2376 = vmax.f32 %v2367, %v2372
      %v2377 = vmax.f32 %v2368, %v2373
      %s2378 = scalar_lea.vmem [#allocation2], 80
      %v2379 = vld [vmem:[%s2378 + $0x1] sm:$0xf]
      %v2380 = vld [vmem:[%s2378 + $0x9] sm:$0xf]
      %v2381 = vld [vmem:[%s2378 + $0x11] sm:$0xf]
      %v2382 = vld [vmem:[%s2378 + $0x19] sm:$0xf]
      %v2383 = vmax.f32 %v2374, %v2379
      %v2384 = vmax.f32 %v2375, %v2380
      %v2385 = vmax.f32 %v2376, %v2381
      %v2386 = vmax.f32 %v2377, %v2382
      %s2387 = scalar_lea.vmem [#allocation2], 128
      %v2388 = vld [vmem:[%s2387 + $0x1] sm:$0xf]
      %v2389 = vld [vmem:[%s2387 + $0x9] sm:$0xf]
      %v2390 = vld [vmem:[%s2387 + $0x11] sm:$0xf]
      %v2391 = vld [vmem:[%s2387 + $0x19] sm:$0xf]
      %v2392 = vmax.f32 %v2383, %v2388
      %v2393 = vmax.f32 %v2384, %v2389
      %v2394 = vmax.f32 %v2385, %v2390
      %v2395 = vmax.f32 %v2386, %v2391
      %v2396 = vld [vmem:[%s2387] sm:$0xf]
      %v2397 = vld [vmem:[%s2387 + $0x8] sm:$0xf]
      %v2398 = vld [vmem:[%s2387 + $0x10] sm:$0xf]
      %v2399 = vld [vmem:[%s2387 + $0x18] sm:$0xf]
      %v2400 = vmax.f32 %v2392, %v2396
      %v2401 = vmax.f32 %v2393, %v2397
      %v2402 = vmax.f32 %v2394, %v2398
      %v2403 = vmax.f32 %v2395, %v2399
      %s2404 = scalar_lea.vmem [#allocation2], 120
      %v2405 = vld [vmem:[%s2404 + $0x1] sm:$0xf]
      %v2406 = vld [vmem:[%s2404 + $0x9] sm:$0xf]
      %v2407 = vld [vmem:[%s2404 + $0x11] sm:$0xf]
      %v2408 = vld [vmem:[%s2404 + $0x19] sm:$0xf]
      %v2409 = vmax.f32 %v2400, %v2405
      %v2410 = vmax.f32 %v2401, %v2406
      %v2411 = vmax.f32 %v2402, %v2407
      %v2412 = vmax.f32 %v2403, %v2408
      %v2413 = vld [vmem:[%s2404] sm:$0xf]
      %v2414 = vld [vmem:[%s2404 + $0x8] sm:$0xf]
      %v2415 = vld [vmem:[%s2404 + $0x10] sm:$0xf]
      %v2416 = vld [vmem:[%s2404 + $0x18] sm:$0xf]
      %v2417 = vmax.f32 %v2409, %v2413
      %v2418 = vmax.f32 %v2410, %v2414
      %v2419 = vmax.f32 %v2411, %v2415
      %v2420 = vmax.f32 %v2412, %v2416
      %2421 = vst [vmem:[#allocation3] sm:$0x3f] 0.0
      %2422 = vst [vmem:[#allocation3 + $0x8] sm:$0x3f] 0.0
      %2423 = vst [vmem:[#allocation3 + $0x10] sm:$0x3f] 0.0
      %2424 = vst [vmem:[#allocation3 + $0x18] sm:$0x3f] 0.0
      %2425 = vst [vmem:[#allocation3 + $0x20] sm:$0x3f] 0.0
      %2426 = vst [vmem:[#allocation3 + $0x28] sm:$0x3f] 0.0
      %s2427 = scalar_lea.vmem [#allocation3], 8
      %2428 = vst [vmem:[%s2427 + $0x1] sm:$0xf] %v2417
      %2429 = vst [vmem:[%s2427 + $0x9] sm:$0xf] %v2418
      %2430 = vst [vmem:[%s2427 + $0x11] sm:$0xf] %v2419
      %2431 = vst [vmem:[%s2427 + $0x19] sm:$0xf] %v2420
      %2436 = vst [vmem:[#allocation1] ss:$2 sm:$0xff] %v2417
      %s2437 = scalar_lea.vmem [#allocation1], 1
      %2438 = vst [vmem:[%s2437] ss:$2 sm:$0xff] %v2418
      %s2439 = scalar_lea.vmem [#allocation1], 16
      %2440 = vst [vmem:[%s2439] ss:$2 sm:$0xff] %v2419
      %s2441 = scalar_lea.vmem [#allocation1], 17
      %2442 = vst [vmem:[%s2441] ss:$2 sm:$0xff] %v2420
      %v2443 = vld.sshfl [vmem:[#allocation1] sm:$0xff pattern:$0x75316420]
      %v2444 = vld.sshfl [vmem:[#allocation1 + $0x10] sm:$0xff pattern:$0x75316420]
      %v2447 = vpack.c.bf16 %v2444, %v2443
      %v2448 = vld [vmem:[%s3] sm:$0xf]
      %v2449 = vld [vmem:[%s3 + $0x4] sm:$0xf]
      %v2450 = vld [vmem:[%s3 + $0x8] sm:$0xf]
      %v2451 = vld [vmem:[%s3 + $0xc] sm:$0xf]
      %v2452 = vld [vmem:[%s3 + $0x10] sm:$0xf]
      %v2453 = vld [vmem:[%s3 + $0x14] sm:$0xf]
      %v2454 = vld [vmem:[%s3 + $0x18] sm:$0xf]
      %v2455 = vld [vmem:[%s3 + $0x1c] sm:$0xf]
      %v2456 = vld [vmem:[%s3 + $0x20] sm:$0xf]
      %v2457 = vld [vmem:[%s3 + $0x24] sm:$0xf]
      %v2458 = vld [vmem:[%s3 + $0x28] sm:$0xf]
      %v2459 = vld [vmem:[%s3 + $0x2c] sm:$0xf]
      %v2460 = vld [vmem:[%s3 + $0x30] sm:$0xf]
      %v2461 = vld [vmem:[%s3 + $0x34] sm:$0xf]
      %v2462 = vld [vmem:[%s3 + $0x38] sm:$0xf]
      %v2463 = vld [vmem:[%s3 + $0x3c] sm:$0xf]
      %v2464 = vld [vmem:[%s4] sm:$0x1]
      %v2466 = vperm.slane %v2464, 0
      %v2484 = vunpack.c.l.b16 %v2448
      %v2485 = vunpack.c.l.b16 %v2449
      %v2486 = vunpack.c.l.b16 %v2450
      %v2487 = vunpack.c.l.b16 %v2451
      %v2488 = vunpack.c.l.b16 %v2452
      %v2489 = vunpack.c.l.b16 %v2453
      %v2490 = vunpack.c.l.b16 %v2454
      %v2491 = vunpack.c.l.b16 %v2455
      %v2492 = vunpack.c.l.b16 %v2456
      %v2493 = vunpack.c.l.b16 %v2457
      %v2494 = vunpack.c.l.b16 %v2458
      %v2495 = vunpack.c.l.b16 %v2459
      %v2496 = vunpack.c.l.b16 %v2460
      %v2497 = vunpack.c.l.b16 %v2461
      %v2498 = vunpack.c.l.b16 %v2462
      %v2499 = vunpack.c.l.b16 %v2463
      %v2500 = vpack.c.b16 %v2485, %v2484
      %v2501 = vpack.c.b16 %v2487, %v2486
      %v2502 = vpack.c.b16 %v2489, %v2488
      %v2503 = vpack.c.b16 %v2491, %v2490
      %v2504 = vpack.c.b16 %v2493, %v2492
      %v2505 = vpack.c.b16 %v2495, %v2494
      %v2506 = vpack.c.b16 %v2497, %v2496
      %v2507 = vpack.c.b16 %v2499, %v2498
      %2516 = vmatpush.bf16.msra.mxu0 %v2507
      %2517 = vmatpush.bf16.msra.mxu0 %v2506
      %2518 = vmatpush.bf16.msra.mxu0 %v2505
      %2519 = vmatpush.bf16.msra.mxu0 %v2504
      %2520 = vmatpush.bf16.msra.mxu0 %v2503
      %2521 = vmatpush.bf16.msra.mxu0 %v2502
      %2522 = vmatpush.bf16.msra.mxu0 %v2501
      %2523 = vmatpush.bf16.msra.mxu0 %v2500
      %2524 = vmatmul.bf16.gmra.mxu0 %v2447
      %v2525 = vpop.f32.mrf.mxu0
      %v2526 = vadd.f32 %v2466, %v2525
      %v2527 = vpop.f32.mrf.mxu0
      %v2528 = vadd.f32 %v2466, %v2527
      %2529 = vdwg.mxu0
      %v2530 = vmax.f32 %v2526, 0.0
      %v2531 = vmax.f32 %v2528, 0.0
      %2532 = vst [vmem:[#allocation4] sm:$0x3f] 0.0
      %2533 = vst [vmem:[#allocation4 + $0x8] sm:$0x3f] 0.0
      %2534 = vst [vmem:[#allocation4 + $0x10] sm:$0x3f] 0.0
      %2535 = vst [vmem:[#allocation4 + $0x18] sm:$0x3f] 0.0
      %2536 = vst [vmem:[#allocation4 + $0x20] sm:$0x3f] 0.0
      %2537 = vst [vmem:[#allocation4 + $0x28] sm:$0x3f] 0.0
      %v2540 = vrot.slane %v2530, 4
      %v2541 = vrot.slane %v2531, 4
      %s2544 = scalar_lea.vmem [#allocation4], 8
      %2545 = vst [vmem:[%s2544 + $0x1] sm:$0xf] %v2530
      %2546 = vst [vmem:[%s2544 + $0x9] sm:$0xf] %v2540
      %2547 = vst [vmem:[%s2544 + $0x11] sm:$0xf] %v2531
      %2548 = vst [vmem:[%s2544 + $0x19] sm:$0xf] %v2541
      %v2549 = vld [vmem:[#allocation3] sm:$0xf]
      %v2550 = vld [vmem:[#allocation3 + $0x8] sm:$0xf]
      %v2551 = vld [vmem:[#allocation3 + $0x10] sm:$0xf]
      %v2552 = vld [vmem:[#allocation3 + $0x18] sm:$0xf]
      %2557 = vst [vmem:[#allocation1] ss:$2 sm:$0xff] %v2549
      %s2558 = scalar_lea.vmem [#allocation1], 1
      %2559 = vst [vmem:[%s2558] ss:$2 sm:$0xff] %v2550
      %s2560 = scalar_lea.vmem [#allocation1], 16
      %2561 = vst [vmem:[%s2560] ss:$2 sm:$0xff] %v2551
      %s2562 = scalar_lea.vmem [#allocation1], 17
      %2563 = vst [vmem:[%s2562] ss:$2 sm:$0xff] %v2552
      %v2564 = vld.sshfl [vmem:[#allocation1] sm:$0xff pattern:$0x75316420]
      %v2565 = vld.sshfl [vmem:[#allocation1 + $0x10] sm:$0xff pattern:$0x75316420]
      %v2568 = vpack.c.bf16 %v2565, %v2564
      %v2569 = vld [vmem:[%s11] sm:$0xf]
      %v2570 = vld [vmem:[%s11 + $0x4] sm:$0xf]
      %v2571 = vld [vmem:[%s11 + $0x8] sm:$0xf]
      %v2572 = vld [vmem:[%s11 + $0xc] sm:$0xf]
      %v2573 = vld [vmem:[%s11 + $0x10] sm:$0xf]
      %v2574 = vld [vmem:[%s11 + $0x14] sm:$0xf]
      %v2575 = vld [vmem:[%s11 + $0x18] sm:$0xf]
      %v2576 = vld [vmem:[%s11 + $0x1c] sm:$0xf]
      %v2577 = vld [vmem:[%s11 + $0x20] sm:$0xf]
      %v2578 = vld [vmem:[%s11 + $0x24] sm:$0xf]
      %v2579 = vld [vmem:[%s11 + $0x28] sm:$0xf]
      %v2580 = vld [vmem:[%s11 + $0x2c] sm:$0xf]
      %v2581 = vld [vmem:[%s11 + $0x30] sm:$0xf]
      %v2582 = vld [vmem:[%s11 + $0x34] sm:$0xf]
      %v2583 = vld [vmem:[%s11 + $0x38] sm:$0xf]
      %v2584 = vld [vmem:[%s11 + $0x3c] sm:$0xf]
      %v2585 = vld [vmem:[#allocation3 + $0x1] sm:$0xf]
      %v2586 = vld [vmem:[#allocation3 + $0x9] sm:$0xf]
      %v2587 = vld [vmem:[#allocation3 + $0x11] sm:$0xf]
      %v2588 = vld [vmem:[#allocation3 + $0x19] sm:$0xf]
      %2593 = vst [vmem:[#allocation1] ss:$2 sm:$0xff] %v2585
      %s2594 = scalar_lea.vmem [#allocation1], 1
      %2595 = vst [vmem:[%s2594] ss:$2 sm:$0xff] %v2586
      %s2596 = scalar_lea.vmem [#allocation1], 16
      %2597 = vst [vmem:[%s2596] ss:$2 sm:$0xff] %v2587
      %s2598 = scalar_lea.vmem [#allocation1], 17
      %2599 = vst [vmem:[%s2598] ss:$2 sm:$0xff] %v2588
      %v2600 = vld.sshfl [vmem:[#allocation1] sm:$0xff pattern:$0x75316420]
      %v2601 = vld.sshfl [vmem:[#allocation1 + $0x10] sm:$0xff pattern:$0x75316420]
      %v2604 = vpack.c.bf16 %v2601, %v2600
      %s2605 = scalar_lea.vmem %s11, 64
      %v2606 = vld [vmem:[%s2605] sm:$0xf]
      %v2607 = vld [vmem:[%s2605 + $0x4] sm:$0xf]
      %v2608 = vld [vmem:[%s2605 + $0x8] sm:$0xf]
      %v2609 = vld [vmem:[%s2605 + $0xc] sm:$0xf]
      %v2610 = vld [vmem:[%s2605 + $0x10] sm:$0xf]
      %v2611 = vld [vmem:[%s2605 + $0x14] sm:$0xf]
      %v2612 = vld [vmem:[%s2605 + $0x18] sm:$0xf]
      %v2613 = vld [vmem:[%s2605 + $0x1c] sm:$0xf]
      %v2614 = vld [vmem:[%s2605 + $0x20] sm:$0xf]
      %v2615 = vld [vmem:[%s2605 + $0x24] sm:$0xf]
      %v2616 = vld [vmem:[%s2605 + $0x28] sm:$0xf]
      %v2617 = vld [vmem:[%s2605 + $0x2c] sm:$0xf]
      %v2618 = vld [vmem:[%s2605 + $0x30] sm:$0xf]
      %v2619 = vld [vmem:[%s2605 + $0x34] sm:$0xf]
      %v2620 = vld [vmem:[%s2605 + $0x38] sm:$0xf]
      %v2621 = vld [vmem:[%s2605 + $0x3c] sm:$0xf]
      %v2638 = vunpack.c.l.b16 %v2606
      %v2639 = vunpack.c.l.b16 %v2607
      %v2640 = vunpack.c.l.b16 %v2608
      %v2641 = vunpack.c.l.b16 %v2609
      %v2642 = vunpack.c.l.b16 %v2610
      %v2643 = vunpack.c.l.b16 %v2611
      %v2644 = vunpack.c.l.b16 %v2612
      %v2645 = vunpack.c.l.b16 %v2613
      %v2646 = vunpack.c.l.b16 %v2614
      %v2647 = vunpack.c.l.b16 %v2615
      %v2648 = vunpack.c.l.b16 %v2616
      %v2649 = vunpack.c.l.b16 %v2617
      %v2650 = vunpack.c.l.b16 %v2618
      %v2651 = vunpack.c.l.b16 %v2619
      %v2652 = vunpack.c.l.b16 %v2620
      %v2653 = vunpack.c.l.b16 %v2621
      %v2654 = vpack.c.b16 %v2639, %v2638
      %v2655 = vpack.c.b16 %v2641, %v2640
      %v2656 = vpack.c.b16 %v2643, %v2642
      %v2657 = vpack.c.b16 %v2645, %v2644
      %v2658 = vpack.c.b16 %v2647, %v2646
      %v2659 = vpack.c.b16 %v2649, %v2648
      %v2660 = vpack.c.b16 %v2651, %v2650
      %v2661 = vpack.c.b16 %v2653, %v2652
      %2670 = vmatpush.bf16.msra.mxu0 %v2661
      %2671 = vmatpush.bf16.msra.mxu0 %v2660
      %2672 = vmatpush.bf16.msra.mxu0 %v2659
      %2673 = vmatpush.bf16.msra.mxu0 %v2658
      %2674 = vmatpush.bf16.msra.mxu0 %v2657
      %2675 = vmatpush.bf16.msra.mxu0 %v2656
      %2676 = vmatpush.bf16.msra.mxu0 %v2655
      %2677 = vmatpush.bf16.msra.mxu0 %v2654
      %2678 = vmatmul.bf16.gmra.mxu0 %v2604
      %v2679 = vpop.f32.mrf.mxu0
      %v2680 = vadd.f32 0.0, %v2679
      %v2681 = vpop.f32.mrf.mxu0
      %v2682 = vadd.f32 0.0, %v2681
      %2683 = vdwg.mxu0
      %v2700 = vunpack.c.l.b16 %v2569
      %v2701 = vunpack.c.l.b16 %v2570
      %v2702 = vunpack.c.l.b16 %v2571
      %v2703 = vunpack.c.l.b16 %v2572
      %v2704 = vunpack.c.l.b16 %v2573
      %v2705 = vunpack.c.l.b16 %v2574
      %v2706 = vunpack.c.l.b16 %v2575
      %v2707 = vunpack.c.l.b16 %v2576
      %v2708 = vunpack.c.l.b16 %v2577
      %v2709 = vunpack.c.l.b16 %v2578
      %v2710 = vunpack.c.l.b16 %v2579
      %v2711 = vunpack.c.l.b16 %v2580
      %v2712 = vunpack.c.l.b16 %v2581
      %v2713 = vunpack.c.l.b16 %v2582
      %v2714 = vunpack.c.l.b16 %v2583
      %v2715 = vunpack.c.l.b16 %v2584
      %v2716 = vpack.c.b16 %v2701, %v2700
      %v2717 = vpack.c.b16 %v2703, %v2702
      %v2718 = vpack.c.b16 %v2705, %v2704
      %v2719 = vpack.c.b16 %v2707, %v2706
      %v2720 = vpack.c.b16 %v2709, %v2708
      %v2721 = vpack.c.b16 %v2711, %v2710
      %v2722 = vpack.c.b16 %v2713, %v2712
      %v2723 = vpack.c.b16 %v2715, %v2714
      %2732 = vmatpush.bf16.msra.mxu0 %v2723
      %2733 = vmatpush.bf16.msra.mxu0 %v2722
      %2734 = vmatpush.bf16.msra.mxu0 %v2721
      %2735 = vmatpush.bf16.msra.mxu0 %v2720
      %2736 = vmatpush.bf16.msra.mxu0 %v2719
      %2737 = vmatpush.bf16.msra.mxu0 %v2718
      %2738 = vmatpush.bf16.msra.mxu0 %v2717
      %2739 = vmatpush.bf16.msra.mxu0 %v2716
      %2740 = vmatmul.bf16.gmra.mxu0 %v2568
      %v2741 = vpop.f32.mrf.mxu0
      %v2742 = vadd.f32 %v2680, %v2741
      %v2743 = vpop.f32.mrf.mxu0
      %v2744 = vadd.f32 %v2682, %v2743
      %2745 = vdwg.mxu0
      %v2746 = vld [vmem:[#allocation3 + $0x2] sm:$0xf]
      %v2747 = vld [vmem:[#allocation3 + $0xa] sm:$0xf]
      %v2748 = vld [vmem:[#allocation3 + $0x12] sm:$0xf]
      %v2749 = vld [vmem:[#allocation3 + $0x1a] sm:$0xf]
      %2754 = vst [vmem:[#allocation1] ss:$2 sm:$0xff] %v2746
      %s2755 = scalar_lea.vmem [#allocation1], 1
      %2756 = vst [vmem:[%s2755] ss:$2 sm:$0xff] %v2747
      %s2757 = scalar_lea.vmem [#allocation1], 16
      %2758 = vst [vmem:[%s2757] ss:$2 sm:$0xff] %v2748
      %s2759 = scalar_lea.vmem [#allocation1], 17
      %2760 = vst [vmem:[%s2759] ss:$2 sm:$0xff] %v2749
      %v2761 = vld.sshfl [vmem:[#allocation1] sm:$0xff pattern:$0x75316420]
      %v2762 = vld.sshfl [vmem:[#allocation1 + $0x10] sm:$0xff pattern:$0x75316420]
      %v2765 = vpack.c.bf16 %v2762, %v2761
      %s2766 = scalar_lea.vmem %s11, 128
      %v2767 = vld [vmem:[%s2766] sm:$0xf]
      %v2768 = vld [vmem:[%s2766 + $0x4] sm:$0xf]
      %v2769 = vld [vmem:[%s2766 + $0x8] sm:$0xf]
      %v2770 = vld [vmem:[%s2766 + $0xc] sm:$0xf]
      %v2771 = vld [vmem:[%s2766 + $0x10] sm:$0xf]
      %v2772 = vld [vmem:[%s2766 + $0x14] sm:$0xf]
      %v2773 = vld [vmem:[%s2766 + $0x18] sm:$0xf]
      %v2774 = vld [vmem:[%s2766 + $0x1c] sm:$0xf]
      %v2775 = vld [vmem:[%s2766 + $0x20] sm:$0xf]
      %v2776 = vld [vmem:[%s2766 + $0x24] sm:$0xf]
      %v2777 = vld [vmem:[%s2766 + $0x28] sm:$0xf]
      %v2778 = vld [vmem:[%s2766 + $0x2c] sm:$0xf]
      %v2779 = vld [vmem:[%s2766 + $0x30] sm:$0xf]
      %v2780 = vld [vmem:[%s2766 + $0x34] sm:$0xf]
      %v2781 = vld [vmem:[%s2766 + $0x38] sm:$0xf]
      %v2782 = vld [vmem:[%s2766 + $0x3c] sm:$0xf]
      %v2799 = vunpack.c.l.b16 %v2767
      %v2800 = vunpack.c.l.b16 %v2768
      %v2801 = vunpack.c.l.b16 %v2769
      %v2802 = vunpack.c.l.b16 %v2770
      %v2803 = vunpack.c.l.b16 %v2771
      %v2804 = vunpack.c.l.b16 %v2772
      %v2805 = vunpack.c.l.b16 %v2773
      %v2806 = vunpack.c.l.b16 %v2774
      %v2807 = vunpack.c.l.b16 %v2775
      %v2808 = vunpack.c.l.b16 %v2776
      %v2809 = vunpack.c.l.b16 %v2777
      %v2810 = vunpack.c.l.b16 %v2778
      %v2811 = vunpack.c.l.b16 %v2779
      %v2812 = vunpack.c.l.b16 %v2780
      %v2813 = vunpack.c.l.b16 %v2781
      %v2814 = vunpack.c.l.b16 %v2782
      %v2815 = vpack.c.b16 %v2800, %v2799
      %v2816 = vpack.c.b16 %v2802, %v2801
      %v2817 = vpack.c.b16 %v2804, %v2803
      %v2818 = vpack.c.b16 %v2806, %v2805
      %v2819 = vpack.c.b16 %v2808, %v2807
      %v2820 = vpack.c.b16 %v2810, %v2809
      %v2821 = vpack.c.b16 %v2812, %v2811
      %v2822 = vpack.c.b16 %v2814, %v2813
      %2831 = vmatpush.bf16.msra.mxu0 %v2822
      %2832 = vmatpush.bf16.msra.mxu0 %v2821
      %2833 = vmatpush.bf16.msra.mxu0 %v2820
      %2834 = vmatpush.bf16.msra.mxu0 %v2819
      %2835 = vmatpush.bf16.msra.mxu0 %v2818
      %2836 = vmatpush.bf16.msra.mxu0 %v2817
      %2837 = vmatpush.bf16.msra.mxu0 %v2816
      %2838 = vmatpush.bf16.msra.mxu0 %v2815
      %2839 = vmatmul.bf16.gmra.mxu0 %v2765
      %v2840 = vpop.f32.mrf.mxu0
      %v2841 = vadd.f32 0.0, %v2840
      %v2842 = vpop.f32.mrf.mxu0
      %v2843 = vadd.f32 0.0, %v2842
      %2844 = vdwg.mxu0
      %v2845 = vadd.f32 %v2742, %v2841
      %v2846 = vadd.f32 %v2744, %v2843
      %v2847 = vld [vmem:[%s2427] sm:$0xf]
      %v2848 = vld [vmem:[%s2427 + $0x8] sm:$0xf]
      %v2849 = vld [vmem:[%s2427 + $0x10] sm:$0xf]
      %v2850 = vld [vmem:[%s2427 + $0x18] sm:$0xf]
      %2855 = vst [vmem:[#allocation1] ss:$2 sm:$0xff] %v2847
      %s2856 = scalar_lea.vmem [#allocation1], 1
      %2857 = vst [vmem:[%s2856] ss:$2 sm:$0xff] %v2848
      %s2858 = scalar_lea.vmem [#allocation1], 16
      %2859 = vst [vmem:[%s2858] ss:$2 sm:$0xff] %v2849
      %s2860 = scalar_lea.vmem [#allocation1], 17
      %2861 = vst [vmem:[%s2860] ss:$2 sm:$0xff] %v2850
      %v2862 = vld.sshfl [vmem:[#allocation1] sm:$0xff pattern:$0x75316420]
      %v2863 = vld.sshfl [vmem:[#allocation1 + $0x10] sm:$0xff pattern:$0x75316420]
      %v2866 = vpack.c.bf16 %v2863, %v2862
      %s2867 = scalar_lea.vmem %s11, 192
      %v2868 = vld [vmem:[%s2867] sm:$0xf]
      %v2869 = vld [vmem:[%s2867 + $0x4] sm:$0xf]
      %v2870 = vld [vmem:[%s2867 + $0x8] sm:$0xf]
      %v2871 = vld [vmem:[%s2867 + $0xc] sm:$0xf]
      %v2872 = vld [vmem:[%s2867 + $0x10] sm:$0xf]
      %v2873 = vld [vmem:[%s2867 + $0x14] sm:$0xf]
      %v2874 = vld [vmem:[%s2867 + $0x18] sm:$0xf]
      %v2875 = vld [vmem:[%s2867 + $0x1c] sm:$0xf]
      %v2876 = vld [vmem:[%s2867 + $0x20] sm:$0xf]
      %v2877 = vld [vmem:[%s2867 + $0x24] sm:$0xf]
      %v2878 = vld [vmem:[%s2867 + $0x28] sm:$0xf]
      %v2879 = vld [vmem:[%s2867 + $0x2c] sm:$0xf]
      %v2880 = vld [vmem:[%s2867 + $0x30] sm:$0xf]
      %v2881 = vld [vmem:[%s2867 + $0x34] sm:$0xf]
      %v2882 = vld [vmem:[%s2867 + $0x38] sm:$0xf]
      %v2883 = vld [vmem:[%s2867 + $0x3c] sm:$0xf]
      %v2900 = vunpack.c.l.b16 %v2868
      %v2901 = vunpack.c.l.b16 %v2869
      %v2902 = vunpack.c.l.b16 %v2870
      %v2903 = vunpack.c.l.b16 %v2871
      %v2904 = vunpack.c.l.b16 %v2872
      %v2905 = vunpack.c.l.b16 %v2873
      %v2906 = vunpack.c.l.b16 %v2874
      %v2907 = vunpack.c.l.b16 %v2875
      %v2908 = vunpack.c.l.b16 %v2876
      %v2909 = vunpack.c.l.b16 %v2877
      %v2910 = vunpack.c.l.b16 %v2878
      %v2911 = vunpack.c.l.b16 %v2879
      %v2912 = vunpack.c.l.b16 %v2880
      %v2913 = vunpack.c.l.b16 %v2881
      %v2914 = vunpack.c.l.b16 %v2882
      %v2915 = vunpack.c.l.b16 %v2883
      %v2916 = vpack.c.b16 %v2901, %v2900
      %v2917 = vpack.c.b16 %v2903, %v2902
      %v2918 = vpack.c.b16 %v2905, %v2904
      %v2919 = vpack.c.b16 %v2907, %v2906
      %v2920 = vpack.c.b16 %v2909, %v2908
      %v2921 = vpack.c.b16 %v2911, %v2910
      %v2922 = vpack.c.b16 %v2913, %v2912
      %v2923 = vpack.c.b16 %v2915, %v2914
      %2932 = vmatpush.bf16.msra.mxu0 %v2923
      %2933 = vmatpush.bf16.msra.mxu0 %v2922
      %2934 = vmatpush.bf16.msra.mxu0 %v2921
      %2935 = vmatpush.bf16.msra.mxu0 %v2920
      %2936 = vmatpush.bf16.msra.mxu0 %v2919
      %2937 = vmatpush.bf16.msra.mxu0 %v2918
      %2938 = vmatpush.bf16.msra.mxu0 %v2917
      %2939 = vmatpush.bf16.msra.mxu0 %v2916
      %2940 = vmatmul.bf16.gmra.mxu0 %v2866
      %v2941 = vpop.f32.mrf.mxu0
      %v2942 = vadd.f32 0.0, %v2941
      %v2943 = vpop.f32.mrf.mxu0
      %v2944 = vadd.f32 0.0, %v2943
      %2945 = vdwg.mxu0
      %v2946 = vadd.f32 %v2845, %v2942
      %v2947 = vadd.f32 %v2846, %v2944
      %v2948 = vld [vmem:[%s2427 + $0x1] sm:$0xf]
      %v2949 = vld [vmem:[%s2427 + $0x9] sm:$0xf]
      %v2950 = vld [vmem:[%s2427 + $0x11] sm:$0xf]
      %v2951 = vld [vmem:[%s2427 + $0x19] sm:$0xf]
      %2956 = vst [vmem:[#allocation1] ss:$2 sm:$0xff] %v2948
      %s2957 = scalar_lea.vmem [#allocation1], 1
      %2958 = vst [vmem:[%s2957] ss:$2 sm:$0xff] %v2949
      %s2959 = scalar_lea.vmem [#allocation1], 16
      %2960 = vst [vmem:[%s2959] ss:$2 sm:$0xff] %v2950
      %s2961 = scalar_lea.vmem [#allocation1], 17
      %2962 = vst [vmem:[%s2961] ss:$2 sm:$0xff] %v2951
      %v2963 = vld.sshfl [vmem:[#allocation1] sm:$0xff pattern:$0x75316420]
      %v2964 = vld.sshfl [vmem:[#allocation1 + $0x10] sm:$0xff pattern:$0x75316420]
      %v2967 = vpack.c.bf16 %v2964, %v2963
      %s2968 = scalar_lea.vmem %s11, 256
      %v2969 = vld [vmem:[%s2968] sm:$0xf]
      %v2970 = vld [vmem:[%s2968 + $0x4] sm:$0xf]
      %v2971 = vld [vmem:[%s2968 + $0x8] sm:$0xf]
      %v2972 = vld [vmem:[%s2968 + $0xc] sm:$0xf]
      %v2973 = vld [vmem:[%s2968 + $0x10] sm:$0xf]
      %v2974 = vld [vmem:[%s2968 + $0x14] sm:$0xf]
      %v2975 = vld [vmem:[%s2968 + $0x18] sm:$0xf]
      %v2976 = vld [vmem:[%s2968 + $0x1c] sm:$0xf]
      %v2977 = vld [vmem:[%s2968 + $0x20] sm:$0xf]
      %v2978 = vld [vmem:[%s2968 + $0x24] sm:$0xf]
      %v2979 = vld [vmem:[%s2968 + $0x28] sm:$0xf]
      %v2980 = vld [vmem:[%s2968 + $0x2c] sm:$0xf]
      %v2981 = vld [vmem:[%s2968 + $0x30] sm:$0xf]
      %v2982 = vld [vmem:[%s2968 + $0x34] sm:$0xf]
      %v2983 = vld [vmem:[%s2968 + $0x38] sm:$0xf]
      %v2984 = vld [vmem:[%s2968 + $0x3c] sm:$0xf]
      %v3001 = vunpack.c.l.b16 %v2969
      %v3002 = vunpack.c.l.b16 %v2970
      %v3003 = vunpack.c.l.b16 %v2971
      %v3004 = vunpack.c.l.b16 %v2972
      %v3005 = vunpack.c.l.b16 %v2973
      %v3006 = vunpack.c.l.b16 %v2974
      %v3007 = vunpack.c.l.b16 %v2975
      %v3008 = vunpack.c.l.b16 %v2976
      %v3009 = vunpack.c.l.b16 %v2977
      %v3010 = vunpack.c.l.b16 %v2978
      %v3011 = vunpack.c.l.b16 %v2979
      %v3012 = vunpack.c.l.b16 %v2980
      %v3013 = vunpack.c.l.b16 %v2981
      %v3014 = vunpack.c.l.b16 %v2982
      %v3015 = vunpack.c.l.b16 %v2983
      %v3016 = vunpack.c.l.b16 %v2984
      %v3017 = vpack.c.b16 %v3002, %v3001
      %v3018 = vpack.c.b16 %v3004, %v3003
      %v3019 = vpack.c.b16 %v3006, %v3005
      %v3020 = vpack.c.b16 %v3008, %v3007
      %v3021 = vpack.c.b16 %v3010, %v3009
      %v3022 = vpack.c.b16 %v3012, %v3011
      %v3023 = vpack.c.b16 %v3014, %v3013
      %v3024 = vpack.c.b16 %v3016, %v3015
      %3033 = vmatpush.bf16.msra.mxu0 %v3024
      %3034 = vmatpush.bf16.msra.mxu0 %v3023
      %3035 = vmatpush.bf16.msra.mxu0 %v3022
      %3036 = vmatpush.bf16.msra.mxu0 %v3021
      %3037 = vmatpush.bf16.msra.mxu0 %v3020
      %3038 = vmatpush.bf16.msra.mxu0 %v3019
      %3039 = vmatpush.bf16.msra.mxu0 %v3018
      %3040 = vmatpush.bf16.msra.mxu0 %v3017
      %3041 = vmatmul.bf16.gmra.mxu0 %v2967
      %v3042 = vpop.f32.mrf.mxu0
      %v3043 = vadd.f32 0.0, %v3042
      %v3044 = vpop.f32.mrf.mxu0
      %v3045 = vadd.f32 0.0, %v3044
      %3046 = vdwg.mxu0
      %v3047 = vadd.f32 %v2946, %v3043
      %v3048 = vadd.f32 %v2947, %v3045
      %v3049 = vld [vmem:[%s2427 + $0x2] sm:$0xf]
      %v3050 = vld [vmem:[%s2427 + $0xa] sm:$0xf]
      %v3051 = vld [vmem:[%s2427 + $0x12] sm:$0xf]
      %v3052 = vld [vmem:[%s2427 + $0x1a] sm:$0xf]
      %3057 = vst [vmem:[#allocation1] ss:$2 sm:$0xff] %v3049
      %s3058 = scalar_lea.vmem [#allocation1], 1
      %3059 = vst [vmem:[%s3058] ss:$2 sm:$0xff] %v3050
      %s3060 = scalar_lea.vmem [#allocation1], 16
      %3061 = vst [vmem:[%s3060] ss:$2 sm:$0xff] %v3051
      %s3062 = scalar_lea.vmem [#allocation1], 17
      %3063 = vst [vmem:[%s3062] ss:$2 sm:$0xff] %v3052
      %v3064 = vld.sshfl [vmem:[#allocation1] sm:$0xff pattern:$0x75316420]
      %v3065 = vld.sshfl [vmem:[#allocation1 + $0x10] sm:$0xff pattern:$0x75316420]
      %v3068 = vpack.c.bf16 %v3065, %v3064
      %s3069 = scalar_lea.vmem %s11, 320
      %v3070 = vld [vmem:[%s3069] sm:$0xf]
      %v3071 = vld [vmem:[%s3069 + $0x4] sm:$0xf]
      %v3072 = vld [vmem:[%s3069 + $0x8] sm:$0xf]
      %v3073 = vld [vmem:[%s3069 + $0xc] sm:$0xf]
      %v3074 = vld [vmem:[%s3069 + $0x10] sm:$0xf]
      %v3075 = vld [vmem:[%s3069 + $0x14] sm:$0xf]
      %v3076 = vld [vmem:[%s3069 + $0x18] sm:$0xf]
      %v3077 = vld [vmem:[%s3069 + $0x1c] sm:$0xf]
      %v3078 = vld [vmem:[%s3069 + $0x20] sm:$0xf]
      %v3079 = vld [vmem:[%s3069 + $0x24] sm:$0xf]
      %v3080 = vld [vmem:[%s3069 + $0x28] sm:$0xf]
      %v3081 = vld [vmem:[%s3069 + $0x2c] sm:$0xf]
      %v3082 = vld [vmem:[%s3069 + $0x30] sm:$0xf]
      %v3083 = vld [vmem:[%s3069 + $0x34] sm:$0xf]
      %v3084 = vld [vmem:[%s3069 + $0x38] sm:$0xf]
      %v3085 = vld [vmem:[%s3069 + $0x3c] sm:$0xf]
      %v3102 = vunpack.c.l.b16 %v3070
      %v3103 = vunpack.c.l.b16 %v3071
      %v3104 = vunpack.c.l.b16 %v3072
      %v3105 = vunpack.c.l.b16 %v3073
      %v3106 = vunpack.c.l.b16 %v3074
      %v3107 = vunpack.c.l.b16 %v3075
      %v3108 = vunpack.c.l.b16 %v3076
      %v3109 = vunpack.c.l.b16 %v3077
      %v3110 = vunpack.c.l.b16 %v3078
      %v3111 = vunpack.c.l.b16 %v3079
      %v3112 = vunpack.c.l.b16 %v3080
      %v3113 = vunpack.c.l.b16 %v3081
      %v3114 = vunpack.c.l.b16 %v3082
      %v3115 = vunpack.c.l.b16 %v3083
      %v3116 = vunpack.c.l.b16 %v3084
      %v3117 = vunpack.c.l.b16 %v3085
      %v3118 = vpack.c.b16 %v3103, %v3102
      %v3119 = vpack.c.b16 %v3105, %v3104
      %v3120 = vpack.c.b16 %v3107, %v3106
      %v3121 = vpack.c.b16 %v3109, %v3108
      %v3122 = vpack.c.b16 %v3111, %v3110
      %v3123 = vpack.c.b16 %v3113, %v3112
      %v3124 = vpack.c.b16 %v3115, %v3114
      %v3125 = vpack.c.b16 %v3117, %v3116
      %3134 = vmatpush.bf16.msra.mxu0 %v3125
      %3135 = vmatpush.bf16.msra.mxu0 %v3124
      %3136 = vmatpush.bf16.msra.mxu0 %v3123
      %3137 = vmatpush.bf16.msra.mxu0 %v3122
      %3138 = vmatpush.bf16.msra.mxu0 %v3121
      %3139 = vmatpush.bf16.msra.mxu0 %v3120
      %3140 = vmatpush.bf16.msra.mxu0 %v3119
      %3141 = vmatpush.bf16.msra.mxu0 %v3118
      %3142 = vmatmul.bf16.gmra.mxu0 %v3068
      %v3143 = vpop.f32.mrf.mxu0
      %v3144 = vadd.f32 0.0, %v3143
      %v3145 = vpop.f32.mrf.mxu0
      %v3146 = vadd.f32 0.0, %v3145
      %3147 = vdwg.mxu0
      %v3148 = vadd.f32 %v3047, %v3144
      %v3149 = vadd.f32 %v3048, %v3146
      %s3150 = scalar_lea.vmem [#allocation3], 16
      %v3151 = vld [vmem:[%s3150] sm:$0xf]
      %v3152 = vld [vmem:[%s3150 + $0x8] sm:$0xf]
      %v3153 = vld [vmem:[%s3150 + $0x10] sm:$0xf]
      %v3154 = vld [vmem:[%s3150 + $0x18] sm:$0xf]
      %3159 = vst [vmem:[#allocation1] ss:$2 sm:$0xff] %v3151
      %s3160 = scalar_lea.vmem [#allocation1], 1
      %3161 = vst [vmem:[%s3160] ss:$2 sm:$0xff] %v3152
      %s3162 = scalar_lea.vmem [#allocation1], 16
      %3163 = vst [vmem:[%s3162] ss:$2 sm:$0xff] %v3153
      %s3164 = scalar_lea.vmem [#allocation1], 17
      %3165 = vst [vmem:[%s3164] ss:$2 sm:$0xff] %v3154
      %v3166 = vld.sshfl [vmem:[#allocation1] sm:$0xff pattern:$0x75316420]
      %v3167 = vld.sshfl [vmem:[#allocation1 + $0x10] sm:$0xff pattern:$0x75316420]
      %v3170 = vpack.c.bf16 %v3167, %v3166
      %s3171 = scalar_lea.vmem %s11, 384
      %v3172 = vld [vmem:[%s3171] sm:$0xf]
      %v3173 = vld [vmem:[%s3171 + $0x4] sm:$0xf]
      %v3174 = vld [vmem:[%s3171 + $0x8] sm:$0xf]
      %v3175 = vld [vmem:[%s3171 + $0xc] sm:$0xf]
      %v3176 = vld [vmem:[%s3171 + $0x10] sm:$0xf]
      %v3177 = vld [vmem:[%s3171 + $0x14] sm:$0xf]
      %v3178 = vld [vmem:[%s3171 + $0x18] sm:$0xf]
      %v3179 = vld [vmem:[%s3171 + $0x1c] sm:$0xf]
      %v3180 = vld [vmem:[%s3171 + $0x20] sm:$0xf]
      %v3181 = vld [vmem:[%s3171 + $0x24] sm:$0xf]
      %v3182 = vld [vmem:[%s3171 + $0x28] sm:$0xf]
      %v3183 = vld [vmem:[%s3171 + $0x2c] sm:$0xf]
      %v3184 = vld [vmem:[%s3171 + $0x30] sm:$0xf]
      %v3185 = vld [vmem:[%s3171 + $0x34] sm:$0xf]
      %v3186 = vld [vmem:[%s3171 + $0x38] sm:$0xf]
      %v3187 = vld [vmem:[%s3171 + $0x3c] sm:$0xf]
      %v3204 = vunpack.c.l.b16 %v3172
      %v3205 = vunpack.c.l.b16 %v3173
      %v3206 = vunpack.c.l.b16 %v3174
      %v3207 = vunpack.c.l.b16 %v3175
      %v3208 = vunpack.c.l.b16 %v3176
      %v3209 = vunpack.c.l.b16 %v3177
      %v3210 = vunpack.c.l.b16 %v3178
      %v3211 = vunpack.c.l.b16 %v3179
      %v3212 = vunpack.c.l.b16 %v3180
      %v3213 = vunpack.c.l.b16 %v3181
      %v3214 = vunpack.c.l.b16 %v3182
      %v3215 = vunpack.c.l.b16 %v3183
      %v3216 = vunpack.c.l.b16 %v3184
      %v3217 = vunpack.c.l.b16 %v3185
      %v3218 = vunpack.c.l.b16 %v3186
      %v3219 = vunpack.c.l.b16 %v3187
      %v3220 = vpack.c.b16 %v3205, %v3204
      %v3221 = vpack.c.b16 %v3207, %v3206
      %v3222 = vpack.c.b16 %v3209, %v3208
      %v3223 = vpack.c.b16 %v3211, %v3210
      %v3224 = vpack.c.b16 %v3213, %v3212
      %v3225 = vpack.c.b16 %v3215, %v3214
      %v3226 = vpack.c.b16 %v3217, %v3216
      %v3227 = vpack.c.b16 %v3219, %v3218
      %3236 = vmatpush.bf16.msra.mxu0 %v3227
      %3237 = vmatpush.bf16.msra.mxu0 %v3226
      %3238 = vmatpush.bf16.msra.mxu0 %v3225
      %3239 = vmatpush.bf16.msra.mxu0 %v3224
      %3240 = vmatpush.bf16.msra.mxu0 %v3223
      %3241 = vmatpush.bf16.msra.mxu0 %v3222
      %3242 = vmatpush.bf16.msra.mxu0 %v3221
      %3243 = vmatpush.bf16.msra.mxu0 %v3220
      %3244 = vmatmul.bf16.gmra.mxu0 %v3170
      %v3245 = vpop.f32.mrf.mxu0
      %v3246 = vadd.f32 0.0, %v3245
      %v3247 = vpop.f32.mrf.mxu0
      %v3248 = vadd.f32 0.0, %v3247
      %3249 = vdwg.mxu0
      %v3250 = vadd.f32 %v3148, %v3246
      %v3251 = vadd.f32 %v3149, %v3248
      %v3252 = vld [vmem:[%s3150 + $0x1] sm:$0xf]
      %v3253 = vld [vmem:[%s3150 + $0x9] sm:$0xf]
      %v3254 = vld [vmem:[%s3150 + $0x11] sm:$0xf]
      %v3255 = vld [vmem:[%s3150 + $0x19] sm:$0xf]
      %3260 = vst [vmem:[#allocation1] ss:$2 sm:$0xff] %v3252
      %s3261 = scalar_lea.vmem [#allocation1], 1
      %3262 = vst [vmem:[%s3261] ss:$2 sm:$0xff] %v3253
      %s3263 = scalar_lea.vmem [#allocation1], 16
      %3264 = vst [vmem:[%s3263] ss:$2 sm:$0xff] %v3254
      %s3265 = scalar_lea.vmem [#allocation1], 17
      %3266 = vst [vmem:[%s3265] ss:$2 sm:$0xff] %v3255
      %v3267 = vld.sshfl [vmem:[#allocation1] sm:$0xff pattern:$0x75316420]
      %v3268 = vld.sshfl [vmem:[#allocation1 + $0x10] sm:$0xff pattern:$0x75316420]
      %v3271 = vpack.c.bf16 %v3268, %v3267
      %s3272 = scalar_lea.vmem %s11, 448
      %v3273 = vld [vmem:[%s3272] sm:$0xf]
      %v3274 = vld [vmem:[%s3272 + $0x4] sm:$0xf]
      %v3275 = vld [vmem:[%s3272 + $0x8] sm:$0xf]
      %v3276 = vld [vmem:[%s3272 + $0xc] sm:$0xf]
      %v3277 = vld [vmem:[%s3272 + $0x10] sm:$0xf]
      %v3278 = vld [vmem:[%s3272 + $0x14] sm:$0xf]
      %v3279 = vld [vmem:[%s3272 + $0x18] sm:$0xf]
      %v3280 = vld [vmem:[%s3272 + $0x1c] sm:$0xf]
      %v3281 = vld [vmem:[%s3272 + $0x20] sm:$0xf]
      %v3282 = vld [vmem:[%s3272 + $0x24] sm:$0xf]
      %v3283 = vld [vmem:[%s3272 + $0x28] sm:$0xf]
      %v3284 = vld [vmem:[%s3272 + $0x2c] sm:$0xf]
      %v3285 = vld [vmem:[%s3272 + $0x30] sm:$0xf]
      %v3286 = vld [vmem:[%s3272 + $0x34] sm:$0xf]
      %v3287 = vld [vmem:[%s3272 + $0x38] sm:$0xf]
      %v3288 = vld [vmem:[%s3272 + $0x3c] sm:$0xf]
      %v3305 = vunpack.c.l.b16 %v3273
      %v3306 = vunpack.c.l.b16 %v3274
      %v3307 = vunpack.c.l.b16 %v3275
      %v3308 = vunpack.c.l.b16 %v3276
      %v3309 = vunpack.c.l.b16 %v3277
      %v3310 = vunpack.c.l.b16 %v3278
      %v3311 = vunpack.c.l.b16 %v3279
      %v3312 = vunpack.c.l.b16 %v3280
      %v3313 = vunpack.c.l.b16 %v3281
      %v3314 = vunpack.c.l.b16 %v3282
      %v3315 = vunpack.c.l.b16 %v3283
      %v3316 = vunpack.c.l.b16 %v3284
      %v3317 = vunpack.c.l.b16 %v3285
      %v3318 = vunpack.c.l.b16 %v3286
      %v3319 = vunpack.c.l.b16 %v3287
      %v3320 = vunpack.c.l.b16 %v3288
      %v3321 = vpack.c.b16 %v3306, %v3305
      %v3322 = vpack.c.b16 %v3308, %v3307
      %v3323 = vpack.c.b16 %v3310, %v3309
      %v3324 = vpack.c.b16 %v3312, %v3311
      %v3325 = vpack.c.b16 %v3314, %v3313
      %v3326 = vpack.c.b16 %v3316, %v3315
      %v3327 = vpack.c.b16 %v3318, %v3317
      %v3328 = vpack.c.b16 %v3320, %v3319
      %3337 = vmatpush.bf16.msra.mxu0 %v3328
      %3338 = vmatpush.bf16.msra.mxu0 %v3327
      %3339 = vmatpush.bf16.msra.mxu0 %v3326
      %3340 = vmatpush.bf16.msra.mxu0 %v3325
      %3341 = vmatpush.bf16.msra.mxu0 %v3324
      %3342 = vmatpush.bf16.msra.mxu0 %v3323
      %3343 = vmatpush.bf16.msra.mxu0 %v3322
      %3344 = vmatpush.bf16.msra.mxu0 %v3321
      %3345 = vmatmul.bf16.gmra.mxu0 %v3271
      %v3346 = vpop.f32.mrf.mxu0
      %v3347 = vadd.f32 0.0, %v3346
      %v3348 = vpop.f32.mrf.mxu0
      %v3349 = vadd.f32 0.0, %v3348
      %3350 = vdwg.mxu0
      %v3351 = vadd.f32 %v3250, %v3347
      %v3352 = vadd.f32 %v3251, %v3349
      %v3353 = vld [vmem:[%s3150 + $0x2] sm:$0xf]
      %v3354 = vld [vmem:[%s3150 + $0xa] sm:$0xf]
      %v3355 = vld [vmem:[%s3150 + $0x12] sm:$0xf]
      %v3356 = vld [vmem:[%s3150 + $0x1a] sm:$0xf]
      %3361 = vst [vmem:[#allocation1] ss:$2 sm:$0xff] %v3353
      %s3362 = scalar_lea.vmem [#allocation1], 1
      %3363 = vst [vmem:[%s3362] ss:$2 sm:$0xff] %v3354
      %s3364 = scalar_lea.vmem [#allocation1], 16
      %3365 = vst [vmem:[%s3364] ss:$2 sm:$0xff] %v3355
      %s3366 = scalar_lea.vmem [#allocation1], 17
      %3367 = vst [vmem:[%s3366] ss:$2 sm:$0xff] %v3356
      %v3368 = vld.sshfl [vmem:[#allocation1] sm:$0xff pattern:$0x75316420]
      %v3369 = vld.sshfl [vmem:[#allocation1 + $0x10] sm:$0xff pattern:$0x75316420]
      %v3372 = vpack.c.bf16 %v3369, %v3368
      %s3373 = scalar_lea.vmem %s11, 512
      %v3374 = vld [vmem:[%s3373] sm:$0xf]
      %v3375 = vld [vmem:[%s3373 + $0x4] sm:$0xf]
      %v3376 = vld [vmem:[%s3373 + $0x8] sm:$0xf]
      %v3377 = vld [vmem:[%s3373 + $0xc] sm:$0xf]
      %v3378 = vld [vmem:[%s3373 + $0x10] sm:$0xf]
      %v3379 = vld [vmem:[%s3373 + $0x14] sm:$0xf]
      %v3380 = vld [vmem:[%s3373 + $0x18] sm:$0xf]
      %v3381 = vld [vmem:[%s3373 + $0x1c] sm:$0xf]
      %v3382 = vld [vmem:[%s3373 + $0x20] sm:$0xf]
      %v3383 = vld [vmem:[%s3373 + $0x24] sm:$0xf]
      %v3384 = vld [vmem:[%s3373 + $0x28] sm:$0xf]
      %v3385 = vld [vmem:[%s3373 + $0x2c] sm:$0xf]
      %v3386 = vld [vmem:[%s3373 + $0x30] sm:$0xf]
      %v3387 = vld [vmem:[%s3373 + $0x34] sm:$0xf]
      %v3388 = vld [vmem:[%s3373 + $0x38] sm:$0xf]
      %v3389 = vld [vmem:[%s3373 + $0x3c] sm:$0xf]
      %v3406 = vunpack.c.l.b16 %v3374
      %v3407 = vunpack.c.l.b16 %v3375
      %v3408 = vunpack.c.l.b16 %v3376
      %v3409 = vunpack.c.l.b16 %v3377
      %v3410 = vunpack.c.l.b16 %v3378
      %v3411 = vunpack.c.l.b16 %v3379
      %v3412 = vunpack.c.l.b16 %v3380
      %v3413 = vunpack.c.l.b16 %v3381
      %v3414 = vunpack.c.l.b16 %v3382
      %v3415 = vunpack.c.l.b16 %v3383
      %v3416 = vunpack.c.l.b16 %v3384
      %v3417 = vunpack.c.l.b16 %v3385
      %v3418 = vunpack.c.l.b16 %v3386
      %v3419 = vunpack.c.l.b16 %v3387
      %v3420 = vunpack.c.l.b16 %v3388
      %v3421 = vunpack.c.l.b16 %v3389
      %v3422 = vpack.c.b16 %v3407, %v3406
      %v3423 = vpack.c.b16 %v3409, %v3408
      %v3424 = vpack.c.b16 %v3411, %v3410
      %v3425 = vpack.c.b16 %v3413, %v3412
      %v3426 = vpack.c.b16 %v3415, %v3414
      %v3427 = vpack.c.b16 %v3417, %v3416
      %v3428 = vpack.c.b16 %v3419, %v3418
      %v3429 = vpack.c.b16 %v3421, %v3420
      %3438 = vmatpush.bf16.msra.mxu0 %v3429
      %3439 = vmatpush.bf16.msra.mxu0 %v3428
      %3440 = vmatpush.bf16.msra.mxu0 %v3427
      %3441 = vmatpush.bf16.msra.mxu0 %v3426
      %3442 = vmatpush.bf16.msra.mxu0 %v3425
      %3443 = vmatpush.bf16.msra.mxu0 %v3424
      %3444 = vmatpush.bf16.msra.mxu0 %v3423
      %3445 = vmatpush.bf16.msra.mxu0 %v3422
      %3446 = vmatmul.bf16.gmra.mxu0 %v3372
      %v3447 = vpop.f32.mrf.mxu0
      %v3448 = vadd.f32 0.0, %v3447
      %v3449 = vpop.f32.mrf.mxu0
      %v3450 = vadd.f32 0.0, %v3449
      %3451 = vdwg.mxu0
      %v3452 = vadd.f32 %v3351, %v3448
      %v3453 = vadd.f32 %v3352, %v3450
      %v3454 = vld [vmem:[%s12] sm:$0x1]
      %v3456 = vperm.slane %v3454, 0
      %v3458 = vadd.f32 %v3452, %v3456
      %v3459 = vadd.f32 %v3453, %v3456
      %3460 = vst [vmem:[%s651] sm:$0xff] %v3458
      %3461 = vst [vmem:[%s651 + $0x8] sm:$0xff] %v3459
      %v3462 = vld [vmem:[#allocation4] sm:$0xf]
      %v3463 = vld [vmem:[#allocation4 + $0x8] sm:$0xf]
      %v3464 = vld [vmem:[#allocation4 + $0x10] sm:$0xf]
      %v3465 = vld [vmem:[#allocation4 + $0x18] sm:$0xf]
      %3470 = vst [vmem:[#allocation1] ss:$2 sm:$0xff] %v3462
      %s3471 = scalar_lea.vmem [#allocation1], 1
      %3472 = vst [vmem:[%s3471] ss:$2 sm:$0xff] %v3463
      %s3473 = scalar_lea.vmem [#allocation1], 16
      %3474 = vst [vmem:[%s3473] ss:$2 sm:$0xff] %v3464
      %s3475 = scalar_lea.vmem [#allocation1], 17
      %3476 = vst [vmem:[%s3475] ss:$2 sm:$0xff] %v3465
      %v3477 = vld.sshfl [vmem:[#allocation1] sm:$0xff pattern:$0x75316420]
      %v3478 = vld.sshfl [vmem:[#allocation1 + $0x10] sm:$0xff pattern:$0x75316420]
      %v3481 = vpack.c.bf16 %v3478, %v3477
      %v3482 = vld [vmem:[%s5] sm:$0xff]
      %v3483 = vld [vmem:[%s5 + $0x8] sm:$0xff]
      %v3484 = vld [vmem:[%s5 + $0x10] sm:$0xff]
      %v3485 = vld [vmem:[%s5 + $0x18] sm:$0xff]
      %v3486 = vld [vmem:[%s5 + $0x20] sm:$0xff]
      %v3487 = vld [vmem:[%s5 + $0x28] sm:$0xff]
      %v3488 = vld [vmem:[%s5 + $0x30] sm:$0xff]
      %v3489 = vld [vmem:[%s5 + $0x38] sm:$0xff]
      %v3490 = vld [vmem:[%s5 + $0x40] sm:$0xff]
      %v3491 = vld [vmem:[%s5 + $0x48] sm:$0xff]
      %v3492 = vld [vmem:[%s5 + $0x50] sm:$0xff]
      %v3493 = vld [vmem:[%s5 + $0x58] sm:$0xff]
      %v3494 = vld [vmem:[%s5 + $0x60] sm:$0xff]
      %v3495 = vld [vmem:[%s5 + $0x68] sm:$0xff]
      %v3496 = vld [vmem:[%s5 + $0x70] sm:$0xff]
      %v3497 = vld [vmem:[%s5 + $0x78] sm:$0xff]
      %v3498 = vld [vmem:[#allocation4 + $0x1] sm:$0xf]
      %v3499 = vld [vmem:[#allocation4 + $0x9] sm:$0xf]
      %v3500 = vld [vmem:[#allocation4 + $0x11] sm:$0xf]
      %v3501 = vld [vmem:[#allocation4 + $0x19] sm:$0xf]
      %3506 = vst [vmem:[#allocation1] ss:$2 sm:$0xff] %v3498
      %s3507 = scalar_lea.vmem [#allocation1], 1
      %3508 = vst [vmem:[%s3507] ss:$2 sm:$0xff] %v3499
      %s3509 = scalar_lea.vmem [#allocation1], 16
      %3510 = vst [vmem:[%s3509] ss:$2 sm:$0xff] %v3500
      %s3511 = scalar_lea.vmem [#allocation1], 17
      %3512 = vst [vmem:[%s3511] ss:$2 sm:$0xff] %v3501
      %v3513 = vld.sshfl [vmem:[#allocation1] sm:$0xff pattern:$0x75316420]
      %v3514 = vld.sshfl [vmem:[#allocation1 + $0x10] sm:$0xff pattern:$0x75316420]
      %v3517 = vpack.c.bf16 %v3514, %v3513
      %s3518 = scalar_lea.vmem %s5, 128
      %v3519 = vld [vmem:[%s3518] sm:$0xff]
      %v3520 = vld [vmem:[%s3518 + $0x8] sm:$0xff]
      %v3521 = vld [vmem:[%s3518 + $0x10] sm:$0xff]
      %v3522 = vld [vmem:[%s3518 + $0x18] sm:$0xff]
      %v3523 = vld [vmem:[%s3518 + $0x20] sm:$0xff]
      %v3524 = vld [vmem:[%s3518 + $0x28] sm:$0xff]
      %v3525 = vld [vmem:[%s3518 + $0x30] sm:$0xff]
      %v3526 = vld [vmem:[%s3518 + $0x38] sm:$0xff]
      %v3527 = vld [vmem:[%s3518 + $0x40] sm:$0xff]
      %v3528 = vld [vmem:[%s3518 + $0x48] sm:$0xff]
      %v3529 = vld [vmem:[%s3518 + $0x50] sm:$0xff]
      %v3530 = vld [vmem:[%s3518 + $0x58] sm:$0xff]
      %v3531 = vld [vmem:[%s3518 + $0x60] sm:$0xff]
      %v3532 = vld [vmem:[%s3518 + $0x68] sm:$0xff]
      %v3533 = vld [vmem:[%s3518 + $0x70] sm:$0xff]
      %v3534 = vld [vmem:[%s3518 + $0x78] sm:$0xff]
      %v3551 = vunpack.c.l.b16 %v3519
      %v3552 = vunpack.c.h.b16 %v3519
      %v3553 = vunpack.c.l.b16 %v3520
      %v3554 = vunpack.c.h.b16 %v3520
      %v3555 = vunpack.c.l.b16 %v3521
      %v3556 = vunpack.c.h.b16 %v3521
      %v3557 = vunpack.c.l.b16 %v3522
      %v3558 = vunpack.c.h.b16 %v3522
      %v3559 = vunpack.c.l.b16 %v3523
      %v3560 = vunpack.c.h.b16 %v3523
      %v3561 = vunpack.c.l.b16 %v3524
      %v3562 = vunpack.c.h.b16 %v3524
      %v3563 = vunpack.c.l.b16 %v3525
      %v3564 = vunpack.c.h.b16 %v3525
      %v3565 = vunpack.c.l.b16 %v3526
      %v3566 = vunpack.c.h.b16 %v3526
      %v3567 = vunpack.c.l.b16 %v3527
      %v3568 = vunpack.c.h.b16 %v3527
      %v3569 = vunpack.c.l.b16 %v3528
      %v3570 = vunpack.c.h.b16 %v3528
      %v3571 = vunpack.c.l.b16 %v3529
      %v3572 = vunpack.c.h.b16 %v3529
      %v3573 = vunpack.c.l.b16 %v3530
      %v3574 = vunpack.c.h.b16 %v3530
      %v3575 = vunpack.c.l.b16 %v3531
      %v3576 = vunpack.c.h.b16 %v3531
      %v3577 = vunpack.c.l.b16 %v3532
      %v3578 = vunpack.c.h.b16 %v3532
      %v3579 = vunpack.c.l.b16 %v3533
      %v3580 = vunpack.c.h.b16 %v3533
      %v3581 = vunpack.c.l.b16 %v3534
      %v3582 = vunpack.c.h.b16 %v3534
      %v3583 = vpack.c.b16 %v3553, %v3551
      %v3584 = vpack.c.b16 %v3554, %v3552
      %v3585 = vpack.c.b16 %v3557, %v3555
      %v3586 = vpack.c.b16 %v3558, %v3556
      %v3587 = vpack.c.b16 %v3561, %v3559
      %v3588 = vpack.c.b16 %v3562, %v3560
      %v3589 = vpack.c.b16 %v3565, %v3563
      %v3590 = vpack.c.b16 %v3566, %v3564
      %v3591 = vpack.c.b16 %v3569, %v3567
      %v3592 = vpack.c.b16 %v3570, %v3568
      %v3593 = vpack.c.b16 %v3573, %v3571
      %v3594 = vpack.c.b16 %v3574, %v3572
      %v3595 = vpack.c.b16 %v3577, %v3575
      %v3596 = vpack.c.b16 %v3578, %v3576
      %v3597 = vpack.c.b16 %v3581, %v3579
      %v3598 = vpack.c.b16 %v3582, %v3580
      %3615 = vmatpush.bf16.msra.mxu0 %v3597
      %3616 = vmatpush.bf16.msra.mxu0 %v3595
      %3617 = vmatpush.bf16.msra.mxu0 %v3593
      %3618 = vmatpush.bf16.msra.mxu0 %v3591
      %3619 = vmatpush.bf16.msra.mxu0 %v3589
      %3620 = vmatpush.bf16.msra.mxu0 %v3587
      %3621 = vmatpush.bf16.msra.mxu0 %v3585
      %3622 = vmatpush.bf16.msra.mxu0 %v3583
      %3623 = vmatmul.bf16.gmra.mxu0 %v3517
      %v3624 = vpop.f32.mrf.mxu0
      %v3625 = vadd.f32 0.0, %v3624
      %v3626 = vpop.f32.mrf.mxu0
      %v3627 = vadd.f32 0.0, %v3626
      %3628 = vdwg.mxu0
      %3629 = vmatpush.bf16.msra.mxu0 %v3598
      %3630 = vmatpush.bf16.msra.mxu0 %v3596
      %3631 = vmatpush.bf16.msra.mxu0 %v3594
      %3632 = vmatpush.bf16.msra.mxu0 %v3592
      %3633 = vmatpush.bf16.msra.mxu0 %v3590
      %3634 = vmatpush.bf16.msra.mxu0 %v3588
      %3635 = vmatpush.bf16.msra.mxu0 %v3586
      %3636 = vmatpush.bf16.msra.mxu0 %v3584
      %3637 = vmatmul.bf16.gmra.mxu0 %v3517
      %v3638 = vpop.f32.mrf.mxu0
      %v3639 = vadd.f32 0.0, %v3638
      %v3640 = vpop.f32.mrf.mxu0
      %v3641 = vadd.f32 0.0, %v3640
      %3642 = vdwg.mxu0
      %v3659 = vunpack.c.l.b16 %v3482
      %v3660 = vunpack.c.h.b16 %v3482
      %v3661 = vunpack.c.l.b16 %v3483
      %v3662 = vunpack.c.h.b16 %v3483
      %v3663 = vunpack.c.l.b16 %v3484
      %v3664 = vunpack.c.h.b16 %v3484
      %v3665 = vunpack.c.l.b16 %v3485
      %v3666 = vunpack.c.h.b16 %v3485
      %v3667 = vunpack.c.l.b16 %v3486
      %v3668 = vunpack.c.h.b16 %v3486
      %v3669 = vunpack.c.l.b16 %v3487
      %v3670 = vunpack.c.h.b16 %v3487
      %v3671 = vunpack.c.l.b16 %v3488
      %v3672 = vunpack.c.h.b16 %v3488
      %v3673 = vunpack.c.l.b16 %v3489
      %v3674 = vunpack.c.h.b16 %v3489
      %v3675 = vunpack.c.l.b16 %v3490
      %v3676 = vunpack.c.h.b16 %v3490
      %v3677 = vunpack.c.l.b16 %v3491
      %v3678 = vunpack.c.h.b16 %v3491
      %v3679 = vunpack.c.l.b16 %v3492
      %v3680 = vunpack.c.h.b16 %v3492
      %v3681 = vunpack.c.l.b16 %v3493
      %v3682 = vunpack.c.h.b16 %v3493
      %v3683 = vunpack.c.l.b16 %v3494
      %v3684 = vunpack.c.h.b16 %v3494
      %v3685 = vunpack.c.l.b16 %v3495
      %v3686 = vunpack.c.h.b16 %v3495
      %v3687 = vunpack.c.l.b16 %v3496
      %v3688 = vunpack.c.h.b16 %v3496
      %v3689 = vunpack.c.l.b16 %v3497
      %v3690 = vunpack.c.h.b16 %v3497
      %v3691 = vpack.c.b16 %v3661, %v3659
      %v3692 = vpack.c.b16 %v3662, %v3660
      %v3693 = vpack.c.b16 %v3665, %v3663
      %v3694 = vpack.c.b16 %v3666, %v3664
      %v3695 = vpack.c.b16 %v3669, %v3667
      %v3696 = vpack.c.b16 %v3670, %v3668
      %v3697 = vpack.c.b16 %v3673, %v3671
      %v3698 = vpack.c.b16 %v3674, %v3672
      %v3699 = vpack.c.b16 %v3677, %v3675
      %v3700 = vpack.c.b16 %v3678, %v3676
      %v3701 = vpack.c.b16 %v3681, %v3679
      %v3702 = vpack.c.b16 %v3682, %v3680
      %v3703 = vpack.c.b16 %v3685, %v3683
      %v3704 = vpack.c.b16 %v3686, %v3684
      %v3705 = vpack.c.b16 %v3689, %v3687
      %v3706 = vpack.c.b16 %v3690, %v3688
      %3723 = vmatpush.bf16.msra.mxu0 %v3705
      %3724 = vmatpush.bf16.msra.mxu0 %v3703
      %3725 = vmatpush.bf16.msra.mxu0 %v3701
      %3726 = vmatpush.bf16.msra.mxu0 %v3699
      %3727 = vmatpush.bf16.msra.mxu0 %v3697
      %3728 = vmatpush.bf16.msra.mxu0 %v3695
      %3729 = vmatpush.bf16.msra.mxu0 %v3693
      %3730 = vmatpush.bf16.msra.mxu0 %v3691
      %3731 = vmatmul.bf16.gmra.mxu0 %v3481
      %v3732 = vpop.f32.mrf.mxu0
      %v3733 = vadd.f32 %v3625, %v3732
      %v3734 = vpop.f32.mrf.mxu0
      %v3735 = vadd.f32 %v3627, %v3734
      %3736 = vdwg.mxu0
      %3737 = vmatpush.bf16.msra.mxu0 %v3706
      %3738 = vmatpush.bf16.msra.mxu0 %v3704
      %3739 = vmatpush.bf16.msra.mxu0 %v3702
      %3740 = vmatpush.bf16.msra.mxu0 %v3700
      %3741 = vmatpush.bf16.msra.mxu0 %v3698
      %3742 = vmatpush.bf16.msra.mxu0 %v3696
      %3743 = vmatpush.bf16.msra.mxu0 %v3694
      %3744 = vmatpush.bf16.msra.mxu0 %v3692
      %3745 = vmatmul.bf16.gmra.mxu0 %v3481
      %v3746 = vpop.f32.mrf.mxu0
      %v3747 = vadd.f32 %v3639, %v3746
      %v3748 = vpop.f32.mrf.mxu0
      %v3749 = vadd.f32 %v3641, %v3748
      %3750 = vdwg.mxu0
      %v3751 = vld [vmem:[#allocation4 + $0x2] sm:$0xf]
      %v3752 = vld [vmem:[#allocation4 + $0xa] sm:$0xf]
      %v3753 = vld [vmem:[#allocation4 + $0x12] sm:$0xf]
      %v3754 = vld [vmem:[#allocation4 + $0x1a] sm:$0xf]
      %3759 = vst [vmem:[#allocation1] ss:$2 sm:$0xff] %v3751
      %s3760 = scalar_lea.vmem [#allocation1], 1
      %3761 = vst [vmem:[%s3760] ss:$2 sm:$0xff] %v3752
      %s3762 = scalar_lea.vmem [#allocation1], 16
      %3763 = vst [vmem:[%s3762] ss:$2 sm:$0xff] %v3753
      %s3764 = scalar_lea.vmem [#allocation1], 17
      %3765 = vst [vmem:[%s3764] ss:$2 sm:$0xff] %v3754
      %v3766 = vld.sshfl [vmem:[#allocation1] sm:$0xff pattern:$0x75316420]
      %v3767 = vld.sshfl [vmem:[#allocation1 + $0x10] sm:$0xff pattern:$0x75316420]
      %v3770 = vpack.c.bf16 %v3767, %v3766
      %s3771 = scalar_lea.vmem %s5, 256
      %v3772 = vld [vmem:[%s3771] sm:$0xff]
      %v3773 = vld [vmem:[%s3771 + $0x8] sm:$0xff]
      %v3774 = vld [vmem:[%s3771 + $0x10] sm:$0xff]
      %v3775 = vld [vmem:[%s3771 + $0x18] sm:$0xff]
      %v3776 = vld [vmem:[%s3771 + $0x20] sm:$0xff]
      %v3777 = vld [vmem:[%s3771 + $0x28] sm:$0xff]
      %v3778 = vld [vmem:[%s3771 + $0x30] sm:$0xff]
      %v3779 = vld [vmem:[%s3771 + $0x38] sm:$0xff]
      %v3780 = vld [vmem:[%s3771 + $0x40] sm:$0xff]
      %v3781 = vld [vmem:[%s3771 + $0x48] sm:$0xff]
      %v3782 = vld [vmem:[%s3771 + $0x50] sm:$0xff]
      %v3783 = vld [vmem:[%s3771 + $0x58] sm:$0xff]
      %v3784 = vld [vmem:[%s3771 + $0x60] sm:$0xff]
      %v3785 = vld [vmem:[%s3771 + $0x68] sm:$0xff]
      %v3786 = vld [vmem:[%s3771 + $0x70] sm:$0xff]
      %v3787 = vld [vmem:[%s3771 + $0x78] sm:$0xff]
      %v3804 = vunpack.c.l.b16 %v3772
      %v3805 = vunpack.c.h.b16 %v3772
      %v3806 = vunpack.c.l.b16 %v3773
      %v3807 = vunpack.c.h.b16 %v3773
      %v3808 = vunpack.c.l.b16 %v3774
      %v3809 = vunpack.c.h.b16 %v3774
      %v3810 = vunpack.c.l.b16 %v3775
      %v3811 = vunpack.c.h.b16 %v3775
      %v3812 = vunpack.c.l.b16 %v3776
      %v3813 = vunpack.c.h.b16 %v3776
      %v3814 = vunpack.c.l.b16 %v3777
      %v3815 = vunpack.c.h.b16 %v3777
      %v3816 = vunpack.c.l.b16 %v3778
      %v3817 = vunpack.c.h.b16 %v3778
      %v3818 = vunpack.c.l.b16 %v3779
      %v3819 = vunpack.c.h.b16 %v3779
      %v3820 = vunpack.c.l.b16 %v3780
      %v3821 = vunpack.c.h.b16 %v3780
      %v3822 = vunpack.c.l.b16 %v3781
      %v3823 = vunpack.c.h.b16 %v3781
      %v3824 = vunpack.c.l.b16 %v3782
      %v3825 = vunpack.c.h.b16 %v3782
      %v3826 = vunpack.c.l.b16 %v3783
      %v3827 = vunpack.c.h.b16 %v3783
      %v3828 = vunpack.c.l.b16 %v3784
      %v3829 = vunpack.c.h.b16 %v3784
      %v3830 = vunpack.c.l.b16 %v3785
      %v3831 = vunpack.c.h.b16 %v3785
      %v3832 = vunpack.c.l.b16 %v3786
      %v3833 = vunpack.c.h.b16 %v3786
      %v3834 = vunpack.c.l.b16 %v3787
      %v3835 = vunpack.c.h.b16 %v3787
      %v3836 = vpack.c.b16 %v3806, %v3804
      %v3837 = vpack.c.b16 %v3807, %v3805
      %v3838 = vpack.c.b16 %v3810, %v3808
      %v3839 = vpack.c.b16 %v3811, %v3809
      %v3840 = vpack.c.b16 %v3814, %v3812
      %v3841 = vpack.c.b16 %v3815, %v3813
      %v3842 = vpack.c.b16 %v3818, %v3816
      %v3843 = vpack.c.b16 %v3819, %v3817
      %v3844 = vpack.c.b16 %v3822, %v3820
      %v3845 = vpack.c.b16 %v3823, %v3821
      %v3846 = vpack.c.b16 %v3826, %v3824
      %v3847 = vpack.c.b16 %v3827, %v3825
      %v3848 = vpack.c.b16 %v3830, %v3828
      %v3849 = vpack.c.b16 %v3831, %v3829
      %v3850 = vpack.c.b16 %v3834, %v3832
      %v3851 = vpack.c.b16 %v3835, %v3833
      %3868 = vmatpush.bf16.msra.mxu0 %v3850
      %3869 = vmatpush.bf16.msra.mxu0 %v3848
      %3870 = vmatpush.bf16.msra.mxu0 %v3846
      %3871 = vmatpush.bf16.msra.mxu0 %v3844
      %3872 = vmatpush.bf16.msra.mxu0 %v3842
      %3873 = vmatpush.bf16.msra.mxu0 %v3840
      %3874 = vmatpush.bf16.msra.mxu0 %v3838
      %3875 = vmatpush.bf16.msra.mxu0 %v3836
      %3876 = vmatmul.bf16.gmra.mxu0 %v3770
      %v3877 = vpop.f32.mrf.mxu0
      %v3878 = vadd.f32 0.0, %v3877
      %v3879 = vpop.f32.mrf.mxu0
      %v3880 = vadd.f32 0.0, %v3879
      %3881 = vdwg.mxu0
      %3882 = vmatpush.bf16.msra.mxu0 %v3851
      %3883 = vmatpush.bf16.msra.mxu0 %v3849
      %3884 = vmatpush.bf16.msra.mxu0 %v3847
      %3885 = vmatpush.bf16.msra.mxu0 %v3845
      %3886 = vmatpush.bf16.msra.mxu0 %v3843
      %3887 = vmatpush.bf16.msra.mxu0 %v3841
      %3888 = vmatpush.bf16.msra.mxu0 %v3839
      %3889 = vmatpush.bf16.msra.mxu0 %v3837
      %3890 = vmatmul.bf16.gmra.mxu0 %v3770
      %v3891 = vpop.f32.mrf.mxu0
      %v3892 = vadd.f32 0.0, %v3891
      %v3893 = vpop.f32.mrf.mxu0
      %v3894 = vadd.f32 0.0, %v3893
      %3895 = vdwg.mxu0
      %v3896 = vadd.f32 %v3733, %v3878
      %v3897 = vadd.f32 %v3747, %v3892
      %v3898 = vadd.f32 %v3735, %v3880
      %v3899 = vadd.f32 %v3749, %v3894
      %v3900 = vld [vmem:[%s2544] sm:$0xf]
      %v3901 = vld [vmem:[%s2544 + $0x8] sm:$0xf]
      %v3902 = vld [vmem:[%s2544 + $0x10] sm:$0xf]
      %v3903 = vld [vmem:[%s2544 + $0x18] sm:$0xf]
      %3908 = vst [vmem:[#allocation1] ss:$2 sm:$0xff] %v3900
      %s3909 = scalar_lea.vmem [#allocation1], 1
      %3910 = vst [vmem:[%s3909] ss:$2 sm:$0xff] %v3901
      %s3911 = scalar_lea.vmem [#allocation1], 16
      %3912 = vst [vmem:[%s3911] ss:$2 sm:$0xff] %v3902
      %s3913 = scalar_lea.vmem [#allocation1], 17
      %3914 = vst [vmem:[%s3913] ss:$2 sm:$0xff] %v3903
      %v3915 = vld.sshfl [vmem:[#allocation1] sm:$0xff pattern:$0x75316420]
      %v3916 = vld.sshfl [vmem:[#allocation1 + $0x10] sm:$0xff pattern:$0x75316420]
      %v3919 = vpack.c.bf16 %v3916, %v3915
      %s3920 = scalar_lea.vmem %s5, 384
      %v3921 = vld [vmem:[%s3920] sm:$0xff]
      %v3922 = vld [vmem:[%s3920 + $0x8] sm:$0xff]
      %v3923 = vld [vmem:[%s3920 + $0x10] sm:$0xff]
      %v3924 = vld [vmem:[%s3920 + $0x18] sm:$0xff]
      %v3925 = vld [vmem:[%s3920 + $0x20] sm:$0xff]
      %v3926 = vld [vmem:[%s3920 + $0x28] sm:$0xff]
      %v3927 = vld [vmem:[%s3920 + $0x30] sm:$0xff]
      %v3928 = vld [vmem:[%s3920 + $0x38] sm:$0xff]
      %v3929 = vld [vmem:[%s3920 + $0x40] sm:$0xff]
      %v3930 = vld [vmem:[%s3920 + $0x48] sm:$0xff]
      %v3931 = vld [vmem:[%s3920 + $0x50] sm:$0xff]
      %v3932 = vld [vmem:[%s3920 + $0x58] sm:$0xff]
      %v3933 = vld [vmem:[%s3920 + $0x60] sm:$0xff]
      %v3934 = vld [vmem:[%s3920 + $0x68] sm:$0xff]
      %v3935 = vld [vmem:[%s3920 + $0x70] sm:$0xff]
      %v3936 = vld [vmem:[%s3920 + $0x78] sm:$0xff]
      %v3953 = vunpack.c.l.b16 %v3921
      %v3954 = vunpack.c.h.b16 %v3921
      %v3955 = vunpack.c.l.b16 %v3922
      %v3956 = vunpack.c.h.b16 %v3922
      %v3957 = vunpack.c.l.b16 %v3923
      %v3958 = vunpack.c.h.b16 %v3923
      %v3959 = vunpack.c.l.b16 %v3924
      %v3960 = vunpack.c.h.b16 %v3924
      %v3961 = vunpack.c.l.b16 %v3925
      %v3962 = vunpack.c.h.b16 %v3925
      %v3963 = vunpack.c.l.b16 %v3926
      %v3964 = vunpack.c.h.b16 %v3926
      %v3965 = vunpack.c.l.b16 %v3927
      %v3966 = vunpack.c.h.b16 %v3927
      %v3967 = vunpack.c.l.b16 %v3928
      %v3968 = vunpack.c.h.b16 %v3928
      %v3969 = vunpack.c.l.b16 %v3929
      %v3970 = vunpack.c.h.b16 %v3929
      %v3971 = vunpack.c.l.b16 %v3930
      %v3972 = vunpack.c.h.b16 %v3930
      %v3973 = vunpack.c.l.b16 %v3931
      %v3974 = vunpack.c.h.b16 %v3931
      %v3975 = vunpack.c.l.b16 %v3932
      %v3976 = vunpack.c.h.b16 %v3932
      %v3977 = vunpack.c.l.b16 %v3933
      %v3978 = vunpack.c.h.b16 %v3933
      %v3979 = vunpack.c.l.b16 %v3934
      %v3980 = vunpack.c.h.b16 %v3934
      %v3981 = vunpack.c.l.b16 %v3935
      %v3982 = vunpack.c.h.b16 %v3935
      %v3983 = vunpack.c.l.b16 %v3936
      %v3984 = vunpack.c.h.b16 %v3936
      %v3985 = vpack.c.b16 %v3955, %v3953
      %v3986 = vpack.c.b16 %v3956, %v3954
      %v3987 = vpack.c.b16 %v3959, %v3957
      %v3988 = vpack.c.b16 %v3960, %v3958
      %v3989 = vpack.c.b16 %v3963, %v3961
      %v3990 = vpack.c.b16 %v3964, %v3962
      %v3991 = vpack.c.b16 %v3967, %v3965
      %v3992 = vpack.c.b16 %v3968, %v3966
      %v3993 = vpack.c.b16 %v3971, %v3969
      %v3994 = vpack.c.b16 %v3972, %v3970
      %v3995 = vpack.c.b16 %v3975, %v3973
      %v3996 = vpack.c.b16 %v3976, %v3974
      %v3997 = vpack.c.b16 %v3979, %v3977
      %v3998 = vpack.c.b16 %v3980, %v3978
      %v3999 = vpack.c.b16 %v3983, %v3981
      %v4000 = vpack.c.b16 %v3984, %v3982
      %4017 = vmatpush.bf16.msra.mxu0 %v3999
      %4018 = vmatpush.bf16.msra.mxu0 %v3997
      %4019 = vmatpush.bf16.msra.mxu0 %v3995
      %4020 = vmatpush.bf16.msra.mxu0 %v3993
      %4021 = vmatpush.bf16.msra.mxu0 %v3991
      %4022 = vmatpush.bf16.msra.mxu0 %v3989
      %4023 = vmatpush.bf16.msra.mxu0 %v3987
      %4024 = vmatpush.bf16.msra.mxu0 %v3985
      %4025 = vmatmul.bf16.gmra.mxu0 %v3919
      %v4026 = vpop.f32.mrf.mxu0
      %v4027 = vadd.f32 0.0, %v4026
      %v4028 = vpop.f32.mrf.mxu0
      %v4029 = vadd.f32 0.0, %v4028
      %4030 = vdwg.mxu0
      %4031 = vmatpush.bf16.msra.mxu0 %v4000
      %4032 = vmatpush.bf16.msra.mxu0 %v3998
      %4033 = vmatpush.bf16.msra.mxu0 %v3996
      %4034 = vmatpush.bf16.msra.mxu0 %v3994
      %4035 = vmatpush.bf16.msra.mxu0 %v3992
      %4036 = vmatpush.bf16.msra.mxu0 %v3990
      %4037 = vmatpush.bf16.msra.mxu0 %v3988
      %4038 = vmatpush.bf16.msra.mxu0 %v3986
      %4039 = vmatmul.bf16.gmra.mxu0 %v3919
      %v4040 = vpop.f32.mrf.mxu0
      %v4041 = vadd.f32 0.0, %v4040
      %v4042 = vpop.f32.mrf.mxu0
      %v4043 = vadd.f32 0.0, %v4042
      %4044 = vdwg.mxu0
      %v4045 = vadd.f32 %v3896, %v4027
      %v4046 = vadd.f32 %v3897, %v4041
      %v4047 = vadd.f32 %v3898, %v4029
      %v4048 = vadd.f32 %v3899, %v4043
      %v4049 = vld [vmem:[%s2544 + $0x1] sm:$0xf]
      %v4050 = vld [vmem:[%s2544 + $0x9] sm:$0xf]
      %v4051 = vld [vmem:[%s2544 + $0x11] sm:$0xf]
      %v4052 = vld [vmem:[%s2544 + $0x19] sm:$0xf]
      %4057 = vst [vmem:[#allocation1] ss:$2 sm:$0xff] %v4049
      %s4058 = scalar_lea.vmem [#allocation1], 1
      %4059 = vst [vmem:[%s4058] ss:$2 sm:$0xff] %v4050
      %s4060 = scalar_lea.vmem [#allocation1], 16
      %4061 = vst [vmem:[%s4060] ss:$2 sm:$0xff] %v4051
      %s4062 = scalar_lea.vmem [#allocation1], 17
      %4063 = vst [vmem:[%s4062] ss:$2 sm:$0xff] %v4052
      %v4064 = vld.sshfl [vmem:[#allocation1] sm:$0xff pattern:$0x75316420]
      %v4065 = vld.sshfl [vmem:[#allocation1 + $0x10] sm:$0xff pattern:$0x75316420]
      %v4068 = vpack.c.bf16 %v4065, %v4064
      %s4069 = scalar_lea.vmem %s5, 512
      %v4070 = vld [vmem:[%s4069] sm:$0xff]
      %v4071 = vld [vmem:[%s4069 + $0x8] sm:$0xff]
      %v4072 = vld [vmem:[%s4069 + $0x10] sm:$0xff]
      %v4073 = vld [vmem:[%s4069 + $0x18] sm:$0xff]
      %v4074 = vld [vmem:[%s4069 + $0x20] sm:$0xff]
      %v4075 = vld [vmem:[%s4069 + $0x28] sm:$0xff]
      %v4076 = vld [vmem:[%s4069 + $0x30] sm:$0xff]
      %v4077 = vld [vmem:[%s4069 + $0x38] sm:$0xff]
      %v4078 = vld [vmem:[%s4069 + $0x40] sm:$0xff]
      %v4079 = vld [vmem:[%s4069 + $0x48] sm:$0xff]
      %v4080 = vld [vmem:[%s4069 + $0x50] sm:$0xff]
      %v4081 = vld [vmem:[%s4069 + $0x58] sm:$0xff]
      %v4082 = vld [vmem:[%s4069 + $0x60] sm:$0xff]
      %v4083 = vld [vmem:[%s4069 + $0x68] sm:$0xff]
      %v4084 = vld [vmem:[%s4069 + $0x70] sm:$0xff]
      %v4085 = vld [vmem:[%s4069 + $0x78] sm:$0xff]
      %v4102 = vunpack.c.l.b16 %v4070
      %v4103 = vunpack.c.h.b16 %v4070
      %v4104 = vunpack.c.l.b16 %v4071
      %v4105 = vunpack.c.h.b16 %v4071
      %v4106 = vunpack.c.l.b16 %v4072
      %v4107 = vunpack.c.h.b16 %v4072
      %v4108 = vunpack.c.l.b16 %v4073
      %v4109 = vunpack.c.h.b16 %v4073
      %v4110 = vunpack.c.l.b16 %v4074
      %v4111 = vunpack.c.h.b16 %v4074
      %v4112 = vunpack.c.l.b16 %v4075
      %v4113 = vunpack.c.h.b16 %v4075
      %v4114 = vunpack.c.l.b16 %v4076
      %v4115 = vunpack.c.h.b16 %v4076
      %v4116 = vunpack.c.l.b16 %v4077
      %v4117 = vunpack.c.h.b16 %v4077
      %v4118 = vunpack.c.l.b16 %v4078
      %v4119 = vunpack.c.h.b16 %v4078
      %v4120 = vunpack.c.l.b16 %v4079
      %v4121 = vunpack.c.h.b16 %v4079
      %v4122 = vunpack.c.l.b16 %v4080
      %v4123 = vunpack.c.h.b16 %v4080
      %v4124 = vunpack.c.l.b16 %v4081
      %v4125 = vunpack.c.h.b16 %v4081
      %v4126 = vunpack.c.l.b16 %v4082
      %v4127 = vunpack.c.h.b16 %v4082
      %v4128 = vunpack.c.l.b16 %v4083
      %v4129 = vunpack.c.h.b16 %v4083
      %v4130 = vunpack.c.l.b16 %v4084
      %v4131 = vunpack.c.h.b16 %v4084
      %v4132 = vunpack.c.l.b16 %v4085
      %v4133 = vunpack.c.h.b16 %v4085
      %v4134 = vpack.c.b16 %v4104, %v4102
      %v4135 = vpack.c.b16 %v4105, %v4103
      %v4136 = vpack.c.b16 %v4108, %v4106
      %v4137 = vpack.c.b16 %v4109, %v4107
      %v4138 = vpack.c.b16 %v4112, %v4110
      %v4139 = vpack.c.b16 %v4113, %v4111
      %v4140 = vpack.c.b16 %v4116, %v4114
      %v4141 = vpack.c.b16 %v4117, %v4115
      %v4142 = vpack.c.b16 %v4120, %v4118
      %v4143 = vpack.c.b16 %v4121, %v4119
      %v4144 = vpack.c.b16 %v4124, %v4122
      %v4145 = vpack.c.b16 %v4125, %v4123
      %v4146 = vpack.c.b16 %v4128, %v4126
      %v4147 = vpack.c.b16 %v4129, %v4127
      %v4148 = vpack.c.b16 %v4132, %v4130
      %v4149 = vpack.c.b16 %v4133, %v4131
      %4166 = vmatpush.bf16.msra.mxu0 %v4148
      %4167 = vmatpush.bf16.msra.mxu0 %v4146
      %4168 = vmatpush.bf16.msra.mxu0 %v4144
      %4169 = vmatpush.bf16.msra.mxu0 %v4142
      %4170 = vmatpush.bf16.msra.mxu0 %v4140
      %4171 = vmatpush.bf16.msra.mxu0 %v4138
      %4172 = vmatpush.bf16.msra.mxu0 %v4136
      %4173 = vmatpush.bf16.msra.mxu0 %v4134
      %4174 = vmatmul.bf16.gmra.mxu0 %v4068
      %v4175 = vpop.f32.mrf.mxu0
      %v4176 = vadd.f32 0.0, %v4175
      %v4177 = vpop.f32.mrf.mxu0
      %v4178 = vadd.f32 0.0, %v4177
      %4179 = vdwg.mxu0
      %4180 = vmatpush.bf16.msra.mxu0 %v4149
      %4181 = vmatpush.bf16.msra.mxu0 %v4147
      %4182 = vmatpush.bf16.msra.mxu0 %v4145
      %4183 = vmatpush.bf16.msra.mxu0 %v4143
      %4184 = vmatpush.bf16.msra.mxu0 %v4141
      %4185 = vmatpush.bf16.msra.mxu0 %v4139
      %4186 = vmatpush.bf16.msra.mxu0 %v4137
      %4187 = vmatpush.bf16.msra.mxu0 %v4135
      %4188 = vmatmul.bf16.gmra.mxu0 %v4068
      %v4189 = vpop.f32.mrf.mxu0
      %v4190 = vadd.f32 0.0, %v4189
      %v4191 = vpop.f32.mrf.mxu0
      %v4192 = vadd.f32 0.0, %v4191
      %4193 = vdwg.mxu0
      %v4194 = vadd.f32 %v4045, %v4176
      %v4195 = vadd.f32 %v4046, %v4190
      %v4196 = vadd.f32 %v4047, %v4178
      %v4197 = vadd.f32 %v4048, %v4192
      %v4198 = vld [vmem:[%s2544 + $0x2] sm:$0xf]
      %v4199 = vld [vmem:[%s2544 + $0xa] sm:$0xf]
      %v4200 = vld [vmem:[%s2544 + $0x12] sm:$0xf]
      %v4201 = vld [vmem:[%s2544 + $0x1a] sm:$0xf]
      %4206 = vst [vmem:[#allocation1] ss:$2 sm:$0xff] %v4198
      %s4207 = scalar_lea.vmem [#allocation1], 1
      %4208 = vst [vmem:[%s4207] ss:$2 sm:$0xff] %v4199
      %s4209 = scalar_lea.vmem [#allocation1], 16
      %4210 = vst [vmem:[%s4209] ss:$2 sm:$0xff] %v4200
      %s4211 = scalar_lea.vmem [#allocation1], 17
      %4212 = vst [vmem:[%s4211] ss:$2 sm:$0xff] %v4201
      %v4213 = vld.sshfl [vmem:[#allocation1] sm:$0xff pattern:$0x75316420]
      %v4214 = vld.sshfl [vmem:[#allocation1 + $0x10] sm:$0xff pattern:$0x75316420]
      %v4217 = vpack.c.bf16 %v4214, %v4213
      %s4218 = scalar_lea.vmem %s5, 640
      %v4219 = vld [vmem:[%s4218] sm:$0xff]
      %v4220 = vld [vmem:[%s4218 + $0x8] sm:$0xff]
      %v4221 = vld [vmem:[%s4218 + $0x10] sm:$0xff]
      %v4222 = vld [vmem:[%s4218 + $0x18] sm:$0xff]
      %v4223 = vld [vmem:[%s4218 + $0x20] sm:$0xff]
      %v4224 = vld [vmem:[%s4218 + $0x28] sm:$0xff]
      %v4225 = vld [vmem:[%s4218 + $0x30] sm:$0xff]
      %v4226 = vld [vmem:[%s4218 + $0x38] sm:$0xff]
      %v4227 = vld [vmem:[%s4218 + $0x40] sm:$0xff]
      %v4228 = vld [vmem:[%s4218 + $0x48] sm:$0xff]
      %v4229 = vld [vmem:[%s4218 + $0x50] sm:$0xff]
      %v4230 = vld [vmem:[%s4218 + $0x58] sm:$0xff]
      %v4231 = vld [vmem:[%s4218 + $0x60] sm:$0xff]
      %v4232 = vld [vmem:[%s4218 + $0x68] sm:$0xff]
      %v4233 = vld [vmem:[%s4218 + $0x70] sm:$0xff]
      %v4234 = vld [vmem:[%s4218 + $0x78] sm:$0xff]
      %v4251 = vunpack.c.l.b16 %v4219
      %v4252 = vunpack.c.h.b16 %v4219
      %v4253 = vunpack.c.l.b16 %v4220
      %v4254 = vunpack.c.h.b16 %v4220
      %v4255 = vunpack.c.l.b16 %v4221
      %v4256 = vunpack.c.h.b16 %v4221
      %v4257 = vunpack.c.l.b16 %v4222
      %v4258 = vunpack.c.h.b16 %v4222
      %v4259 = vunpack.c.l.b16 %v4223
      %v4260 = vunpack.c.h.b16 %v4223
      %v4261 = vunpack.c.l.b16 %v4224
      %v4262 = vunpack.c.h.b16 %v4224
      %v4263 = vunpack.c.l.b16 %v4225
      %v4264 = vunpack.c.h.b16 %v4225
      %v4265 = vunpack.c.l.b16 %v4226
      %v4266 = vunpack.c.h.b16 %v4226
      %v4267 = vunpack.c.l.b16 %v4227
      %v4268 = vunpack.c.h.b16 %v4227
      %v4269 = vunpack.c.l.b16 %v4228
      %v4270 = vunpack.c.h.b16 %v4228
      %v4271 = vunpack.c.l.b16 %v4229
      %v4272 = vunpack.c.h.b16 %v4229
      %v4273 = vunpack.c.l.b16 %v4230
      %v4274 = vunpack.c.h.b16 %v4230
      %v4275 = vunpack.c.l.b16 %v4231
      %v4276 = vunpack.c.h.b16 %v4231
      %v4277 = vunpack.c.l.b16 %v4232
      %v4278 = vunpack.c.h.b16 %v4232
      %v4279 = vunpack.c.l.b16 %v4233
      %v4280 = vunpack.c.h.b16 %v4233
      %v4281 = vunpack.c.l.b16 %v4234
      %v4282 = vunpack.c.h.b16 %v4234
      %v4283 = vpack.c.b16 %v4253, %v4251
      %v4284 = vpack.c.b16 %v4254, %v4252
      %v4285 = vpack.c.b16 %v4257, %v4255
      %v4286 = vpack.c.b16 %v4258, %v4256
      %v4287 = vpack.c.b16 %v4261, %v4259
      %v4288 = vpack.c.b16 %v4262, %v4260
      %v4289 = vpack.c.b16 %v4265, %v4263
      %v4290 = vpack.c.b16 %v4266, %v4264
      %v4291 = vpack.c.b16 %v4269, %v4267
      %v4292 = vpack.c.b16 %v4270, %v4268
      %v4293 = vpack.c.b16 %v4273, %v4271
      %v4294 = vpack.c.b16 %v4274, %v4272
      %v4295 = vpack.c.b16 %v4277, %v4275
      %v4296 = vpack.c.b16 %v4278, %v4276
      %v4297 = vpack.c.b16 %v4281, %v4279
      %v4298 = vpack.c.b16 %v4282, %v4280
      %4315 = vmatpush.bf16.msra.mxu0 %v4297
      %4316 = vmatpush.bf16.msra.mxu0 %v4295
      %4317 = vmatpush.bf16.msra.mxu0 %v4293
      %4318 = vmatpush.bf16.msra.mxu0 %v4291
      %4319 = vmatpush.bf16.msra.mxu0 %v4289
      %4320 = vmatpush.bf16.msra.mxu0 %v4287
      %4321 = vmatpush.bf16.msra.mxu0 %v4285
      %4322 = vmatpush.bf16.msra.mxu0 %v4283
      %4323 = vmatmul.bf16.gmra.mxu0 %v4217
      %v4324 = vpop.f32.mrf.mxu0
      %v4325 = vadd.f32 0.0, %v4324
      %v4326 = vpop.f32.mrf.mxu0
      %v4327 = vadd.f32 0.0, %v4326
      %4328 = vdwg.mxu0
      %4329 = vmatpush.bf16.msra.mxu0 %v4298
      %4330 = vmatpush.bf16.msra.mxu0 %v4296
      %4331 = vmatpush.bf16.msra.mxu0 %v4294
      %4332 = vmatpush.bf16.msra.mxu0 %v4292
      %4333 = vmatpush.bf16.msra.mxu0 %v4290
      %4334 = vmatpush.bf16.msra.mxu0 %v4288
      %4335 = vmatpush.bf16.msra.mxu0 %v4286
      %4336 = vmatpush.bf16.msra.mxu0 %v4284
      %4337 = vmatmul.bf16.gmra.mxu0 %v4217
      %v4338 = vpop.f32.mrf.mxu0
      %v4339 = vadd.f32 0.0, %v4338
      %v4340 = vpop.f32.mrf.mxu0
      %v4341 = vadd.f32 0.0, %v4340
      %4342 = vdwg.mxu0
      %v4343 = vadd.f32 %v4194, %v4325
      %v4344 = vadd.f32 %v4195, %v4339
      %v4345 = vadd.f32 %v4196, %v4327
      %v4346 = vadd.f32 %v4197, %v4341
      %s4347 = scalar_lea.vmem [#allocation4], 16
      %v4348 = vld [vmem:[%s4347] sm:$0xf]
      %v4349 = vld [vmem:[%s4347 + $0x8] sm:$0xf]
      %v4350 = vld [vmem:[%s4347 + $0x10] sm:$0xf]
      %v4351 = vld [vmem:[%s4347 + $0x18] sm:$0xf]
      %4356 = vst [vmem:[#allocation1] ss:$2 sm:$0xff] %v4348
      %s4357 = scalar_lea.vmem [#allocation1], 1
      %4358 = vst [vmem:[%s4357] ss:$2 sm:$0xff] %v4349
      %s4359 = scalar_lea.vmem [#allocation1], 16
      %4360 = vst [vmem:[%s4359] ss:$2 sm:$0xff] %v4350
      %s4361 = scalar_lea.vmem [#allocation1], 17
      %4362 = vst [vmem:[%s4361] ss:$2 sm:$0xff] %v4351
      %v4363 = vld.sshfl [vmem:[#allocation1] sm:$0xff pattern:$0x75316420]
      %v4364 = vld.sshfl [vmem:[#allocation1 + $0x10] sm:$0xff pattern:$0x75316420]
      %v4367 = vpack.c.bf16 %v4364, %v4363
      %s4368 = scalar_lea.vmem %s5, 768
      %v4369 = vld [vmem:[%s4368] sm:$0xff]
      %v4370 = vld [vmem:[%s4368 + $0x8] sm:$0xff]
      %v4371 = vld [vmem:[%s4368 + $0x10] sm:$0xff]
      %v4372 = vld [vmem:[%s4368 + $0x18] sm:$0xff]
      %v4373 = vld [vmem:[%s4368 + $0x20] sm:$0xff]
      %v4374 = vld [vmem:[%s4368 + $0x28] sm:$0xff]
      %v4375 = vld [vmem:[%s4368 + $0x30] sm:$0xff]
      %v4376 = vld [vmem:[%s4368 + $0x38] sm:$0xff]
      %v4377 = vld [vmem:[%s4368 + $0x40] sm:$0xff]
      %v4378 = vld [vmem:[%s4368 + $0x48] sm:$0xff]
      %v4379 = vld [vmem:[%s4368 + $0x50] sm:$0xff]
      %v4380 = vld [vmem:[%s4368 + $0x58] sm:$0xff]
      %v4381 = vld [vmem:[%s4368 + $0x60] sm:$0xff]
      %v4382 = vld [vmem:[%s4368 + $0x68] sm:$0xff]
      %v4383 = vld [vmem:[%s4368 + $0x70] sm:$0xff]
      %v4384 = vld [vmem:[%s4368 + $0x78] sm:$0xff]
      %v4401 = vunpack.c.l.b16 %v4369
      %v4402 = vunpack.c.h.b16 %v4369
      %v4403 = vunpack.c.l.b16 %v4370
      %v4404 = vunpack.c.h.b16 %v4370
      %v4405 = vunpack.c.l.b16 %v4371
      %v4406 = vunpack.c.h.b16 %v4371
      %v4407 = vunpack.c.l.b16 %v4372
      %v4408 = vunpack.c.h.b16 %v4372
      %v4409 = vunpack.c.l.b16 %v4373
      %v4410 = vunpack.c.h.b16 %v4373
      %v4411 = vunpack.c.l.b16 %v4374
      %v4412 = vunpack.c.h.b16 %v4374
      %v4413 = vunpack.c.l.b16 %v4375
      %v4414 = vunpack.c.h.b16 %v4375
      %v4415 = vunpack.c.l.b16 %v4376
      %v4416 = vunpack.c.h.b16 %v4376
      %v4417 = vunpack.c.l.b16 %v4377
      %v4418 = vunpack.c.h.b16 %v4377
      %v4419 = vunpack.c.l.b16 %v4378
      %v4420 = vunpack.c.h.b16 %v4378
      %v4421 = vunpack.c.l.b16 %v4379
      %v4422 = vunpack.c.h.b16 %v4379
      %v4423 = vunpack.c.l.b16 %v4380
      %v4424 = vunpack.c.h.b16 %v4380
      %v4425 = vunpack.c.l.b16 %v4381
      %v4426 = vunpack.c.h.b16 %v4381
      %v4427 = vunpack.c.l.b16 %v4382
      %v4428 = vunpack.c.h.b16 %v4382
      %v4429 = vunpack.c.l.b16 %v4383
      %v4430 = vunpack.c.h.b16 %v4383
      %v4431 = vunpack.c.l.b16 %v4384
      %v4432 = vunpack.c.h.b16 %v4384
      %v4433 = vpack.c.b16 %v4403, %v4401
      %v4434 = vpack.c.b16 %v4404, %v4402
      %v4435 = vpack.c.b16 %v4407, %v4405
      %v4436 = vpack.c.b16 %v4408, %v4406
      %v4437 = vpack.c.b16 %v4411, %v4409
      %v4438 = vpack.c.b16 %v4412, %v4410
      %v4439 = vpack.c.b16 %v4415, %v4413
      %v4440 = vpack.c.b16 %v4416, %v4414
      %v4441 = vpack.c.b16 %v4419, %v4417
      %v4442 = vpack.c.b16 %v4420, %v4418
      %v4443 = vpack.c.b16 %v4423, %v4421
      %v4444 = vpack.c.b16 %v4424, %v4422
      %v4445 = vpack.c.b16 %v4427, %v4425
      %v4446 = vpack.c.b16 %v4428, %v4426
      %v4447 = vpack.c.b16 %v4431, %v4429
      %v4448 = vpack.c.b16 %v4432, %v4430
      %4465 = vmatpush.bf16.msra.mxu0 %v4447
      %4466 = vmatpush.bf16.msra.mxu0 %v4445
      %4467 = vmatpush.bf16.msra.mxu0 %v4443
      %4468 = vmatpush.bf16.msra.mxu0 %v4441
      %4469 = vmatpush.bf16.msra.mxu0 %v4439
      %4470 = vmatpush.bf16.msra.mxu0 %v4437
      %4471 = vmatpush.bf16.msra.mxu0 %v4435
      %4472 = vmatpush.bf16.msra.mxu0 %v4433
      %4473 = vmatmul.bf16.gmra.mxu0 %v4367
      %v4474 = vpop.f32.mrf.mxu0
      %v4475 = vadd.f32 0.0, %v4474
      %v4476 = vpop.f32.mrf.mxu0
      %v4477 = vadd.f32 0.0, %v4476
      %4478 = vdwg.mxu0
      %4479 = vmatpush.bf16.msra.mxu0 %v4448
      %4480 = vmatpush.bf16.msra.mxu0 %v4446
      %4481 = vmatpush.bf16.msra.mxu0 %v4444
      %4482 = vmatpush.bf16.msra.mxu0 %v4442
      %4483 = vmatpush.bf16.msra.mxu0 %v4440
      %4484 = vmatpush.bf16.msra.mxu0 %v4438
      %4485 = vmatpush.bf16.msra.mxu0 %v4436
      %4486 = vmatpush.bf16.msra.mxu0 %v4434
      %4487 = vmatmul.bf16.gmra.mxu0 %v4367
      %v4488 = vpop.f32.mrf.mxu0
      %v4489 = vadd.f32 0.0, %v4488
      %v4490 = vpop.f32.mrf.mxu0
      %v4491 = vadd.f32 0.0, %v4490
      %4492 = vdwg.mxu0
      %v4493 = vadd.f32 %v4343, %v4475
      %v4494 = vadd.f32 %v4344, %v4489
      %v4495 = vadd.f32 %v4345, %v4477
      %v4496 = vadd.f32 %v4346, %v4491
      %v4497 = vld [vmem:[%s4347 + $0x1] sm:$0xf]
      %v4498 = vld [vmem:[%s4347 + $0x9] sm:$0xf]
      %v4499 = vld [vmem:[%s4347 + $0x11] sm:$0xf]
      %v4500 = vld [vmem:[%s4347 + $0x19] sm:$0xf]
      %4505 = vst [vmem:[#allocation1] ss:$2 sm:$0xff] %v4497
      %s4506 = scalar_lea.vmem [#allocation1], 1
      %4507 = vst [vmem:[%s4506] ss:$2 sm:$0xff] %v4498
      %s4508 = scalar_lea.vmem [#allocation1], 16
      %4509 = vst [vmem:[%s4508] ss:$2 sm:$0xff] %v4499
      %s4510 = scalar_lea.vmem [#allocation1], 17
      %4511 = vst [vmem:[%s4510] ss:$2 sm:$0xff] %v4500
      %v4512 = vld.sshfl [vmem:[#allocation1] sm:$0xff pattern:$0x75316420]
      %v4513 = vld.sshfl [vmem:[#allocation1 + $0x10] sm:$0xff pattern:$0x75316420]
      %v4516 = vpack.c.bf16 %v4513, %v4512
      %s4517 = scalar_lea.vmem %s5, 896
      %v4518 = vld [vmem:[%s4517] sm:$0xff]
      %v4519 = vld [vmem:[%s4517 + $0x8] sm:$0xff]
      %v4520 = vld [vmem:[%s4517 + $0x10] sm:$0xff]
      %v4521 = vld [vmem:[%s4517 + $0x18] sm:$0xff]
      %v4522 = vld [vmem:[%s4517 + $0x20] sm:$0xff]
      %v4523 = vld [vmem:[%s4517 + $0x28] sm:$0xff]
      %v4524 = vld [vmem:[%s4517 + $0x30] sm:$0xff]
      %v4525 = vld [vmem:[%s4517 + $0x38] sm:$0xff]
      %v4526 = vld [vmem:[%s4517 + $0x40] sm:$0xff]
      %v4527 = vld [vmem:[%s4517 + $0x48] sm:$0xff]
      %v4528 = vld [vmem:[%s4517 + $0x50] sm:$0xff]
      %v4529 = vld [vmem:[%s4517 + $0x58] sm:$0xff]
      %v4530 = vld [vmem:[%s4517 + $0x60] sm:$0xff]
      %v4531 = vld [vmem:[%s4517 + $0x68] sm:$0xff]
      %v4532 = vld [vmem:[%s4517 + $0x70] sm:$0xff]
      %v4533 = vld [vmem:[%s4517 + $0x78] sm:$0xff]
      %v4550 = vunpack.c.l.b16 %v4518
      %v4551 = vunpack.c.h.b16 %v4518
      %v4552 = vunpack.c.l.b16 %v4519
      %v4553 = vunpack.c.h.b16 %v4519
      %v4554 = vunpack.c.l.b16 %v4520
      %v4555 = vunpack.c.h.b16 %v4520
      %v4556 = vunpack.c.l.b16 %v4521
      %v4557 = vunpack.c.h.b16 %v4521
      %v4558 = vunpack.c.l.b16 %v4522
      %v4559 = vunpack.c.h.b16 %v4522
      %v4560 = vunpack.c.l.b16 %v4523
      %v4561 = vunpack.c.h.b16 %v4523
      %v4562 = vunpack.c.l.b16 %v4524
      %v4563 = vunpack.c.h.b16 %v4524
      %v4564 = vunpack.c.l.b16 %v4525
      %v4565 = vunpack.c.h.b16 %v4525
      %v4566 = vunpack.c.l.b16 %v4526
      %v4567 = vunpack.c.h.b16 %v4526
      %v4568 = vunpack.c.l.b16 %v4527
      %v4569 = vunpack.c.h.b16 %v4527
      %v4570 = vunpack.c.l.b16 %v4528
      %v4571 = vunpack.c.h.b16 %v4528
      %v4572 = vunpack.c.l.b16 %v4529
      %v4573 = vunpack.c.h.b16 %v4529
      %v4574 = vunpack.c.l.b16 %v4530
      %v4575 = vunpack.c.h.b16 %v4530
      %v4576 = vunpack.c.l.b16 %v4531
      %v4577 = vunpack.c.h.b16 %v4531
      %v4578 = vunpack.c.l.b16 %v4532
      %v4579 = vunpack.c.h.b16 %v4532
      %v4580 = vunpack.c.l.b16 %v4533
      %v4581 = vunpack.c.h.b16 %v4533
      %v4582 = vpack.c.b16 %v4552, %v4550
      %v4583 = vpack.c.b16 %v4553, %v4551
      %v4584 = vpack.c.b16 %v4556, %v4554
      %v4585 = vpack.c.b16 %v4557, %v4555
      %v4586 = vpack.c.b16 %v4560, %v4558
      %v4587 = vpack.c.b16 %v4561, %v4559
      %v4588 = vpack.c.b16 %v4564, %v4562
      %v4589 = vpack.c.b16 %v4565, %v4563
      %v4590 = vpack.c.b16 %v4568, %v4566
      %v4591 = vpack.c.b16 %v4569, %v4567
      %v4592 = vpack.c.b16 %v4572, %v4570
      %v4593 = vpack.c.b16 %v4573, %v4571
      %v4594 = vpack.c.b16 %v4576, %v4574
      %v4595 = vpack.c.b16 %v4577, %v4575
      %v4596 = vpack.c.b16 %v4580, %v4578
      %v4597 = vpack.c.b16 %v4581, %v4579
      %4614 = vmatpush.bf16.msra.mxu0 %v4596
      %4615 = vmatpush.bf16.msra.mxu0 %v4594
      %4616 = vmatpush.bf16.msra.mxu0 %v4592
      %4617 = vmatpush.bf16.msra.mxu0 %v4590
      %4618 = vmatpush.bf16.msra.mxu0 %v4588
      %4619 = vmatpush.bf16.msra.mxu0 %v4586
      %4620 = vmatpush.bf16.msra.mxu0 %v4584
      %4621 = vmatpush.bf16.msra.mxu0 %v4582
      %4622 = vmatmul.bf16.gmra.mxu0 %v4516
      %v4623 = vpop.f32.mrf.mxu0
      %v4624 = vadd.f32 0.0, %v4623
      %v4625 = vpop.f32.mrf.mxu0
      %v4626 = vadd.f32 0.0, %v4625
      %4627 = vdwg.mxu0
      %4628 = vmatpush.bf16.msra.mxu0 %v4597
      %4629 = vmatpush.bf16.msra.mxu0 %v4595
      %4630 = vmatpush.bf16.msra.mxu0 %v4593
      %4631 = vmatpush.bf16.msra.mxu0 %v4591
      %4632 = vmatpush.bf16.msra.mxu0 %v4589
      %4633 = vmatpush.bf16.msra.mxu0 %v4587
      %4634 = vmatpush.bf16.msra.mxu0 %v4585
      %4635 = vmatpush.bf16.msra.mxu0 %v4583
      %4636 = vmatmul.bf16.gmra.mxu0 %v4516
      %v4637 = vpop.f32.mrf.mxu0
      %v4638 = vadd.f32 0.0, %v4637
      %v4639 = vpop.f32.mrf.mxu0
      %v4640 = vadd.f32 0.0, %v4639
      %4641 = vdwg.mxu0
      %v4642 = vadd.f32 %v4493, %v4624
      %v4643 = vadd.f32 %v4494, %v4638
      %v4644 = vadd.f32 %v4495, %v4626
      %v4645 = vadd.f32 %v4496, %v4640
      %v4646 = vld [vmem:[%s4347 + $0x2] sm:$0xf]
      %v4647 = vld [vmem:[%s4347 + $0xa] sm:$0xf]
      %v4648 = vld [vmem:[%s4347 + $0x12] sm:$0xf]
      %v4649 = vld [vmem:[%s4347 + $0x1a] sm:$0xf]
      %4654 = vst [vmem:[#allocation1] ss:$2 sm:$0xff] %v4646
      %s4655 = scalar_lea.vmem [#allocation1], 1
      %4656 = vst [vmem:[%s4655] ss:$2 sm:$0xff] %v4647
      %s4657 = scalar_lea.vmem [#allocation1], 16
      %4658 = vst [vmem:[%s4657] ss:$2 sm:$0xff] %v4648
      %s4659 = scalar_lea.vmem [#allocation1], 17
      %4660 = vst [vmem:[%s4659] ss:$2 sm:$0xff] %v4649
      %v4661 = vld.sshfl [vmem:[#allocation1] sm:$0xff pattern:$0x75316420]
      %v4662 = vld.sshfl [vmem:[#allocation1 + $0x10] sm:$0xff pattern:$0x75316420]
      %v4665 = vpack.c.bf16 %v4662, %v4661
      %s4666 = scalar_lea.vmem %s5, 1024
      %v4667 = vld [vmem:[%s4666] sm:$0xff]
      %v4668 = vld [vmem:[%s4666 + $0x8] sm:$0xff]
      %v4669 = vld [vmem:[%s4666 + $0x10] sm:$0xff]
      %v4670 = vld [vmem:[%s4666 + $0x18] sm:$0xff]
      %v4671 = vld [vmem:[%s4666 + $0x20] sm:$0xff]
      %v4672 = vld [vmem:[%s4666 + $0x28] sm:$0xff]
      %v4673 = vld [vmem:[%s4666 + $0x30] sm:$0xff]
      %v4674 = vld [vmem:[%s4666 + $0x38] sm:$0xff]
      %v4675 = vld [vmem:[%s4666 + $0x40] sm:$0xff]
      %v4676 = vld [vmem:[%s4666 + $0x48] sm:$0xff]
      %v4677 = vld [vmem:[%s4666 + $0x50] sm:$0xff]
      %v4678 = vld [vmem:[%s4666 + $0x58] sm:$0xff]
      %v4679 = vld [vmem:[%s4666 + $0x60] sm:$0xff]
      %v4680 = vld [vmem:[%s4666 + $0x68] sm:$0xff]
      %v4681 = vld [vmem:[%s4666 + $0x70] sm:$0xff]
      %v4682 = vld [vmem:[%s4666 + $0x78] sm:$0xff]
      %v4699 = vunpack.c.l.b16 %v4667
      %v4700 = vunpack.c.h.b16 %v4667
      %v4701 = vunpack.c.l.b16 %v4668
      %v4702 = vunpack.c.h.b16 %v4668
      %v4703 = vunpack.c.l.b16 %v4669
      %v4704 = vunpack.c.h.b16 %v4669
      %v4705 = vunpack.c.l.b16 %v4670
      %v4706 = vunpack.c.h.b16 %v4670
      %v4707 = vunpack.c.l.b16 %v4671
      %v4708 = vunpack.c.h.b16 %v4671
      %v4709 = vunpack.c.l.b16 %v4672
      %v4710 = vunpack.c.h.b16 %v4672
      %v4711 = vunpack.c.l.b16 %v4673
      %v4712 = vunpack.c.h.b16 %v4673
      %v4713 = vunpack.c.l.b16 %v4674
      %v4714 = vunpack.c.h.b16 %v4674
      %v4715 = vunpack.c.l.b16 %v4675
      %v4716 = vunpack.c.h.b16 %v4675
      %v4717 = vunpack.c.l.b16 %v4676
      %v4718 = vunpack.c.h.b16 %v4676
      %v4719 = vunpack.c.l.b16 %v4677
      %v4720 = vunpack.c.h.b16 %v4677
      %v4721 = vunpack.c.l.b16 %v4678
      %v4722 = vunpack.c.h.b16 %v4678
      %v4723 = vunpack.c.l.b16 %v4679
      %v4724 = vunpack.c.h.b16 %v4679
      %v4725 = vunpack.c.l.b16 %v4680
      %v4726 = vunpack.c.h.b16 %v4680
      %v4727 = vunpack.c.l.b16 %v4681
      %v4728 = vunpack.c.h.b16 %v4681
      %v4729 = vunpack.c.l.b16 %v4682
      %v4730 = vunpack.c.h.b16 %v4682
      %v4731 = vpack.c.b16 %v4701, %v4699
      %v4732 = vpack.c.b16 %v4702, %v4700
      %v4733 = vpack.c.b16 %v4705, %v4703
      %v4734 = vpack.c.b16 %v4706, %v4704
      %v4735 = vpack.c.b16 %v4709, %v4707
      %v4736 = vpack.c.b16 %v4710, %v4708
      %v4737 = vpack.c.b16 %v4713, %v4711
      %v4738 = vpack.c.b16 %v4714, %v4712
      %v4739 = vpack.c.b16 %v4717, %v4715
      %v4740 = vpack.c.b16 %v4718, %v4716
      %v4741 = vpack.c.b16 %v4721, %v4719
      %v4742 = vpack.c.b16 %v4722, %v4720
      %v4743 = vpack.c.b16 %v4725, %v4723
      %v4744 = vpack.c.b16 %v4726, %v4724
      %v4745 = vpack.c.b16 %v4729, %v4727
      %v4746 = vpack.c.b16 %v4730, %v4728
      %4763 = vmatpush.bf16.msra.mxu0 %v4745
      %4764 = vmatpush.bf16.msra.mxu0 %v4743
      %4765 = vmatpush.bf16.msra.mxu0 %v4741
      %4766 = vmatpush.bf16.msra.mxu0 %v4739
      %4767 = vmatpush.bf16.msra.mxu0 %v4737
      %4768 = vmatpush.bf16.msra.mxu0 %v4735
      %4769 = vmatpush.bf16.msra.mxu0 %v4733
      %4770 = vmatpush.bf16.msra.mxu0 %v4731
      %4771 = vmatmul.bf16.gmra.mxu0 %v4665
      %v4772 = vpop.f32.mrf.mxu0
      %v4773 = vadd.f32 0.0, %v4772
      %v4774 = vpop.f32.mrf.mxu0
      %v4775 = vadd.f32 0.0, %v4774
      %4776 = vdwg.mxu0
      %4777 = vmatpush.bf16.msra.mxu0 %v4746
      %4778 = vmatpush.bf16.msra.mxu0 %v4744
      %4779 = vmatpush.bf16.msra.mxu0 %v4742
      %4780 = vmatpush.bf16.msra.mxu0 %v4740
      %4781 = vmatpush.bf16.msra.mxu0 %v4738
      %4782 = vmatpush.bf16.msra.mxu0 %v4736
      %4783 = vmatpush.bf16.msra.mxu0 %v4734
      %4784 = vmatpush.bf16.msra.mxu0 %v4732
      %4785 = vmatmul.bf16.gmra.mxu0 %v4665
      %v4786 = vpop.f32.mrf.mxu0
      %v4787 = vadd.f32 0.0, %v4786
      %v4788 = vpop.f32.mrf.mxu0
      %v4789 = vadd.f32 0.0, %v4788
      %4790 = vdwg.mxu0
      %v4791 = vadd.f32 %v4642, %v4773
      %v4792 = vadd.f32 %v4643, %v4787
      %v4793 = vadd.f32 %v4644, %v4775
      %v4794 = vadd.f32 %v4645, %v4789
      %v4795 = vld [vmem:[%s6] sm:$0x3]
      %v4797 = vperm.slane %v4795, 0
      %v4798 = vperm.slane %v4795, 1
      %v4801 = vadd.f32 %v4791, %v4797
      %v4802 = vadd.f32 %v4792, %v4798
      %v4803 = vadd.f32 %v4793, %v4797
      %v4804 = vadd.f32 %v4794, %v4798
      %v4807 = vrot.slane %v4801, 1
      %v4808 = vrot.slane %v4802, 1
      %v4813 = vrot.slane %v4803, 6
      %v4814 = vrot.slane %v4804, 6
      %v4817 = vrot.slane %v4803, 7
      %v4818 = vrot.slane %v4804, 7
      %vm4821 = vcmask 1040384
      %v4822 = vsel %vm4821, %v4801, %v4807
      %v4823 = vsel %vm4821, %v4802, %v4808
      %vm4824 = vcmask 1041408
      %v4825 = vsel %vm4824, %v4822, %v4813
      %v4826 = vsel %vm4824, %v4823, %v4814
      %vm4827 = vcmask 1042432
      %v4828 = vsel %vm4827, %v4825, %v4817
      %v4829 = vsel %vm4827, %v4826, %v4818
      %v4830 = vmax.f32 %v4828, 0.0
      %v4831 = vmax.f32 %v4829, 0.0
      %v4832 = vpack.c.bf16 %v4830, %v4830
      %v4833 = vpack.c.bf16 %v4831, %v4831
      %4834 = vst [vmem:[#allocation5] sm:$0xff] 0.0
      %4835 = vst [vmem:[#allocation5 + $0x8] sm:$0xff] 0.0
      %4836 = vst [vmem:[#allocation5 + $0x10] sm:$0xff] 0.0
      %4837 = vst [vmem:[#allocation5 + $0x18] sm:$0xff] 0.0
      %v4840 = vrot.slane %v4831, 6
      %v4841 = vsel %vm4824, %v4830, %v4840
      %vm4842 = vcmask 1043458
      %v4843 = vsel %vm4842, %v4830, %v4840
      %v4844 = vrot.slane %v4843, 2
      %4845 = vst [vmem:[#allocation1] ss:$2 sm:$0xff] %v4841
      %v4846 = vld.sshfl [vmem:[#allocation1] sm:$0xff pattern:$0x75643120]
      %s4847 = scalar_lea.vmem [#allocation1], 16
      %4848 = vst [vmem:[%s4847] ss:$2 sm:$0xff] %v4844
      %v4849 = vld.sshfl [vmem:[#allocation1 + $0x10] sm:$0xff pattern:$0x75643120]
      %v4850 = vrot.slane %v4846, 7
      %v4851 = vrot.slane %v4849, 7
      %s4854 = scalar_lea.vmem [#allocation5], 8
      %4855 = vst [vmem:[%s4854] sm:$0x66] %v4850
      %4856 = vst [vmem:[%s4854 + $0x8] sm:$0x66] %v4851
      %v4857 = vld [vmem:[%s7] sm:$0xf]
      %v4858 = vld [vmem:[%s7 + $0x4] sm:$0xf]
      %v4859 = vld [vmem:[%s7 + $0x8] sm:$0xf]
      %v4860 = vld [vmem:[%s7 + $0xc] sm:$0xf]
      %v4861 = vld [vmem:[%s7 + $0x10] sm:$0xf]
      %v4862 = vld [vmem:[%s7 + $0x14] sm:$0xf]
      %v4863 = vld [vmem:[%s7 + $0x18] sm:$0xf]
      %v4864 = vld [vmem:[%s7 + $0x1c] sm:$0xf]
      %v4865 = vld [vmem:[%s7 + $0x20] sm:$0xf]
      %v4866 = vld [vmem:[%s7 + $0x24] sm:$0xf]
      %v4867 = vld [vmem:[%s7 + $0x28] sm:$0xf]
      %v4868 = vld [vmem:[%s7 + $0x2c] sm:$0xf]
      %v4869 = vld [vmem:[%s7 + $0x30] sm:$0xf]
      %v4870 = vld [vmem:[%s7 + $0x34] sm:$0xf]
      %v4871 = vld [vmem:[%s7 + $0x38] sm:$0xf]
      %v4872 = vld [vmem:[%s7 + $0x3c] sm:$0xf]
      %v4873 = vld [vmem:[%s7 + $0x40] sm:$0xf]
      %v4874 = vld [vmem:[%s7 + $0x44] sm:$0xf]
      %v4875 = vld [vmem:[%s7 + $0x48] sm:$0xf]
      %v4876 = vld [vmem:[%s7 + $0x4c] sm:$0xf]
      %v4877 = vld [vmem:[%s7 + $0x50] sm:$0xf]
      %v4878 = vld [vmem:[%s7 + $0x54] sm:$0xf]
      %v4879 = vld [vmem:[%s7 + $0x58] sm:$0xf]
      %v4880 = vld [vmem:[%s7 + $0x5c] sm:$0xf]
      %v4881 = vld [vmem:[%s7 + $0x60] sm:$0xf]
      %v4882 = vld [vmem:[%s7 + $0x64] sm:$0xf]
      %v4883 = vld [vmem:[%s7 + $0x68] sm:$0xf]
      %v4884 = vld [vmem:[%s7 + $0x6c] sm:$0xf]
      %v4885 = vld [vmem:[%s7 + $0x70] sm:$0xf]
      %v4886 = vld [vmem:[%s7 + $0x74] sm:$0xf]
      %v4887 = vld [vmem:[%s7 + $0x78] sm:$0xf]
      %v4888 = vld [vmem:[%s7 + $0x7c] sm:$0xf]
      %v4889 = vld [vmem:[%s8] sm:$0x1]
      %v4891 = vperm.slane %v4889, 0
      %v4925 = vunpack.c.l.b16 %v4857
      %v4926 = vunpack.c.l.b16 %v4858
      %v4927 = vunpack.c.l.b16 %v4859
      %v4928 = vunpack.c.l.b16 %v4860
      %v4929 = vunpack.c.l.b16 %v4861
      %v4930 = vunpack.c.l.b16 %v4862
      %v4931 = vunpack.c.l.b16 %v4863
      %v4932 = vunpack.c.l.b16 %v4864
      %v4933 = vunpack.c.l.b16 %v4865
      %v4934 = vunpack.c.l.b16 %v4866
      %v4935 = vunpack.c.l.b16 %v4867
      %v4936 = vunpack.c.l.b16 %v4868
      %v4937 = vunpack.c.l.b16 %v4869
      %v4938 = vunpack.c.l.b16 %v4870
      %v4939 = vunpack.c.l.b16 %v4871
      %v4940 = vunpack.c.l.b16 %v4872
      %v4941 = vunpack.c.l.b16 %v4873
      %v4942 = vunpack.c.l.b16 %v4874
      %v4943 = vunpack.c.l.b16 %v4875
      %v4944 = vunpack.c.l.b16 %v4876
      %v4945 = vunpack.c.l.b16 %v4877
      %v4946 = vunpack.c.l.b16 %v4878
      %v4947 = vunpack.c.l.b16 %v4879
      %v4948 = vunpack.c.l.b16 %v4880
      %v4949 = vunpack.c.l.b16 %v4881
      %v4950 = vunpack.c.l.b16 %v4882
      %v4951 = vunpack.c.l.b16 %v4883
      %v4952 = vunpack.c.l.b16 %v4884
      %v4953 = vunpack.c.l.b16 %v4885
      %v4954 = vunpack.c.l.b16 %v4886
      %v4955 = vunpack.c.l.b16 %v4887
      %v4956 = vunpack.c.l.b16 %v4888
      %v4957 = vpack.c.b16 %v4926, %v4925
      %v4958 = vpack.c.b16 %v4928, %v4927
      %v4959 = vpack.c.b16 %v4930, %v4929
      %v4960 = vpack.c.b16 %v4932, %v4931
      %v4961 = vpack.c.b16 %v4934, %v4933
      %v4962 = vpack.c.b16 %v4936, %v4935
      %v4963 = vpack.c.b16 %v4938, %v4937
      %v4964 = vpack.c.b16 %v4940, %v4939
      %v4965 = vpack.c.b16 %v4942, %v4941
      %v4966 = vpack.c.b16 %v4944, %v4943
      %v4967 = vpack.c.b16 %v4946, %v4945
      %v4968 = vpack.c.b16 %v4948, %v4947
      %v4969 = vpack.c.b16 %v4950, %v4949
      %v4970 = vpack.c.b16 %v4952, %v4951
      %v4971 = vpack.c.b16 %v4954, %v4953
      %v4972 = vpack.c.b16 %v4956, %v4955
      %4989 = vmatpush.bf16.msra.mxu0 %v4964
      %4990 = vmatpush.bf16.msra.mxu0 %v4963
      %4991 = vmatpush.bf16.msra.mxu0 %v4962
      %4992 = vmatpush.bf16.msra.mxu0 %v4961
      %4993 = vmatpush.bf16.msra.mxu0 %v4960
      %4994 = vmatpush.bf16.msra.mxu0 %v4959
      %4995 = vmatpush.bf16.msra.mxu0 %v4958
      %4996 = vmatpush.bf16.msra.mxu0 %v4957
      %4997 = vmatmul.bf16.gmra.mxu0 %v4832
      %v4998 = vpop.f32.mrf.mxu0
      %v4999 = vadd.f32 %v4891, %v4998
      %v5000 = vpop.f32.mrf.mxu0
      %5001 = vdwg.mxu0
      %5002 = vmatpush.bf16.msra.mxu0 %v4972
      %5003 = vmatpush.bf16.msra.mxu0 %v4971
      %5004 = vmatpush.bf16.msra.mxu0 %v4970
      %5005 = vmatpush.bf16.msra.mxu0 %v4969
      %5006 = vmatpush.bf16.msra.mxu0 %v4968
      %5007 = vmatpush.bf16.msra.mxu0 %v4967
      %5008 = vmatpush.bf16.msra.mxu0 %v4966
      %5009 = vmatpush.bf16.msra.mxu0 %v4965
      %5010 = vmatmul.bf16.gmra.mxu0 %v4833
      %v5011 = vpop.f32.mrf.mxu0
      %v5012 = vadd.f32 %v4999, %v5011
      %v5013 = vpop.f32.mrf.mxu0
      %5014 = vdwg.mxu0
      %v5015 = vmax.f32 %v5012, 0.0
      %v5016 = vpack.c.bf16 %v5015, %v5015
      %v5017 = vld [vmem:[%s9] sm:$0xff]
      %v5018 = vld [vmem:[%s9 + $0x8] sm:$0xff]
      %v5019 = vld [vmem:[%s9 + $0x10] sm:$0xff]
      %v5020 = vld [vmem:[%s9 + $0x18] sm:$0xff]
      %v5021 = vld [vmem:[%s9 + $0x20] sm:$0xff]
      %v5022 = vld [vmem:[%s9 + $0x28] sm:$0xff]
      %v5023 = vld [vmem:[%s9 + $0x30] sm:$0xff]
      %v5024 = vld [vmem:[%s9 + $0x38] sm:$0xff]
      %v5025 = vld [vmem:[%s9 + $0x40] sm:$0xff]
      %v5026 = vld [vmem:[%s9 + $0x48] sm:$0xff]
      %v5027 = vld [vmem:[%s9 + $0x50] sm:$0xff]
      %v5028 = vld [vmem:[%s9 + $0x58] sm:$0xff]
      %v5029 = vld [vmem:[%s9 + $0x60] sm:$0xff]
      %v5030 = vld [vmem:[%s9 + $0x68] sm:$0xff]
      %v5031 = vld [vmem:[%s9 + $0x70] sm:$0xff]
      %v5032 = vld [vmem:[%s9 + $0x78] sm:$0xff]
      %s5033 = scalar_lea.vmem %s9, 128
      %v5034 = vld [vmem:[%s5033] sm:$0xff]
      %v5035 = vld [vmem:[%s5033 + $0x8] sm:$0xff]
      %v5036 = vld [vmem:[%s5033 + $0x10] sm:$0xff]
      %v5037 = vld [vmem:[%s5033 + $0x18] sm:$0xff]
      %v5038 = vld [vmem:[%s5033 + $0x20] sm:$0xff]
      %v5039 = vld [vmem:[%s5033 + $0x28] sm:$0xff]
      %v5040 = vld [vmem:[%s5033 + $0x30] sm:$0xff]
      %v5041 = vld [vmem:[%s5033 + $0x38] sm:$0xff]
      %v5042 = vld [vmem:[%s5033 + $0x40] sm:$0xff]
      %v5043 = vld [vmem:[%s5033 + $0x48] sm:$0xff]
      %v5044 = vld [vmem:[%s5033 + $0x50] sm:$0xff]
      %v5045 = vld [vmem:[%s5033 + $0x58] sm:$0xff]
      %v5046 = vld [vmem:[%s5033 + $0x60] sm:$0xff]
      %v5047 = vld [vmem:[%s5033 + $0x68] sm:$0xff]
      %v5048 = vld [vmem:[%s5033 + $0x70] sm:$0xff]
      %v5049 = vld [vmem:[%s5033 + $0x78] sm:$0xff]
      %v5051 = vunpack.c.l.b16 %v5016
      %v5052 = vpack.c.b16 %v5051, %v5051
      %v5054 = vshrl.u32 %v5052, 16
      %v5073 = vunpack.c.l.b16 %v5034
      %v5074 = vunpack.c.h.b16 %v5034
      %v5075 = vunpack.c.l.b16 %v5035
      %v5076 = vunpack.c.h.b16 %v5035
      %v5077 = vunpack.c.l.b16 %v5036
      %v5078 = vunpack.c.h.b16 %v5036
      %v5079 = vunpack.c.l.b16 %v5037
      %v5080 = vunpack.c.h.b16 %v5037
      %v5081 = vunpack.c.l.b16 %v5038
      %v5082 = vunpack.c.h.b16 %v5038
      %v5083 = vunpack.c.l.b16 %v5039
      %v5084 = vunpack.c.h.b16 %v5039
      %v5085 = vunpack.c.l.b16 %v5040
      %v5086 = vunpack.c.h.b16 %v5040
      %v5087 = vunpack.c.l.b16 %v5041
      %v5088 = vunpack.c.h.b16 %v5041
      %v5089 = vunpack.c.l.b16 %v5042
      %v5090 = vunpack.c.h.b16 %v5042
      %v5091 = vunpack.c.l.b16 %v5043
      %v5092 = vunpack.c.h.b16 %v5043
      %v5093 = vunpack.c.l.b16 %v5044
      %v5094 = vunpack.c.h.b16 %v5044
      %v5095 = vunpack.c.l.b16 %v5045
      %v5096 = vunpack.c.h.b16 %v5045
      %v5097 = vunpack.c.l.b16 %v5046
      %v5098 = vunpack.c.h.b16 %v5046
      %v5099 = vunpack.c.l.b16 %v5047
      %v5100 = vunpack.c.h.b16 %v5047
      %v5101 = vunpack.c.l.b16 %v5048
      %v5102 = vunpack.c.h.b16 %v5048
      %v5103 = vunpack.c.l.b16 %v5049
      %v5104 = vunpack.c.h.b16 %v5049
      %v5105 = vpack.c.b16 %v5075, %v5073
      %v5106 = vpack.c.b16 %v5076, %v5074
      %v5107 = vpack.c.b16 %v5079, %v5077
      %v5108 = vpack.c.b16 %v5080, %v5078
      %v5109 = vpack.c.b16 %v5083, %v5081
      %v5110 = vpack.c.b16 %v5084, %v5082
      %v5111 = vpack.c.b16 %v5087, %v5085
      %v5112 = vpack.c.b16 %v5088, %v5086
      %v5113 = vpack.c.b16 %v5091, %v5089
      %v5114 = vpack.c.b16 %v5092, %v5090
      %v5115 = vpack.c.b16 %v5095, %v5093
      %v5116 = vpack.c.b16 %v5096, %v5094
      %v5117 = vpack.c.b16 %v5099, %v5097
      %v5118 = vpack.c.b16 %v5100, %v5098
      %v5119 = vpack.c.b16 %v5103, %v5101
      %v5120 = vpack.c.b16 %v5104, %v5102
      %5137 = vmatpush.bf16.msra.mxu0 %v5119
      %5138 = vmatpush.bf16.msra.mxu0 %v5117
      %5139 = vmatpush.bf16.msra.mxu0 %v5115
      %5140 = vmatpush.bf16.msra.mxu0 %v5113
      %5141 = vmatpush.bf16.msra.mxu0 %v5111
      %5142 = vmatpush.bf16.msra.mxu0 %v5109
      %5143 = vmatpush.bf16.msra.mxu0 %v5107
      %5144 = vmatpush.bf16.msra.mxu0 %v5105
      %5145 = vmatmul.bf16.gmra.mxu0 %v5054
      %v5146 = vpop.f32.mrf.mxu0
      %v5147 = vadd.f32 0.0, %v5146
      %v5148 = vpop.f32.mrf.mxu0
      %5149 = vdwg.mxu0
      %5150 = vmatpush.bf16.msra.mxu0 %v5120
      %5151 = vmatpush.bf16.msra.mxu0 %v5118
      %5152 = vmatpush.bf16.msra.mxu0 %v5116
      %5153 = vmatpush.bf16.msra.mxu0 %v5114
      %5154 = vmatpush.bf16.msra.mxu0 %v5112
      %5155 = vmatpush.bf16.msra.mxu0 %v5110
      %5156 = vmatpush.bf16.msra.mxu0 %v5108
      %5157 = vmatpush.bf16.msra.mxu0 %v5106
      %5158 = vmatmul.bf16.gmra.mxu0 %v5054
      %v5159 = vpop.f32.mrf.mxu0
      %v5160 = vadd.f32 0.0, %v5159
      %v5161 = vpop.f32.mrf.mxu0
      %5162 = vdwg.mxu0
      %v5179 = vunpack.c.l.b16 %v5017
      %v5180 = vunpack.c.h.b16 %v5017
      %v5181 = vunpack.c.l.b16 %v5018
      %v5182 = vunpack.c.h.b16 %v5018
      %v5183 = vunpack.c.l.b16 %v5019
      %v5184 = vunpack.c.h.b16 %v5019
      %v5185 = vunpack.c.l.b16 %v5020
      %v5186 = vunpack.c.h.b16 %v5020
      %v5187 = vunpack.c.l.b16 %v5021
      %v5188 = vunpack.c.h.b16 %v5021
      %v5189 = vunpack.c.l.b16 %v5022
      %v5190 = vunpack.c.h.b16 %v5022
      %v5191 = vunpack.c.l.b16 %v5023
      %v5192 = vunpack.c.h.b16 %v5023
      %v5193 = vunpack.c.l.b16 %v5024
      %v5194 = vunpack.c.h.b16 %v5024
      %v5195 = vunpack.c.l.b16 %v5025
      %v5196 = vunpack.c.h.b16 %v5025
      %v5197 = vunpack.c.l.b16 %v5026
      %v5198 = vunpack.c.h.b16 %v5026
      %v5199 = vunpack.c.l.b16 %v5027
      %v5200 = vunpack.c.h.b16 %v5027
      %v5201 = vunpack.c.l.b16 %v5028
      %v5202 = vunpack.c.h.b16 %v5028
      %v5203 = vunpack.c.l.b16 %v5029
      %v5204 = vunpack.c.h.b16 %v5029
      %v5205 = vunpack.c.l.b16 %v5030
      %v5206 = vunpack.c.h.b16 %v5030
      %v5207 = vunpack.c.l.b16 %v5031
      %v5208 = vunpack.c.h.b16 %v5031
      %v5209 = vunpack.c.l.b16 %v5032
      %v5210 = vunpack.c.h.b16 %v5032
      %v5211 = vpack.c.b16 %v5181, %v5179
      %v5212 = vpack.c.b16 %v5182, %v5180
      %v5213 = vpack.c.b16 %v5185, %v5183
      %v5214 = vpack.c.b16 %v5186, %v5184
      %v5215 = vpack.c.b16 %v5189, %v5187
      %v5216 = vpack.c.b16 %v5190, %v5188
      %v5217 = vpack.c.b16 %v5193, %v5191
      %v5218 = vpack.c.b16 %v5194, %v5192
      %v5219 = vpack.c.b16 %v5197, %v5195
      %v5220 = vpack.c.b16 %v5198, %v5196
      %v5221 = vpack.c.b16 %v5201, %v5199
      %v5222 = vpack.c.b16 %v5202, %v5200
      %v5223 = vpack.c.b16 %v5205, %v5203
      %v5224 = vpack.c.b16 %v5206, %v5204
      %v5225 = vpack.c.b16 %v5209, %v5207
      %v5226 = vpack.c.b16 %v5210, %v5208
      %5243 = vmatpush.bf16.msra.mxu0 %v5225
      %5244 = vmatpush.bf16.msra.mxu0 %v5223
      %5245 = vmatpush.bf16.msra.mxu0 %v5221
      %5246 = vmatpush.bf16.msra.mxu0 %v5219
      %5247 = vmatpush.bf16.msra.mxu0 %v5217
      %5248 = vmatpush.bf16.msra.mxu0 %v5215
      %5249 = vmatpush.bf16.msra.mxu0 %v5213
      %5250 = vmatpush.bf16.msra.mxu0 %v5211
      %5251 = vmatmul.bf16.gmra.mxu0 %v5016
      %v5252 = vpop.f32.mrf.mxu0
      %v5253 = vadd.f32 %v5147, %v5252
      %v5254 = vpop.f32.mrf.mxu0
      %5255 = vdwg.mxu0
      %5256 = vmatpush.bf16.msra.mxu0 %v5226
      %5257 = vmatpush.bf16.msra.mxu0 %v5224
      %5258 = vmatpush.bf16.msra.mxu0 %v5222
      %5259 = vmatpush.bf16.msra.mxu0 %v5220
      %5260 = vmatpush.bf16.msra.mxu0 %v5218
      %5261 = vmatpush.bf16.msra.mxu0 %v5216
      %5262 = vmatpush.bf16.msra.mxu0 %v5214
      %5263 = vmatpush.bf16.msra.mxu0 %v5212
      %5264 = vmatmul.bf16.gmra.mxu0 %v5016
      %v5265 = vpop.f32.mrf.mxu0
      %v5266 = vadd.f32 %v5160, %v5265
      %v5267 = vpop.f32.mrf.mxu0
      %5268 = vdwg.mxu0
      %s5269 = scalar_lea.vmem %s9, 256
      %v5270 = vld [vmem:[%s5269] sm:$0xff]
      %v5271 = vld [vmem:[%s5269 + $0x8] sm:$0xff]
      %v5272 = vld [vmem:[%s5269 + $0x10] sm:$0xff]
      %v5273 = vld [vmem:[%s5269 + $0x18] sm:$0xff]
      %v5274 = vld [vmem:[%s5269 + $0x20] sm:$0xff]
      %v5275 = vld [vmem:[%s5269 + $0x28] sm:$0xff]
      %v5276 = vld [vmem:[%s5269 + $0x30] sm:$0xff]
      %v5277 = vld [vmem:[%s5269 + $0x38] sm:$0xff]
      %v5278 = vld [vmem:[%s5269 + $0x40] sm:$0xff]
      %v5279 = vld [vmem:[%s5269 + $0x48] sm:$0xff]
      %v5280 = vld [vmem:[%s5269 + $0x50] sm:$0xff]
      %v5281 = vld [vmem:[%s5269 + $0x58] sm:$0xff]
      %v5282 = vld [vmem:[%s5269 + $0x60] sm:$0xff]
      %v5283 = vld [vmem:[%s5269 + $0x68] sm:$0xff]
      %v5284 = vld [vmem:[%s5269 + $0x70] sm:$0xff]
      %v5285 = vld [vmem:[%s5269 + $0x78] sm:$0xff]
      %v5286 = vrot.slane %v5052, 1
      %v5304 = vunpack.c.l.b16 %v5270
      %v5305 = vunpack.c.h.b16 %v5270
      %v5306 = vunpack.c.l.b16 %v5271
      %v5307 = vunpack.c.h.b16 %v5271
      %v5308 = vunpack.c.l.b16 %v5272
      %v5309 = vunpack.c.h.b16 %v5272
      %v5310 = vunpack.c.l.b16 %v5273
      %v5311 = vunpack.c.h.b16 %v5273
      %v5312 = vunpack.c.l.b16 %v5274
      %v5313 = vunpack.c.h.b16 %v5274
      %v5314 = vunpack.c.l.b16 %v5275
      %v5315 = vunpack.c.h.b16 %v5275
      %v5316 = vunpack.c.l.b16 %v5276
      %v5317 = vunpack.c.h.b16 %v5276
      %v5318 = vunpack.c.l.b16 %v5277
      %v5319 = vunpack.c.h.b16 %v5277
      %v5320 = vunpack.c.l.b16 %v5278
      %v5321 = vunpack.c.h.b16 %v5278
      %v5322 = vunpack.c.l.b16 %v5279
      %v5323 = vunpack.c.h.b16 %v5279
      %v5324 = vunpack.c.l.b16 %v5280
      %v5325 = vunpack.c.h.b16 %v5280
      %v5326 = vunpack.c.l.b16 %v5281
      %v5327 = vunpack.c.h.b16 %v5281
      %v5328 = vunpack.c.l.b16 %v5282
      %v5329 = vunpack.c.h.b16 %v5282
      %v5330 = vunpack.c.l.b16 %v5283
      %v5331 = vunpack.c.h.b16 %v5283
      %v5332 = vunpack.c.l.b16 %v5284
      %v5333 = vunpack.c.h.b16 %v5284
      %v5334 = vunpack.c.l.b16 %v5285
      %v5335 = vunpack.c.h.b16 %v5285
      %v5336 = vpack.c.b16 %v5306, %v5304
      %v5337 = vpack.c.b16 %v5307, %v5305
      %v5338 = vpack.c.b16 %v5310, %v5308
      %v5339 = vpack.c.b16 %v5311, %v5309
      %v5340 = vpack.c.b16 %v5314, %v5312
      %v5341 = vpack.c.b16 %v5315, %v5313
      %v5342 = vpack.c.b16 %v5318, %v5316
      %v5343 = vpack.c.b16 %v5319, %v5317
      %v5344 = vpack.c.b16 %v5322, %v5320
      %v5345 = vpack.c.b16 %v5323, %v5321
      %v5346 = vpack.c.b16 %v5326, %v5324
      %v5347 = vpack.c.b16 %v5327, %v5325
      %v5348 = vpack.c.b16 %v5330, %v5328
      %v5349 = vpack.c.b16 %v5331, %v5329
      %v5350 = vpack.c.b16 %v5334, %v5332
      %v5351 = vpack.c.b16 %v5335, %v5333
      %5368 = vmatpush.bf16.msra.mxu0 %v5350
      %5369 = vmatpush.bf16.msra.mxu0 %v5348
      %5370 = vmatpush.bf16.msra.mxu0 %v5346
      %5371 = vmatpush.bf16.msra.mxu0 %v5344
      %5372 = vmatpush.bf16.msra.mxu0 %v5342
      %5373 = vmatpush.bf16.msra.mxu0 %v5340
      %5374 = vmatpush.bf16.msra.mxu0 %v5338
      %5375 = vmatpush.bf16.msra.mxu0 %v5336
      %5376 = vmatmul.bf16.gmra.mxu0 %v5286
      %v5377 = vpop.f32.mrf.mxu0
      %v5378 = vadd.f32 0.0, %v5377
      %v5379 = vpop.f32.mrf.mxu0
      %5380 = vdwg.mxu0
      %5381 = vmatpush.bf16.msra.mxu0 %v5351
      %5382 = vmatpush.bf16.msra.mxu0 %v5349
      %5383 = vmatpush.bf16.msra.mxu0 %v5347
      %5384 = vmatpush.bf16.msra.mxu0 %v5345
      %5385 = vmatpush.bf16.msra.mxu0 %v5343
      %5386 = vmatpush.bf16.msra.mxu0 %v5341
      %5387 = vmatpush.bf16.msra.mxu0 %v5339
      %5388 = vmatpush.bf16.msra.mxu0 %v5337
      %5389 = vmatmul.bf16.gmra.mxu0 %v5286
      %v5390 = vpop.f32.mrf.mxu0
      %v5391 = vadd.f32 0.0, %v5390
      %v5392 = vpop.f32.mrf.mxu0
      %5393 = vdwg.mxu0
      %v5394 = vadd.f32 %v5253, %v5378
      %v5395 = vadd.f32 %v5266, %v5391
      %s5396 = scalar_lea.vmem %s9, 384
      %v5397 = vld [vmem:[%s5396] sm:$0xff]
      %v5398 = vld [vmem:[%s5396 + $0x8] sm:$0xff]
      %v5399 = vld [vmem:[%s5396 + $0x10] sm:$0xff]
      %v5400 = vld [vmem:[%s5396 + $0x18] sm:$0xff]
      %v5401 = vld [vmem:[%s5396 + $0x20] sm:$0xff]
      %v5402 = vld [vmem:[%s5396 + $0x28] sm:$0xff]
      %v5403 = vld [vmem:[%s5396 + $0x30] sm:$0xff]
      %v5404 = vld [vmem:[%s5396 + $0x38] sm:$0xff]
      %v5405 = vld [vmem:[%s5396 + $0x40] sm:$0xff]
      %v5406 = vld [vmem:[%s5396 + $0x48] sm:$0xff]
      %v5407 = vld [vmem:[%s5396 + $0x50] sm:$0xff]
      %v5408 = vld [vmem:[%s5396 + $0x58] sm:$0xff]
      %v5409 = vld [vmem:[%s5396 + $0x60] sm:$0xff]
      %v5410 = vld [vmem:[%s5396 + $0x68] sm:$0xff]
      %v5411 = vld [vmem:[%s5396 + $0x70] sm:$0xff]
      %v5412 = vld [vmem:[%s5396 + $0x78] sm:$0xff]
      %v5413 = vrot.slane %v5054, 1
      %v5431 = vunpack.c.l.b16 %v5397
      %v5432 = vunpack.c.h.b16 %v5397
      %v5433 = vunpack.c.l.b16 %v5398
      %v5434 = vunpack.c.h.b16 %v5398
      %v5435 = vunpack.c.l.b16 %v5399
      %v5436 = vunpack.c.h.b16 %v5399
      %v5437 = vunpack.c.l.b16 %v5400
      %v5438 = vunpack.c.h.b16 %v5400
      %v5439 = vunpack.c.l.b16 %v5401
      %v5440 = vunpack.c.h.b16 %v5401
      %v5441 = vunpack.c.l.b16 %v5402
      %v5442 = vunpack.c.h.b16 %v5402
      %v5443 = vunpack.c.l.b16 %v5403
      %v5444 = vunpack.c.h.b16 %v5403
      %v5445 = vunpack.c.l.b16 %v5404
      %v5446 = vunpack.c.h.b16 %v5404
      %v5447 = vunpack.c.l.b16 %v5405
      %v5448 = vunpack.c.h.b16 %v5405
      %v5449 = vunpack.c.l.b16 %v5406
      %v5450 = vunpack.c.h.b16 %v5406
      %v5451 = vunpack.c.l.b16 %v5407
      %v5452 = vunpack.c.h.b16 %v5407
      %v5453 = vunpack.c.l.b16 %v5408
      %v5454 = vunpack.c.h.b16 %v5408
      %v5455 = vunpack.c.l.b16 %v5409
      %v5456 = vunpack.c.h.b16 %v5409
      %v5457 = vunpack.c.l.b16 %v5410
      %v5458 = vunpack.c.h.b16 %v5410
      %v5459 = vunpack.c.l.b16 %v5411
      %v5460 = vunpack.c.h.b16 %v5411
      %v5461 = vunpack.c.l.b16 %v5412
      %v5462 = vunpack.c.h.b16 %v5412
      %v5463 = vpack.c.b16 %v5433, %v5431
      %v5464 = vpack.c.b16 %v5434, %v5432
      %v5465 = vpack.c.b16 %v5437, %v5435
      %v5466 = vpack.c.b16 %v5438, %v5436
      %v5467 = vpack.c.b16 %v5441, %v5439
      %v5468 = vpack.c.b16 %v5442, %v5440
      %v5469 = vpack.c.b16 %v5445, %v5443
      %v5470 = vpack.c.b16 %v5446, %v5444
      %v5471 = vpack.c.b16 %v5449, %v5447
      %v5472 = vpack.c.b16 %v5450, %v5448
      %v5473 = vpack.c.b16 %v5453, %v5451
      %v5474 = vpack.c.b16 %v5454, %v5452
      %v5475 = vpack.c.b16 %v5457, %v5455
      %v5476 = vpack.c.b16 %v5458, %v5456
      %v5477 = vpack.c.b16 %v5461, %v5459
      %v5478 = vpack.c.b16 %v5462, %v5460
      %5495 = vmatpush.bf16.msra.mxu0 %v5477
      %5496 = vmatpush.bf16.msra.mxu0 %v5475
      %5497 = vmatpush.bf16.msra.mxu0 %v5473
      %5498 = vmatpush.bf16.msra.mxu0 %v5471
      %5499 = vmatpush.bf16.msra.mxu0 %v5469
      %5500 = vmatpush.bf16.msra.mxu0 %v5467
      %5501 = vmatpush.bf16.msra.mxu0 %v5465
      %5502 = vmatpush.bf16.msra.mxu0 %v5463
      %5503 = vmatmul.bf16.gmra.mxu0 %v5413
      %v5504 = vpop.f32.mrf.mxu0
      %v5505 = vadd.f32 0.0, %v5504
      %v5506 = vpop.f32.mrf.mxu0
      %5507 = vdwg.mxu0
      %5508 = vmatpush.bf16.msra.mxu0 %v5478
      %5509 = vmatpush.bf16.msra.mxu0 %v5476
      %5510 = vmatpush.bf16.msra.mxu0 %v5474
      %5511 = vmatpush.bf16.msra.mxu0 %v5472
      %5512 = vmatpush.bf16.msra.mxu0 %v5470
      %5513 = vmatpush.bf16.msra.mxu0 %v5468
      %5514 = vmatpush.bf16.msra.mxu0 %v5466
      %5515 = vmatpush.bf16.msra.mxu0 %v5464
      %5516 = vmatmul.bf16.gmra.mxu0 %v5413
      %v5517 = vpop.f32.mrf.mxu0
      %v5518 = vadd.f32 0.0, %v5517
      %v5519 = vpop.f32.mrf.mxu0
      %5520 = vdwg.mxu0
      %v5521 = vadd.f32 %v5394, %v5505
      %v5522 = vadd.f32 %v5395, %v5518
      %v5523 = vld [vmem:[%s10] sm:$0x3]
      %v5525 = vperm.slane %v5523, 0
      %v5526 = vperm.slane %v5523, 1
      %v5529 = vadd.f32 %v5521, %v5525
      %v5530 = vadd.f32 %v5522, %v5526
      %v5531 = vmax.f32 %v5529, 0.0
      %v5532 = vmax.f32 %v5530, 0.0
      %v5535 = vrot.slane %v5532, 7
      %v5536 = vsel %vm4821, %v5531, %v5535
      %v5538 = vlaneseq
      %vm5539 = vcmp.ge.s32.totalorder %v5538, 0
      %vm5540 = vcmp.lt.s32.totalorder %v5538, 256
      %vm5541 = vmand %vm5539, %vm5540
      %5542 = vst.msk [vmem:[%s646] sm:$0x3] %vm5541, %v5536
      %v5543 = vld [vmem:[#allocation5] sm:$0x33]
      %v5544 = vld [vmem:[#allocation5 + $0x8] sm:$0x33]
      %v5547 = vrot.slane %v5543, 2
      %v5548 = vrot.slane %v5544, 2
      %v5549 = vsel %vm4824, %v5543, %v5547
      %v5550 = vsel %vm4824, %v5544, %v5548
      %5551 = vst [vmem:[#allocation1] ss:$4 sm:$0xff] %v5549
      %s5552 = scalar_lea.vmem [#allocation1], 1
      %5553 = vst [vmem:[%s5552] ss:$4 sm:$0xff] %v5550
      %v5554 = vld.sshfl [vmem:[#allocation1] sm:$0xff pattern:$0x73625140]
      %v5555 = vld.sshfl [vmem:[#allocation1 + $0x8] sm:$0xff pattern:$0x73625140]
      %v5558 = vpack.c.bf16 %v5554, %v5554
      %v5559 = vpack.c.bf16 %v5555, %v5555
      %v5560 = vld [vmem:[%s13] sm:$0xf]
      %v5561 = vld [vmem:[%s13 + $0x4] sm:$0xf]
      %v5562 = vld [vmem:[%s13 + $0x8] sm:$0xf]
      %v5563 = vld [vmem:[%s13 + $0xc] sm:$0xf]
      %v5564 = vld [vmem:[%s13 + $0x10] sm:$0xf]
      %v5565 = vld [vmem:[%s13 + $0x14] sm:$0xf]
      %v5566 = vld [vmem:[%s13 + $0x18] sm:$0xf]
      %v5567 = vld [vmem:[%s13 + $0x1c] sm:$0xf]
      %v5568 = vld [vmem:[%s13 + $0x20] sm:$0xf]
      %v5569 = vld [vmem:[%s13 + $0x24] sm:$0xf]
      %v5570 = vld [vmem:[%s13 + $0x28] sm:$0xf]
      %v5571 = vld [vmem:[%s13 + $0x2c] sm:$0xf]
      %v5572 = vld [vmem:[%s13 + $0x30] sm:$0xf]
      %v5573 = vld [vmem:[%s13 + $0x34] sm:$0xf]
      %v5574 = vld [vmem:[%s13 + $0x38] sm:$0xf]
      %v5575 = vld [vmem:[%s13 + $0x3c] sm:$0xf]
      %v5576 = vld [vmem:[%s13 + $0x40] sm:$0xf]
      %v5577 = vld [vmem:[%s13 + $0x44] sm:$0xf]
      %v5578 = vld [vmem:[%s13 + $0x48] sm:$0xf]
      %v5579 = vld [vmem:[%s13 + $0x4c] sm:$0xf]
      %v5580 = vld [vmem:[%s13 + $0x50] sm:$0xf]
      %v5581 = vld [vmem:[%s13 + $0x54] sm:$0xf]
      %v5582 = vld [vmem:[%s13 + $0x58] sm:$0xf]
      %v5583 = vld [vmem:[%s13 + $0x5c] sm:$0xf]
      %v5584 = vld [vmem:[%s13 + $0x60] sm:$0xf]
      %v5585 = vld [vmem:[%s13 + $0x64] sm:$0xf]
      %v5586 = vld [vmem:[%s13 + $0x68] sm:$0xf]
      %v5587 = vld [vmem:[%s13 + $0x6c] sm:$0xf]
      %v5588 = vld [vmem:[%s13 + $0x70] sm:$0xf]
      %v5589 = vld [vmem:[%s13 + $0x74] sm:$0xf]
      %v5590 = vld [vmem:[%s13 + $0x78] sm:$0xf]
      %v5591 = vld [vmem:[%s13 + $0x7c] sm:$0xf]
      %v5592 = vld [vmem:[#allocation5] sm:$0x66]
      %v5593 = vld [vmem:[#allocation5 + $0x8] sm:$0x66]
      %v5596 = vrot.slane %v5592, 2
      %v5597 = vrot.slane %v5593, 2
      %v5598 = vsel %vm4824, %v5592, %v5596
      %v5599 = vsel %vm4842, %v5592, %v5596
      %v5600 = vrot.slane %v5599, 2
      %v5601 = vsel %vm4824, %v5593, %v5597
      %v5602 = vsel %vm4842, %v5593, %v5597
      %v5603 = vrot.slane %v5602, 2
      %vm5604 = vcmask 1042434
      %vm5605 = vmor %vm4821, %vm5604
      %vm5606 = vcmask 1044484
      %vm5607 = vmor %vm5605, %vm5606
      %vm5608 = vcmask 1046534
      %vm5609 = vmor %vm5607, %vm5608
      %v5610 = vrot.slane %v5598, 7
      %v5611 = vrot.slane %v5610, 2
      %v5612 = vrot.slane %v5600, 7
      %v5613 = vsel %vm5609, %v5611, %v5612
      %v5614 = vrot.slane %v5601, 7
      %v5615 = vrot.slane %v5614, 2
      %v5616 = vrot.slane %v5603, 7
      %v5617 = vsel %vm5609, %v5615, %v5616
      %5618 = vst [vmem:[#allocation1] ss:$4 sm:$0xff] %v5613
      %s5619 = scalar_lea.vmem [#allocation1], 1
      %5620 = vst [vmem:[%s5619] ss:$4 sm:$0xff] %v5617
      %v5621 = vld.sshfl [vmem:[#allocation1] sm:$0xff pattern:$0x73625140]
      %v5622 = vld.sshfl [vmem:[#allocation1 + $0x8] sm:$0xff pattern:$0x73625140]
      %v5625 = vpack.c.bf16 %v5621, %v5621
      %v5626 = vpack.c.bf16 %v5622, %v5622
      %s5627 = scalar_lea.vmem %s13, 128
      %v5628 = vld [vmem:[%s5627] sm:$0xf]
      %v5629 = vld [vmem:[%s5627 + $0x4] sm:$0xf]
      %v5630 = vld [vmem:[%s5627 + $0x8] sm:$0xf]
      %v5631 = vld [vmem:[%s5627 + $0xc] sm:$0xf]
      %v5632 = vld [vmem:[%s5627 + $0x10] sm:$0xf]
      %v5633 = vld [vmem:[%s5627 + $0x14] sm:$0xf]
      %v5634 = vld [vmem:[%s5627 + $0x18] sm:$0xf]
      %v5635 = vld [vmem:[%s5627 + $0x1c] sm:$0xf]
      %v5636 = vld [vmem:[%s5627 + $0x20] sm:$0xf]
      %v5637 = vld [vmem:[%s5627 + $0x24] sm:$0xf]
      %v5638 = vld [vmem:[%s5627 + $0x28] sm:$0xf]
      %v5639 = vld [vmem:[%s5627 + $0x2c] sm:$0xf]
      %v5640 = vld [vmem:[%s5627 + $0x30] sm:$0xf]
      %v5641 = vld [vmem:[%s5627 + $0x34] sm:$0xf]
      %v5642 = vld [vmem:[%s5627 + $0x38] sm:$0xf]
      %v5643 = vld [vmem:[%s5627 + $0x3c] sm:$0xf]
      %v5644 = vld [vmem:[%s5627 + $0x40] sm:$0xf]
      %v5645 = vld [vmem:[%s5627 + $0x44] sm:$0xf]
      %v5646 = vld [vmem:[%s5627 + $0x48] sm:$0xf]
      %v5647 = vld [vmem:[%s5627 + $0x4c] sm:$0xf]
      %v5648 = vld [vmem:[%s5627 + $0x50] sm:$0xf]
      %v5649 = vld [vmem:[%s5627 + $0x54] sm:$0xf]
      %v5650 = vld [vmem:[%s5627 + $0x58] sm:$0xf]
      %v5651 = vld [vmem:[%s5627 + $0x5c] sm:$0xf]
      %v5652 = vld [vmem:[%s5627 + $0x60] sm:$0xf]
      %v5653 = vld [vmem:[%s5627 + $0x64] sm:$0xf]
      %v5654 = vld [vmem:[%s5627 + $0x68] sm:$0xf]
      %v5655 = vld [vmem:[%s5627 + $0x6c] sm:$0xf]
      %v5656 = vld [vmem:[%s5627 + $0x70] sm:$0xf]
      %v5657 = vld [vmem:[%s5627 + $0x74] sm:$0xf]
      %v5658 = vld [vmem:[%s5627 + $0x78] sm:$0xf]
      %v5659 = vld [vmem:[%s5627 + $0x7c] sm:$0xf]
      %v5692 = vunpack.c.l.b16 %v5628
      %v5693 = vunpack.c.l.b16 %v5629
      %v5694 = vunpack.c.l.b16 %v5630
      %v5695 = vunpack.c.l.b16 %v5631
      %v5696 = vunpack.c.l.b16 %v5632
      %v5697 = vunpack.c.l.b16 %v5633
      %v5698 = vunpack.c.l.b16 %v5634
      %v5699 = vunpack.c.l.b16 %v5635
      %v5700 = vunpack.c.l.b16 %v5636
      %v5701 = vunpack.c.l.b16 %v5637
      %v5702 = vunpack.c.l.b16 %v5638
      %v5703 = vunpack.c.l.b16 %v5639
      %v5704 = vunpack.c.l.b16 %v5640
      %v5705 = vunpack.c.l.b16 %v5641
      %v5706 = vunpack.c.l.b16 %v5642
      %v5707 = vunpack.c.l.b16 %v5643
      %v5708 = vunpack.c.l.b16 %v5644
      %v5709 = vunpack.c.l.b16 %v5645
      %v5710 = vunpack.c.l.b16 %v5646
      %v5711 = vunpack.c.l.b16 %v5647
      %v5712 = vunpack.c.l.b16 %v5648
      %v5713 = vunpack.c.l.b16 %v5649
      %v5714 = vunpack.c.l.b16 %v5650
      %v5715 = vunpack.c.l.b16 %v5651
      %v5716 = vunpack.c.l.b16 %v5652
      %v5717 = vunpack.c.l.b16 %v5653
      %v5718 = vunpack.c.l.b16 %v5654
      %v5719 = vunpack.c.l.b16 %v5655
      %v5720 = vunpack.c.l.b16 %v5656
      %v5721 = vunpack.c.l.b16 %v5657
      %v5722 = vunpack.c.l.b16 %v5658
      %v5723 = vunpack.c.l.b16 %v5659
      %v5724 = vpack.c.b16 %v5693, %v5692
      %v5725 = vpack.c.b16 %v5695, %v5694
      %v5726 = vpack.c.b16 %v5697, %v5696
      %v5727 = vpack.c.b16 %v5699, %v5698
      %v5728 = vpack.c.b16 %v5701, %v5700
      %v5729 = vpack.c.b16 %v5703, %v5702
      %v5730 = vpack.c.b16 %v5705, %v5704
      %v5731 = vpack.c.b16 %v5707, %v5706
      %v5732 = vpack.c.b16 %v5709, %v5708
      %v5733 = vpack.c.b16 %v5711, %v5710
      %v5734 = vpack.c.b16 %v5713, %v5712
      %v5735 = vpack.c.b16 %v5715, %v5714
      %v5736 = vpack.c.b16 %v5717, %v5716
      %v5737 = vpack.c.b16 %v5719, %v5718
      %v5738 = vpack.c.b16 %v5721, %v5720
      %v5739 = vpack.c.b16 %v5723, %v5722
      %5756 = vmatpush.bf16.msra.mxu0 %v5731
      %5757 = vmatpush.bf16.msra.mxu0 %v5730
      %5758 = vmatpush.bf16.msra.mxu0 %v5729
      %5759 = vmatpush.bf16.msra.mxu0 %v5728
      %5760 = vmatpush.bf16.msra.mxu0 %v5727
      %5761 = vmatpush.bf16.msra.mxu0 %v5726
      %5762 = vmatpush.bf16.msra.mxu0 %v5725
      %5763 = vmatpush.bf16.msra.mxu0 %v5724
      %5764 = vmatmul.bf16.gmra.mxu0 %v5625
      %v5765 = vpop.f32.mrf.mxu0
      %v5766 = vadd.f32 0.0, %v5765
      %v5767 = vpop.f32.mrf.mxu0
      %5768 = vdwg.mxu0
      %5769 = vmatpush.bf16.msra.mxu0 %v5739
      %5770 = vmatpush.bf16.msra.mxu0 %v5738
      %5771 = vmatpush.bf16.msra.mxu0 %v5737
      %5772 = vmatpush.bf16.msra.mxu0 %v5736
      %5773 = vmatpush.bf16.msra.mxu0 %v5735
      %5774 = vmatpush.bf16.msra.mxu0 %v5734
      %5775 = vmatpush.bf16.msra.mxu0 %v5733
      %5776 = vmatpush.bf16.msra.mxu0 %v5732
      %5777 = vmatmul.bf16.gmra.mxu0 %v5626
      %v5778 = vpop.f32.mrf.mxu0
      %v5779 = vadd.f32 %v5766, %v5778
      %v5780 = vpop.f32.mrf.mxu0
      %5781 = vdwg.mxu0
      %v5814 = vunpack.c.l.b16 %v5560
      %v5815 = vunpack.c.l.b16 %v5561
      %v5816 = vunpack.c.l.b16 %v5562
      %v5817 = vunpack.c.l.b16 %v5563
      %v5818 = vunpack.c.l.b16 %v5564
      %v5819 = vunpack.c.l.b16 %v5565
      %v5820 = vunpack.c.l.b16 %v5566
      %v5821 = vunpack.c.l.b16 %v5567
      %v5822 = vunpack.c.l.b16 %v5568
      %v5823 = vunpack.c.l.b16 %v5569
      %v5824 = vunpack.c.l.b16 %v5570
      %v5825 = vunpack.c.l.b16 %v5571
      %v5826 = vunpack.c.l.b16 %v5572
      %v5827 = vunpack.c.l.b16 %v5573
      %v5828 = vunpack.c.l.b16 %v5574
      %v5829 = vunpack.c.l.b16 %v5575
      %v5830 = vunpack.c.l.b16 %v5576
      %v5831 = vunpack.c.l.b16 %v5577
      %v5832 = vunpack.c.l.b16 %v5578
      %v5833 = vunpack.c.l.b16 %v5579
      %v5834 = vunpack.c.l.b16 %v5580
      %v5835 = vunpack.c.l.b16 %v5581
      %v5836 = vunpack.c.l.b16 %v5582
      %v5837 = vunpack.c.l.b16 %v5583
      %v5838 = vunpack.c.l.b16 %v5584
      %v5839 = vunpack.c.l.b16 %v5585
      %v5840 = vunpack.c.l.b16 %v5586
      %v5841 = vunpack.c.l.b16 %v5587
      %v5842 = vunpack.c.l.b16 %v5588
      %v5843 = vunpack.c.l.b16 %v5589
      %v5844 = vunpack.c.l.b16 %v5590
      %v5845 = vunpack.c.l.b16 %v5591
      %v5846 = vpack.c.b16 %v5815, %v5814
      %v5847 = vpack.c.b16 %v5817, %v5816
      %v5848 = vpack.c.b16 %v5819, %v5818
      %v5849 = vpack.c.b16 %v5821, %v5820
      %v5850 = vpack.c.b16 %v5823, %v5822
      %v5851 = vpack.c.b16 %v5825, %v5824
      %v5852 = vpack.c.b16 %v5827, %v5826
      %v5853 = vpack.c.b16 %v5829, %v5828
      %v5854 = vpack.c.b16 %v5831, %v5830
      %v5855 = vpack.c.b16 %v5833, %v5832
      %v5856 = vpack.c.b16 %v5835, %v5834
      %v5857 = vpack.c.b16 %v5837, %v5836
      %v5858 = vpack.c.b16 %v5839, %v5838
      %v5859 = vpack.c.b16 %v5841, %v5840
      %v5860 = vpack.c.b16 %v5843, %v5842
      %v5861 = vpack.c.b16 %v5845, %v5844
      %5878 = vmatpush.bf16.msra.mxu0 %v5853
      %5879 = vmatpush.bf16.msra.mxu0 %v5852
      %5880 = vmatpush.bf16.msra.mxu0 %v5851
      %5881 = vmatpush.bf16.msra.mxu0 %v5850
      %5882 = vmatpush.bf16.msra.mxu0 %v5849
      %5883 = vmatpush.bf16.msra.mxu0 %v5848
      %5884 = vmatpush.bf16.msra.mxu0 %v5847
      %5885 = vmatpush.bf16.msra.mxu0 %v5846
      %5886 = vmatmul.bf16.gmra.mxu0 %v5558
      %v5887 = vpop.f32.mrf.mxu0
      %v5888 = vadd.f32 %v5779, %v5887
      %v5889 = vpop.f32.mrf.mxu0
      %5890 = vdwg.mxu0
      %5891 = vmatpush.bf16.msra.mxu0 %v5861
      %5892 = vmatpush.bf16.msra.mxu0 %v5860
      %5893 = vmatpush.bf16.msra.mxu0 %v5859
      %5894 = vmatpush.bf16.msra.mxu0 %v5858
      %5895 = vmatpush.bf16.msra.mxu0 %v5857
      %5896 = vmatpush.bf16.msra.mxu0 %v5856
      %5897 = vmatpush.bf16.msra.mxu0 %v5855
      %5898 = vmatpush.bf16.msra.mxu0 %v5854
      %5899 = vmatmul.bf16.gmra.mxu0 %v5559
      %v5900 = vpop.f32.mrf.mxu0
      %v5901 = vadd.f32 %v5888, %v5900
      %v5902 = vpop.f32.mrf.mxu0
      %5903 = vdwg.mxu0
      %v5904 = vld [vmem:[#allocation5] sm:$0xcc]
      %v5905 = vld [vmem:[#allocation5 + $0x8] sm:$0xcc]
      %5908 = vst.sshfl [vmem:[#allocation1] sm:$0xff pattern:$0x75643120] %v5904
      %s5909 = scalar_lea.vmem [#allocation1], 1
      %v5910 = vld [vmem:[%s5909] ss:$2 sm:$0xff]
      %5911 = vst.sshfl [vmem:[#allocation1 + $0x10] sm:$0xff pattern:$0x75643120] %v5905
      %s5912 = scalar_lea.vmem [#allocation1], 17
      %v5913 = vld [vmem:[%s5912] ss:$2 sm:$0xff]
      %5914 = vst [vmem:[#allocation1] ss:$4 sm:$0xff] %v5910
      %s5915 = scalar_lea.vmem [#allocation1], 1
      %5916 = vst [vmem:[%s5915] ss:$4 sm:$0xff] %v5913
      %v5917 = vld.sshfl [vmem:[#allocation1] sm:$0xff pattern:$0x73625140]
      %v5918 = vld.sshfl [vmem:[#allocation1 + $0x8] sm:$0xff pattern:$0x73625140]
      %v5921 = vpack.c.bf16 %v5917, %v5917
      %v5922 = vpack.c.bf16 %v5918, %v5918
      %s5923 = scalar_lea.vmem %s13, 256
      %v5924 = vld [vmem:[%s5923] sm:$0xf]
      %v5925 = vld [vmem:[%s5923 + $0x4] sm:$0xf]
      %v5926 = vld [vmem:[%s5923 + $0x8] sm:$0xf]
      %v5927 = vld [vmem:[%s5923 + $0xc] sm:$0xf]
      %v5928 = vld [vmem:[%s5923 + $0x10] sm:$0xf]
      %v5929 = vld [vmem:[%s5923 + $0x14] sm:$0xf]
      %v5930 = vld [vmem:[%s5923 + $0x18] sm:$0xf]
      %v5931 = vld [vmem:[%s5923 + $0x1c] sm:$0xf]
      %v5932 = vld [vmem:[%s5923 + $0x20] sm:$0xf]
      %v5933 = vld [vmem:[%s5923 + $0x24] sm:$0xf]
      %v5934 = vld [vmem:[%s5923 + $0x28] sm:$0xf]
      %v5935 = vld [vmem:[%s5923 + $0x2c] sm:$0xf]
      %v5936 = vld [vmem:[%s5923 + $0x30] sm:$0xf]
      %v5937 = vld [vmem:[%s5923 + $0x34] sm:$0xf]
      %v5938 = vld [vmem:[%s5923 + $0x38] sm:$0xf]
      %v5939 = vld [vmem:[%s5923 + $0x3c] sm:$0xf]
      %v5940 = vld [vmem:[%s5923 + $0x40] sm:$0xf]
      %v5941 = vld [vmem:[%s5923 + $0x44] sm:$0xf]
      %v5942 = vld [vmem:[%s5923 + $0x48] sm:$0xf]
      %v5943 = vld [vmem:[%s5923 + $0x4c] sm:$0xf]
      %v5944 = vld [vmem:[%s5923 + $0x50] sm:$0xf]
      %v5945 = vld [vmem:[%s5923 + $0x54] sm:$0xf]
      %v5946 = vld [vmem:[%s5923 + $0x58] sm:$0xf]
      %v5947 = vld [vmem:[%s5923 + $0x5c] sm:$0xf]
      %v5948 = vld [vmem:[%s5923 + $0x60] sm:$0xf]
      %v5949 = vld [vmem:[%s5923 + $0x64] sm:$0xf]
      %v5950 = vld [vmem:[%s5923 + $0x68] sm:$0xf]
      %v5951 = vld [vmem:[%s5923 + $0x6c] sm:$0xf]
      %v5952 = vld [vmem:[%s5923 + $0x70] sm:$0xf]
      %v5953 = vld [vmem:[%s5923 + $0x74] sm:$0xf]
      %v5954 = vld [vmem:[%s5923 + $0x78] sm:$0xf]
      %v5955 = vld [vmem:[%s5923 + $0x7c] sm:$0xf]
      %v5988 = vunpack.c.l.b16 %v5924
      %v5989 = vunpack.c.l.b16 %v5925
      %v5990 = vunpack.c.l.b16 %v5926
      %v5991 = vunpack.c.l.b16 %v5927
      %v5992 = vunpack.c.l.b16 %v5928
      %v5993 = vunpack.c.l.b16 %v5929
      %v5994 = vunpack.c.l.b16 %v5930
      %v5995 = vunpack.c.l.b16 %v5931
      %v5996 = vunpack.c.l.b16 %v5932
      %v5997 = vunpack.c.l.b16 %v5933
      %v5998 = vunpack.c.l.b16 %v5934
      %v5999 = vunpack.c.l.b16 %v5935
      %v6000 = vunpack.c.l.b16 %v5936
      %v6001 = vunpack.c.l.b16 %v5937
      %v6002 = vunpack.c.l.b16 %v5938
      %v6003 = vunpack.c.l.b16 %v5939
      %v6004 = vunpack.c.l.b16 %v5940
      %v6005 = vunpack.c.l.b16 %v5941
      %v6006 = vunpack.c.l.b16 %v5942
      %v6007 = vunpack.c.l.b16 %v5943
      %v6008 = vunpack.c.l.b16 %v5944
      %v6009 = vunpack.c.l.b16 %v5945
      %v6010 = vunpack.c.l.b16 %v5946
      %v6011 = vunpack.c.l.b16 %v5947
      %v6012 = vunpack.c.l.b16 %v5948
      %v6013 = vunpack.c.l.b16 %v5949
      %v6014 = vunpack.c.l.b16 %v5950
      %v6015 = vunpack.c.l.b16 %v5951
      %v6016 = vunpack.c.l.b16 %v5952
      %v6017 = vunpack.c.l.b16 %v5953
      %v6018 = vunpack.c.l.b16 %v5954
      %v6019 = vunpack.c.l.b16 %v5955
      %v6020 = vpack.c.b16 %v5989, %v5988
      %v6021 = vpack.c.b16 %v5991, %v5990
      %v6022 = vpack.c.b16 %v5993, %v5992
      %v6023 = vpack.c.b16 %v5995, %v5994
      %v6024 = vpack.c.b16 %v5997, %v5996
      %v6025 = vpack.c.b16 %v5999, %v5998
      %v6026 = vpack.c.b16 %v6001, %v6000
      %v6027 = vpack.c.b16 %v6003, %v6002
      %v6028 = vpack.c.b16 %v6005, %v6004
      %v6029 = vpack.c.b16 %v6007, %v6006
      %v6030 = vpack.c.b16 %v6009, %v6008
      %v6031 = vpack.c.b16 %v6011, %v6010
      %v6032 = vpack.c.b16 %v6013, %v6012
      %v6033 = vpack.c.b16 %v6015, %v6014
      %v6034 = vpack.c.b16 %v6017, %v6016
      %v6035 = vpack.c.b16 %v6019, %v6018
      %6052 = vmatpush.bf16.msra.mxu0 %v6027
      %6053 = vmatpush.bf16.msra.mxu0 %v6026
      %6054 = vmatpush.bf16.msra.mxu0 %v6025
      %6055 = vmatpush.bf16.msra.mxu0 %v6024
      %6056 = vmatpush.bf16.msra.mxu0 %v6023
      %6057 = vmatpush.bf16.msra.mxu0 %v6022
      %6058 = vmatpush.bf16.msra.mxu0 %v6021
      %6059 = vmatpush.bf16.msra.mxu0 %v6020
      %6060 = vmatmul.bf16.gmra.mxu0 %v5921
      %v6061 = vpop.f32.mrf.mxu0
      %v6062 = vadd.f32 0.0, %v6061
      %v6063 = vpop.f32.mrf.mxu0
      %6064 = vdwg.mxu0
      %6065 = vmatpush.bf16.msra.mxu0 %v6035
      %6066 = vmatpush.bf16.msra.mxu0 %v6034
      %6067 = vmatpush.bf16.msra.mxu0 %v6033
      %6068 = vmatpush.bf16.msra.mxu0 %v6032
      %6069 = vmatpush.bf16.msra.mxu0 %v6031
      %6070 = vmatpush.bf16.msra.mxu0 %v6030
      %6071 = vmatpush.bf16.msra.mxu0 %v6029
      %6072 = vmatpush.bf16.msra.mxu0 %v6028
      %6073 = vmatmul.bf16.gmra.mxu0 %v5922
      %v6074 = vpop.f32.mrf.mxu0
      %v6075 = vadd.f32 %v6062, %v6074
      %v6076 = vpop.f32.mrf.mxu0
      %6077 = vdwg.mxu0
      %v6078 = vadd.f32 %v5901, %v6075
      %v6079 = vld [vmem:[%s4854] sm:$0x33]
      %v6080 = vld [vmem:[%s4854 + $0x8] sm:$0x33]
      %v6083 = vrot.slane %v6079, 2
      %v6084 = vrot.slane %v6080, 2
      %v6085 = vsel %vm4824, %v6079, %v6083
      %v6086 = vsel %vm4824, %v6080, %v6084
      %6087 = vst [vmem:[#allocation1] ss:$4 sm:$0xff] %v6085
      %s6088 = scalar_lea.vmem [#allocation1], 1
      %6089 = vst [vmem:[%s6088] ss:$4 sm:$0xff] %v6086
      %v6090 = vld.sshfl [vmem:[#allocation1] sm:$0xff pattern:$0x73625140]
      %v6091 = vld.sshfl [vmem:[#allocation1 + $0x8] sm:$0xff pattern:$0x73625140]
      %v6094 = vpack.c.bf16 %v6090, %v6090
      %v6095 = vpack.c.bf16 %v6091, %v6091
      %s6096 = scalar_lea.vmem %s13, 384
      %v6097 = vld [vmem:[%s6096] sm:$0xf]
      %v6098 = vld [vmem:[%s6096 + $0x4] sm:$0xf]
      %v6099 = vld [vmem:[%s6096 + $0x8] sm:$0xf]
      %v6100 = vld [vmem:[%s6096 + $0xc] sm:$0xf]
      %v6101 = vld [vmem:[%s6096 + $0x10] sm:$0xf]
      %v6102 = vld [vmem:[%s6096 + $0x14] sm:$0xf]
      %v6103 = vld [vmem:[%s6096 + $0x18] sm:$0xf]
      %v6104 = vld [vmem:[%s6096 + $0x1c] sm:$0xf]
      %v6105 = vld [vmem:[%s6096 + $0x20] sm:$0xf]
      %v6106 = vld [vmem:[%s6096 + $0x24] sm:$0xf]
      %v6107 = vld [vmem:[%s6096 + $0x28] sm:$0xf]
      %v6108 = vld [vmem:[%s6096 + $0x2c] sm:$0xf]
      %v6109 = vld [vmem:[%s6096 + $0x30] sm:$0xf]
      %v6110 = vld [vmem:[%s6096 + $0x34] sm:$0xf]
      %v6111 = vld [vmem:[%s6096 + $0x38] sm:$0xf]
      %v6112 = vld [vmem:[%s6096 + $0x3c] sm:$0xf]
      %v6113 = vld [vmem:[%s6096 + $0x40] sm:$0xf]
      %v6114 = vld [vmem:[%s6096 + $0x44] sm:$0xf]
      %v6115 = vld [vmem:[%s6096 + $0x48] sm:$0xf]
      %v6116 = vld [vmem:[%s6096 + $0x4c] sm:$0xf]
      %v6117 = vld [vmem:[%s6096 + $0x50] sm:$0xf]
      %v6118 = vld [vmem:[%s6096 + $0x54] sm:$0xf]
      %v6119 = vld [vmem:[%s6096 + $0x58] sm:$0xf]
      %v6120 = vld [vmem:[%s6096 + $0x5c] sm:$0xf]
      %v6121 = vld [vmem:[%s6096 + $0x60] sm:$0xf]
      %v6122 = vld [vmem:[%s6096 + $0x64] sm:$0xf]
      %v6123 = vld [vmem:[%s6096 + $0x68] sm:$0xf]
      %v6124 = vld [vmem:[%s6096 + $0x6c] sm:$0xf]
      %v6125 = vld [vmem:[%s6096 + $0x70] sm:$0xf]
      %v6126 = vld [vmem:[%s6096 + $0x74] sm:$0xf]
      %v6127 = vld [vmem:[%s6096 + $0x78] sm:$0xf]
      %v6128 = vld [vmem:[%s6096 + $0x7c] sm:$0xf]
      %v6161 = vunpack.c.l.b16 %v6097
      %v6162 = vunpack.c.l.b16 %v6098
      %v6163 = vunpack.c.l.b16 %v6099
      %v6164 = vunpack.c.l.b16 %v6100
      %v6165 = vunpack.c.l.b16 %v6101
      %v6166 = vunpack.c.l.b16 %v6102
      %v6167 = vunpack.c.l.b16 %v6103
      %v6168 = vunpack.c.l.b16 %v6104
      %v6169 = vunpack.c.l.b16 %v6105
      %v6170 = vunpack.c.l.b16 %v6106
      %v6171 = vunpack.c.l.b16 %v6107
      %v6172 = vunpack.c.l.b16 %v6108
      %v6173 = vunpack.c.l.b16 %v6109
      %v6174 = vunpack.c.l.b16 %v6110
      %v6175 = vunpack.c.l.b16 %v6111
      %v6176 = vunpack.c.l.b16 %v6112
      %v6177 = vunpack.c.l.b16 %v6113
      %v6178 = vunpack.c.l.b16 %v6114
      %v6179 = vunpack.c.l.b16 %v6115
      %v6180 = vunpack.c.l.b16 %v6116
      %v6181 = vunpack.c.l.b16 %v6117
      %v6182 = vunpack.c.l.b16 %v6118
      %v6183 = vunpack.c.l.b16 %v6119
      %v6184 = vunpack.c.l.b16 %v6120
      %v6185 = vunpack.c.l.b16 %v6121
      %v6186 = vunpack.c.l.b16 %v6122
      %v6187 = vunpack.c.l.b16 %v6123
      %v6188 = vunpack.c.l.b16 %v6124
      %v6189 = vunpack.c.l.b16 %v6125
      %v6190 = vunpack.c.l.b16 %v6126
      %v6191 = vunpack.c.l.b16 %v6127
      %v6192 = vunpack.c.l.b16 %v6128
      %v6193 = vpack.c.b16 %v6162, %v6161
      %v6194 = vpack.c.b16 %v6164, %v6163
      %v6195 = vpack.c.b16 %v6166, %v6165
      %v6196 = vpack.c.b16 %v6168, %v6167
      %v6197 = vpack.c.b16 %v6170, %v6169
      %v6198 = vpack.c.b16 %v6172, %v6171
      %v6199 = vpack.c.b16 %v6174, %v6173
      %v6200 = vpack.c.b16 %v6176, %v6175
      %v6201 = vpack.c.b16 %v6178, %v6177
      %v6202 = vpack.c.b16 %v6180, %v6179
      %v6203 = vpack.c.b16 %v6182, %v6181
      %v6204 = vpack.c.b16 %v6184, %v6183
      %v6205 = vpack.c.b16 %v6186, %v6185
      %v6206 = vpack.c.b16 %v6188, %v6187
      %v6207 = vpack.c.b16 %v6190, %v6189
      %v6208 = vpack.c.b16 %v6192, %v6191
      %6225 = vmatpush.bf16.msra.mxu0 %v6200
      %6226 = vmatpush.bf16.msra.mxu0 %v6199
      %6227 = vmatpush.bf16.msra.mxu0 %v6198
      %6228 = vmatpush.bf16.msra.mxu0 %v6197
      %6229 = vmatpush.bf16.msra.mxu0 %v6196
      %6230 = vmatpush.bf16.msra.mxu0 %v6195
      %6231 = vmatpush.bf16.msra.mxu0 %v6194
      %6232 = vmatpush.bf16.msra.mxu0 %v6193
      %6233 = vmatmul.bf16.gmra.mxu0 %v6094
      %v6234 = vpop.f32.mrf.mxu0
      %v6235 = vadd.f32 0.0, %v6234
      %v6236 = vpop.f32.mrf.mxu0
      %6237 = vdwg.mxu0
      %6238 = vmatpush.bf16.msra.mxu0 %v6208
      %6239 = vmatpush.bf16.msra.mxu0 %v6207
      %6240 = vmatpush.bf16.msra.mxu0 %v6206
      %6241 = vmatpush.bf16.msra.mxu0 %v6205
      %6242 = vmatpush.bf16.msra.mxu0 %v6204
      %6243 = vmatpush.bf16.msra.mxu0 %v6203
      %6244 = vmatpush.bf16.msra.mxu0 %v6202
      %6245 = vmatpush.bf16.msra.mxu0 %v6201
      %6246 = vmatmul.bf16.gmra.mxu0 %v6095
      %v6247 = vpop.f32.mrf.mxu0
      %v6248 = vadd.f32 %v6235, %v6247
      %v6249 = vpop.f32.mrf.mxu0
      %6250 = vdwg.mxu0
      %v6251 = vadd.f32 %v6078, %v6248
      %v6252 = vld [vmem:[%s4854] sm:$0x66]
      %v6253 = vld [vmem:[%s4854 + $0x8] sm:$0x66]
      %v6256 = vrot.slane %v6252, 2
      %v6257 = vrot.slane %v6253, 2
      %v6258 = vsel %vm4824, %v6252, %v6256
      %v6259 = vsel %vm4842, %v6252, %v6256
      %v6260 = vrot.slane %v6259, 2
      %v6261 = vsel %vm4824, %v6253, %v6257
      %v6262 = vsel %vm4842, %v6253, %v6257
      %v6263 = vrot.slane %v6262, 2
      %v6264 = vrot.slane %v6258, 7
      %v6265 = vrot.slane %v6264, 2
      %v6266 = vrot.slane %v6260, 7
      %v6267 = vsel %vm5609, %v6265, %v6266
      %v6268 = vrot.slane %v6261, 7
      %v6269 = vrot.slane %v6268, 2
      %v6270 = vrot.slane %v6263, 7
      %v6271 = vsel %vm5609, %v6269, %v6270
      %6272 = vst [vmem:[#allocation1] ss:$4 sm:$0xff] %v6267
      %s6273 = scalar_lea.vmem [#allocation1], 1
      %6274 = vst [vmem:[%s6273] ss:$4 sm:$0xff] %v6271
      %v6275 = vld.sshfl [vmem:[#allocation1] sm:$0xff pattern:$0x73625140]
      %v6276 = vld.sshfl [vmem:[#allocation1 + $0x8] sm:$0xff pattern:$0x73625140]
      %v6279 = vpack.c.bf16 %v6275, %v6275
      %v6280 = vpack.c.bf16 %v6276, %v6276
      %s6281 = scalar_lea.vmem %s13, 512
      %v6282 = vld [vmem:[%s6281] sm:$0xf]
      %v6283 = vld [vmem:[%s6281 + $0x4] sm:$0xf]
      %v6284 = vld [vmem:[%s6281 + $0x8] sm:$0xf]
      %v6285 = vld [vmem:[%s6281 + $0xc] sm:$0xf]
      %v6286 = vld [vmem:[%s6281 + $0x10] sm:$0xf]
      %v6287 = vld [vmem:[%s6281 + $0x14] sm:$0xf]
      %v6288 = vld [vmem:[%s6281 + $0x18] sm:$0xf]
      %v6289 = vld [vmem:[%s6281 + $0x1c] sm:$0xf]
      %v6290 = vld [vmem:[%s6281 + $0x20] sm:$0xf]
      %v6291 = vld [vmem:[%s6281 + $0x24] sm:$0xf]
      %v6292 = vld [vmem:[%s6281 + $0x28] sm:$0xf]
      %v6293 = vld [vmem:[%s6281 + $0x2c] sm:$0xf]
      %v6294 = vld [vmem:[%s6281 + $0x30] sm:$0xf]
      %v6295 = vld [vmem:[%s6281 + $0x34] sm:$0xf]
      %v6296 = vld [vmem:[%s6281 + $0x38] sm:$0xf]
      %v6297 = vld [vmem:[%s6281 + $0x3c] sm:$0xf]
      %v6298 = vld [vmem:[%s6281 + $0x40] sm:$0xf]
      %v6299 = vld [vmem:[%s6281 + $0x44] sm:$0xf]
      %v6300 = vld [vmem:[%s6281 + $0x48] sm:$0xf]
      %v6301 = vld [vmem:[%s6281 + $0x4c] sm:$0xf]
      %v6302 = vld [vmem:[%s6281 + $0x50] sm:$0xf]
      %v6303 = vld [vmem:[%s6281 + $0x54] sm:$0xf]
      %v6304 = vld [vmem:[%s6281 + $0x58] sm:$0xf]
      %v6305 = vld [vmem:[%s6281 + $0x5c] sm:$0xf]
      %v6306 = vld [vmem:[%s6281 + $0x60] sm:$0xf]
      %v6307 = vld [vmem:[%s6281 + $0x64] sm:$0xf]
      %v6308 = vld [vmem:[%s6281 + $0x68] sm:$0xf]
      %v6309 = vld [vmem:[%s6281 + $0x6c] sm:$0xf]
      %v6310 = vld [vmem:[%s6281 + $0x70] sm:$0xf]
      %v6311 = vld [vmem:[%s6281 + $0x74] sm:$0xf]
      %v6312 = vld [vmem:[%s6281 + $0x78] sm:$0xf]
      %v6313 = vld [vmem:[%s6281 + $0x7c] sm:$0xf]
      %v6346 = vunpack.c.l.b16 %v6282
      %v6347 = vunpack.c.l.b16 %v6283
      %v6348 = vunpack.c.l.b16 %v6284
      %v6349 = vunpack.c.l.b16 %v6285
      %v6350 = vunpack.c.l.b16 %v6286
      %v6351 = vunpack.c.l.b16 %v6287
      %v6352 = vunpack.c.l.b16 %v6288
      %v6353 = vunpack.c.l.b16 %v6289
      %v6354 = vunpack.c.l.b16 %v6290
      %v6355 = vunpack.c.l.b16 %v6291
      %v6356 = vunpack.c.l.b16 %v6292
      %v6357 = vunpack.c.l.b16 %v6293
      %v6358 = vunpack.c.l.b16 %v6294
      %v6359 = vunpack.c.l.b16 %v6295
      %v6360 = vunpack.c.l.b16 %v6296
      %v6361 = vunpack.c.l.b16 %v6297
      %v6362 = vunpack.c.l.b16 %v6298
      %v6363 = vunpack.c.l.b16 %v6299
      %v6364 = vunpack.c.l.b16 %v6300
      %v6365 = vunpack.c.l.b16 %v6301
      %v6366 = vunpack.c.l.b16 %v6302
      %v6367 = vunpack.c.l.b16 %v6303
      %v6368 = vunpack.c.l.b16 %v6304
      %v6369 = vunpack.c.l.b16 %v6305
      %v6370 = vunpack.c.l.b16 %v6306
      %v6371 = vunpack.c.l.b16 %v6307
      %v6372 = vunpack.c.l.b16 %v6308
      %v6373 = vunpack.c.l.b16 %v6309
      %v6374 = vunpack.c.l.b16 %v6310
      %v6375 = vunpack.c.l.b16 %v6311
      %v6376 = vunpack.c.l.b16 %v6312
      %v6377 = vunpack.c.l.b16 %v6313
      %v6378 = vpack.c.b16 %v6347, %v6346
      %v6379 = vpack.c.b16 %v6349, %v6348
      %v6380 = vpack.c.b16 %v6351, %v6350
      %v6381 = vpack.c.b16 %v6353, %v6352
      %v6382 = vpack.c.b16 %v6355, %v6354
      %v6383 = vpack.c.b16 %v6357, %v6356
      %v6384 = vpack.c.b16 %v6359, %v6358
      %v6385 = vpack.c.b16 %v6361, %v6360
      %v6386 = vpack.c.b16 %v6363, %v6362
      %v6387 = vpack.c.b16 %v6365, %v6364
      %v6388 = vpack.c.b16 %v6367, %v6366
      %v6389 = vpack.c.b16 %v6369, %v6368
      %v6390 = vpack.c.b16 %v6371, %v6370
      %v6391 = vpack.c.b16 %v6373, %v6372
      %v6392 = vpack.c.b16 %v6375, %v6374
      %v6393 = vpack.c.b16 %v6377, %v6376
      %6410 = vmatpush.bf16.msra.mxu0 %v6385
      %6411 = vmatpush.bf16.msra.mxu0 %v6384
      %6412 = vmatpush.bf16.msra.mxu0 %v6383
      %6413 = vmatpush.bf16.msra.mxu0 %v6382
      %6414 = vmatpush.bf16.msra.mxu0 %v6381
      %6415 = vmatpush.bf16.msra.mxu0 %v6380
      %6416 = vmatpush.bf16.msra.mxu0 %v6379
      %6417 = vmatpush.bf16.msra.mxu0 %v6378
      %6418 = vmatmul.bf16.gmra.mxu0 %v6279
      %v6419 = vpop.f32.mrf.mxu0
      %v6420 = vadd.f32 0.0, %v6419
      %v6421 = vpop.f32.mrf.mxu0
      %6422 = vdwg.mxu0
      %6423 = vmatpush.bf16.msra.mxu0 %v6393
      %6424 = vmatpush.bf16.msra.mxu0 %v6392
      %6425 = vmatpush.bf16.msra.mxu0 %v6391
      %6426 = vmatpush.bf16.msra.mxu0 %v6390
      %6427 = vmatpush.bf16.msra.mxu0 %v6389
      %6428 = vmatpush.bf16.msra.mxu0 %v6388
      %6429 = vmatpush.bf16.msra.mxu0 %v6387
      %6430 = vmatpush.bf16.msra.mxu0 %v6386
      %6431 = vmatmul.bf16.gmra.mxu0 %v6280
      %v6432 = vpop.f32.mrf.mxu0
      %v6433 = vadd.f32 %v6420, %v6432
      %v6434 = vpop.f32.mrf.mxu0
      %6435 = vdwg.mxu0
      %v6436 = vadd.f32 %v6251, %v6433
      %v6437 = vld [vmem:[%s4854] sm:$0xcc]
      %v6438 = vld [vmem:[%s4854 + $0x8] sm:$0xcc]
      %6441 = vst.sshfl [vmem:[#allocation1] sm:$0xff pattern:$0x75643120] %v6437
      %s6442 = scalar_lea.vmem [#allocation1], 1
      %v6443 = vld [vmem:[%s6442] ss:$2 sm:$0xff]
      %6444 = vst.sshfl [vmem:[#allocation1 + $0x10] sm:$0xff pattern:$0x75643120] %v6438
      %s6445 = scalar_lea.vmem [#allocation1], 17
      %v6446 = vld [vmem:[%s6445] ss:$2 sm:$0xff]
      %6447 = vst [vmem:[#allocation1] ss:$4 sm:$0xff] %v6443
      %s6448 = scalar_lea.vmem [#allocation1], 1
      %6449 = vst [vmem:[%s6448] ss:$4 sm:$0xff] %v6446
      %v6450 = vld.sshfl [vmem:[#allocation1] sm:$0xff pattern:$0x73625140]
      %v6451 = vld.sshfl [vmem:[#allocation1 + $0x8] sm:$0xff pattern:$0x73625140]
      %v6454 = vpack.c.bf16 %v6450, %v6450
      %v6455 = vpack.c.bf16 %v6451, %v6451
      %s6456 = scalar_lea.vmem %s13, 640
      %v6457 = vld [vmem:[%s6456] sm:$0xf]
      %v6458 = vld [vmem:[%s6456 + $0x4] sm:$0xf]
      %v6459 = vld [vmem:[%s6456 + $0x8] sm:$0xf]
      %v6460 = vld [vmem:[%s6456 + $0xc] sm:$0xf]
      %v6461 = vld [vmem:[%s6456 + $0x10] sm:$0xf]
      %v6462 = vld [vmem:[%s6456 + $0x14] sm:$0xf]
      %v6463 = vld [vmem:[%s6456 + $0x18] sm:$0xf]
      %v6464 = vld [vmem:[%s6456 + $0x1c] sm:$0xf]
      %v6465 = vld [vmem:[%s6456 + $0x20] sm:$0xf]
      %v6466 = vld [vmem:[%s6456 + $0x24] sm:$0xf]
      %v6467 = vld [vmem:[%s6456 + $0x28] sm:$0xf]
      %v6468 = vld [vmem:[%s6456 + $0x2c] sm:$0xf]
      %v6469 = vld [vmem:[%s6456 + $0x30] sm:$0xf]
      %v6470 = vld [vmem:[%s6456 + $0x34] sm:$0xf]
      %v6471 = vld [vmem:[%s6456 + $0x38] sm:$0xf]
      %v6472 = vld [vmem:[%s6456 + $0x3c] sm:$0xf]
      %v6473 = vld [vmem:[%s6456 + $0x40] sm:$0xf]
      %v6474 = vld [vmem:[%s6456 + $0x44] sm:$0xf]
      %v6475 = vld [vmem:[%s6456 + $0x48] sm:$0xf]
      %v6476 = vld [vmem:[%s6456 + $0x4c] sm:$0xf]
      %v6477 = vld [vmem:[%s6456 + $0x50] sm:$0xf]
      %v6478 = vld [vmem:[%s6456 + $0x54] sm:$0xf]
      %v6479 = vld [vmem:[%s6456 + $0x58] sm:$0xf]
      %v6480 = vld [vmem:[%s6456 + $0x5c] sm:$0xf]
      %v6481 = vld [vmem:[%s6456 + $0x60] sm:$0xf]
      %v6482 = vld [vmem:[%s6456 + $0x64] sm:$0xf]
      %v6483 = vld [vmem:[%s6456 + $0x68] sm:$0xf]
      %v6484 = vld [vmem:[%s6456 + $0x6c] sm:$0xf]
      %v6485 = vld [vmem:[%s6456 + $0x70] sm:$0xf]
      %v6486 = vld [vmem:[%s6456 + $0x74] sm:$0xf]
      %v6487 = vld [vmem:[%s6456 + $0x78] sm:$0xf]
      %v6488 = vld [vmem:[%s6456 + $0x7c] sm:$0xf]
      %v6521 = vunpack.c.l.b16 %v6457
      %v6522 = vunpack.c.l.b16 %v6458
      %v6523 = vunpack.c.l.b16 %v6459
      %v6524 = vunpack.c.l.b16 %v6460
      %v6525 = vunpack.c.l.b16 %v6461
      %v6526 = vunpack.c.l.b16 %v6462
      %v6527 = vunpack.c.l.b16 %v6463
      %v6528 = vunpack.c.l.b16 %v6464
      %v6529 = vunpack.c.l.b16 %v6465
      %v6530 = vunpack.c.l.b16 %v6466
      %v6531 = vunpack.c.l.b16 %v6467
      %v6532 = vunpack.c.l.b16 %v6468
      %v6533 = vunpack.c.l.b16 %v6469
      %v6534 = vunpack.c.l.b16 %v6470
      %v6535 = vunpack.c.l.b16 %v6471
      %v6536 = vunpack.c.l.b16 %v6472
      %v6537 = vunpack.c.l.b16 %v6473
      %v6538 = vunpack.c.l.b16 %v6474
      %v6539 = vunpack.c.l.b16 %v6475
      %v6540 = vunpack.c.l.b16 %v6476
      %v6541 = vunpack.c.l.b16 %v6477
      %v6542 = vunpack.c.l.b16 %v6478
      %v6543 = vunpack.c.l.b16 %v6479
      %v6544 = vunpack.c.l.b16 %v6480
      %v6545 = vunpack.c.l.b16 %v6481
      %v6546 = vunpack.c.l.b16 %v6482
      %v6547 = vunpack.c.l.b16 %v6483
      %v6548 = vunpack.c.l.b16 %v6484
      %v6549 = vunpack.c.l.b16 %v6485
      %v6550 = vunpack.c.l.b16 %v6486
      %v6551 = vunpack.c.l.b16 %v6487
      %v6552 = vunpack.c.l.b16 %v6488
      %v6553 = vpack.c.b16 %v6522, %v6521
      %v6554 = vpack.c.b16 %v6524, %v6523
      %v6555 = vpack.c.b16 %v6526, %v6525
      %v6556 = vpack.c.b16 %v6528, %v6527
      %v6557 = vpack.c.b16 %v6530, %v6529
      %v6558 = vpack.c.b16 %v6532, %v6531
      %v6559 = vpack.c.b16 %v6534, %v6533
      %v6560 = vpack.c.b16 %v6536, %v6535
      %v6561 = vpack.c.b16 %v6538, %v6537
      %v6562 = vpack.c.b16 %v6540, %v6539
      %v6563 = vpack.c.b16 %v6542, %v6541
      %v6564 = vpack.c.b16 %v6544, %v6543
      %v6565 = vpack.c.b16 %v6546, %v6545
      %v6566 = vpack.c.b16 %v6548, %v6547
      %v6567 = vpack.c.b16 %v6550, %v6549
      %v6568 = vpack.c.b16 %v6552, %v6551
      %6585 = vmatpush.bf16.msra.mxu0 %v6560
      %6586 = vmatpush.bf16.msra.mxu0 %v6559
      %6587 = vmatpush.bf16.msra.mxu0 %v6558
      %6588 = vmatpush.bf16.msra.mxu0 %v6557
      %6589 = vmatpush.bf16.msra.mxu0 %v6556
      %6590 = vmatpush.bf16.msra.mxu0 %v6555
      %6591 = vmatpush.bf16.msra.mxu0 %v6554
      %6592 = vmatpush.bf16.msra.mxu0 %v6553
      %6593 = vmatmul.bf16.gmra.mxu0 %v6454
      %v6594 = vpop.f32.mrf.mxu0
      %v6595 = vadd.f32 0.0, %v6594
      %v6596 = vpop.f32.mrf.mxu0
      %6597 = vdwg.mxu0
      %6598 = vmatpush.bf16.msra.mxu0 %v6568
      %6599 = vmatpush.bf16.msra.mxu0 %v6567
      %6600 = vmatpush.bf16.msra.mxu0 %v6566
      %6601 = vmatpush.bf16.msra.mxu0 %v6565
      %6602 = vmatpush.bf16.msra.mxu0 %v6564
      %6603 = vmatpush.bf16.msra.mxu0 %v6563
      %6604 = vmatpush.bf16.msra.mxu0 %v6562
      %6605 = vmatpush.bf16.msra.mxu0 %v6561
      %6606 = vmatmul.bf16.gmra.mxu0 %v6455
      %v6607 = vpop.f32.mrf.mxu0
      %v6608 = vadd.f32 %v6595, %v6607
      %v6609 = vpop.f32.mrf.mxu0
      %6610 = vdwg.mxu0
      %v6611 = vadd.f32 %v6436, %v6608
      %s6612 = scalar_lea.vmem [#allocation5], 16
      %v6613 = vld [vmem:[%s6612] sm:$0x33]
      %v6614 = vld [vmem:[%s6612 + $0x8] sm:$0x33]
      %v6617 = vrot.slane %v6613, 2
      %v6618 = vrot.slane %v6614, 2
      %v6619 = vsel %vm4824, %v6613, %v6617
      %v6620 = vsel %vm4824, %v6614, %v6618
      %6621 = vst [vmem:[#allocation1] ss:$4 sm:$0xff] %v6619
      %s6622 = scalar_lea.vmem [#allocation1], 1
      %6623 = vst [vmem:[%s6622] ss:$4 sm:$0xff] %v6620
      %v6624 = vld.sshfl [vmem:[#allocation1] sm:$0xff pattern:$0x73625140]
      %v6625 = vld.sshfl [vmem:[#allocation1 + $0x8] sm:$0xff pattern:$0x73625140]
      %v6628 = vpack.c.bf16 %v6624, %v6624
      %v6629 = vpack.c.bf16 %v6625, %v6625
      %s6630 = scalar_lea.vmem %s13, 768
      %v6631 = vld [vmem:[%s6630] sm:$0xf]
      %v6632 = vld [vmem:[%s6630 + $0x4] sm:$0xf]
      %v6633 = vld [vmem:[%s6630 + $0x8] sm:$0xf]
      %v6634 = vld [vmem:[%s6630 + $0xc] sm:$0xf]
      %v6635 = vld [vmem:[%s6630 + $0x10] sm:$0xf]
      %v6636 = vld [vmem:[%s6630 + $0x14] sm:$0xf]
      %v6637 = vld [vmem:[%s6630 + $0x18] sm:$0xf]
      %v6638 = vld [vmem:[%s6630 + $0x1c] sm:$0xf]
      %v6639 = vld [vmem:[%s6630 + $0x20] sm:$0xf]
      %v6640 = vld [vmem:[%s6630 + $0x24] sm:$0xf]
      %v6641 = vld [vmem:[%s6630 + $0x28] sm:$0xf]
      %v6642 = vld [vmem:[%s6630 + $0x2c] sm:$0xf]
      %v6643 = vld [vmem:[%s6630 + $0x30] sm:$0xf]
      %v6644 = vld [vmem:[%s6630 + $0x34] sm:$0xf]
      %v6645 = vld [vmem:[%s6630 + $0x38] sm:$0xf]
      %v6646 = vld [vmem:[%s6630 + $0x3c] sm:$0xf]
      %v6647 = vld [vmem:[%s6630 + $0x40] sm:$0xf]
      %v6648 = vld [vmem:[%s6630 + $0x44] sm:$0xf]
      %v6649 = vld [vmem:[%s6630 + $0x48] sm:$0xf]
      %v6650 = vld [vmem:[%s6630 + $0x4c] sm:$0xf]
      %v6651 = vld [vmem:[%s6630 + $0x50] sm:$0xf]
      %v6652 = vld [vmem:[%s6630 + $0x54] sm:$0xf]
      %v6653 = vld [vmem:[%s6630 + $0x58] sm:$0xf]
      %v6654 = vld [vmem:[%s6630 + $0x5c] sm:$0xf]
      %v6655 = vld [vmem:[%s6630 + $0x60] sm:$0xf]
      %v6656 = vld [vmem:[%s6630 + $0x64] sm:$0xf]
      %v6657 = vld [vmem:[%s6630 + $0x68] sm:$0xf]
      %v6658 = vld [vmem:[%s6630 + $0x6c] sm:$0xf]
      %v6659 = vld [vmem:[%s6630 + $0x70] sm:$0xf]
      %v6660 = vld [vmem:[%s6630 + $0x74] sm:$0xf]
      %v6661 = vld [vmem:[%s6630 + $0x78] sm:$0xf]
      %v6662 = vld [vmem:[%s6630 + $0x7c] sm:$0xf]
      %v6695 = vunpack.c.l.b16 %v6631
      %v6696 = vunpack.c.l.b16 %v6632
      %v6697 = vunpack.c.l.b16 %v6633
      %v6698 = vunpack.c.l.b16 %v6634
      %v6699 = vunpack.c.l.b16 %v6635
      %v6700 = vunpack.c.l.b16 %v6636
      %v6701 = vunpack.c.l.b16 %v6637
      %v6702 = vunpack.c.l.b16 %v6638
      %v6703 = vunpack.c.l.b16 %v6639
      %v6704 = vunpack.c.l.b16 %v6640
      %v6705 = vunpack.c.l.b16 %v6641
      %v6706 = vunpack.c.l.b16 %v6642
      %v6707 = vunpack.c.l.b16 %v6643
      %v6708 = vunpack.c.l.b16 %v6644
      %v6709 = vunpack.c.l.b16 %v6645
      %v6710 = vunpack.c.l.b16 %v6646
      %v6711 = vunpack.c.l.b16 %v6647
      %v6712 = vunpack.c.l.b16 %v6648
      %v6713 = vunpack.c.l.b16 %v6649
      %v6714 = vunpack.c.l.b16 %v6650
      %v6715 = vunpack.c.l.b16 %v6651
      %v6716 = vunpack.c.l.b16 %v6652
      %v6717 = vunpack.c.l.b16 %v6653
      %v6718 = vunpack.c.l.b16 %v6654
      %v6719 = vunpack.c.l.b16 %v6655
      %v6720 = vunpack.c.l.b16 %v6656
      %v6721 = vunpack.c.l.b16 %v6657
      %v6722 = vunpack.c.l.b16 %v6658
      %v6723 = vunpack.c.l.b16 %v6659
      %v6724 = vunpack.c.l.b16 %v6660
      %v6725 = vunpack.c.l.b16 %v6661
      %v6726 = vunpack.c.l.b16 %v6662
      %v6727 = vpack.c.b16 %v6696, %v6695
      %v6728 = vpack.c.b16 %v6698, %v6697
      %v6729 = vpack.c.b16 %v6700, %v6699
      %v6730 = vpack.c.b16 %v6702, %v6701
      %v6731 = vpack.c.b16 %v6704, %v6703
      %v6732 = vpack.c.b16 %v6706, %v6705
      %v6733 = vpack.c.b16 %v6708, %v6707
      %v6734 = vpack.c.b16 %v6710, %v6709
      %v6735 = vpack.c.b16 %v6712, %v6711
      %v6736 = vpack.c.b16 %v6714, %v6713
      %v6737 = vpack.c.b16 %v6716, %v6715
      %v6738 = vpack.c.b16 %v6718, %v6717
      %v6739 = vpack.c.b16 %v6720, %v6719
      %v6740 = vpack.c.b16 %v6722, %v6721
      %v6741 = vpack.c.b16 %v6724, %v6723
      %v6742 = vpack.c.b16 %v6726, %v6725
      %6759 = vmatpush.bf16.msra.mxu0 %v6734
      %6760 = vmatpush.bf16.msra.mxu0 %v6733
      %6761 = vmatpush.bf16.msra.mxu0 %v6732
      %6762 = vmatpush.bf16.msra.mxu0 %v6731
      %6763 = vmatpush.bf16.msra.mxu0 %v6730
      %6764 = vmatpush.bf16.msra.mxu0 %v6729
      %6765 = vmatpush.bf16.msra.mxu0 %v6728
      %6766 = vmatpush.bf16.msra.mxu0 %v6727
      %6767 = vmatmul.bf16.gmra.mxu0 %v6628
      %v6768 = vpop.f32.mrf.mxu0
      %v6769 = vadd.f32 0.0, %v6768
      %v6770 = vpop.f32.mrf.mxu0
      %6771 = vdwg.mxu0
      %6772 = vmatpush.bf16.msra.mxu0 %v6742
      %6773 = vmatpush.bf16.msra.mxu0 %v6741
      %6774 = vmatpush.bf16.msra.mxu0 %v6740
      %6775 = vmatpush.bf16.msra.mxu0 %v6739
      %6776 = vmatpush.bf16.msra.mxu0 %v6738
      %6777 = vmatpush.bf16.msra.mxu0 %v6737
      %6778 = vmatpush.bf16.msra.mxu0 %v6736
      %6779 = vmatpush.bf16.msra.mxu0 %v6735
      %6780 = vmatmul.bf16.gmra.mxu0 %v6629
      %v6781 = vpop.f32.mrf.mxu0
      %v6782 = vadd.f32 %v6769, %v6781
      %v6783 = vpop.f32.mrf.mxu0
      %6784 = vdwg.mxu0
      %v6785 = vadd.f32 %v6611, %v6782
      %v6786 = vld [vmem:[%s6612] sm:$0x66]
      %v6787 = vld [vmem:[%s6612 + $0x8] sm:$0x66]
      %v6790 = vrot.slane %v6786, 2
      %v6791 = vrot.slane %v6787, 2
      %v6792 = vsel %vm4824, %v6786, %v6790
      %v6793 = vsel %vm4842, %v6786, %v6790
      %v6794 = vrot.slane %v6793, 2
      %v6795 = vsel %vm4824, %v6787, %v6791
      %v6796 = vsel %vm4842, %v6787, %v6791
      %v6797 = vrot.slane %v6796, 2
      %v6798 = vrot.slane %v6792, 7
      %v6799 = vrot.slane %v6798, 2
      %v6800 = vrot.slane %v6794, 7
      %v6801 = vsel %vm5609, %v6799, %v6800
      %v6802 = vrot.slane %v6795, 7
      %v6803 = vrot.slane %v6802, 2
      %v6804 = vrot.slane %v6797, 7
      %v6805 = vsel %vm5609, %v6803, %v6804
      %6806 = vst [vmem:[#allocation1] ss:$4 sm:$0xff] %v6801
      %s6807 = scalar_lea.vmem [#allocation1], 1
      %6808 = vst [vmem:[%s6807] ss:$4 sm:$0xff] %v6805
      %v6809 = vld.sshfl [vmem:[#allocation1] sm:$0xff pattern:$0x73625140]
      %v6810 = vld.sshfl [vmem:[#allocation1 + $0x8] sm:$0xff pattern:$0x73625140]
      %v6813 = vpack.c.bf16 %v6809, %v6809
      %v6814 = vpack.c.bf16 %v6810, %v6810
      %s6815 = scalar_lea.vmem %s13, 896
      %v6816 = vld [vmem:[%s6815] sm:$0xf]
      %v6817 = vld [vmem:[%s6815 + $0x4] sm:$0xf]
      %v6818 = vld [vmem:[%s6815 + $0x8] sm:$0xf]
      %v6819 = vld [vmem:[%s6815 + $0xc] sm:$0xf]
      %v6820 = vld [vmem:[%s6815 + $0x10] sm:$0xf]
      %v6821 = vld [vmem:[%s6815 + $0x14] sm:$0xf]
      %v6822 = vld [vmem:[%s6815 + $0x18] sm:$0xf]
      %v6823 = vld [vmem:[%s6815 + $0x1c] sm:$0xf]
      %v6824 = vld [vmem:[%s6815 + $0x20] sm:$0xf]
      %v6825 = vld [vmem:[%s6815 + $0x24] sm:$0xf]
      %v6826 = vld [vmem:[%s6815 + $0x28] sm:$0xf]
      %v6827 = vld [vmem:[%s6815 + $0x2c] sm:$0xf]
      %v6828 = vld [vmem:[%s6815 + $0x30] sm:$0xf]
      %v6829 = vld [vmem:[%s6815 + $0x34] sm:$0xf]
      %v6830 = vld [vmem:[%s6815 + $0x38] sm:$0xf]
      %v6831 = vld [vmem:[%s6815 + $0x3c] sm:$0xf]
      %v6832 = vld [vmem:[%s6815 + $0x40] sm:$0xf]
      %v6833 = vld [vmem:[%s6815 + $0x44] sm:$0xf]
      %v6834 = vld [vmem:[%s6815 + $0x48] sm:$0xf]
      %v6835 = vld [vmem:[%s6815 + $0x4c] sm:$0xf]
      %v6836 = vld [vmem:[%s6815 + $0x50] sm:$0xf]
      %v6837 = vld [vmem:[%s6815 + $0x54] sm:$0xf]
      %v6838 = vld [vmem:[%s6815 + $0x58] sm:$0xf]
      %v6839 = vld [vmem:[%s6815 + $0x5c] sm:$0xf]
      %v6840 = vld [vmem:[%s6815 + $0x60] sm:$0xf]
      %v6841 = vld [vmem:[%s6815 + $0x64] sm:$0xf]
      %v6842 = vld [vmem:[%s6815 + $0x68] sm:$0xf]
      %v6843 = vld [vmem:[%s6815 + $0x6c] sm:$0xf]
      %v6844 = vld [vmem:[%s6815 + $0x70] sm:$0xf]
      %v6845 = vld [vmem:[%s6815 + $0x74] sm:$0xf]
      %v6846 = vld [vmem:[%s6815 + $0x78] sm:$0xf]
      %v6847 = vld [vmem:[%s6815 + $0x7c] sm:$0xf]
      %v6880 = vunpack.c.l.b16 %v6816
      %v6881 = vunpack.c.l.b16 %v6817
      %v6882 = vunpack.c.l.b16 %v6818
      %v6883 = vunpack.c.l.b16 %v6819
      %v6884 = vunpack.c.l.b16 %v6820
      %v6885 = vunpack.c.l.b16 %v6821
      %v6886 = vunpack.c.l.b16 %v6822
      %v6887 = vunpack.c.l.b16 %v6823
      %v6888 = vunpack.c.l.b16 %v6824
      %v6889 = vunpack.c.l.b16 %v6825
      %v6890 = vunpack.c.l.b16 %v6826
      %v6891 = vunpack.c.l.b16 %v6827
      %v6892 = vunpack.c.l.b16 %v6828
      %v6893 = vunpack.c.l.b16 %v6829
      %v6894 = vunpack.c.l.b16 %v6830
      %v6895 = vunpack.c.l.b16 %v6831
      %v6896 = vunpack.c.l.b16 %v6832
      %v6897 = vunpack.c.l.b16 %v6833
      %v6898 = vunpack.c.l.b16 %v6834
      %v6899 = vunpack.c.l.b16 %v6835
      %v6900 = vunpack.c.l.b16 %v6836
      %v6901 = vunpack.c.l.b16 %v6837
      %v6902 = vunpack.c.l.b16 %v6838
      %v6903 = vunpack.c.l.b16 %v6839
      %v6904 = vunpack.c.l.b16 %v6840
      %v6905 = vunpack.c.l.b16 %v6841
      %v6906 = vunpack.c.l.b16 %v6842
      %v6907 = vunpack.c.l.b16 %v6843
      %v6908 = vunpack.c.l.b16 %v6844
      %v6909 = vunpack.c.l.b16 %v6845
      %v6910 = vunpack.c.l.b16 %v6846
      %v6911 = vunpack.c.l.b16 %v6847
      %v6912 = vpack.c.b16 %v6881, %v6880
      %v6913 = vpack.c.b16 %v6883, %v6882
      %v6914 = vpack.c.b16 %v6885, %v6884
      %v6915 = vpack.c.b16 %v6887, %v6886
      %v6916 = vpack.c.b16 %v6889, %v6888
      %v6917 = vpack.c.b16 %v6891, %v6890
      %v6918 = vpack.c.b16 %v6893, %v6892
      %v6919 = vpack.c.b16 %v6895, %v6894
      %v6920 = vpack.c.b16 %v6897, %v6896
      %v6921 = vpack.c.b16 %v6899, %v6898
      %v6922 = vpack.c.b16 %v6901, %v6900
      %v6923 = vpack.c.b16 %v6903, %v6902
      %v6924 = vpack.c.b16 %v6905, %v6904
      %v6925 = vpack.c.b16 %v6907, %v6906
      %v6926 = vpack.c.b16 %v6909, %v6908
      %v6927 = vpack.c.b16 %v6911, %v6910
      %6944 = vmatpush.bf16.msra.mxu0 %v6919
      %6945 = vmatpush.bf16.msra.mxu0 %v6918
      %6946 = vmatpush.bf16.msra.mxu0 %v6917
      %6947 = vmatpush.bf16.msra.mxu0 %v6916
      %6948 = vmatpush.bf16.msra.mxu0 %v6915
      %6949 = vmatpush.bf16.msra.mxu0 %v6914
      %6950 = vmatpush.bf16.msra.mxu0 %v6913
      %6951 = vmatpush.bf16.msra.mxu0 %v6912
      %6952 = vmatmul.bf16.gmra.mxu0 %v6813
      %v6953 = vpop.f32.mrf.mxu0
      %v6954 = vadd.f32 0.0, %v6953
      %v6955 = vpop.f32.mrf.mxu0
      %6956 = vdwg.mxu0
      %6957 = vmatpush.bf16.msra.mxu0 %v6927
      %6958 = vmatpush.bf16.msra.mxu0 %v6926
      %6959 = vmatpush.bf16.msra.mxu0 %v6925
      %6960 = vmatpush.bf16.msra.mxu0 %v6924
      %6961 = vmatpush.bf16.msra.mxu0 %v6923
      %6962 = vmatpush.bf16.msra.mxu0 %v6922
      %6963 = vmatpush.bf16.msra.mxu0 %v6921
      %6964 = vmatpush.bf16.msra.mxu0 %v6920
      %6965 = vmatmul.bf16.gmra.mxu0 %v6814
      %v6966 = vpop.f32.mrf.mxu0
      %v6967 = vadd.f32 %v6954, %v6966
      %v6968 = vpop.f32.mrf.mxu0
      %6969 = vdwg.mxu0
      %v6970 = vadd.f32 %v6785, %v6967
      %v6971 = vld [vmem:[%s6612] sm:$0xcc]
      %v6972 = vld [vmem:[%s6612 + $0x8] sm:$0xcc]
      %6975 = vst.sshfl [vmem:[#allocation1] sm:$0xff pattern:$0x75643120] %v6971
      %s6976 = scalar_lea.vmem [#allocation1], 1
      %v6977 = vld [vmem:[%s6976] ss:$2 sm:$0xff]
      %6978 = vst.sshfl [vmem:[#allocation1 + $0x10] sm:$0xff pattern:$0x75643120] %v6972
      %s6979 = scalar_lea.vmem [#allocation1], 17
      %v6980 = vld [vmem:[%s6979] ss:$2 sm:$0xff]
      %6981 = vst [vmem:[#allocation1] ss:$4 sm:$0xff] %v6977
      %s6982 = scalar_lea.vmem [#allocation1], 1
      %6983 = vst [vmem:[%s6982] ss:$4 sm:$0xff] %v6980
      %v6984 = vld.sshfl [vmem:[#allocation1] sm:$0xff pattern:$0x73625140]
      %v6985 = vld.sshfl [vmem:[#allocation1 + $0x8] sm:$0xff pattern:$0x73625140]
      %v6988 = vpack.c.bf16 %v6984, %v6984
      %v6989 = vpack.c.bf16 %v6985, %v6985
      %s6990 = scalar_lea.vmem %s13, 1024
      %v6991 = vld [vmem:[%s6990] sm:$0xf]
      %v6992 = vld [vmem:[%s6990 + $0x4] sm:$0xf]
      %v6993 = vld [vmem:[%s6990 + $0x8] sm:$0xf]
      %v6994 = vld [vmem:[%s6990 + $0xc] sm:$0xf]
      %v6995 = vld [vmem:[%s6990 + $0x10] sm:$0xf]
      %v6996 = vld [vmem:[%s6990 + $0x14] sm:$0xf]
      %v6997 = vld [vmem:[%s6990 + $0x18] sm:$0xf]
      %v6998 = vld [vmem:[%s6990 + $0x1c] sm:$0xf]
      %v6999 = vld [vmem:[%s6990 + $0x20] sm:$0xf]
      %v7000 = vld [vmem:[%s6990 + $0x24] sm:$0xf]
      %v7001 = vld [vmem:[%s6990 + $0x28] sm:$0xf]
      %v7002 = vld [vmem:[%s6990 + $0x2c] sm:$0xf]
      %v7003 = vld [vmem:[%s6990 + $0x30] sm:$0xf]
      %v7004 = vld [vmem:[%s6990 + $0x34] sm:$0xf]
      %v7005 = vld [vmem:[%s6990 + $0x38] sm:$0xf]
      %v7006 = vld [vmem:[%s6990 + $0x3c] sm:$0xf]
      %v7007 = vld [vmem:[%s6990 + $0x40] sm:$0xf]
      %v7008 = vld [vmem:[%s6990 + $0x44] sm:$0xf]
      %v7009 = vld [vmem:[%s6990 + $0x48] sm:$0xf]
      %v7010 = vld [vmem:[%s6990 + $0x4c] sm:$0xf]
      %v7011 = vld [vmem:[%s6990 + $0x50] sm:$0xf]
      %v7012 = vld [vmem:[%s6990 + $0x54] sm:$0xf]
      %v7013 = vld [vmem:[%s6990 + $0x58] sm:$0xf]
      %v7014 = vld [vmem:[%s6990 + $0x5c] sm:$0xf]
      %v7015 = vld [vmem:[%s6990 + $0x60] sm:$0xf]
      %v7016 = vld [vmem:[%s6990 + $0x64] sm:$0xf]
      %v7017 = vld [vmem:[%s6990 + $0x68] sm:$0xf]
      %v7018 = vld [vmem:[%s6990 + $0x6c] sm:$0xf]
      %v7019 = vld [vmem:[%s6990 + $0x70] sm:$0xf]
      %v7020 = vld [vmem:[%s6990 + $0x74] sm:$0xf]
      %v7021 = vld [vmem:[%s6990 + $0x78] sm:$0xf]
      %v7022 = vld [vmem:[%s6990 + $0x7c] sm:$0xf]
      %v7055 = vunpack.c.l.b16 %v6991
      %v7056 = vunpack.c.l.b16 %v6992
      %v7057 = vunpack.c.l.b16 %v6993
      %v7058 = vunpack.c.l.b16 %v6994
      %v7059 = vunpack.c.l.b16 %v6995
      %v7060 = vunpack.c.l.b16 %v6996
      %v7061 = vunpack.c.l.b16 %v6997
      %v7062 = vunpack.c.l.b16 %v6998
      %v7063 = vunpack.c.l.b16 %v6999
      %v7064 = vunpack.c.l.b16 %v7000
      %v7065 = vunpack.c.l.b16 %v7001
      %v7066 = vunpack.c.l.b16 %v7002
      %v7067 = vunpack.c.l.b16 %v7003
      %v7068 = vunpack.c.l.b16 %v7004
      %v7069 = vunpack.c.l.b16 %v7005
      %v7070 = vunpack.c.l.b16 %v7006
      %v7071 = vunpack.c.l.b16 %v7007
      %v7072 = vunpack.c.l.b16 %v7008
      %v7073 = vunpack.c.l.b16 %v7009
      %v7074 = vunpack.c.l.b16 %v7010
      %v7075 = vunpack.c.l.b16 %v7011
      %v7076 = vunpack.c.l.b16 %v7012
      %v7077 = vunpack.c.l.b16 %v7013
      %v7078 = vunpack.c.l.b16 %v7014
      %v7079 = vunpack.c.l.b16 %v7015
      %v7080 = vunpack.c.l.b16 %v7016
      %v7081 = vunpack.c.l.b16 %v7017
      %v7082 = vunpack.c.l.b16 %v7018
      %v7083 = vunpack.c.l.b16 %v7019
      %v7084 = vunpack.c.l.b16 %v7020
      %v7085 = vunpack.c.l.b16 %v7021
      %v7086 = vunpack.c.l.b16 %v7022
      %v7087 = vpack.c.b16 %v7056, %v7055
      %v7088 = vpack.c.b16 %v7058, %v7057
      %v7089 = vpack.c.b16 %v7060, %v7059
      %v7090 = vpack.c.b16 %v7062, %v7061
      %v7091 = vpack.c.b16 %v7064, %v7063
      %v7092 = vpack.c.b16 %v7066, %v7065
      %v7093 = vpack.c.b16 %v7068, %v7067
      %v7094 = vpack.c.b16 %v7070, %v7069
      %v7095 = vpack.c.b16 %v7072, %v7071
      %v7096 = vpack.c.b16 %v7074, %v7073
      %v7097 = vpack.c.b16 %v7076, %v7075
      %v7098 = vpack.c.b16 %v7078, %v7077
      %v7099 = vpack.c.b16 %v7080, %v7079
      %v7100 = vpack.c.b16 %v7082, %v7081
      %v7101 = vpack.c.b16 %v7084, %v7083
      %v7102 = vpack.c.b16 %v7086, %v7085
      %7119 = vmatpush.bf16.msra.mxu0 %v7094
      %7120 = vmatpush.bf16.msra.mxu0 %v7093
      %7121 = vmatpush.bf16.msra.mxu0 %v7092
      %7122 = vmatpush.bf16.msra.mxu0 %v7091
      %7123 = vmatpush.bf16.msra.mxu0 %v7090
      %7124 = vmatpush.bf16.msra.mxu0 %v7089
      %7125 = vmatpush.bf16.msra.mxu0 %v7088
      %7126 = vmatpush.bf16.msra.mxu0 %v7087
      %7127 = vmatmul.bf16.gmra.mxu0 %v6988
      %v7128 = vpop.f32.mrf.mxu0
      %v7129 = vadd.f32 0.0, %v7128
      %v7130 = vpop.f32.mrf.mxu0
      %7131 = vdwg.mxu0
      %7132 = vmatpush.bf16.msra.mxu0 %v7102
      %7133 = vmatpush.bf16.msra.mxu0 %v7101
      %7134 = vmatpush.bf16.msra.mxu0 %v7100
      %7135 = vmatpush.bf16.msra.mxu0 %v7099
      %7136 = vmatpush.bf16.msra.mxu0 %v7098
      %7137 = vmatpush.bf16.msra.mxu0 %v7097
      %7138 = vmatpush.bf16.msra.mxu0 %v7096
      %7139 = vmatpush.bf16.msra.mxu0 %v7095
      %7140 = vmatmul.bf16.gmra.mxu0 %v6989
      %v7141 = vpop.f32.mrf.mxu0
      %v7142 = vadd.f32 %v7129, %v7141
      %v7143 = vpop.f32.mrf.mxu0
      %7144 = vdwg.mxu0
      %v7145 = vadd.f32 %v6970, %v7142
      %v7146 = vld [vmem:[%s14] sm:$0x1]
      %v7148 = vperm.slane %v7146, 0
      %v7150 = vadd.f32 %v7145, %v7148
      %vm7151 = vcmask 44032
      %7152 = vst.msk [vmem:[%s655] sm:$0xf] %vm7151, %v7150
      %v7153 = vpack.c.bf16 %v5531, %v5531
      %v7154 = vpack.c.bf16 %v5532, %v5532
      %v7155 = vld [vmem:[%s15] sm:$0xf]
      %v7156 = vld [vmem:[%s15 + $0x4] sm:$0xf]
      %v7157 = vld [vmem:[%s15 + $0x8] sm:$0xf]
      %v7158 = vld [vmem:[%s15 + $0xc] sm:$0xf]
      %v7159 = vld [vmem:[%s15 + $0x10] sm:$0xf]
      %v7160 = vld [vmem:[%s15 + $0x14] sm:$0xf]
      %v7161 = vld [vmem:[%s15 + $0x18] sm:$0xf]
      %v7162 = vld [vmem:[%s15 + $0x1c] sm:$0xf]
      %v7163 = vld [vmem:[%s15 + $0x20] sm:$0xf]
      %v7164 = vld [vmem:[%s15 + $0x24] sm:$0xf]
      %v7165 = vld [vmem:[%s15 + $0x28] sm:$0xf]
      %v7166 = vld [vmem:[%s15 + $0x2c] sm:$0xf]
      %v7167 = vld [vmem:[%s15 + $0x30] sm:$0xf]
      %v7168 = vld [vmem:[%s15 + $0x34] sm:$0xf]
      %v7169 = vld [vmem:[%s15 + $0x38] sm:$0xf]
      %v7170 = vld [vmem:[%s15 + $0x3c] sm:$0xf]
      %v7171 = vld [vmem:[%s15 + $0x40] sm:$0xf]
      %v7172 = vld [vmem:[%s15 + $0x44] sm:$0xf]
      %v7173 = vld [vmem:[%s15 + $0x48] sm:$0xf]
      %v7174 = vld [vmem:[%s15 + $0x4c] sm:$0xf]
      %v7175 = vld [vmem:[%s15 + $0x50] sm:$0xf]
      %v7176 = vld [vmem:[%s15 + $0x54] sm:$0xf]
      %v7177 = vld [vmem:[%s15 + $0x58] sm:$0xf]
      %v7178 = vld [vmem:[%s15 + $0x5c] sm:$0xf]
      %v7179 = vld [vmem:[%s15 + $0x60] sm:$0xf]
      %v7180 = vld [vmem:[%s15 + $0x64] sm:$0xf]
      %v7181 = vld [vmem:[%s15 + $0x68] sm:$0xf]
      %v7182 = vld [vmem:[%s15 + $0x6c] sm:$0xf]
      %v7183 = vld [vmem:[%s15 + $0x70] sm:$0xf]
      %v7184 = vld [vmem:[%s15 + $0x74] sm:$0xf]
      %v7185 = vld [vmem:[%s15 + $0x78] sm:$0xf]
      %v7186 = vld [vmem:[%s15 + $0x7c] sm:$0xf]
      %v7187 = vld [vmem:[%s16] sm:$0x1]
      %v7220 = vunpack.c.l.b16 %v7155
      %v7221 = vunpack.c.l.b16 %v7156
      %v7222 = vunpack.c.l.b16 %v7157
      %v7223 = vunpack.c.l.b16 %v7158
      %v7224 = vunpack.c.l.b16 %v7159
      %v7225 = vunpack.c.l.b16 %v7160
      %v7226 = vunpack.c.l.b16 %v7161
      %v7227 = vunpack.c.l.b16 %v7162
      %v7228 = vunpack.c.l.b16 %v7163
      %v7229 = vunpack.c.l.b16 %v7164
      %v7230 = vunpack.c.l.b16 %v7165
      %v7231 = vunpack.c.l.b16 %v7166
      %v7232 = vunpack.c.l.b16 %v7167
      %v7233 = vunpack.c.l.b16 %v7168
      %v7234 = vunpack.c.l.b16 %v7169
      %v7235 = vunpack.c.l.b16 %v7170
      %v7236 = vunpack.c.l.b16 %v7171
      %v7237 = vunpack.c.l.b16 %v7172
      %v7238 = vunpack.c.l.b16 %v7173
      %v7239 = vunpack.c.l.b16 %v7174
      %v7240 = vunpack.c.l.b16 %v7175
      %v7241 = vunpack.c.l.b16 %v7176
      %v7242 = vunpack.c.l.b16 %v7177
      %v7243 = vunpack.c.l.b16 %v7178
      %v7244 = vunpack.c.l.b16 %v7179
      %v7245 = vunpack.c.l.b16 %v7180
      %v7246 = vunpack.c.l.b16 %v7181
      %v7247 = vunpack.c.l.b16 %v7182
      %v7248 = vunpack.c.l.b16 %v7183
      %v7249 = vunpack.c.l.b16 %v7184
      %v7250 = vunpack.c.l.b16 %v7185
      %v7251 = vunpack.c.l.b16 %v7186
      %v7252 = vpack.c.b16 %v7221, %v7220
      %v7253 = vpack.c.b16 %v7223, %v7222
      %v7254 = vpack.c.b16 %v7225, %v7224
      %v7255 = vpack.c.b16 %v7227, %v7226
      %v7256 = vpack.c.b16 %v7229, %v7228
      %v7257 = vpack.c.b16 %v7231, %v7230
      %v7258 = vpack.c.b16 %v7233, %v7232
      %v7259 = vpack.c.b16 %v7235, %v7234
      %v7260 = vpack.c.b16 %v7237, %v7236
      %v7261 = vpack.c.b16 %v7239, %v7238
      %v7262 = vpack.c.b16 %v7241, %v7240
      %v7263 = vpack.c.b16 %v7243, %v7242
      %v7264 = vpack.c.b16 %v7245, %v7244
      %v7265 = vpack.c.b16 %v7247, %v7246
      %v7266 = vpack.c.b16 %v7249, %v7248
      %v7267 = vpack.c.b16 %v7251, %v7250
      %7284 = vmatpush.bf16.msra.mxu0 %v7259
      %7285 = vmatpush.bf16.msra.mxu0 %v7258
      %7286 = vmatpush.bf16.msra.mxu0 %v7257
      %7287 = vmatpush.bf16.msra.mxu0 %v7256
      %7288 = vmatpush.bf16.msra.mxu0 %v7255
      %7289 = vmatpush.bf16.msra.mxu0 %v7254
      %7290 = vmatpush.bf16.msra.mxu0 %v7253
      %7291 = vmatpush.bf16.msra.mxu0 %v7252
      %7292 = vmatmul.bf16.gmra.mxu0 %v7153
      %v7293 = vpop.f32.mrf.mxu0
      %v7294 = vadd.f32 %v7187, %v7293
      %v7295 = vpop.f32.mrf.mxu0
      %7296 = vdwg.mxu0
      %7297 = vmatpush.bf16.msra.mxu0 %v7267
      %7298 = vmatpush.bf16.msra.mxu0 %v7266
      %7299 = vmatpush.bf16.msra.mxu0 %v7265
      %7300 = vmatpush.bf16.msra.mxu0 %v7264
      %7301 = vmatpush.bf16.msra.mxu0 %v7263
      %7302 = vmatpush.bf16.msra.mxu0 %v7262
      %7303 = vmatpush.bf16.msra.mxu0 %v7261
      %7304 = vmatpush.bf16.msra.mxu0 %v7260
      %7305 = vmatmul.bf16.gmra.mxu0 %v7154
      %v7306 = vpop.f32.mrf.mxu0
      %v7307 = vadd.f32 %v7294, %v7306
      %v7308 = vpop.f32.mrf.mxu0
      %7309 = vdwg.mxu0
      %vm7310 = vcmask 40960
      %7311 = vst.msk [vmem:[%s658] sm:$0x1] %vm7310, %v7307
      %p7312 = scmp.lt.s32.totalorder %s32, 1
      %s7313 = scalar_select %p7312, %s32, 1
      %s7314 = smul.addr %s7313, 2
      %s7315 = scalar_lea.vmem %s17, %s7314
      %p7316 = scmp.lt.s32.totalorder %s32, 1
      %s7317 = scalar_select %p7316, %s32, 1
      %s7318 = smul.addr %s7317, 2
      %s7319 = smul.addr %s7318, 8
      %s7320 = scalar_lea.vmem %s18, %s7319
      %p7321 = scmp.lt.s32.totalorder %s32, 1
      %s7322 = scalar_select %p7321, %s32, 1
      %s7323 = smul.addr %s7322, 4
      %s7324 = scalar_lea.vmem %s19, %s7323
      %p7325 = scmp.lt.s32.totalorder %s32, 1
      %s7326 = scalar_select %p7325, %s32, 1
      %s7327 = scalar_lea.vmem %s20, %s7326
      // Predicated region
      $region89: #{faceboxes_s_forward.3} parent=87 // pred_check
        %p7328 = pneg %p412
      $region90: #{faceboxes_s_forward.3} parent=87 // pred_check_branch
        %7330 = sbr.rel (%p7328) target = $region92
      $region91: #{faceboxes_s_forward.3} parent=87 // pred_region
        _
      $region92: #{faceboxes_s_forward.3} parent=87 // pred_fallthru
        _
      // Predicated region
      $region93: #{faceboxes_s_forward.3} parent=87 // pred_check
        %p7331 = pneg %p438
      $region94: #{faceboxes_s_forward.3} parent=87 // pred_check_branch
        %7333 = sbr.rel (%p7331) target = $region96
      $region95: #{faceboxes_s_forward.3} parent=87 // pred_region
        _
      $region96: #{faceboxes_s_forward.3} parent=87 // pred_fallthru
        _
      // Predicated region
      $region97: #{faceboxes_s_forward.3} parent=87 // pred_check
        %p7334 = pneg %p464
      $region98: #{faceboxes_s_forward.3} parent=87 // pred_check_branch
        %7336 = sbr.rel (%p7334) target = $region100
      $region99: #{faceboxes_s_forward.3} parent=87 // pred_region
        _
      $region100: #{faceboxes_s_forward.3} parent=87 // pred_fallthru
        _
      // Predicated region
      $region101: #{faceboxes_s_forward.3} parent=87 // pred_check
        %p7337 = pneg %p490
      $region102: #{faceboxes_s_forward.3} parent=87 // pred_check_branch
        %7339 = sbr.rel (%p7337) target = $region104
      $region103: #{faceboxes_s_forward.3} parent=87 // pred_region
        _
      $region104: #{faceboxes_s_forward.3} parent=87 // pred_fallthru
        _
    $region88: #{faceboxes_s_forward.3} parent=5 // pred_fallthru
      _
    %p7340 = scmp.le.s32.totalorder 2, %s27
    // Predicated region
    $region105: #{faceboxes_s_forward.3} parent=5 // pred_check
      %p7341 = pneg %p7340
    $region106: #{faceboxes_s_forward.3} parent=5 // pred_check_branch
      %7343 = sbr.rel (%p7341) target = $region108
    $region107: #{faceboxes_s_forward.3} parent=5 // pred_region
      %s7344 = ssub.s32 %s27, 2
      // Predicated region
      $region109: #{faceboxes_s_forward.3} parent=107 // pred_check
        %p7345 = pneg %p418
      $region110: #{faceboxes_s_forward.3} parent=107 // pred_check_branch
        %7347 = sbr.rel (%p7345) target = $region112
      $region111: #{faceboxes_s_forward.3} parent=107 // pred_region
        %p7348 = scmp.lt.s32.totalorder %s33, 1
        %s7349 = scalar_select %p7348, %s33, 1
        %s7350 = smul.addr %s7349, 2
        %s7351 = scalar_lea.vmem %s17, %s7350
      $region112: #{faceboxes_s_forward.3} parent=107 // pred_fallthru
        _
      // Predicated region
      $region113: #{faceboxes_s_forward.3} parent=107 // pred_check
        %p7352 = pneg %p444
      $region114: #{faceboxes_s_forward.3} parent=107 // pred_check_branch
        %7354 = sbr.rel (%p7352) target = $region116
      $region115: #{faceboxes_s_forward.3} parent=107 // pred_region
        %p7355 = scmp.lt.s32.totalorder %s33, 1
        %s7356 = scalar_select %p7355, %s33, 1
        %s7357 = smul.addr %s7356, 2
        %s7358 = smul.addr %s7357, 8
        %s7359 = scalar_lea.vmem %s18, %s7358
      $region116: #{faceboxes_s_forward.3} parent=107 // pred_fallthru
        _
      // Predicated region
      $region117: #{faceboxes_s_forward.3} parent=107 // pred_check
        %p7360 = pneg %p470
      $region118: #{faceboxes_s_forward.3} parent=107 // pred_check_branch
        %7362 = sbr.rel (%p7360) target = $region120
      $region119: #{faceboxes_s_forward.3} parent=107 // pred_region
        %p7363 = scmp.lt.s32.totalorder %s33, 1
        %s7364 = scalar_select %p7363, %s33, 1
        %s7365 = smul.addr %s7364, 4
        %s7366 = scalar_lea.vmem %s19, %s7365
      $region120: #{faceboxes_s_forward.3} parent=107 // pred_fallthru
        _
      // Predicated region
      $region121: #{faceboxes_s_forward.3} parent=107 // pred_check
        %p7367 = pneg %p496
      $region122: #{faceboxes_s_forward.3} parent=107 // pred_check_branch
        %7369 = sbr.rel (%p7367) target = $region124
      $region123: #{faceboxes_s_forward.3} parent=107 // pred_region
        %p7370 = scmp.lt.s32.totalorder %s33, 1
        %s7371 = scalar_select %p7370, %s33, 1
        %s7372 = scalar_lea.vmem %s20, %s7371
      $region124: #{faceboxes_s_forward.3} parent=107 // pred_fallthru
        _
    $region108: #{faceboxes_s_forward.3} parent=5 // pred_fallthru
      _
  $region6: #{faceboxes_s_forward.3} parent=0 // loop_footer
    %s31 = sadd.s32 1, %s27
  $region7: #{faceboxes_s_forward.3} parent=0 // loop_footer_branch
    %26 = sbr.rel target = $region3
  $region8: #{faceboxes_s_forward.3} parent=0 // loop_exit
    _

</llo_original>
